<compile_context>
chip_gen: v5e
topology: v5e:2x2
jax: 0.10.0
libtpu: 0.0.40
codegen_flags: <defaults>
</compile_context>

<pallas_src>
import functools

import jax
import jax.numpy as jnp
from jax import lax
from jax.experimental import pallas as pl
from jax.experimental.pallas import tpu as pltpu

VMEM_LIMIT = 64 * 1024 * 1024   # proven on the sandbox; working sets are far below this
LANE = 128                       # lane (last-dim) multiple
SUBLANE = 16                     # sublane multiple (bf16-safe)
P_TILE_TARGET = 1024             # spatial-row tile target (fallback path)
K_TILE_TARGET = 1024             # reduction tile target
FUSED_P_MAX = 2048               # max spatial rows for the fully-fused norm path
IN_EPS = 1e-5                    # matches PyTorch InstanceNorm2d


def _round_up(n, m):
    return ((n + m - 1) // m) * m


def _pick_tile(full, target, mult):
    """Largest tile <= target that divides `full` and is a multiple of `mult`."""
    if full <= target:
        return full
    for t in range(target - target % mult, 0, -mult):
        if full % t == 0:
            return t
    return full


# -----------------------------------------------------------------------------
# Fused path: matmul + InstanceNorm + activation (+ residual) in one kernel.
# Valid when the whole spatial map is a single P tile (Pp == full rows).
# -----------------------------------------------------------------------------
def make_fused_norm_matmul_kernel(act, has_res: bool, inv_p: float):
    def kernel(*refs):
        if has_res:
            p_ref, w_ref, r_ref, o_ref, acc_ref = refs
        else:
            p_ref, w_ref, o_ref, acc_ref = refs
        k = pl.program_id(1)

        @pl.when(k == 0)
        def _():
            acc_ref[...] = jnp.zeros_like(acc_ref)

        acc_ref[...] += jnp.dot(p_ref[...], w_ref[...],
                                preferred_element_type=jnp.float32)

        @pl.when(k == pl.num_programs(1) - 1)
        def _():
            y = acc_ref[...]                                   # (Pp, C) f32
            # Zero-padded rows contribute nothing; divide by the true row
            # count (inv_p) so mean / var match PyTorch InstanceNorm2d.
            mean = jnp.sum(y, axis=0, keepdims=True) * inv_p   # (1, C)
            msq = jnp.sum(y * y, axis=0, keepdims=True) * inv_p
            var = jnp.maximum(msq - mean * mean, 0.0)
            y = (y - mean) * lax.rsqrt(var + IN_EPS)
            if act == "relu":
                y = jnp.maximum(y, 0.0)
            if has_res:
                y = y + r_ref[...]
            o_ref[...] = y

    return kernel


def fused_norm_matmul(patches, w, residual, act, true_rows):
    """patches: (N, Pp, Kp) bf16, w: (Kp, C) bf16, residual: (N, Pp, C) f32|None."""
    N, Pp, Kp = patches.shape
    C = w.shape[1]
    tk = _pick_tile(Kp, K_TILE_TARGET, LANE)
    nK = Kp // tk
    has_res = residual is not None

    in_specs = [
        pl.BlockSpec((None, Pp, tk), lambda n, k: (n, 0, k)),
        pl.BlockSpec((tk, C), lambda n, k: (k, 0)),
    ]
    args = [patches, w]
    if has_res:
        in_specs.append(pl.BlockSpec((None, Pp, C), lambda n, k: (n, 0, 0)))
        args.append(residual)

    return pl.pallas_call(
        make_fused_norm_matmul_kernel(act, has_res, 1.0 / float(true_rows)),
        out_shape=jax.ShapeDtypeStruct((N, Pp, C), jnp.float32),
        grid=(N, nK),
        in_specs=in_specs,
        out_specs=pl.BlockSpec((None, Pp, C), lambda n, k: (n, 0, 0)),
        scratch_shapes=[pltpu.VMEM((Pp, C), jnp.float32)],
        compiler_params=pltpu.CompilerParams(
            dimension_semantics=("parallel", "arbitrary"),
            vmem_limit_bytes=VMEM_LIMIT),
    )(*args)


# -----------------------------------------------------------------------------
# Fallback pass 1: tiled matmul (+ bias, optional activation, partial stats)
# -----------------------------------------------------------------------------
def make_matmul_kernel(compute_stats: bool, act):
    def kernel(p_ref, w_ref, b_ref, y_ref, *rest):
        if compute_stats:
            st_ref, acc_ref = rest
        else:
            (acc_ref,) = rest
        k = pl.program_id(2)

        @pl.when(k == 0)
        def _():
            acc_ref[...] = jnp.zeros_like(acc_ref)

        acc_ref[...] += jnp.dot(p_ref[...], w_ref[...],
                                preferred_element_type=jnp.float32)

        @pl.when(k == pl.num_programs(2) - 1)
        def _():
            y = acc_ref[...] + b_ref[...]
            if act == "relu":
                y = jnp.maximum(y, 0.0)
            elif act == "tanh":
                y = jnp.tanh(y)
            y_ref[...] = y
            if compute_stats:
                c = y.shape[1]
                s = jnp.sum(y, axis=0, keepdims=True)        # (1, C)
                sq = jnp.sum(y * y, axis=0, keepdims=True)   # (1, C) one pass
                st_ref[...] = jnp.concatenate(
                    [s, sq, jnp.zeros((6, c), jnp.float32)], axis=0)

    return kernel


def tiled_matmul(patches, w, bias, *, compute_stats, act):
    """patches: (N, Pp, Kp) bf16, w: (Kp, C) bf16, bias: (1, C) f32."""
    N, Pp, Kp = patches.shape
    C = w.shape[1]
    tp = _pick_tile(Pp, P_TILE_TARGET, SUBLANE)
    tk = _pick_tile(Kp, K_TILE_TARGET, LANE)
    nP, nK = Pp // tp, Kp // tk

    in_specs = [
        pl.BlockSpec((None, tp, tk), lambda n, p, k: (n, p, k)),
        pl.BlockSpec((tk, C), lambda n, p, k: (k, 0)),
        pl.BlockSpec((1, C), lambda n, p, k: (0, 0)),
    ]
    y_spec = pl.BlockSpec((None, tp, C), lambda n, p, k: (n, p, 0))
    y_shape = jax.ShapeDtypeStruct((N, Pp, C), jnp.float32)

    if compute_stats:
        out_shape = (y_shape,
                     jax.ShapeDtypeStruct((N, 8 * nP, C), jnp.float32))
        out_specs = (y_spec,
                     pl.BlockSpec((None, 8, C), lambda n, p, k: (n, p, 0)))
    else:
        out_shape = y_shape
        out_specs = y_spec

    return pl.pallas_call(
        make_matmul_kernel(compute_stats, act),
        out_shape=out_shape,
        grid=(N, nP, nK),
        in_specs=in_specs,
        out_specs=out_specs,
        scratch_shapes=[pltpu.VMEM((tp, C), jnp.float32)],
        compiler_params=pltpu.CompilerParams(
            dimension_semantics=("parallel", "parallel", "arbitrary"),
            vmem_limit_bytes=VMEM_LIMIT),
    )(patches, w, bias)


# -----------------------------------------------------------------------------
# Fallback pass 2: tiled InstanceNorm apply + activation (+ residual add)
# -----------------------------------------------------------------------------
def make_norm_act_kernel(act, has_res: bool):
    def kernel(*refs):
        if has_res:
            y_ref, mu_ref, iv_ref, r_ref, o_ref = refs
        else:
            y_ref, mu_ref, iv_ref, o_ref = refs
        y = (y_ref[...] - mu_ref[...]) * iv_ref[...]
        if act == "relu":
            y = jnp.maximum(y, 0.0)
        if has_res:
            y = y + r_ref[...]
        o_ref[...] = y
    return kernel


def norm_act_pallas(y, mean, inv_std, residual, act):
    N, Pp, C = y.shape
    tp = _pick_tile(Pp, P_TILE_TARGET, SUBLANE)
    nP = Pp // tp
    has_res = residual is not None

    in_specs = [
        pl.BlockSpec((None, tp, C), lambda n, p: (n, p, 0)),
        pl.BlockSpec((None, 1, C), lambda n, p: (n, 0, 0)),
        pl.BlockSpec((None, 1, C), lambda n, p: (n, 0, 0)),
    ]
    args = [y, mean.reshape(N, 1, C), inv_std.reshape(N, 1, C)]
    if has_res:
        in_specs.append(pl.BlockSpec((None, tp, C), lambda n, p: (n, p, 0)))
        args.append(residual)

    return pl.pallas_call(
        make_norm_act_kernel(act, has_res),
        out_shape=jax.ShapeDtypeStruct((N, Pp, C), jnp.float32),
        grid=(N, nP),
        in_specs=in_specs,
        out_specs=pl.BlockSpec((None, tp, C), lambda n, p: (n, p, 0)),
        compiler_params=pltpu.CompilerParams(
            dimension_semantics=("parallel", "parallel"),
            vmem_limit_bytes=VMEM_LIMIT),
    )(*args)


# -----------------------------------------------------------------------------
# JAX glue: padding, im2col, conv-transpose input preparation
# -----------------------------------------------------------------------------
def reflect_pad(x, p):
    return jnp.pad(x, ((0, 0), (p, p), (p, p), (0, 0)), mode="reflect")


def zero_pad(x, p):
    return jnp.pad(x, ((0, 0), (p, p), (p, p), (0, 0)))


def im2col(x, k, stride):
    """x: (N, H, W, C) already padded -> (N, Ho*Wo, k*k*C)."""
    # TODO(synk): do the 3x3 im2col inside the kernel from a VMEM row-band
    # (static shifted slices) to avoid the k^2 HBM inflation of host-side
    # patch materialization.
    N, H, W, C = x.shape
    Ho = (H - k) // stride + 1
    Wo = (W - k) // stride + 1
    cols = []
    for i in range(k):
        for j in range(k):
            cols.append(x[:, i:i + stride * Ho:stride, j:j + stride * Wo:stride, :])
    p = jnp.stack(cols, axis=3)                # (N, Ho, Wo, k*k, C)
    return p.reshape(N, Ho * Wo, k * k * C), Ho, Wo


def conv_transpose_prep(x, stride=2, k=3, padding=1, output_padding=1):
    """ConvTranspose2d(k=3, s=2, p=1, op=1) == zero-dilate + pad + regular conv."""
    # TODO(synk): replace zero-dilation with the 4-sub-conv decomposition of
    # ConvTranspose2d(s=2) to avoid ~4x zero-row MXU/DMA work; note real
    # PyTorch ConvTranspose2d weights would also need a spatial flip and
    # in/out channel transpose (synthetic weights here make this a no-op).
    N, H, W, C = x.shape
    d = jnp.zeros((N, (H - 1) * stride + 1, (W - 1) * stride + 1, C), x.dtype)
    d = d.at[:, ::stride, ::stride, :].set(x)
    lo = k - 1 - padding
    hi = k - 1 - padding + output_padding
    return jnp.pad(d, ((0, 0), (lo, hi), (lo, hi), (0, 0)))


def conv_layer(x_padded, w, b, k, stride, norm, act, residual=None):
    # Cast to bf16 before im2col so the k^2-inflated patch array is half-size.
    xb = x_padded.astype(jnp.bfloat16)
    patches, Ho, Wo = im2col(xb, k, stride)              # (N, P, K0) bf16
    N, P, K0 = patches.shape
    C = w.shape[1]

    # Lane-pad the reduction dim (multiple of 128) and sublane-pad the
    # spatial-row dim (multiple of 16, bf16-safe). Zero padding is free.
    Kp = _round_up(K0, LANE)
    Pp = _round_up(P, SUBLANE)
    patches = jnp.pad(patches, ((0, 0), (0, Pp - P), (0, Kp - K0)))
    w_bf = jnp.pad(w, ((0, Kp - K0), (0, 0))).astype(jnp.bfloat16)

    if norm:
        # Conv bias is mathematically cancelled by InstanceNorm2d(affine=False),
        # so it is dropped: zero-padded rows then contribute nothing to stats.
        res_flat = None
        if residual is not None:
            res_flat = residual.reshape(N, P, C).astype(jnp.float32)
            res_flat = jnp.pad(res_flat, ((0, 0), (0, Pp - P), (0, 0)))

        if Pp <= FUSED_P_MAX:
            # Whole spatial map is one P tile: matmul + IN + act + residual
            # fused in a single kernel (no second HBM pass).
            y = fused_norm_matmul(patches, w_bf, res_flat, act, true_rows=P)
        else:
            b2 = jnp.zeros((1, C), jnp.float32)
            y, stats = tiled_matmul(patches, w_bf, b2,
                                    compute_stats=True, act=None)
            nP = stats.shape[1] // 8
            st = stats.reshape(N, nP, 8, C)
            s = jnp.sum(st[:, :, 0, :], axis=1)              # (N, C)
            sq = jnp.sum(st[:, :, 1, :], axis=1)             # (N, C)
            mean = s / P
            var = jnp.maximum(sq / P - mean * mean, 0.0)
            inv_std = lax.rsqrt(var + IN_EPS)
            y = norm_act_pallas(y, mean, inv_std, res_flat, act)
    else:
        b2 = b.reshape(1, C).astype(jnp.float32)
        y = tiled_matmul(patches, w_bf, b2, compute_stats=False, act=act)

    return y[:, :P, :].reshape(N, Ho, Wo, C)


# -----------------------------------------------------------------------------
# Parameters (deterministic synthetic init, stored directly in matmul layout)
# -----------------------------------------------------------------------------
def init_params(key, in_channels=3, out_channels=3, res_blocks=2):
    params = {}
    counter = [0]
    keys = jax.random.split(key, 64)

    def conv_w(k, cin, cout):
        kw = keys[counter[0]]
        kb = keys[counter[0] + 1]
        counter[0] += 2
        scale = 1.0 / jnp.sqrt(jnp.float32(k * k * cin))
        w = jax.random.normal(kw, (k * k * cin, cout), jnp.float32) * scale
        b = jax.random.normal(kb, (cout,), jnp.float32) * 0.01
        return w, b

    params["c0"] = conv_w(7, in_channels, 64)      # initial 7x7 conv
    params["d1"] = conv_w(3, 64, 128)              # downsample 1
    params["d2"] = conv_w(3, 128, 256)             # downsample 2
    for r in range(res_blocks):
        params[f"r{r}a"] = conv_w(3, 256, 256)
        params[f"r{r}b"] = conv_w(3, 256, 256)
    params["u1"] = conv_w(3, 256, 128)             # transpose conv 1 (as conv)
    params["u2"] = conv_w(3, 128, 64)              # transpose conv 2 (as conv)
    params["cf"] = conv_w(7, 64, out_channels)     # final 7x7 conv
    return params


# -----------------------------------------------------------------------------
# GeneratorResNet forward
# -----------------------------------------------------------------------------
def generator_resnet_forward(x_nchw, params, res_blocks=2, out_channels=3):
    x = jnp.transpose(x_nchw, (0, 2, 3, 1)).astype(jnp.float32)  # NCHW -> NHWC

    # ReflectionPad(3) + Conv 7x7 + IN + ReLU
    h = conv_layer(reflect_pad(x, 3), *params["c0"], k=7, stride=1,
                   norm=True, act="relu")

    # two stride-2 downsampling convs (padding=1) + IN + ReLU
    h = conv_layer(zero_pad(h, 1), *params["d1"], k=3, stride=2,
                   norm=True, act="relu")
    h = conv_layer(zero_pad(h, 1), *params["d2"], k=3, stride=2,
                   norm=True, act="relu")

    # residual blocks
    for r in range(res_blocks):
        inp = h
        t = conv_layer(reflect_pad(h, 1), *params[f"r{r}a"], k=3, stride=1,
                       norm=True, act="relu")
        h = conv_layer(reflect_pad(t, 1), *params[f"r{r}b"], k=3, stride=1,
                       norm=True, act=None, residual=inp)

    # two ConvTranspose2d(3, s=2, p=1, op=1) + IN + ReLU, via dilate+pad+conv
    h = conv_layer(conv_transpose_prep(h), *params["u1"], k=3, stride=1,
                   norm=True, act="relu")
    h = conv_layer(conv_transpose_prep(h), *params["u2"], k=3, stride=1,
                   norm=True, act="relu")

    # ReflectionPad(3) + Conv 7x7 + Tanh (no norm). Pad the 3 output channels
    # to a full lane (128) for dense stores, slice back afterwards.
    w_cf, b_cf = params["cf"]
    c_pad = _round_up(out_channels, LANE)
    w_cf = jnp.pad(w_cf, ((0, 0), (0, c_pad - out_channels)))
    b_cf = jnp.pad(b_cf, ((0, c_pad - out_channels),))
    h = conv_layer(reflect_pad(h, 3), w_cf, b_cf, k=7, stride=1,
                   norm=False, act="tanh")
    h = h[..., :out_channels]

    return jnp.transpose(h, (0, 3, 1, 2))   # NHWC -> NCHW


# -----------------------------------------------------------------------------
if __name__ == "__main__":
    key = jax.random.PRNGKey(0)
    k_x, k_p = jax.random.split(key)

    RES_BLOCKS = 2                                              # small config
    x = jax.random.normal(k_x, (2, 3, 16, 16), jnp.float32)     # NCHW input
    params = init_params(k_p, in_channels=3, out_channels=3,
                         res_blocks=RES_BLOCKS)

    fwd = jax.jit(functools.partial(generator_resnet_forward,
                                    res_blocks=RES_BLOCKS, out_channels=3))
    out = jax.block_until_ready(fwd(x, params))

    assert out.shape == (2, 3, 16, 16), out.shape
    assert out.dtype == jnp.float32
    assert bool(jnp.all(jnp.isfinite(out)))
    assert bool(jnp.all(jnp.abs(out) <= 1.0))        # tanh output range
    print("KERNEL_OK")
</pallas_src>

<mosaic_0001>
module attributes {stable_mosaic.version = 11 : i64} {
  func.func @kernel(%arg0: i32, %arg1: i32, %arg2: memref<1x256x256xbf16, #tpu.memory_space<vmem>>, %arg3: memref<256x64xbf16, #tpu.memory_space<vmem>>, %arg4: memref<1x256x64xf32, #tpu.memory_space<vmem>>, %arg5: memref<256x64xf32, #tpu.memory_space<vmem>>) attributes {dimension_semantics = [#tpu.dimension_semantics<parallel>, #tpu.dimension_semantics<arbitrary>], iteration_bounds = array<i64: 2, 1>, scalar_prefetch = 0 : i64, scratch_operands = 1 : i64, tpu.core_type = #tpu.core_type<tc>, window_params = [{transform_indices = @transform_0, window_bounds = array<i64: 1, 256, 256>}, {transform_indices = @transform_1, window_bounds = array<i64: 256, 64>}, {transform_indices = @transform_2, window_bounds = array<i64: 1, 256, 64>}]} {
    %c0_i32 = arith.constant 0 : i32
    %0 = arith.cmpi eq, %arg1, %c0_i32 : i32
    %1 = arith.extui %0 : i1 to i32
    %c0_i32_0 = arith.constant 0 : i32
    %2 = arith.cmpi ne, %1, %c0_i32_0 : i32
    scf.if %2 {
      %cst_11 = arith.constant 0.000000e+00 : f32
      %13 = vector.broadcast %cst_11 : f32 to vector<256x64xf32>
      %c0_12 = arith.constant 0 : index
      %c0_13 = arith.constant 0 : index
      %14 = vector.load %arg5[%c0_12, %c0_13] : memref<256x64xf32, #tpu.memory_space<vmem>>, vector<256x64xf32>
      tpu.vector_store %arg5[%c0_12, %c0_13], %13 {strides = array<i32>} : memref<256x64xf32, #tpu.memory_space<vmem>>, vector<256x64xf32>,
    } else {
    }
    %c0 = arith.constant 0 : index
    %c0_1 = arith.constant 0 : index
    %3 = vector.load %arg5[%c0, %c0_1] : memref<256x64xf32, #tpu.memory_space<vmem>>, vector<256x64xf32>
    %c0_2 = arith.constant 0 : index
    %c0_3 = arith.constant 0 : index
    %c0_4 = arith.constant 0 : index
    %4 = vector.load %arg2[%c0_2, %c0_3, %c0_4] : memref<1x256x256xbf16, #tpu.memory_space<vmem>>, vector<1x256x256xbf16>
    %5 = vector.shape_cast %4 : vector<1x256x256xbf16> to vector<256x256xbf16>
    %c0_5 = arith.constant 0 : index
    %c0_6 = arith.constant 0 : index
    %6 = vector.load %arg3[%c0_5, %c0_6] : memref<256x64xbf16, #tpu.memory_space<vmem>>, vector<256x64xbf16>
    %cst = arith.constant dense<0.000000e+00> : vector<256x64xf32>
    %7 = tpu.matmul %5, %6, %cst {dimension_numbers = #tpu.dot_dimension_numbers<[1], [0], [0], [1], [0, 0, 1, 1], [], []>} : vector<256x256xbf16>, vector<256x64xbf16>, vector<256x64xf32> -> vector<256x64xf32>
    %8 = arith.addf %3, %7 : vector<256x64xf32>
    %c0_7 = arith.constant 0 : index
    %c0_8 = arith.constant 0 : index
    %9 = vector.load %arg5[%c0_7, %c0_8] : memref<256x64xf32, #tpu.memory_space<vmem>>, vector<256x64xf32>
    tpu.vector_store %arg5[%c0_7, %c0_8], %8 {strides = array<i32>} : memref<256x64xf32, #tpu.memory_space<vmem>>, vector<256x64xf32>,
    %c0_i32_9 = arith.constant 0 : i32
    %10 = arith.cmpi eq, %arg1, %c0_i32_9 : i32
    %11 = arith.extui %10 : i1 to i32
    %c0_i32_10 = arith.constant 0 : i32
    %12 = arith.cmpi ne, %11, %c0_i32_10 : i32
    scf.if %12 {
      %c0_11 = arith.constant 0 : index
      %c0_12 = arith.constant 0 : index
      %13 = vector.load %arg5[%c0_11, %c0_12] : memref<256x64xf32, #tpu.memory_space<vmem>>, vector<256x64xf32>
      %cst_13 = arith.constant dense<0.000000e+00> : vector<64xf32>
      %14 = vector.multi_reduction <add>, %13, %cst_13 [0] : vector<256x64xf32> to vector<64xf32>
      %15 = vector.shape_cast %14 : vector<64xf32> to vector<1x64xf32>
      %cst_14 = arith.constant 3.906250e-03 : f32
      %16 = vector.broadcast %cst_14 : f32 to vector<1x64xf32>
      %17 = arith.mulf %15, %16 : vector<1x64xf32>
      %18 = arith.mulf %13, %13 : vector<256x64xf32>
      %cst_15 = arith.constant dense<0.000000e+00> : vector<64xf32>
      %19 = vector.multi_reduction <add>, %18, %cst_15 [0] : vector<256x64xf32> to vector<64xf32>
      %20 = vector.shape_cast %19 : vector<64xf32> to vector<1x64xf32>
      %cst_16 = arith.constant 3.906250e-03 : f32
      %21 = vector.broadcast %cst_16 : f32 to vector<1x64xf32>
      %22 = arith.mulf %20, %21 : vector<1x64xf32>
      %23 = arith.mulf %17, %17 : vector<1x64xf32>
      %24 = arith.subf %22, %23 : vector<1x64xf32>
      %cst_17 = arith.constant 0.000000e+00 : f32
      %25 = vector.broadcast %cst_17 : f32 to vector<1x64xf32>
      %26 = arith.maximumf %24, %25 : vector<1x64xf32>
      %27 = vector.broadcast %17 : vector<1x64xf32> to vector<256x64xf32>
      %28 = arith.subf %13, %27 : vector<256x64xf32>
      %cst_18 = arith.constant 9.99999974E-6 : f32
      %29 = vector.broadcast %cst_18 : f32 to vector<1x64xf32>
      %30 = arith.addf %26, %29 : vector<1x64xf32>
      %31 = math.rsqrt %30 : vector<1x64xf32>
      %32 = vector.broadcast %31 : vector<1x64xf32> to vector<256x64xf32>
      %33 = arith.mulf %28, %32 : vector<256x64xf32>
      %cst_19 = arith.constant 0.000000e+00 : f32
      %34 = vector.broadcast %cst_19 : f32 to vector<256x64xf32>
      %35 = arith.maximumf %33, %34 : vector<256x64xf32>
      %c0_20 = arith.constant 0 : index
      %c0_21 = arith.constant 0 : index
      %c0_22 = arith.constant 0 : index
      %36 = vector.load %arg4[%c0_20, %c0_21, %c0_22] : memref<1x256x64xf32, #tpu.memory_space<vmem>>, vector<1x256x64xf32>
      %37 = vector.shape_cast %36 : vector<1x256x64xf32> to vector<256x64xf32>
      %38 = vector.shape_cast %35 : vector<256x64xf32> to vector<1x256x64xf32>
      tpu.vector_store %arg4[%c0_20, %c0_21, %c0_22], %38 {strides = array<i32>} : memref<1x256x64xf32, #tpu.memory_space<vmem>>, vector<1x256x64xf32>,
    } else {
    }
    return
  }
  func.func @transform_0(%arg0: i32, %arg1: i32) -> (i32, i32, i32) {
    %c0_i32 = arith.constant 0 : i32
    %c0_i32_0 = arith.constant 0 : i32
    return %arg0, %c0_i32, %arg1 : i32, i32, i32
  }
  func.func @transform_1(%arg0: i32, %arg1: i32) -> (i32, i32) {
    %c0_i32 = arith.constant 0 : i32
    %c0_i32_0 = arith.constant 0 : i32
    return %arg1, %c0_i32 : i32, i32
  }
  func.func @transform_2(%arg0: i32, %arg1: i32) -> (i32, i32, i32) {
    %c0_i32 = arith.constant 0 : i32
    %c0_i32_0 = arith.constant 0 : i32
    %c0_i32_1 = arith.constant 0 : i32
    return %arg0, %c0_i32, %c0_i32_0 : i32, i32, i32
  }
}

module attributes {stable_mosaic.version = 11 : i64} {
  func.func @kernel(%arg0: i32, %arg1: i32, %arg2: memref<1x64x640xbf16, #tpu.memory_space<vmem>>, %arg3: memref<640x128xbf16, #tpu.memory_space<vmem>>, %arg4: memref<1x64x128xf32, #tpu.memory_space<vmem>>, %arg5: memref<64x128xf32, #tpu.memory_space<vmem>>) attributes {dimension_semantics = [#tpu.dimension_semantics<parallel>, #tpu.dimension_semantics<arbitrary>], iteration_bounds = array<i64: 2, 1>, scalar_prefetch = 0 : i64, scratch_operands = 1 : i64, tpu.core_type = #tpu.core_type<tc>, window_params = [{transform_indices = @transform_0, window_bounds = array<i64: 1, 64, 640>}, {transform_indices = @transform_1, window_bounds = array<i64: 640, 128>}, {transform_indices = @transform_2, window_bounds = array<i64: 1, 64, 128>}]} {
    %c0_i32 = arith.constant 0 : i32
    %0 = arith.cmpi eq, %arg1, %c0_i32 : i32
    %1 = arith.extui %0 : i1 to i32
    %c0_i32_0 = arith.constant 0 : i32
    %2 = arith.cmpi ne, %1, %c0_i32_0 : i32
    scf.if %2 {
      %cst_11 = arith.constant 0.000000e+00 : f32
      %13 = vector.broadcast %cst_11 : f32 to vector<64x128xf32>
      %c0_12 = arith.constant 0 : index
      %c0_13 = arith.constant 0 : index
      %14 = vector.load %arg5[%c0_12, %c0_13] : memref<64x128xf32, #tpu.memory_space<vmem>>, vector<64x128xf32>
      tpu.vector_store %arg5[%c0_12, %c0_13], %13 {strides = array<i32>} : memref<64x128xf32, #tpu.memory_space<vmem>>, vector<64x128xf32>,
    } else {
    }
    %c0 = arith.constant 0 : index
    %c0_1 = arith.constant 0 : index
    %3 = vector.load %arg5[%c0, %c0_1] : memref<64x128xf32, #tpu.memory_space<vmem>>, vector<64x128xf32>
    %c0_2 = arith.constant 0 : index
    %c0_3 = arith.constant 0 : index
    %c0_4 = arith.constant 0 : index
    %4 = vector.load %arg2[%c0_2, %c0_3, %c0_4] : memref<1x64x640xbf16, #tpu.memory_space<vmem>>, vector<1x64x640xbf16>
    %5 = vector.shape_cast %4 : vector<1x64x640xbf16> to vector<64x640xbf16>
    %c0_5 = arith.constant 0 : index
    %c0_6 = arith.constant 0 : index
    %6 = vector.load %arg3[%c0_5, %c0_6] : memref<640x128xbf16, #tpu.memory_space<vmem>>, vector<640x128xbf16>
    %cst = arith.constant dense<0.000000e+00> : vector<64x128xf32>
    %7 = tpu.matmul %5, %6, %cst {dimension_numbers = #tpu.dot_dimension_numbers<[1], [0], [0], [1], [0, 0, 1, 1], [], []>} : vector<64x640xbf16>, vector<640x128xbf16>, vector<64x128xf32> -> vector<64x128xf32>
    %8 = arith.addf %3, %7 : vector<64x128xf32>
    %c0_7 = arith.constant 0 : index
    %c0_8 = arith.constant 0 : index
    %9 = vector.load %arg5[%c0_7, %c0_8] : memref<64x128xf32, #tpu.memory_space<vmem>>, vector<64x128xf32>
    tpu.vector_store %arg5[%c0_7, %c0_8], %8 {strides = array<i32>} : memref<64x128xf32, #tpu.memory_space<vmem>>, vector<64x128xf32>,
    %c0_i32_9 = arith.constant 0 : i32
    %10 = arith.cmpi eq, %arg1, %c0_i32_9 : i32
    %11 = arith.extui %10 : i1 to i32
    %c0_i32_10 = arith.constant 0 : i32
    %12 = arith.cmpi ne, %11, %c0_i32_10 : i32
    scf.if %12 {
      %c0_11 = arith.constant 0 : index
      %c0_12 = arith.constant 0 : index
      %13 = vector.load %arg5[%c0_11, %c0_12] : memref<64x128xf32, #tpu.memory_space<vmem>>, vector<64x128xf32>
      %cst_13 = arith.constant dense<0.000000e+00> : vector<128xf32>
      %14 = vector.multi_reduction <add>, %13, %cst_13 [0] : vector<64x128xf32> to vector<128xf32>
      %15 = vector.shape_cast %14 : vector<128xf32> to vector<1x128xf32>
      %cst_14 = arith.constant 1.562500e-02 : f32
      %16 = vector.broadcast %cst_14 : f32 to vector<1x128xf32>
      %17 = arith.mulf %15, %16 : vector<1x128xf32>
      %18 = arith.mulf %13, %13 : vector<64x128xf32>
      %cst_15 = arith.constant dense<0.000000e+00> : vector<128xf32>
      %19 = vector.multi_reduction <add>, %18, %cst_15 [0] : vector<64x128xf32> to vector<128xf32>
      %20 = vector.shape_cast %19 : vector<128xf32> to vector<1x128xf32>
      %cst_16 = arith.constant 1.562500e-02 : f32
      %21 = vector.broadcast %cst_16 : f32 to vector<1x128xf32>
      %22 = arith.mulf %20, %21 : vector<1x128xf32>
      %23 = arith.mulf %17, %17 : vector<1x128xf32>
      %24 = arith.subf %22, %23 : vector<1x128xf32>
      %cst_17 = arith.constant 0.000000e+00 : f32
      %25 = vector.broadcast %cst_17 : f32 to vector<1x128xf32>
      %26 = arith.maximumf %24, %25 : vector<1x128xf32>
      %27 = vector.broadcast %17 : vector<1x128xf32> to vector<64x128xf32>
      %28 = arith.subf %13, %27 : vector<64x128xf32>
      %cst_18 = arith.constant 9.99999974E-6 : f32
      %29 = vector.broadcast %cst_18 : f32 to vector<1x128xf32>
      %30 = arith.addf %26, %29 : vector<1x128xf32>
      %31 = math.rsqrt %30 : vector<1x128xf32>
      %32 = vector.broadcast %31 : vector<1x128xf32> to vector<64x128xf32>
      %33 = arith.mulf %28, %32 : vector<64x128xf32>
      %cst_19 = arith.constant 0.000000e+00 : f32
      %34 = vector.broadcast %cst_19 : f32 to vector<64x128xf32>
      %35 = arith.maximumf %33, %34 : vector<64x128xf32>
      %c0_20 = arith.constant 0 : index
      %c0_21 = arith.constant 0 : index
      %c0_22 = arith.constant 0 : index
      %36 = vector.load %arg4[%c0_20, %c0_21, %c0_22] : memref<1x64x128xf32, #tpu.memory_space<vmem>>, vector<1x64x128xf32>
      %37 = vector.shape_cast %36 : vector<1x64x128xf32> to vector<64x128xf32>
      %38 = vector.shape_cast %35 : vector<64x128xf32> to vector<1x64x128xf32>
      tpu.vector_store %arg4[%c0_20, %c0_21, %c0_22], %38 {strides = array<i32>} : memref<1x64x128xf32, #tpu.memory_space<vmem>>, vector<1x64x128xf32>,
    } else {
    }
    return
  }
  func.func @transform_0(%arg0: i32, %arg1: i32) -> (i32, i32, i32) {
    %c0_i32 = arith.constant 0 : i32
    %c0_i32_0 = arith.constant 0 : i32
    return %arg0, %c0_i32, %arg1 : i32, i32, i32
  }
  func.func @transform_1(%arg0: i32, %arg1: i32) -> (i32, i32) {
    %c0_i32 = arith.constant 0 : i32
    %c0_i32_0 = arith.constant 0 : i32
    return %arg1, %c0_i32 : i32, i32
  }
  func.func @transform_2(%arg0: i32, %arg1: i32) -> (i32, i32, i32) {
    %c0_i32 = arith.constant 0 : i32
    %c0_i32_0 = arith.constant 0 : i32
    %c0_i32_1 = arith.constant 0 : i32
    return %arg0, %c0_i32, %c0_i32_0 : i32, i32, i32
  }
}

module attributes {stable_mosaic.version = 11 : i64} {
  func.func @kernel(%arg0: i32, %arg1: i32, %arg2: memref<1x16x384xbf16, #tpu.memory_space<vmem>>, %arg3: memref<384x256xbf16, #tpu.memory_space<vmem>>, %arg4: memref<1x16x256xf32, #tpu.memory_space<vmem>>, %arg5: memref<16x256xf32, #tpu.memory_space<vmem>>) attributes {dimension_semantics = [#tpu.dimension_semantics<parallel>, #tpu.dimension_semantics<arbitrary>], iteration_bounds = array<i64: 2, 3>, scalar_prefetch = 0 : i64, scratch_operands = 1 : i64, tpu.core_type = #tpu.core_type<tc>, window_params = [{transform_indices = @transform_0, window_bounds = array<i64: 1, 16, 384>}, {transform_indices = @transform_1, window_bounds = array<i64: 384, 256>}, {transform_indices = @transform_2, window_bounds = array<i64: 1, 16, 256>}]} {
    %c0_i32 = arith.constant 0 : i32
    %0 = arith.cmpi eq, %arg1, %c0_i32 : i32
    %1 = arith.extui %0 : i1 to i32
    %c0_i32_0 = arith.constant 0 : i32
    %2 = arith.cmpi ne, %1, %c0_i32_0 : i32
    scf.if %2 {
      %cst_10 = arith.constant 0.000000e+00 : f32
      %13 = vector.broadcast %cst_10 : f32 to vector<16x256xf32>
      %c0_11 = arith.constant 0 : index
      %c0_12 = arith.constant 0 : index
      %14 = vector.load %arg5[%c0_11, %c0_12] : memref<16x256xf32, #tpu.memory_space<vmem>>, vector<16x256xf32>
      tpu.vector_store %arg5[%c0_11, %c0_12], %13 {strides = array<i32>} : memref<16x256xf32, #tpu.memory_space<vmem>>, vector<16x256xf32>,
    } else {
    }
    %c0 = arith.constant 0 : index
    %c0_1 = arith.constant 0 : index
    %3 = vector.load %arg5[%c0, %c0_1] : memref<16x256xf32, #tpu.memory_space<vmem>>, vector<16x256xf32>
    %c0_2 = arith.constant 0 : index
    %c0_3 = arith.constant 0 : index
    %c0_4 = arith.constant 0 : index
    %4 = vector.load %arg2[%c0_2, %c0_3, %c0_4] : memref<1x16x384xbf16, #tpu.memory_space<vmem>>, vector<1x16x384xbf16>
    %5 = vector.shape_cast %4 : vector<1x16x384xbf16> to vector<16x384xbf16>
    %c0_5 = arith.constant 0 : index
    %c0_6 = arith.constant 0 : index
    %6 = vector.load %arg3[%c0_5, %c0_6] : memref<384x256xbf16, #tpu.memory_space<vmem>>, vector<384x256xbf16>
    %cst = arith.constant dense<0.000000e+00> : vector<16x256xf32>
    %7 = tpu.matmul %5, %6, %cst {dimension_numbers = #tpu.dot_dimension_numbers<[1], [0], [0], [1], [0, 0, 1, 1], [], []>} : vector<16x384xbf16>, vector<384x256xbf16>, vector<16x256xf32> -> vector<16x256xf32>
    %8 = arith.addf %3, %7 : vector<16x256xf32>
    %c0_7 = arith.constant 0 : index
    %c0_8 = arith.constant 0 : index
    %9 = vector.load %arg5[%c0_7, %c0_8] : memref<16x256xf32, #tpu.memory_space<vmem>>, vector<16x256xf32>
    tpu.vector_store %arg5[%c0_7, %c0_8], %8 {strides = array<i32>} : memref<16x256xf32, #tpu.memory_space<vmem>>, vector<16x256xf32>,
    %c2_i32 = arith.constant 2 : i32
    %10 = arith.cmpi eq, %arg1, %c2_i32 : i32
    %11 = arith.extui %10 : i1 to i32
    %c0_i32_9 = arith.constant 0 : i32
    %12 = arith.cmpi ne, %11, %c0_i32_9 : i32
    scf.if %12 {
      %c0_10 = arith.constant 0 : index
      %c0_11 = arith.constant 0 : index
      %13 = vector.load %arg5[%c0_10, %c0_11] : memref<16x256xf32, #tpu.memory_space<vmem>>, vector<16x256xf32>
      %cst_12 = arith.constant dense<0.000000e+00> : vector<256xf32>
      %14 = vector.multi_reduction <add>, %13, %cst_12 [0] : vector<16x256xf32> to vector<256xf32>
      %15 = vector.shape_cast %14 : vector<256xf32> to vector<1x256xf32>
      %cst_13 = arith.constant 6.250000e-02 : f32
      %16 = vector.broadcast %cst_13 : f32 to vector<1x256xf32>
      %17 = arith.mulf %15, %16 : vector<1x256xf32>
      %18 = arith.mulf %13, %13 : vector<16x256xf32>
      %cst_14 = arith.constant dense<0.000000e+00> : vector<256xf32>
      %19 = vector.multi_reduction <add>, %18, %cst_14 [0] : vector<16x256xf32> to vector<256xf32>
      %20 = vector.shape_cast %19 : vector<256xf32> to vector<1x256xf32>
      %cst_15 = arith.constant 6.250000e-02 : f32
      %21 = vector.broadcast %cst_15 : f32 to vector<1x256xf32>
      %22 = arith.mulf %20, %21 : vector<1x256xf32>
      %23 = arith.mulf %17, %17 : vector<1x256xf32>
      %24 = arith.subf %22, %23 : vector<1x256xf32>
      %cst_16 = arith.constant 0.000000e+00 : f32
      %25 = vector.broadcast %cst_16 : f32 to vector<1x256xf32>
      %26 = arith.maximumf %24, %25 : vector<1x256xf32>
      %27 = vector.broadcast %17 : vector<1x256xf32> to vector<16x256xf32>
      %28 = arith.subf %13, %27 : vector<16x256xf32>
      %cst_17 = arith.constant 9.99999974E-6 : f32
      %29 = vector.broadcast %cst_17 : f32 to vector<1x256xf32>
      %30 = arith.addf %26, %29 : vector<1x256xf32>
      %31 = math.rsqrt %30 : vector<1x256xf32>
      %32 = vector.broadcast %31 : vector<1x256xf32> to vector<16x256xf32>
      %33 = arith.mulf %28, %32 : vector<16x256xf32>
      %cst_18 = arith.constant 0.000000e+00 : f32
      %34 = vector.broadcast %cst_18 : f32 to vector<16x256xf32>
      %35 = arith.maximumf %33, %34 : vector<16x256xf32>
      %c0_19 = arith.constant 0 : index
      %c0_20 = arith.constant 0 : index
      %c0_21 = arith.constant 0 : index
      %36 = vector.load %arg4[%c0_19, %c0_20, %c0_21] : memref<1x16x256xf32, #tpu.memory_space<vmem>>, vector<1x16x256xf32>
      %37 = vector.shape_cast %36 : vector<1x16x256xf32> to vector<16x256xf32>
      %38 = vector.shape_cast %35 : vector<16x256xf32> to vector<1x16x256xf32>
      tpu.vector_store %arg4[%c0_19, %c0_20, %c0_21], %38 {strides = array<i32>} : memref<1x16x256xf32, #tpu.memory_space<vmem>>, vector<1x16x256xf32>,
    } else {
    }
    return
  }
  func.func @transform_0(%arg0: i32, %arg1: i32) -> (i32, i32, i32) {
    %c0_i32 = arith.constant 0 : i32
    %c0_i32_0 = arith.constant 0 : i32
    return %arg0, %c0_i32, %arg1 : i32, i32, i32
  }
  func.func @transform_1(%arg0: i32, %arg1: i32) -> (i32, i32) {
    %c0_i32 = arith.constant 0 : i32
    %c0_i32_0 = arith.constant 0 : i32
    return %arg1, %c0_i32 : i32, i32
  }
  func.func @transform_2(%arg0: i32, %arg1: i32) -> (i32, i32, i32) {
    %c0_i32 = arith.constant 0 : i32
    %c0_i32_0 = arith.constant 0 : i32
    %c0_i32_1 = arith.constant 0 : i32
    return %arg0, %c0_i32, %c0_i32_0 : i32, i32, i32
  }
}

module attributes {stable_mosaic.version = 11 : i64} {
  func.func @kernel(%arg0: i32, %arg1: i32, %arg2: memref<1x16x768xbf16, #tpu.memory_space<vmem>>, %arg3: memref<768x256xbf16, #tpu.memory_space<vmem>>, %arg4: memref<1x16x256xf32, #tpu.memory_space<vmem>>, %arg5: memref<16x256xf32, #tpu.memory_space<vmem>>) attributes {dimension_semantics = [#tpu.dimension_semantics<parallel>, #tpu.dimension_semantics<arbitrary>], iteration_bounds = array<i64: 2, 3>, scalar_prefetch = 0 : i64, scratch_operands = 1 : i64, tpu.core_type = #tpu.core_type<tc>, window_params = [{transform_indices = @transform_0, window_bounds = array<i64: 1, 16, 768>}, {transform_indices = @transform_1, window_bounds = array<i64: 768, 256>}, {transform_indices = @transform_2, window_bounds = array<i64: 1, 16, 256>}]} {
    %c0_i32 = arith.constant 0 : i32
    %0 = arith.cmpi eq, %arg1, %c0_i32 : i32
    %1 = arith.extui %0 : i1 to i32
    %c0_i32_0 = arith.constant 0 : i32
    %2 = arith.cmpi ne, %1, %c0_i32_0 : i32
    scf.if %2 {
      %cst_10 = arith.constant 0.000000e+00 : f32
      %13 = vector.broadcast %cst_10 : f32 to vector<16x256xf32>
      %c0_11 = arith.constant 0 : index
      %c0_12 = arith.constant 0 : index
      %14 = vector.load %arg5[%c0_11, %c0_12] : memref<16x256xf32, #tpu.memory_space<vmem>>, vector<16x256xf32>
      tpu.vector_store %arg5[%c0_11, %c0_12], %13 {strides = array<i32>} : memref<16x256xf32, #tpu.memory_space<vmem>>, vector<16x256xf32>,
    } else {
    }
    %c0 = arith.constant 0 : index
    %c0_1 = arith.constant 0 : index
    %3 = vector.load %arg5[%c0, %c0_1] : memref<16x256xf32, #tpu.memory_space<vmem>>, vector<16x256xf32>
    %c0_2 = arith.constant 0 : index
    %c0_3 = arith.constant 0 : index
    %c0_4 = arith.constant 0 : index
    %4 = vector.load %arg2[%c0_2, %c0_3, %c0_4] : memref<1x16x768xbf16, #tpu.memory_space<vmem>>, vector<1x16x768xbf16>
    %5 = vector.shape_cast %4 : vector<1x16x768xbf16> to vector<16x768xbf16>
    %c0_5 = arith.constant 0 : index
    %c0_6 = arith.constant 0 : index
    %6 = vector.load %arg3[%c0_5, %c0_6] : memref<768x256xbf16, #tpu.memory_space<vmem>>, vector<768x256xbf16>
    %cst = arith.constant dense<0.000000e+00> : vector<16x256xf32>
    %7 = tpu.matmul %5, %6, %cst {dimension_numbers = #tpu.dot_dimension_numbers<[1], [0], [0], [1], [0, 0, 1, 1], [], []>} : vector<16x768xbf16>, vector<768x256xbf16>, vector<16x256xf32> -> vector<16x256xf32>
    %8 = arith.addf %3, %7 : vector<16x256xf32>
    %c0_7 = arith.constant 0 : index
    %c0_8 = arith.constant 0 : index
    %9 = vector.load %arg5[%c0_7, %c0_8] : memref<16x256xf32, #tpu.memory_space<vmem>>, vector<16x256xf32>
    tpu.vector_store %arg5[%c0_7, %c0_8], %8 {strides = array<i32>} : memref<16x256xf32, #tpu.memory_space<vmem>>, vector<16x256xf32>,
    %c2_i32 = arith.constant 2 : i32
    %10 = arith.cmpi eq, %arg1, %c2_i32 : i32
    %11 = arith.extui %10 : i1 to i32
    %c0_i32_9 = arith.constant 0 : i32
    %12 = arith.cmpi ne, %11, %c0_i32_9 : i32
    scf.if %12 {
      %c0_10 = arith.constant 0 : index
      %c0_11 = arith.constant 0 : index
      %13 = vector.load %arg5[%c0_10, %c0_11] : memref<16x256xf32, #tpu.memory_space<vmem>>, vector<16x256xf32>
      %cst_12 = arith.constant dense<0.000000e+00> : vector<256xf32>
      %14 = vector.multi_reduction <add>, %13, %cst_12 [0] : vector<16x256xf32> to vector<256xf32>
      %15 = vector.shape_cast %14 : vector<256xf32> to vector<1x256xf32>
      %cst_13 = arith.constant 6.250000e-02 : f32
      %16 = vector.broadcast %cst_13 : f32 to vector<1x256xf32>
      %17 = arith.mulf %15, %16 : vector<1x256xf32>
      %18 = arith.mulf %13, %13 : vector<16x256xf32>
      %cst_14 = arith.constant dense<0.000000e+00> : vector<256xf32>
      %19 = vector.multi_reduction <add>, %18, %cst_14 [0] : vector<16x256xf32> to vector<256xf32>
      %20 = vector.shape_cast %19 : vector<256xf32> to vector<1x256xf32>
      %cst_15 = arith.constant 6.250000e-02 : f32
      %21 = vector.broadcast %cst_15 : f32 to vector<1x256xf32>
      %22 = arith.mulf %20, %21 : vector<1x256xf32>
      %23 = arith.mulf %17, %17 : vector<1x256xf32>
      %24 = arith.subf %22, %23 : vector<1x256xf32>
      %cst_16 = arith.constant 0.000000e+00 : f32
      %25 = vector.broadcast %cst_16 : f32 to vector<1x256xf32>
      %26 = arith.maximumf %24, %25 : vector<1x256xf32>
      %27 = vector.broadcast %17 : vector<1x256xf32> to vector<16x256xf32>
      %28 = arith.subf %13, %27 : vector<16x256xf32>
      %cst_17 = arith.constant 9.99999974E-6 : f32
      %29 = vector.broadcast %cst_17 : f32 to vector<1x256xf32>
      %30 = arith.addf %26, %29 : vector<1x256xf32>
      %31 = math.rsqrt %30 : vector<1x256xf32>
      %32 = vector.broadcast %31 : vector<1x256xf32> to vector<16x256xf32>
      %33 = arith.mulf %28, %32 : vector<16x256xf32>
      %cst_18 = arith.constant 0.000000e+00 : f32
      %34 = vector.broadcast %cst_18 : f32 to vector<16x256xf32>
      %35 = arith.maximumf %33, %34 : vector<16x256xf32>
      %c0_19 = arith.constant 0 : index
      %c0_20 = arith.constant 0 : index
      %c0_21 = arith.constant 0 : index
      %36 = vector.load %arg4[%c0_19, %c0_20, %c0_21] : memref<1x16x256xf32, #tpu.memory_space<vmem>>, vector<1x16x256xf32>
      %37 = vector.shape_cast %36 : vector<1x16x256xf32> to vector<16x256xf32>
      %38 = vector.shape_cast %35 : vector<16x256xf32> to vector<1x16x256xf32>
      tpu.vector_store %arg4[%c0_19, %c0_20, %c0_21], %38 {strides = array<i32>} : memref<1x16x256xf32, #tpu.memory_space<vmem>>, vector<1x16x256xf32>,
    } else {
    }
    return
  }
  func.func @transform_0(%arg0: i32, %arg1: i32) -> (i32, i32, i32) {
    %c0_i32 = arith.constant 0 : i32
    %c0_i32_0 = arith.constant 0 : i32
    return %arg0, %c0_i32, %arg1 : i32, i32, i32
  }
  func.func @transform_1(%arg0: i32, %arg1: i32) -> (i32, i32) {
    %c0_i32 = arith.constant 0 : i32
    %c0_i32_0 = arith.constant 0 : i32
    return %arg1, %c0_i32 : i32, i32
  }
  func.func @transform_2(%arg0: i32, %arg1: i32) -> (i32, i32, i32) {
    %c0_i32 = arith.constant 0 : i32
    %c0_i32_0 = arith.constant 0 : i32
    %c0_i32_1 = arith.constant 0 : i32
    return %arg0, %c0_i32, %c0_i32_0 : i32, i32, i32
  }
}

module attributes {stable_mosaic.version = 11 : i64} {
  func.func @kernel(%arg0: i32, %arg1: i32, %arg2: memref<1x16x768xbf16, #tpu.memory_space<vmem>>, %arg3: memref<768x256xbf16, #tpu.memory_space<vmem>>, %arg4: memref<1x16x256xf32, #tpu.memory_space<vmem>>, %arg5: memref<1x16x256xf32, #tpu.memory_space<vmem>>, %arg6: memref<16x256xf32, #tpu.memory_space<vmem>>) attributes {dimension_semantics = [#tpu.dimension_semantics<parallel>, #tpu.dimension_semantics<arbitrary>], iteration_bounds = array<i64: 2, 3>, scalar_prefetch = 0 : i64, scratch_operands = 1 : i64, tpu.core_type = #tpu.core_type<tc>, window_params = [{transform_indices = @transform_0, window_bounds = array<i64: 1, 16, 768>}, {transform_indices = @transform_1, window_bounds = array<i64: 768, 256>}, {transform_indices = @transform_2, window_bounds = array<i64: 1, 16, 256>}, {transform_indices = @transform_3, window_bounds = array<i64: 1, 16, 256>}]} {
    %c0_i32 = arith.constant 0 : i32
    %0 = arith.cmpi eq, %arg1, %c0_i32 : i32
    %1 = arith.extui %0 : i1 to i32
    %c0_i32_0 = arith.constant 0 : i32
    %2 = arith.cmpi ne, %1, %c0_i32_0 : i32
    scf.if %2 {
      %cst_10 = arith.constant 0.000000e+00 : f32
      %13 = vector.broadcast %cst_10 : f32 to vector<16x256xf32>
      %c0_11 = arith.constant 0 : index
      %c0_12 = arith.constant 0 : index
      %14 = vector.load %arg6[%c0_11, %c0_12] : memref<16x256xf32, #tpu.memory_space<vmem>>, vector<16x256xf32>
      tpu.vector_store %arg6[%c0_11, %c0_12], %13 {strides = array<i32>} : memref<16x256xf32, #tpu.memory_space<vmem>>, vector<16x256xf32>,
    } else {
    }
    %c0 = arith.constant 0 : index
    %c0_1 = arith.constant 0 : index
    %3 = vector.load %arg6[%c0, %c0_1] : memref<16x256xf32, #tpu.memory_space<vmem>>, vector<16x256xf32>
    %c0_2 = arith.constant 0 : index
    %c0_3 = arith.constant 0 : index
    %c0_4 = arith.constant 0 : index
    %4 = vector.load %arg2[%c0_2, %c0_3, %c0_4] : memref<1x16x768xbf16, #tpu.memory_space<vmem>>, vector<1x16x768xbf16>
    %5 = vector.shape_cast %4 : vector<1x16x768xbf16> to vector<16x768xbf16>
    %c0_5 = arith.constant 0 : index
    %c0_6 = arith.constant 0 : index
    %6 = vector.load %arg3[%c0_5, %c0_6] : memref<768x256xbf16, #tpu.memory_space<vmem>>, vector<768x256xbf16>
    %cst = arith.constant dense<0.000000e+00> : vector<16x256xf32>
    %7 = tpu.matmul %5, %6, %cst {dimension_numbers = #tpu.dot_dimension_numbers<[1], [0], [0], [1], [0, 0, 1, 1], [], []>} : vector<16x768xbf16>, vector<768x256xbf16>, vector<16x256xf32> -> vector<16x256xf32>
    %8 = arith.addf %3, %7 : vector<16x256xf32>
    %c0_7 = arith.constant 0 : index
    %c0_8 = arith.constant 0 : index
    %9 = vector.load %arg6[%c0_7, %c0_8] : memref<16x256xf32, #tpu.memory_space<vmem>>, vector<16x256xf32>
    tpu.vector_store %arg6[%c0_7, %c0_8], %8 {strides = array<i32>} : memref<16x256xf32, #tpu.memory_space<vmem>>, vector<16x256xf32>,
    %c2_i32 = arith.constant 2 : i32
    %10 = arith.cmpi eq, %arg1, %c2_i32 : i32
    %11 = arith.extui %10 : i1 to i32
    %c0_i32_9 = arith.constant 0 : i32
    %12 = arith.cmpi ne, %11, %c0_i32_9 : i32
    scf.if %12 {
      %c0_10 = arith.constant 0 : index
      %c0_11 = arith.constant 0 : index
      %13 = vector.load %arg6[%c0_10, %c0_11] : memref<16x256xf32, #tpu.memory_space<vmem>>, vector<16x256xf32>
      %cst_12 = arith.constant dense<0.000000e+00> : vector<256xf32>
      %14 = vector.multi_reduction <add>, %13, %cst_12 [0] : vector<16x256xf32> to vector<256xf32>
      %15 = vector.shape_cast %14 : vector<256xf32> to vector<1x256xf32>
      %cst_13 = arith.constant 6.250000e-02 : f32
      %16 = vector.broadcast %cst_13 : f32 to vector<1x256xf32>
      %17 = arith.mulf %15, %16 : vector<1x256xf32>
      %18 = arith.mulf %13, %13 : vector<16x256xf32>
      %cst_14 = arith.constant dense<0.000000e+00> : vector<256xf32>
      %19 = vector.multi_reduction <add>, %18, %cst_14 [0] : vector<16x256xf32> to vector<256xf32>
      %20 = vector.shape_cast %19 : vector<256xf32> to vector<1x256xf32>
      %cst_15 = arith.constant 6.250000e-02 : f32
      %21 = vector.broadcast %cst_15 : f32 to vector<1x256xf32>
      %22 = arith.mulf %20, %21 : vector<1x256xf32>
      %23 = arith.mulf %17, %17 : vector<1x256xf32>
      %24 = arith.subf %22, %23 : vector<1x256xf32>
      %cst_16 = arith.constant 0.000000e+00 : f32
      %25 = vector.broadcast %cst_16 : f32 to vector<1x256xf32>
      %26 = arith.maximumf %24, %25 : vector<1x256xf32>
      %27 = vector.broadcast %17 : vector<1x256xf32> to vector<16x256xf32>
      %28 = arith.subf %13, %27 : vector<16x256xf32>
      %cst_17 = arith.constant 9.99999974E-6 : f32
      %29 = vector.broadcast %cst_17 : f32 to vector<1x256xf32>
      %30 = arith.addf %26, %29 : vector<1x256xf32>
      %31 = math.rsqrt %30 : vector<1x256xf32>
      %32 = vector.broadcast %31 : vector<1x256xf32> to vector<16x256xf32>
      %33 = arith.mulf %28, %32 : vector<16x256xf32>
      %c0_18 = arith.constant 0 : index
      %c0_19 = arith.constant 0 : index
      %c0_20 = arith.constant 0 : index
      %34 = vector.load %arg4[%c0_18, %c0_19, %c0_20] : memref<1x16x256xf32, #tpu.memory_space<vmem>>, vector<1x16x256xf32>
      %35 = vector.shape_cast %34 : vector<1x16x256xf32> to vector<16x256xf32>
      %36 = arith.addf %33, %35 : vector<16x256xf32>
      %c0_21 = arith.constant 0 : index
      %c0_22 = arith.constant 0 : index
      %c0_23 = arith.constant 0 : index
      %37 = vector.load %arg5[%c0_21, %c0_22, %c0_23] : memref<1x16x256xf32, #tpu.memory_space<vmem>>, vector<1x16x256xf32>
      %38 = vector.shape_cast %37 : vector<1x16x256xf32> to vector<16x256xf32>
      %39 = vector.shape_cast %36 : vector<16x256xf32> to vector<1x16x256xf32>
      tpu.vector_store %arg5[%c0_21, %c0_22, %c0_23], %39 {strides = array<i32>} : memref<1x16x256xf32, #tpu.memory_space<vmem>>, vector<1x16x256xf32>,
    } else {
    }
    return
  }
  func.func @transform_0(%arg0: i32, %arg1: i32) -> (i32, i32, i32) {
    %c0_i32 = arith.constant 0 : i32
    %c0_i32_0 = arith.constant 0 : i32
    return %arg0, %c0_i32, %arg1 : i32, i32, i32
  }
  func.func @transform_1(%arg0: i32, %arg1: i32) -> (i32, i32) {
    %c0_i32 = arith.constant 0 : i32
    %c0_i32_0 = arith.constant 0 : i32
    return %arg1, %c0_i32 : i32, i32
  }
  func.func @transform_2(%arg0: i32, %arg1: i32) -> (i32, i32, i32) {
    %c0_i32 = arith.constant 0 : i32
    %c0_i32_0 = arith.constant 0 : i32
    %c0_i32_1 = arith.constant 0 : i32
    return %arg0, %c0_i32, %c0_i32_0 : i32, i32, i32
  }
  func.func @transform_3(%arg0: i32, %arg1: i32) -> (i32, i32, i32) {
    %c0_i32 = arith.constant 0 : i32
    %c0_i32_0 = arith.constant 0 : i32
    %c0_i32_1 = arith.constant 0 : i32
    return %arg0, %c0_i32, %c0_i32_0 : i32, i32, i32
  }
}

module attributes {stable_mosaic.version = 11 : i64} {
  func.func @kernel(%arg0: i32, %arg1: i32, %arg2: memref<1x64x768xbf16, #tpu.memory_space<vmem>>, %arg3: memref<768x128xbf16, #tpu.memory_space<vmem>>, %arg4: memref<1x64x128xf32, #tpu.memory_space<vmem>>, %arg5: memref<64x128xf32, #tpu.memory_space<vmem>>) attributes {dimension_semantics = [#tpu.dimension_semantics<parallel>, #tpu.dimension_semantics<arbitrary>], iteration_bounds = array<i64: 2, 3>, scalar_prefetch = 0 : i64, scratch_operands = 1 : i64, tpu.core_type = #tpu.core_type<tc>, window_params = [{transform_indices = @transform_0, window_bounds = array<i64: 1, 64, 768>}, {transform_indices = @transform_1, window_bounds = array<i64: 768, 128>}, {transform_indices = @transform_2, window_bounds = array<i64: 1, 64, 128>}]} {
    %c0_i32 = arith.constant 0 : i32
    %0 = arith.cmpi eq, %arg1, %c0_i32 : i32
    %1 = arith.extui %0 : i1 to i32
    %c0_i32_0 = arith.constant 0 : i32
    %2 = arith.cmpi ne, %1, %c0_i32_0 : i32
    scf.if %2 {
      %cst_10 = arith.constant 0.000000e+00 : f32
      %13 = vector.broadcast %cst_10 : f32 to vector<64x128xf32>
      %c0_11 = arith.constant 0 : index
      %c0_12 = arith.constant 0 : index
      %14 = vector.load %arg5[%c0_11, %c0_12] : memref<64x128xf32, #tpu.memory_space<vmem>>, vector<64x128xf32>
      tpu.vector_store %arg5[%c0_11, %c0_12], %13 {strides = array<i32>} : memref<64x128xf32, #tpu.memory_space<vmem>>, vector<64x128xf32>,
    } else {
    }
    %c0 = arith.constant 0 : index
    %c0_1 = arith.constant 0 : index
    %3 = vector.load %arg5[%c0, %c0_1] : memref<64x128xf32, #tpu.memory_space<vmem>>, vector<64x128xf32>
    %c0_2 = arith.constant 0 : index
    %c0_3 = arith.constant 0 : index
    %c0_4 = arith.constant 0 : index
    %4 = vector.load %arg2[%c0_2, %c0_3, %c0_4] : memref<1x64x768xbf16, #tpu.memory_space<vmem>>, vector<1x64x768xbf16>
    %5 = vector.shape_cast %4 : vector<1x64x768xbf16> to vector<64x768xbf16>
    %c0_5 = arith.constant 0 : index
    %c0_6 = arith.constant 0 : index
    %6 = vector.load %arg3[%c0_5, %c0_6] : memref<768x128xbf16, #tpu.memory_space<vmem>>, vector<768x128xbf16>
    %cst = arith.constant dense<0.000000e+00> : vector<64x128xf32>
    %7 = tpu.matmul %5, %6, %cst {dimension_numbers = #tpu.dot_dimension_numbers<[1], [0], [0], [1], [0, 0, 1, 1], [], []>} : vector<64x768xbf16>, vector<768x128xbf16>, vector<64x128xf32> -> vector<64x128xf32>
    %8 = arith.addf %3, %7 : vector<64x128xf32>
    %c0_7 = arith.constant 0 : index
    %c0_8 = arith.constant 0 : index
    %9 = vector.load %arg5[%c0_7, %c0_8] : memref<64x128xf32, #tpu.memory_space<vmem>>, vector<64x128xf32>
    tpu.vector_store %arg5[%c0_7, %c0_8], %8 {strides = array<i32>} : memref<64x128xf32, #tpu.memory_space<vmem>>, vector<64x128xf32>,
    %c2_i32 = arith.constant 2 : i32
    %10 = arith.cmpi eq, %arg1, %c2_i32 : i32
    %11 = arith.extui %10 : i1 to i32
    %c0_i32_9 = arith.constant 0 : i32
    %12 = arith.cmpi ne, %11, %c0_i32_9 : i32
    scf.if %12 {
      %c0_10 = arith.constant 0 : index
      %c0_11 = arith.constant 0 : index
      %13 = vector.load %arg5[%c0_10, %c0_11] : memref<64x128xf32, #tpu.memory_space<vmem>>, vector<64x128xf32>
      %cst_12 = arith.constant dense<0.000000e+00> : vector<128xf32>
      %14 = vector.multi_reduction <add>, %13, %cst_12 [0] : vector<64x128xf32> to vector<128xf32>
      %15 = vector.shape_cast %14 : vector<128xf32> to vector<1x128xf32>
      %cst_13 = arith.constant 1.562500e-02 : f32
      %16 = vector.broadcast %cst_13 : f32 to vector<1x128xf32>
      %17 = arith.mulf %15, %16 : vector<1x128xf32>
      %18 = arith.mulf %13, %13 : vector<64x128xf32>
      %cst_14 = arith.constant dense<0.000000e+00> : vector<128xf32>
      %19 = vector.multi_reduction <add>, %18, %cst_14 [0] : vector<64x128xf32> to vector<128xf32>
      %20 = vector.shape_cast %19 : vector<128xf32> to vector<1x128xf32>
      %cst_15 = arith.constant 1.562500e-02 : f32
      %21 = vector.broadcast %cst_15 : f32 to vector<1x128xf32>
      %22 = arith.mulf %20, %21 : vector<1x128xf32>
      %23 = arith.mulf %17, %17 : vector<1x128xf32>
      %24 = arith.subf %22, %23 : vector<1x128xf32>
      %cst_16 = arith.constant 0.000000e+00 : f32
      %25 = vector.broadcast %cst_16 : f32 to vector<1x128xf32>
      %26 = arith.maximumf %24, %25 : vector<1x128xf32>
      %27 = vector.broadcast %17 : vector<1x128xf32> to vector<64x128xf32>
      %28 = arith.subf %13, %27 : vector<64x128xf32>
      %cst_17 = arith.constant 9.99999974E-6 : f32
      %29 = vector.broadcast %cst_17 : f32 to vector<1x128xf32>
      %30 = arith.addf %26, %29 : vector<1x128xf32>
      %31 = math.rsqrt %30 : vector<1x128xf32>
      %32 = vector.broadcast %31 : vector<1x128xf32> to vector<64x128xf32>
      %33 = arith.mulf %28, %32 : vector<64x128xf32>
      %cst_18 = arith.constant 0.000000e+00 : f32
      %34 = vector.broadcast %cst_18 : f32 to vector<64x128xf32>
      %35 = arith.maximumf %33, %34 : vector<64x128xf32>
      %c0_19 = arith.constant 0 : index
      %c0_20 = arith.constant 0 : index
      %c0_21 = arith.constant 0 : index
      %36 = vector.load %arg4[%c0_19, %c0_20, %c0_21] : memref<1x64x128xf32, #tpu.memory_space<vmem>>, vector<1x64x128xf32>
      %37 = vector.shape_cast %36 : vector<1x64x128xf32> to vector<64x128xf32>
      %38 = vector.shape_cast %35 : vector<64x128xf32> to vector<1x64x128xf32>
      tpu.vector_store %arg4[%c0_19, %c0_20, %c0_21], %38 {strides = array<i32>} : memref<1x64x128xf32, #tpu.memory_space<vmem>>, vector<1x64x128xf32>,
    } else {
    }
    return
  }
  func.func @transform_0(%arg0: i32, %arg1: i32) -> (i32, i32, i32) {
    %c0_i32 = arith.constant 0 : i32
    %c0_i32_0 = arith.constant 0 : i32
    return %arg0, %c0_i32, %arg1 : i32, i32, i32
  }
  func.func @transform_1(%arg0: i32, %arg1: i32) -> (i32, i32) {
    %c0_i32 = arith.constant 0 : i32
    %c0_i32_0 = arith.constant 0 : i32
    return %arg1, %c0_i32 : i32, i32
  }
  func.func @transform_2(%arg0: i32, %arg1: i32) -> (i32, i32, i32) {
    %c0_i32 = arith.constant 0 : i32
    %c0_i32_0 = arith.constant 0 : i32
    %c0_i32_1 = arith.constant 0 : i32
    return %arg0, %c0_i32, %c0_i32_0 : i32, i32, i32
  }
}

module attributes {stable_mosaic.version = 11 : i64} {
  func.func @kernel(%arg0: i32, %arg1: i32, %arg2: memref<1x256x384xbf16, #tpu.memory_space<vmem>>, %arg3: memref<384x64xbf16, #tpu.memory_space<vmem>>, %arg4: memref<1x256x64xf32, #tpu.memory_space<vmem>>, %arg5: memref<256x64xf32, #tpu.memory_space<vmem>>) attributes {dimension_semantics = [#tpu.dimension_semantics<parallel>, #tpu.dimension_semantics<arbitrary>], iteration_bounds = array<i64: 2, 3>, scalar_prefetch = 0 : i64, scratch_operands = 1 : i64, tpu.core_type = #tpu.core_type<tc>, window_params = [{transform_indices = @transform_0, window_bounds = array<i64: 1, 256, 384>}, {transform_indices = @transform_1, window_bounds = array<i64: 384, 64>}, {transform_indices = @transform_2, window_bounds = array<i64: 1, 256, 64>}]} {
    %c0_i32 = arith.constant 0 : i32
    %0 = arith.cmpi eq, %arg1, %c0_i32 : i32
    %1 = arith.extui %0 : i1 to i32
    %c0_i32_0 = arith.constant 0 : i32
    %2 = arith.cmpi ne, %1, %c0_i32_0 : i32
    scf.if %2 {
      %cst_10 = arith.constant 0.000000e+00 : f32
      %13 = vector.broadcast %cst_10 : f32 to vector<256x64xf32>
      %c0_11 = arith.constant 0 : index
      %c0_12 = arith.constant 0 : index
      %14 = vector.load %arg5[%c0_11, %c0_12] : memref<256x64xf32, #tpu.memory_space<vmem>>, vector<256x64xf32>
      tpu.vector_store %arg5[%c0_11, %c0_12], %13 {strides = array<i32>} : memref<256x64xf32, #tpu.memory_space<vmem>>, vector<256x64xf32>,
    } else {
    }
    %c0 = arith.constant 0 : index
    %c0_1 = arith.constant 0 : index
    %3 = vector.load %arg5[%c0, %c0_1] : memref<256x64xf32, #tpu.memory_space<vmem>>, vector<256x64xf32>
    %c0_2 = arith.constant 0 : index
    %c0_3 = arith.constant 0 : index
    %c0_4 = arith.constant 0 : index
    %4 = vector.load %arg2[%c0_2, %c0_3, %c0_4] : memref<1x256x384xbf16, #tpu.memory_space<vmem>>, vector<1x256x384xbf16>
    %5 = vector.shape_cast %4 : vector<1x256x384xbf16> to vector<256x384xbf16>
    %c0_5 = arith.constant 0 : index
    %c0_6 = arith.constant 0 : index
    %6 = vector.load %arg3[%c0_5, %c0_6] : memref<384x64xbf16, #tpu.memory_space<vmem>>, vector<384x64xbf16>
    %cst = arith.constant dense<0.000000e+00> : vector<256x64xf32>
    %7 = tpu.matmul %5, %6, %cst {dimension_numbers = #tpu.dot_dimension_numbers<[1], [0], [0], [1], [0, 0, 1, 1], [], []>} : vector<256x384xbf16>, vector<384x64xbf16>, vector<256x64xf32> -> vector<256x64xf32>
    %8 = arith.addf %3, %7 : vector<256x64xf32>
    %c0_7 = arith.constant 0 : index
    %c0_8 = arith.constant 0 : index
    %9 = vector.load %arg5[%c0_7, %c0_8] : memref<256x64xf32, #tpu.memory_space<vmem>>, vector<256x64xf32>
    tpu.vector_store %arg5[%c0_7, %c0_8], %8 {strides = array<i32>} : memref<256x64xf32, #tpu.memory_space<vmem>>, vector<256x64xf32>,
    %c2_i32 = arith.constant 2 : i32
    %10 = arith.cmpi eq, %arg1, %c2_i32 : i32
    %11 = arith.extui %10 : i1 to i32
    %c0_i32_9 = arith.constant 0 : i32
    %12 = arith.cmpi ne, %11, %c0_i32_9 : i32
    scf.if %12 {
      %c0_10 = arith.constant 0 : index
      %c0_11 = arith.constant 0 : index
      %13 = vector.load %arg5[%c0_10, %c0_11] : memref<256x64xf32, #tpu.memory_space<vmem>>, vector<256x64xf32>
      %cst_12 = arith.constant dense<0.000000e+00> : vector<64xf32>
      %14 = vector.multi_reduction <add>, %13, %cst_12 [0] : vector<256x64xf32> to vector<64xf32>
      %15 = vector.shape_cast %14 : vector<64xf32> to vector<1x64xf32>
      %cst_13 = arith.constant 3.906250e-03 : f32
      %16 = vector.broadcast %cst_13 : f32 to vector<1x64xf32>
      %17 = arith.mulf %15, %16 : vector<1x64xf32>
      %18 = arith.mulf %13, %13 : vector<256x64xf32>
      %cst_14 = arith.constant dense<0.000000e+00> : vector<64xf32>
      %19 = vector.multi_reduction <add>, %18, %cst_14 [0] : vector<256x64xf32> to vector<64xf32>
      %20 = vector.shape_cast %19 : vector<64xf32> to vector<1x64xf32>
      %cst_15 = arith.constant 3.906250e-03 : f32
      %21 = vector.broadcast %cst_15 : f32 to vector<1x64xf32>
      %22 = arith.mulf %20, %21 : vector<1x64xf32>
      %23 = arith.mulf %17, %17 : vector<1x64xf32>
      %24 = arith.subf %22, %23 : vector<1x64xf32>
      %cst_16 = arith.constant 0.000000e+00 : f32
      %25 = vector.broadcast %cst_16 : f32 to vector<1x64xf32>
      %26 = arith.maximumf %24, %25 : vector<1x64xf32>
      %27 = vector.broadcast %17 : vector<1x64xf32> to vector<256x64xf32>
      %28 = arith.subf %13, %27 : vector<256x64xf32>
      %cst_17 = arith.constant 9.99999974E-6 : f32
      %29 = vector.broadcast %cst_17 : f32 to vector<1x64xf32>
      %30 = arith.addf %26, %29 : vector<1x64xf32>
      %31 = math.rsqrt %30 : vector<1x64xf32>
      %32 = vector.broadcast %31 : vector<1x64xf32> to vector<256x64xf32>
      %33 = arith.mulf %28, %32 : vector<256x64xf32>
      %cst_18 = arith.constant 0.000000e+00 : f32
      %34 = vector.broadcast %cst_18 : f32 to vector<256x64xf32>
      %35 = arith.maximumf %33, %34 : vector<256x64xf32>
      %c0_19 = arith.constant 0 : index
      %c0_20 = arith.constant 0 : index
      %c0_21 = arith.constant 0 : index
      %36 = vector.load %arg4[%c0_19, %c0_20, %c0_21] : memref<1x256x64xf32, #tpu.memory_space<vmem>>, vector<1x256x64xf32>
      %37 = vector.shape_cast %36 : vector<1x256x64xf32> to vector<256x64xf32>
      %38 = vector.shape_cast %35 : vector<256x64xf32> to vector<1x256x64xf32>
      tpu.vector_store %arg4[%c0_19, %c0_20, %c0_21], %38 {strides = array<i32>} : memref<1x256x64xf32, #tpu.memory_space<vmem>>, vector<1x256x64xf32>,
    } else {
    }
    return
  }
  func.func @transform_0(%arg0: i32, %arg1: i32) -> (i32, i32, i32) {
    %c0_i32 = arith.constant 0 : i32
    %c0_i32_0 = arith.constant 0 : i32
    return %arg0, %c0_i32, %arg1 : i32, i32, i32
  }
  func.func @transform_1(%arg0: i32, %arg1: i32) -> (i32, i32) {
    %c0_i32 = arith.constant 0 : i32
    %c0_i32_0 = arith.constant 0 : i32
    return %arg1, %c0_i32 : i32, i32
  }
  func.func @transform_2(%arg0: i32, %arg1: i32) -> (i32, i32, i32) {
    %c0_i32 = arith.constant 0 : i32
    %c0_i32_0 = arith.constant 0 : i32
    %c0_i32_1 = arith.constant 0 : i32
    return %arg0, %c0_i32, %c0_i32_0 : i32, i32, i32
  }
}

module attributes {stable_mosaic.version = 11 : i64} {
  func.func @kernel(%arg0: i32, %arg1: i32, %arg2: i32, %arg3: memref<1x256x640xbf16, #tpu.memory_space<vmem>>, %arg4: memref<640x128xbf16, #tpu.memory_space<vmem>>, %arg5: memref<1x128xf32, #tpu.memory_space<vmem>>, %arg6: memref<1x256x128xf32, #tpu.memory_space<vmem>>, %arg7: memref<256x128xf32, #tpu.memory_space<vmem>>) attributes {dimension_semantics = [#tpu.dimension_semantics<parallel>, #tpu.dimension_semantics<parallel>, #tpu.dimension_semantics<arbitrary>], iteration_bounds = array<i64: 2, 1, 5>, scalar_prefetch = 0 : i64, scratch_operands = 1 : i64, tpu.core_type = #tpu.core_type<tc>, window_params = [{transform_indices = @transform_0, window_bounds = array<i64: 1, 256, 640>}, {transform_indices = @transform_1, window_bounds = array<i64: 640, 128>}, {pipeline_mode = #tpu.pipeline_mode<synchronous>, transform_indices = @transform_2, window_bounds = array<i64: 1, 128>}, {transform_indices = @transform_3, window_bounds = array<i64: 1, 256, 128>}]} {
    %c0_i32 = arith.constant 0 : i32
    %0 = arith.cmpi eq, %arg2, %c0_i32 : i32
    %1 = arith.extui %0 : i1 to i32
    %c0_i32_0 = arith.constant 0 : i32
    %2 = arith.cmpi ne, %1, %c0_i32_0 : i32
    scf.if %2 {
      %cst_10 = arith.constant 0.000000e+00 : f32
      %13 = vector.broadcast %cst_10 : f32 to vector<256x128xf32>
      %c0_11 = arith.constant 0 : index
      %c0_12 = arith.constant 0 : index
      %14 = vector.load %arg7[%c0_11, %c0_12] : memref<256x128xf32, #tpu.memory_space<vmem>>, vector<256x128xf32>
      tpu.vector_store %arg7[%c0_11, %c0_12], %13 {strides = array<i32>} : memref<256x128xf32, #tpu.memory_space<vmem>>, vector<256x128xf32>,
    } else {
    }
    %c0 = arith.constant 0 : index
    %c0_1 = arith.constant 0 : index
    %3 = vector.load %arg7[%c0, %c0_1] : memref<256x128xf32, #tpu.memory_space<vmem>>, vector<256x128xf32>
    %c0_2 = arith.constant 0 : index
    %c0_3 = arith.constant 0 : index
    %c0_4 = arith.constant 0 : index
    %4 = vector.load %arg3[%c0_2, %c0_3, %c0_4] : memref<1x256x640xbf16, #tpu.memory_space<vmem>>, vector<1x256x640xbf16>
    %5 = vector.shape_cast %4 : vector<1x256x640xbf16> to vector<256x640xbf16>
    %c0_5 = arith.constant 0 : index
    %c0_6 = arith.constant 0 : index
    %6 = vector.load %arg4[%c0_5, %c0_6] : memref<640x128xbf16, #tpu.memory_space<vmem>>, vector<640x128xbf16>
    %cst = arith.constant dense<0.000000e+00> : vector<256x128xf32>
    %7 = tpu.matmul %5, %6, %cst {dimension_numbers = #tpu.dot_dimension_numbers<[1], [0], [0], [1], [0, 0, 1, 1], [], []>} : vector<256x640xbf16>, vector<640x128xbf16>, vector<256x128xf32> -> vector<256x128xf32>
    %8 = arith.addf %3, %7 : vector<256x128xf32>
    %c0_7 = arith.constant 0 : index
    %c0_8 = arith.constant 0 : index
    %9 = vector.load %arg7[%c0_7, %c0_8] : memref<256x128xf32, #tpu.memory_space<vmem>>, vector<256x128xf32>
    tpu.vector_store %arg7[%c0_7, %c0_8], %8 {strides = array<i32>} : memref<256x128xf32, #tpu.memory_space<vmem>>, vector<256x128xf32>,
    %c4_i32 = arith.constant 4 : i32
    %10 = arith.cmpi eq, %arg2, %c4_i32 : i32
    %11 = arith.extui %10 : i1 to i32
    %c0_i32_9 = arith.constant 0 : i32
    %12 = arith.cmpi ne, %11, %c0_i32_9 : i32
    scf.if %12 {
      %c0_10 = arith.constant 0 : index
      %c0_11 = arith.constant 0 : index
      %13 = vector.load %arg7[%c0_10, %c0_11] : memref<256x128xf32, #tpu.memory_space<vmem>>, vector<256x128xf32>
      %c0_12 = arith.constant 0 : index
      %c0_13 = arith.constant 0 : index
      %14 = vector.load %arg5[%c0_12, %c0_13] : memref<1x128xf32, #tpu.memory_space<vmem>>, vector<1x128xf32>
      %15 = vector.broadcast %14 : vector<1x128xf32> to vector<256x128xf32>
      %16 = arith.addf %13, %15 : vector<256x128xf32>
      %17 = math.tanh %16 : vector<256x128xf32>
      %c0_14 = arith.constant 0 : index
      %c0_15 = arith.constant 0 : index
      %c0_16 = arith.constant 0 : index
      %18 = vector.load %arg6[%c0_14, %c0_15, %c0_16] : memref<1x256x128xf32, #tpu.memory_space<vmem>>, vector<1x256x128xf32>
      %19 = vector.shape_cast %18 : vector<1x256x128xf32> to vector<256x128xf32>
      %20 = vector.shape_cast %17 : vector<256x128xf32> to vector<1x256x128xf32>
      tpu.vector_store %arg6[%c0_14, %c0_15, %c0_16], %20 {strides = array<i32>} : memref<1x256x128xf32, #tpu.memory_space<vmem>>, vector<1x256x128xf32>,
    } else {
    }
    return
  }
  func.func @transform_0(%arg0: i32, %arg1: i32, %arg2: i32) -> (i32, i32, i32) {
    %c0_i32 = arith.constant 0 : i32
    return %arg0, %arg1, %arg2 : i32, i32, i32
  }
  func.func @transform_1(%arg0: i32, %arg1: i32, %arg2: i32) -> (i32, i32) {
    %c0_i32 = arith.constant 0 : i32
    %c0_i32_0 = arith.constant 0 : i32
    return %arg2, %c0_i32 : i32, i32
  }
  func.func @transform_2(%arg0: i32, %arg1: i32, %arg2: i32) -> (i32, i32) {
    %c0_i32 = arith.constant 0 : i32
    %c0_i32_0 = arith.constant 0 : i32
    %c0_i32_1 = arith.constant 0 : i32
    return %c0_i32, %c0_i32_0 : i32, i32
  }
  func.func @transform_3(%arg0: i32, %arg1: i32, %arg2: i32) -> (i32, i32, i32) {
    %c0_i32 = arith.constant 0 : i32
    %c0_i32_0 = arith.constant 0 : i32
    return %arg0, %arg1, %c0_i32 : i32, i32, i32
  }
}

</mosaic_0001>

<llo_original>
// kernel: generator_resnet_forward.10
$region0: #{generator_resnet_forward.10}
  #allocation0 [shape = 'u32[]', space=smem, size = 0x4, offset = 0x4, fixed_abs, tag = 'smem constant byte address 0x4 - core index']
  #allocation1 [shape = 'u32[72,128]{1,0:T(1,128)}', space=vmem, size = 0x9000, scoped, tag = 'internal scratch']
  #allocation2 [shape = 'f32[256,64]{1,0:T(8,128)}', space=vmem, size = 0x20000, scoped, tag = 'scratch operand']
  %s0 = inlined_call_operand.vmem [shape: bf16[2,256,256], index: 0, kind: input, shape index: {}]
  %s1 = inlined_call_operand.vmem [shape: bf16[256,64], index: 1, kind: input, shape index: {}]
  %s2 = inlined_call_operand.vmem [shape: f32[2,256,64], index: 2, kind: output, shape index: {}]
  %s3 = sld [smem:[#allocation0]]
  $region49: #{generator_resnet_forward.10} parent=0
    _
  %s5 = ssub.s32 1, %s3
  %s6 = scalar_select 0, %s5, %s3
  loop: start=0, step=1, limit=4
  $region2: #{generator_resnet_forward.10} parent=0 // loop_pre_header
    _
  $region3: #{generator_resnet_forward.10} parent=0 // loop_header
    %s8 = sphi 0, %s12
    %p9 = scmp.ge.s32.totalorder %s8, 4
    %s15 = sphi 0, %s27
    %s16 = sphi 0, %s23
    %s17 = sphi 0, %s15
    %s18 = sphi 0, %s16
    %s19 = sphi 0, %s17
    %s20 = sphi 0, %s18
    %s32 = sphi 0, %s34
    %s35 = sphi 0, %s32
    %s36 = sphi 0, %s35
    %s52 = sphi 0, %s36
    %s58 = sphi 0, %s60
    %s61 = sphi 0, %s58
    %s62 = sphi 0, %s61
    %s78 = sphi 0, %s62
    %s84 = sphi 0, %s86
    %s87 = sphi 0, %s84
    %s88 = sphi 0, %s87
    %s104 = sphi 0, %s88
  $region4: #{generator_resnet_forward.10} parent=0 // loop_header_branch
    %11 = sbr.rel (%p9) target = $region8
  $region5: #{generator_resnet_forward.10} parent=0 // loop_body
    %s13 = ssub.s32 %s8, 1
    %s14 = ssub.s32 %s8, 2
    %s21 = sadd.s32 1, %s16
    %p22 = scmp.ge.s32.totalorder %s21, 1
    %s23 = scalar_select %p22, 0, %s21
    %s24 = sadd.s32 1, %s15
    %s25 = scalar_select %p22, %s24, %s15
    %p26 = scmp.ge.s32.totalorder %s25, 2
    %s27 = scalar_select %p26, 0, %s25
    %s28 = ssub.s32 %s15, %s27
    %s29 = ssub.s32 %s16, %s23
    %s30 = sor.u32 %s28, %s29
    %p31 = scmp.eq.s32.totalorder %s30, 0
    %s33 = sadd.s32 %s32, 1
    %s34 = scalar_select %p31, %s32, %s33
    %p37 = pneg %p31
    %p38 = scmp.eq.s32.totalorder %s8, 1
    %p39 = por %p37, %p38
    %p40 = scmp.ne.s32.totalorder %s32, %s35
    %p41 = scmp.eq.s32.totalorder %s8, 0
    %p42 = por %p40, %p41
    %p43 = scmp.ne.s32.totalorder %s32, %s35
    %p44 = scmp.eq.s32.totalorder %s13, 1
    %p45 = por %p43, %p44
    %p46 = scmp.ne.s32.totalorder %s35, %s36
    %p47 = scmp.eq.s32.totalorder %s13, 0
    %p48 = por %p46, %p47
    %p49 = scmp.ne.s32.totalorder %s35, %s36
    %p50 = scmp.eq.s32.totalorder %s14, 1
    %p51 = por %p49, %p50
    %p53 = scmp.ne.s32.totalorder %s36, %s52
    %p54 = scmp.eq.s32.totalorder %s14, 0
    %p55 = por %p53, %p54
    %s56 = ssub.s32 %s16, %s23
    %p57 = scmp.eq.s32.totalorder %s56, 0
    %s59 = sadd.s32 %s58, 1
    %s60 = scalar_select %p57, %s58, %s59
    %p63 = pneg %p57
    %p64 = scmp.eq.s32.totalorder %s8, 1
    %p65 = por %p63, %p64
    %p66 = scmp.ne.s32.totalorder %s58, %s61
    %p67 = scmp.eq.s32.totalorder %s8, 0
    %p68 = por %p66, %p67
    %p69 = scmp.ne.s32.totalorder %s58, %s61
    %p70 = scmp.eq.s32.totalorder %s13, 1
    %p71 = por %p69, %p70
    %p72 = scmp.ne.s32.totalorder %s61, %s62
    %p73 = scmp.eq.s32.totalorder %s13, 0
    %p74 = por %p72, %p73
    %p75 = scmp.ne.s32.totalorder %s61, %s62
    %p76 = scmp.eq.s32.totalorder %s14, 1
    %p77 = por %p75, %p76
    %p79 = scmp.ne.s32.totalorder %s62, %s78
    %p80 = scmp.eq.s32.totalorder %s14, 0
    %p81 = por %p79, %p80
    %s82 = ssub.s32 %s15, %s27
    %p83 = scmp.eq.s32.totalorder %s82, 0
    %s85 = sadd.s32 %s84, 1
    %s86 = scalar_select %p83, %s84, %s85
    %p89 = pneg %p83
    %p90 = scmp.eq.s32.totalorder %s8, 1
    %p91 = por %p89, %p90
    %p92 = scmp.ne.s32.totalorder %s84, %s87
    %p93 = scmp.eq.s32.totalorder %s8, 0
    %p94 = por %p92, %p93
    %p95 = scmp.ne.s32.totalorder %s84, %s87
    %p96 = scmp.eq.s32.totalorder %s13, 1
    %p97 = por %p95, %p96
    %p98 = scmp.ne.s32.totalorder %s87, %s88
    %p99 = scmp.eq.s32.totalorder %s13, 0
    %p100 = por %p98, %p99
    %p101 = scmp.ne.s32.totalorder %s87, %s88
    %p102 = scmp.eq.s32.totalorder %s14, 1
    %p103 = por %p101, %p102
    %p105 = scmp.ne.s32.totalorder %s88, %s104
    %p106 = scmp.eq.s32.totalorder %s14, 0
    %p107 = por %p105, %p106
    %p108 = scmp.le.s32.totalorder 1, %s8
    %p109 = scmp.lt.s32.totalorder %s8, 3
    %p110 = pnand %p108, %p109
    %p111 = pneg %p110
    // Predicated region
    $region9: #{generator_resnet_forward.10} parent=5 // pred_check
      _
    $region10: #{generator_resnet_forward.10} parent=5 // pred_check_branch
      %113 = sbr.rel (%p110) target = $region12
    $region11: #{generator_resnet_forward.10} parent=5 // pred_region
      %s114 = ssub.s32 %s8, 1
      // Predicated region
      $region13: #{generator_resnet_forward.10} parent=11 // pred_check
        %p115 = pneg %p74
      $region14: #{generator_resnet_forward.10} parent=11 // pred_check_branch
        %117 = sbr.rel (%p115) target = $region16
      $region15: #{generator_resnet_forward.10} parent=11 // pred_region
        %s118 = smul.u32 32, %s18
        %p119 = scmp.lt.s32.totalorder %s118, 31
        %s120 = scalar_select %p119, %s118, 31
        %s121 = smul.addr %s120, 4
        %s122 = scalar_lea.vmem %s1, %s121
        %s123 = smul.u32 32, %s18
      $region16: #{generator_resnet_forward.10} parent=11 // pred_fallthru
        _
    $region12: #{generator_resnet_forward.10} parent=5 // pred_fallthru
      _
    %p124 = scmp.lt.s32.totalorder %s8, 2
    // Predicated region
    $region17: #{generator_resnet_forward.10} parent=5 // pred_check
      %p125 = pneg %p124
    $region18: #{generator_resnet_forward.10} parent=5 // pred_check_branch
      %127 = sbr.rel (%p125) target = $region20
    $region19: #{generator_resnet_forward.10} parent=5 // pred_region
      // Predicated region
      $region21: #{generator_resnet_forward.10} parent=19 // pred_check
        %p128 = pneg %p42
      $region22: #{generator_resnet_forward.10} parent=19 // pred_check_branch
        %130 = sbr.rel (%p128) target = $region24
      $region23: #{generator_resnet_forward.10} parent=19 // pred_region
        %s131 = smul.u32 2, %s16
        %p132 = scmp.lt.s32.totalorder %s15, 1
        %s133 = scalar_select %p132, %s15, 1
        %p134 = scmp.lt.s32.totalorder %s131, 1
        %s135 = scalar_select %p134, %s131, 1
        %s136 = smul.addr %s133, 64
        %s137 = sadd.s32 %s135, %s136
        %s138 = smul.addr %s137, 4
        %s139 = scalar_lea.vmem %s0, %s138
        %s140 = smul.u32 2, %s16
      $region24: #{generator_resnet_forward.10} parent=19 // pred_fallthru
        _
    $region20: #{generator_resnet_forward.10} parent=5 // pred_fallthru
      _
    %p141 = scmp.le.s32.totalorder 1, %s8
    %p142 = scmp.lt.s32.totalorder %s8, 3
    %p143 = pnand %p141, %p142
    %p144 = pneg %p143
    // Predicated region
    $region25: #{generator_resnet_forward.10} parent=5 // pred_check
      _
    $region26: #{generator_resnet_forward.10} parent=5 // pred_check_branch
      %146 = sbr.rel (%p143) target = $region28
    $region27: #{generator_resnet_forward.10} parent=5 // pred_region
      %s147 = ssub.s32 %s8, 1
      %s148 = smul.u32 2, %s18
      %p149 = scmp.lt.s32.totalorder %s17, 1
      %s150 = scalar_select %p149, %s17, 1
      %p151 = scmp.lt.s32.totalorder %s148, 1
      %s152 = scalar_select %p151, %s148, 1
      %s153 = smul.addr %s150, 64
      %s154 = sadd.s32 %s152, %s153
      %s155 = smul.addr %s154, 4
      %s156 = scalar_lea.vmem %s0, %s155
      %p157 = pneg %p48
      %p158 = pneg %p45
      %s159 = smul.u32 32, %s18
      %p160 = scmp.lt.s32.totalorder %s159, 31
      %s161 = scalar_select %p160, %s159, 31
      %s162 = smul.addr %s161, 4
      %s163 = scalar_lea.vmem %s1, %s162
      %p164 = pneg %p74
      %p165 = pneg %p71
      %p166 = pneg %p100
      %p167 = pneg %p97
      %p168 = scmp.lt.s32.totalorder %s17, 1
      %s169 = scalar_select %p168, %s17, 1
      %s170 = smul.addr %s169, 32
      %s171 = smul.addr %s170, 8
      %s172 = scalar_lea.vmem %s2, %s171
      %s173 = smul.u32 2, %s18
      %p174 = scmp.lt.s32.totalorder %s17, 1
      %s175 = scalar_select %p174, %s17, 1
      %p176 = scmp.lt.s32.totalorder %s173, 1
      %s177 = scalar_select %p176, %s173, 1
      %s178 = smul.addr %s175, 64
      %s179 = sadd.s32 %s177, %s178
      %s180 = smul.addr %s179, 4
      %s181 = scalar_lea.vmem %s0, %s180
      %s182 = smul.u32 2, %s18
      %s183 = smul.u32 32, %s18
      %p184 = scmp.lt.s32.totalorder %s183, 31
      %s185 = scalar_select %p184, %s183, 31
      %s186 = smul.addr %s185, 4
      %s187 = scalar_lea.vmem %s1, %s186
      %s188 = smul.u32 32, %s18
      %p189 = scmp.lt.s32.totalorder %s17, 1
      %s190 = scalar_select %p189, %s17, 1
      %s191 = smul.addr %s190, 32
      %s192 = smul.addr %s191, 8
      %s193 = scalar_lea.vmem %s2, %s192
      %p194 = scmp.eq.s32.totalorder %s18, 0
      // Predicated region
      $region29: #{generator_resnet_forward.10} parent=27 // pred_check
        %p195 = pneg %p194
      $region30: #{generator_resnet_forward.10} parent=27 // pred_check_branch
        %197 = sbr.rel (%p195) target = $region32
      $region31: #{generator_resnet_forward.10} parent=27 // pred_region
        %vm198 = vcmask 523264
        %199 = vst.msk [vmem:[#allocation2] sm:$0xff] %vm198, 0.0
        %200 = vst.msk [vmem:[#allocation2 + $0x8] sm:$0xff] %vm198, 0.0
        %201 = vst.msk [vmem:[#allocation2 + $0x10] sm:$0xff] %vm198, 0.0
        %202 = vst.msk [vmem:[#allocation2 + $0x18] sm:$0xff] %vm198, 0.0
        %203 = vst.msk [vmem:[#allocation2 + $0x20] sm:$0xff] %vm198, 0.0
        %204 = vst.msk [vmem:[#allocation2 + $0x28] sm:$0xff] %vm198, 0.0
        %205 = vst.msk [vmem:[#allocation2 + $0x30] sm:$0xff] %vm198, 0.0
        %206 = vst.msk [vmem:[#allocation2 + $0x38] sm:$0xff] %vm198, 0.0
        %207 = vst.msk [vmem:[#allocation2 + $0x40] sm:$0xff] %vm198, 0.0
        %208 = vst.msk [vmem:[#allocation2 + $0x48] sm:$0xff] %vm198, 0.0
        %209 = vst.msk [vmem:[#allocation2 + $0x50] sm:$0xff] %vm198, 0.0
        %210 = vst.msk [vmem:[#allocation2 + $0x58] sm:$0xff] %vm198, 0.0
        %211 = vst.msk [vmem:[#allocation2 + $0x60] sm:$0xff] %vm198, 0.0
        %212 = vst.msk [vmem:[#allocation2 + $0x68] sm:$0xff] %vm198, 0.0
        %213 = vst.msk [vmem:[#allocation2 + $0x70] sm:$0xff] %vm198, 0.0
        %214 = vst.msk [vmem:[#allocation2 + $0x78] sm:$0xff] %vm198, 0.0
        %215 = vst.msk [vmem:[#allocation2 + $0x80] sm:$0xff] %vm198, 0.0
        %216 = vst.msk [vmem:[#allocation2 + $0x88] sm:$0xff] %vm198, 0.0
        %217 = vst.msk [vmem:[#allocation2 + $0x90] sm:$0xff] %vm198, 0.0
        %218 = vst.msk [vmem:[#allocation2 + $0x98] sm:$0xff] %vm198, 0.0
        %219 = vst.msk [vmem:[#allocation2 + $0xa0] sm:$0xff] %vm198, 0.0
        %220 = vst.msk [vmem:[#allocation2 + $0xa8] sm:$0xff] %vm198, 0.0
        %221 = vst.msk [vmem:[#allocation2 + $0xb0] sm:$0xff] %vm198, 0.0
        %222 = vst.msk [vmem:[#allocation2 + $0xb8] sm:$0xff] %vm198, 0.0
        %223 = vst.msk [vmem:[#allocation2 + $0xc0] sm:$0xff] %vm198, 0.0
        %224 = vst.msk [vmem:[#allocation2 + $0xc8] sm:$0xff] %vm198, 0.0
        %225 = vst.msk [vmem:[#allocation2 + $0xd0] sm:$0xff] %vm198, 0.0
        %226 = vst.msk [vmem:[#allocation2 + $0xd8] sm:$0xff] %vm198, 0.0
        %227 = vst.msk [vmem:[#allocation2 + $0xe0] sm:$0xff] %vm198, 0.0
        %228 = vst.msk [vmem:[#allocation2 + $0xe8] sm:$0xff] %vm198, 0.0
        %229 = vst.msk [vmem:[#allocation2 + $0xf0] sm:$0xff] %vm198, 0.0
        %230 = vst.msk [vmem:[#allocation2 + $0xf8] sm:$0xff] %vm198, 0.0
      $region32: #{generator_resnet_forward.10} parent=27 // pred_fallthru
        _
      %v231 = vld [vmem:[#allocation2] sm:$0xff]
      %v232 = vld [vmem:[#allocation2 + $0x8] sm:$0xff]
      %v233 = vld [vmem:[#allocation2 + $0x10] sm:$0xff]
      %v234 = vld [vmem:[#allocation2 + $0x18] sm:$0xff]
      %v235 = vld [vmem:[#allocation2 + $0x20] sm:$0xff]
      %v236 = vld [vmem:[#allocation2 + $0x28] sm:$0xff]
      %v237 = vld [vmem:[#allocation2 + $0x30] sm:$0xff]
      %v238 = vld [vmem:[#allocation2 + $0x38] sm:$0xff]
      %v239 = vld [vmem:[#allocation2 + $0x40] sm:$0xff]
      %v240 = vld [vmem:[#allocation2 + $0x48] sm:$0xff]
      %v241 = vld [vmem:[#allocation2 + $0x50] sm:$0xff]
      %v242 = vld [vmem:[#allocation2 + $0x58] sm:$0xff]
      %v243 = vld [vmem:[#allocation2 + $0x60] sm:$0xff]
      %v244 = vld [vmem:[#allocation2 + $0x68] sm:$0xff]
      %v245 = vld [vmem:[#allocation2 + $0x70] sm:$0xff]
      %v246 = vld [vmem:[#allocation2 + $0x78] sm:$0xff]
      %v247 = vld [vmem:[#allocation2 + $0x80] sm:$0xff]
      %v248 = vld [vmem:[#allocation2 + $0x88] sm:$0xff]
      %v249 = vld [vmem:[#allocation2 + $0x90] sm:$0xff]
      %v250 = vld [vmem:[#allocation2 + $0x98] sm:$0xff]
      %v251 = vld [vmem:[#allocation2 + $0xa0] sm:$0xff]
      %v252 = vld [vmem:[#allocation2 + $0xa8] sm:$0xff]
      %v253 = vld [vmem:[#allocation2 + $0xb0] sm:$0xff]
      %v254 = vld [vmem:[#allocation2 + $0xb8] sm:$0xff]
      %v255 = vld [vmem:[#allocation2 + $0xc0] sm:$0xff]
      %v256 = vld [vmem:[#allocation2 + $0xc8] sm:$0xff]
      %v257 = vld [vmem:[#allocation2 + $0xd0] sm:$0xff]
      %v258 = vld [vmem:[#allocation2 + $0xd8] sm:$0xff]
      %v259 = vld [vmem:[#allocation2 + $0xe0] sm:$0xff]
      %v260 = vld [vmem:[#allocation2 + $0xe8] sm:$0xff]
      %v261 = vld [vmem:[#allocation2 + $0xf0] sm:$0xff]
      %v262 = vld [vmem:[#allocation2 + $0xf8] sm:$0xff]
      %v263 = vld [vmem:[%s181] sm:$0xff]
      %v264 = vld [vmem:[%s181 + $0x8] sm:$0xff]
      %v265 = vld [vmem:[%s181 + $0x10] sm:$0xff]
      %v266 = vld [vmem:[%s181 + $0x18] sm:$0xff]
      %v267 = vld [vmem:[%s181 + $0x20] sm:$0xff]
      %v268 = vld [vmem:[%s181 + $0x28] sm:$0xff]
      %v269 = vld [vmem:[%s181 + $0x30] sm:$0xff]
      %v270 = vld [vmem:[%s181 + $0x38] sm:$0xff]
      %v271 = vld [vmem:[%s181 + $0x40] sm:$0xff]
      %v272 = vld [vmem:[%s181 + $0x48] sm:$0xff]
      %v273 = vld [vmem:[%s181 + $0x50] sm:$0xff]
      %v274 = vld [vmem:[%s181 + $0x58] sm:$0xff]
      %v275 = vld [vmem:[%s181 + $0x60] sm:$0xff]
      %v276 = vld [vmem:[%s181 + $0x68] sm:$0xff]
      %v277 = vld [vmem:[%s181 + $0x70] sm:$0xff]
      %v278 = vld [vmem:[%s181 + $0x78] sm:$0xff]
      %v279 = vld [vmem:[%s181 + $0x80] sm:$0xff]
      %v280 = vld [vmem:[%s181 + $0x88] sm:$0xff]
      %v281 = vld [vmem:[%s181 + $0x90] sm:$0xff]
      %v282 = vld [vmem:[%s181 + $0x98] sm:$0xff]
      %v283 = vld [vmem:[%s181 + $0xa0] sm:$0xff]
      %v284 = vld [vmem:[%s181 + $0xa8] sm:$0xff]
      %v285 = vld [vmem:[%s181 + $0xb0] sm:$0xff]
      %v286 = vld [vmem:[%s181 + $0xb8] sm:$0xff]
      %v287 = vld [vmem:[%s181 + $0xc0] sm:$0xff]
      %v288 = vld [vmem:[%s181 + $0xc8] sm:$0xff]
      %v289 = vld [vmem:[%s181 + $0xd0] sm:$0xff]
      %v290 = vld [vmem:[%s181 + $0xd8] sm:$0xff]
      %v291 = vld [vmem:[%s181 + $0xe0] sm:$0xff]
      %v292 = vld [vmem:[%s181 + $0xe8] sm:$0xff]
      %v293 = vld [vmem:[%s181 + $0xf0] sm:$0xff]
      %v294 = vld [vmem:[%s181 + $0xf8] sm:$0xff]
      %v295 = vld [vmem:[%s187] sm:$0xf]
      %v296 = vld [vmem:[%s187 + $0x4] sm:$0xf]
      %v297 = vld [vmem:[%s187 + $0x8] sm:$0xf]
      %v298 = vld [vmem:[%s187 + $0xc] sm:$0xf]
      %v299 = vld [vmem:[%s187 + $0x10] sm:$0xf]
      %v300 = vld [vmem:[%s187 + $0x14] sm:$0xf]
      %v301 = vld [vmem:[%s187 + $0x18] sm:$0xf]
      %v302 = vld [vmem:[%s187 + $0x1c] sm:$0xf]
      %v303 = vld [vmem:[%s187 + $0x20] sm:$0xf]
      %v304 = vld [vmem:[%s187 + $0x24] sm:$0xf]
      %v305 = vld [vmem:[%s187 + $0x28] sm:$0xf]
      %v306 = vld [vmem:[%s187 + $0x2c] sm:$0xf]
      %v307 = vld [vmem:[%s187 + $0x30] sm:$0xf]
      %v308 = vld [vmem:[%s187 + $0x34] sm:$0xf]
      %v309 = vld [vmem:[%s187 + $0x38] sm:$0xf]
      %v310 = vld [vmem:[%s187 + $0x3c] sm:$0xf]
      %v311 = vld [vmem:[%s187 + $0x40] sm:$0xf]
      %v312 = vld [vmem:[%s187 + $0x44] sm:$0xf]
      %v313 = vld [vmem:[%s187 + $0x48] sm:$0xf]
      %v314 = vld [vmem:[%s187 + $0x4c] sm:$0xf]
      %v315 = vld [vmem:[%s187 + $0x50] sm:$0xf]
      %v316 = vld [vmem:[%s187 + $0x54] sm:$0xf]
      %v317 = vld [vmem:[%s187 + $0x58] sm:$0xf]
      %v318 = vld [vmem:[%s187 + $0x5c] sm:$0xf]
      %v319 = vld [vmem:[%s187 + $0x60] sm:$0xf]
      %v320 = vld [vmem:[%s187 + $0x64] sm:$0xf]
      %v321 = vld [vmem:[%s187 + $0x68] sm:$0xf]
      %v322 = vld [vmem:[%s187 + $0x6c] sm:$0xf]
      %v323 = vld [vmem:[%s187 + $0x70] sm:$0xf]
      %v324 = vld [vmem:[%s187 + $0x74] sm:$0xf]
      %v325 = vld [vmem:[%s187 + $0x78] sm:$0xf]
      %v326 = vld [vmem:[%s187 + $0x7c] sm:$0xf]
      %v359 = vunpack.c.l.b16 %v263
      %v360 = vunpack.c.h.b16 %v263
      %v361 = vunpack.c.l.b16 %v264
      %v362 = vunpack.c.h.b16 %v264
      %v363 = vunpack.c.l.b16 %v265
      %v364 = vunpack.c.h.b16 %v265
      %v365 = vunpack.c.l.b16 %v266
      %v366 = vunpack.c.h.b16 %v266
      %v367 = vunpack.c.l.b16 %v267
      %v368 = vunpack.c.h.b16 %v267
      %v369 = vunpack.c.l.b16 %v268
      %v370 = vunpack.c.h.b16 %v268
      %v371 = vunpack.c.l.b16 %v269
      %v372 = vunpack.c.h.b16 %v269
      %v373 = vunpack.c.l.b16 %v270
      %v374 = vunpack.c.h.b16 %v270
      %v375 = vunpack.c.l.b16 %v271
      %v376 = vunpack.c.h.b16 %v271
      %v377 = vunpack.c.l.b16 %v272
      %v378 = vunpack.c.h.b16 %v272
      %v379 = vunpack.c.l.b16 %v273
      %v380 = vunpack.c.h.b16 %v273
      %v381 = vunpack.c.l.b16 %v274
      %v382 = vunpack.c.h.b16 %v274
      %v383 = vunpack.c.l.b16 %v275
      %v384 = vunpack.c.h.b16 %v275
      %v385 = vunpack.c.l.b16 %v276
      %v386 = vunpack.c.h.b16 %v276
      %v387 = vunpack.c.l.b16 %v277
      %v388 = vunpack.c.h.b16 %v277
      %v389 = vunpack.c.l.b16 %v278
      %v390 = vunpack.c.h.b16 %v278
      %v391 = vunpack.c.l.b16 %v279
      %v392 = vunpack.c.h.b16 %v279
      %v393 = vunpack.c.l.b16 %v280
      %v394 = vunpack.c.h.b16 %v280
      %v395 = vunpack.c.l.b16 %v281
      %v396 = vunpack.c.h.b16 %v281
      %v397 = vunpack.c.l.b16 %v282
      %v398 = vunpack.c.h.b16 %v282
      %v399 = vunpack.c.l.b16 %v283
      %v400 = vunpack.c.h.b16 %v283
      %v401 = vunpack.c.l.b16 %v284
      %v402 = vunpack.c.h.b16 %v284
      %v403 = vunpack.c.l.b16 %v285
      %v404 = vunpack.c.h.b16 %v285
      %v405 = vunpack.c.l.b16 %v286
      %v406 = vunpack.c.h.b16 %v286
      %v407 = vunpack.c.l.b16 %v287
      %v408 = vunpack.c.h.b16 %v287
      %v409 = vunpack.c.l.b16 %v288
      %v410 = vunpack.c.h.b16 %v288
      %v411 = vunpack.c.l.b16 %v289
      %v412 = vunpack.c.h.b16 %v289
      %v413 = vunpack.c.l.b16 %v290
      %v414 = vunpack.c.h.b16 %v290
      %v415 = vunpack.c.l.b16 %v291
      %v416 = vunpack.c.h.b16 %v291
      %v417 = vunpack.c.l.b16 %v292
      %v418 = vunpack.c.h.b16 %v292
      %v419 = vunpack.c.l.b16 %v293
      %v420 = vunpack.c.h.b16 %v293
      %v421 = vunpack.c.l.b16 %v294
      %v422 = vunpack.c.h.b16 %v294
      %v423 = vpack.c.b16 %v361, %v359
      %v424 = vpack.c.b16 %v362, %v360
      %v425 = vpack.c.b16 %v365, %v363
      %v426 = vpack.c.b16 %v366, %v364
      %v427 = vpack.c.b16 %v369, %v367
      %v428 = vpack.c.b16 %v370, %v368
      %v429 = vpack.c.b16 %v373, %v371
      %v430 = vpack.c.b16 %v374, %v372
      %v431 = vpack.c.b16 %v377, %v375
      %v432 = vpack.c.b16 %v378, %v376
      %v433 = vpack.c.b16 %v381, %v379
      %v434 = vpack.c.b16 %v382, %v380
      %v435 = vpack.c.b16 %v385, %v383
      %v436 = vpack.c.b16 %v386, %v384
      %v437 = vpack.c.b16 %v389, %v387
      %v438 = vpack.c.b16 %v390, %v388
      %v439 = vpack.c.b16 %v393, %v391
      %v440 = vpack.c.b16 %v394, %v392
      %v441 = vpack.c.b16 %v397, %v395
      %v442 = vpack.c.b16 %v398, %v396
      %v443 = vpack.c.b16 %v401, %v399
      %v444 = vpack.c.b16 %v402, %v400
      %v445 = vpack.c.b16 %v405, %v403
      %v446 = vpack.c.b16 %v406, %v404
      %v447 = vpack.c.b16 %v409, %v407
      %v448 = vpack.c.b16 %v410, %v408
      %v449 = vpack.c.b16 %v413, %v411
      %v450 = vpack.c.b16 %v414, %v412
      %v451 = vpack.c.b16 %v417, %v415
      %v452 = vpack.c.b16 %v418, %v416
      %v453 = vpack.c.b16 %v421, %v419
      %v454 = vpack.c.b16 %v422, %v420
      %v519 = vunpack.c.l.b16 %v295
      %v520 = vunpack.c.l.b16 %v296
      %v521 = vunpack.c.l.b16 %v297
      %v522 = vunpack.c.l.b16 %v298
      %v523 = vunpack.c.l.b16 %v299
      %v524 = vunpack.c.l.b16 %v300
      %v525 = vunpack.c.l.b16 %v301
      %v526 = vunpack.c.l.b16 %v302
      %v527 = vunpack.c.l.b16 %v303
      %v528 = vunpack.c.l.b16 %v304
      %v529 = vunpack.c.l.b16 %v305
      %v530 = vunpack.c.l.b16 %v306
      %v531 = vunpack.c.l.b16 %v307
      %v532 = vunpack.c.l.b16 %v308
      %v533 = vunpack.c.l.b16 %v309
      %v534 = vunpack.c.l.b16 %v310
      %v535 = vunpack.c.l.b16 %v311
      %v536 = vunpack.c.l.b16 %v312
      %v537 = vunpack.c.l.b16 %v313
      %v538 = vunpack.c.l.b16 %v314
      %v539 = vunpack.c.l.b16 %v315
      %v540 = vunpack.c.l.b16 %v316
      %v541 = vunpack.c.l.b16 %v317
      %v542 = vunpack.c.l.b16 %v318
      %v543 = vunpack.c.l.b16 %v319
      %v544 = vunpack.c.l.b16 %v320
      %v545 = vunpack.c.l.b16 %v321
      %v546 = vunpack.c.l.b16 %v322
      %v547 = vunpack.c.l.b16 %v323
      %v548 = vunpack.c.l.b16 %v324
      %v549 = vunpack.c.l.b16 %v325
      %v550 = vunpack.c.l.b16 %v326
      %v551 = vpack.c.b16 %v520, %v519
      %v552 = vpack.c.b16 %v522, %v521
      %v553 = vpack.c.b16 %v524, %v523
      %v554 = vpack.c.b16 %v526, %v525
      %v555 = vpack.c.b16 %v528, %v527
      %v556 = vpack.c.b16 %v530, %v529
      %v557 = vpack.c.b16 %v532, %v531
      %v558 = vpack.c.b16 %v534, %v533
      %v559 = vpack.c.b16 %v536, %v535
      %v560 = vpack.c.b16 %v538, %v537
      %v561 = vpack.c.b16 %v540, %v539
      %v562 = vpack.c.b16 %v542, %v541
      %v563 = vpack.c.b16 %v544, %v543
      %v564 = vpack.c.b16 %v546, %v545
      %v565 = vpack.c.b16 %v548, %v547
      %v566 = vpack.c.b16 %v550, %v549
      %583 = vmatpush.bf16.msra.mxu0 %v558
      %584 = vmatpush.bf16.msra.mxu0 %v557
      %585 = vmatpush.bf16.msra.mxu0 %v556
      %586 = vmatpush.bf16.msra.mxu0 %v555
      %587 = vmatpush.bf16.msra.mxu0 %v554
      %588 = vmatpush.bf16.msra.mxu0 %v553
      %589 = vmatpush.bf16.msra.mxu0 %v552
      %590 = vmatpush.bf16.msra.mxu0 %v551
      %591 = vmatmul.bf16.gmra.mxu0 %v423
      %v592 = vpop.f32.mrf.mxu0
      %v593 = vadd.f32 0.0, %v592
      %v594 = vpop.f32.mrf.mxu0
      %v595 = vadd.f32 0.0, %v594
      %596 = vmatmul.bf16.gmra.mxu0 %v425
      %v597 = vpop.f32.mrf.mxu0
      %v598 = vadd.f32 0.0, %v597
      %v599 = vpop.f32.mrf.mxu0
      %v600 = vadd.f32 0.0, %v599
      %601 = vmatmul.bf16.gmra.mxu0 %v427
      %v602 = vpop.f32.mrf.mxu0
      %v603 = vadd.f32 0.0, %v602
      %v604 = vpop.f32.mrf.mxu0
      %v605 = vadd.f32 0.0, %v604
      %606 = vmatmul.bf16.gmra.mxu0 %v429
      %v607 = vpop.f32.mrf.mxu0
      %v608 = vadd.f32 0.0, %v607
      %v609 = vpop.f32.mrf.mxu0
      %v610 = vadd.f32 0.0, %v609
      %611 = vmatmul.bf16.gmra.mxu0 %v431
      %v612 = vpop.f32.mrf.mxu0
      %v613 = vadd.f32 0.0, %v612
      %v614 = vpop.f32.mrf.mxu0
      %v615 = vadd.f32 0.0, %v614
      %616 = vmatmul.bf16.gmra.mxu0 %v433
      %v617 = vpop.f32.mrf.mxu0
      %v618 = vadd.f32 0.0, %v617
      %v619 = vpop.f32.mrf.mxu0
      %v620 = vadd.f32 0.0, %v619
      %621 = vmatmul.bf16.gmra.mxu0 %v435
      %v622 = vpop.f32.mrf.mxu0
      %v623 = vadd.f32 0.0, %v622
      %v624 = vpop.f32.mrf.mxu0
      %v625 = vadd.f32 0.0, %v624
      %626 = vmatmul.bf16.gmra.mxu0 %v437
      %v627 = vpop.f32.mrf.mxu0
      %v628 = vadd.f32 0.0, %v627
      %v629 = vpop.f32.mrf.mxu0
      %v630 = vadd.f32 0.0, %v629
      %631 = vmatmul.bf16.gmra.mxu0 %v439
      %v632 = vpop.f32.mrf.mxu0
      %v633 = vadd.f32 0.0, %v632
      %v634 = vpop.f32.mrf.mxu0
      %v635 = vadd.f32 0.0, %v634
      %636 = vmatmul.bf16.gmra.mxu0 %v441
      %v637 = vpop.f32.mrf.mxu0
      %v638 = vadd.f32 0.0, %v637
      %v639 = vpop.f32.mrf.mxu0
      %v640 = vadd.f32 0.0, %v639
      %641 = vmatmul.bf16.gmra.mxu0 %v443
      %v642 = vpop.f32.mrf.mxu0
      %v643 = vadd.f32 0.0, %v642
      %v644 = vpop.f32.mrf.mxu0
      %v645 = vadd.f32 0.0, %v644
      %646 = vmatmul.bf16.gmra.mxu0 %v445
      %v647 = vpop.f32.mrf.mxu0
      %v648 = vadd.f32 0.0, %v647
      %v649 = vpop.f32.mrf.mxu0
      %v650 = vadd.f32 0.0, %v649
      %651 = vmatmul.bf16.gmra.mxu0 %v447
      %v652 = vpop.f32.mrf.mxu0
      %v653 = vadd.f32 0.0, %v652
      %v654 = vpop.f32.mrf.mxu0
      %v655 = vadd.f32 0.0, %v654
      %656 = vmatmul.bf16.gmra.mxu0 %v449
      %v657 = vpop.f32.mrf.mxu0
      %v658 = vadd.f32 0.0, %v657
      %v659 = vpop.f32.mrf.mxu0
      %v660 = vadd.f32 0.0, %v659
      %661 = vmatmul.bf16.gmra.mxu0 %v451
      %v662 = vpop.f32.mrf.mxu0
      %v663 = vadd.f32 0.0, %v662
      %v664 = vpop.f32.mrf.mxu0
      %v665 = vadd.f32 0.0, %v664
      %666 = vmatmul.bf16.gmra.mxu0 %v453
      %v667 = vpop.f32.mrf.mxu0
      %v668 = vadd.f32 0.0, %v667
      %v669 = vpop.f32.mrf.mxu0
      %v670 = vadd.f32 0.0, %v669
      %671 = vdwg.mxu0
      %672 = vmatpush.bf16.msra.mxu0 %v566
      %673 = vmatpush.bf16.msra.mxu0 %v565
      %674 = vmatpush.bf16.msra.mxu0 %v564
      %675 = vmatpush.bf16.msra.mxu0 %v563
      %676 = vmatpush.bf16.msra.mxu0 %v562
      %677 = vmatpush.bf16.msra.mxu0 %v561
      %678 = vmatpush.bf16.msra.mxu0 %v560
      %679 = vmatpush.bf16.msra.mxu0 %v559
      %680 = vmatmul.bf16.gmra.mxu0 %v424
      %v681 = vpop.f32.mrf.mxu0
      %v682 = vadd.f32 %v593, %v681
      %v683 = vpop.f32.mrf.mxu0
      %v684 = vadd.f32 %v595, %v683
      %685 = vmatmul.bf16.gmra.mxu0 %v426
      %v686 = vpop.f32.mrf.mxu0
      %v687 = vadd.f32 %v598, %v686
      %v688 = vpop.f32.mrf.mxu0
      %v689 = vadd.f32 %v600, %v688
      %690 = vmatmul.bf16.gmra.mxu0 %v428
      %v691 = vpop.f32.mrf.mxu0
      %v692 = vadd.f32 %v603, %v691
      %v693 = vpop.f32.mrf.mxu0
      %v694 = vadd.f32 %v605, %v693
      %695 = vmatmul.bf16.gmra.mxu0 %v430
      %v696 = vpop.f32.mrf.mxu0
      %v697 = vadd.f32 %v608, %v696
      %v698 = vpop.f32.mrf.mxu0
      %v699 = vadd.f32 %v610, %v698
      %700 = vmatmul.bf16.gmra.mxu0 %v432
      %v701 = vpop.f32.mrf.mxu0
      %v702 = vadd.f32 %v613, %v701
      %v703 = vpop.f32.mrf.mxu0
      %v704 = vadd.f32 %v615, %v703
      %705 = vmatmul.bf16.gmra.mxu0 %v434
      %v706 = vpop.f32.mrf.mxu0
      %v707 = vadd.f32 %v618, %v706
      %v708 = vpop.f32.mrf.mxu0
      %v709 = vadd.f32 %v620, %v708
      %710 = vmatmul.bf16.gmra.mxu0 %v436
      %v711 = vpop.f32.mrf.mxu0
      %v712 = vadd.f32 %v623, %v711
      %v713 = vpop.f32.mrf.mxu0
      %v714 = vadd.f32 %v625, %v713
      %715 = vmatmul.bf16.gmra.mxu0 %v438
      %v716 = vpop.f32.mrf.mxu0
      %v717 = vadd.f32 %v628, %v716
      %v718 = vpop.f32.mrf.mxu0
      %v719 = vadd.f32 %v630, %v718
      %720 = vmatmul.bf16.gmra.mxu0 %v440
      %v721 = vpop.f32.mrf.mxu0
      %v722 = vadd.f32 %v633, %v721
      %v723 = vpop.f32.mrf.mxu0
      %v724 = vadd.f32 %v635, %v723
      %725 = vmatmul.bf16.gmra.mxu0 %v442
      %v726 = vpop.f32.mrf.mxu0
      %v727 = vadd.f32 %v638, %v726
      %v728 = vpop.f32.mrf.mxu0
      %v729 = vadd.f32 %v640, %v728
      %730 = vmatmul.bf16.gmra.mxu0 %v444
      %v731 = vpop.f32.mrf.mxu0
      %v732 = vadd.f32 %v643, %v731
      %v733 = vpop.f32.mrf.mxu0
      %v734 = vadd.f32 %v645, %v733
      %735 = vmatmul.bf16.gmra.mxu0 %v446
      %v736 = vpop.f32.mrf.mxu0
      %v737 = vadd.f32 %v648, %v736
      %v738 = vpop.f32.mrf.mxu0
      %v739 = vadd.f32 %v650, %v738
      %740 = vmatmul.bf16.gmra.mxu0 %v448
      %v741 = vpop.f32.mrf.mxu0
      %v742 = vadd.f32 %v653, %v741
      %v743 = vpop.f32.mrf.mxu0
      %v744 = vadd.f32 %v655, %v743
      %745 = vmatmul.bf16.gmra.mxu0 %v450
      %v746 = vpop.f32.mrf.mxu0
      %v747 = vadd.f32 %v658, %v746
      %v748 = vpop.f32.mrf.mxu0
      %v749 = vadd.f32 %v660, %v748
      %750 = vmatmul.bf16.gmra.mxu0 %v452
      %v751 = vpop.f32.mrf.mxu0
      %v752 = vadd.f32 %v663, %v751
      %v753 = vpop.f32.mrf.mxu0
      %v754 = vadd.f32 %v665, %v753
      %755 = vmatmul.bf16.gmra.mxu0 %v454
      %v756 = vpop.f32.mrf.mxu0
      %v757 = vadd.f32 %v668, %v756
      %v758 = vpop.f32.mrf.mxu0
      %v759 = vadd.f32 %v670, %v758
      %760 = vdwg.mxu0
      %v761 = vadd.f32 %v231, %v682
      %v762 = vadd.f32 %v232, %v684
      %v763 = vadd.f32 %v233, %v687
      %v764 = vadd.f32 %v234, %v689
      %v765 = vadd.f32 %v235, %v692
      %v766 = vadd.f32 %v236, %v694
      %v767 = vadd.f32 %v237, %v697
      %v768 = vadd.f32 %v238, %v699
      %v769 = vadd.f32 %v239, %v702
      %v770 = vadd.f32 %v240, %v704
      %v771 = vadd.f32 %v241, %v707
      %v772 = vadd.f32 %v242, %v709
      %v773 = vadd.f32 %v243, %v712
      %v774 = vadd.f32 %v244, %v714
      %v775 = vadd.f32 %v245, %v717
      %v776 = vadd.f32 %v246, %v719
      %v777 = vadd.f32 %v247, %v722
      %v778 = vadd.f32 %v248, %v724
      %v779 = vadd.f32 %v249, %v727
      %v780 = vadd.f32 %v250, %v729
      %v781 = vadd.f32 %v251, %v732
      %v782 = vadd.f32 %v252, %v734
      %v783 = vadd.f32 %v253, %v737
      %v784 = vadd.f32 %v254, %v739
      %v785 = vadd.f32 %v255, %v742
      %v786 = vadd.f32 %v256, %v744
      %v787 = vadd.f32 %v257, %v747
      %v788 = vadd.f32 %v258, %v749
      %v789 = vadd.f32 %v259, %v752
      %v790 = vadd.f32 %v260, %v754
      %v791 = vadd.f32 %v261, %v757
      %v792 = vadd.f32 %v262, %v759
      %vm793 = vcmask 523264
      %794 = vst.msk [vmem:[#allocation2] sm:$0xff] %vm793, %v761
      %795 = vst.msk [vmem:[#allocation2 + $0x8] sm:$0xff] %vm793, %v762
      %796 = vst.msk [vmem:[#allocation2 + $0x10] sm:$0xff] %vm793, %v763
      %797 = vst.msk [vmem:[#allocation2 + $0x18] sm:$0xff] %vm793, %v764
      %798 = vst.msk [vmem:[#allocation2 + $0x20] sm:$0xff] %vm793, %v765
      %799 = vst.msk [vmem:[#allocation2 + $0x28] sm:$0xff] %vm793, %v766
      %800 = vst.msk [vmem:[#allocation2 + $0x30] sm:$0xff] %vm793, %v767
      %801 = vst.msk [vmem:[#allocation2 + $0x38] sm:$0xff] %vm793, %v768
      %802 = vst.msk [vmem:[#allocation2 + $0x40] sm:$0xff] %vm793, %v769
      %803 = vst.msk [vmem:[#allocation2 + $0x48] sm:$0xff] %vm793, %v770
      %804 = vst.msk [vmem:[#allocation2 + $0x50] sm:$0xff] %vm793, %v771
      %805 = vst.msk [vmem:[#allocation2 + $0x58] sm:$0xff] %vm793, %v772
      %806 = vst.msk [vmem:[#allocation2 + $0x60] sm:$0xff] %vm793, %v773
      %807 = vst.msk [vmem:[#allocation2 + $0x68] sm:$0xff] %vm793, %v774
      %808 = vst.msk [vmem:[#allocation2 + $0x70] sm:$0xff] %vm793, %v775
      %809 = vst.msk [vmem:[#allocation2 + $0x78] sm:$0xff] %vm793, %v776
      %810 = vst.msk [vmem:[#allocation2 + $0x80] sm:$0xff] %vm793, %v777
      %811 = vst.msk [vmem:[#allocation2 + $0x88] sm:$0xff] %vm793, %v778
      %812 = vst.msk [vmem:[#allocation2 + $0x90] sm:$0xff] %vm793, %v779
      %813 = vst.msk [vmem:[#allocation2 + $0x98] sm:$0xff] %vm793, %v780
      %814 = vst.msk [vmem:[#allocation2 + $0xa0] sm:$0xff] %vm793, %v781
      %815 = vst.msk [vmem:[#allocation2 + $0xa8] sm:$0xff] %vm793, %v782
      %816 = vst.msk [vmem:[#allocation2 + $0xb0] sm:$0xff] %vm793, %v783
      %817 = vst.msk [vmem:[#allocation2 + $0xb8] sm:$0xff] %vm793, %v784
      %818 = vst.msk [vmem:[#allocation2 + $0xc0] sm:$0xff] %vm793, %v785
      %819 = vst.msk [vmem:[#allocation2 + $0xc8] sm:$0xff] %vm793, %v786
      %820 = vst.msk [vmem:[#allocation2 + $0xd0] sm:$0xff] %vm793, %v787
      %821 = vst.msk [vmem:[#allocation2 + $0xd8] sm:$0xff] %vm793, %v788
      %822 = vst.msk [vmem:[#allocation2 + $0xe0] sm:$0xff] %vm793, %v789
      %823 = vst.msk [vmem:[#allocation2 + $0xe8] sm:$0xff] %vm793, %v790
      %824 = vst.msk [vmem:[#allocation2 + $0xf0] sm:$0xff] %vm793, %v791
      %825 = vst.msk [vmem:[#allocation2 + $0xf8] sm:$0xff] %vm793, %v792
      // Predicated region
      $region33: #{generator_resnet_forward.10} parent=27 // pred_check
        %p826 = pneg %p194
      $region34: #{generator_resnet_forward.10} parent=27 // pred_check_branch
        %828 = sbr.rel (%p826) target = $region36
      $region35: #{generator_resnet_forward.10} parent=27 // pred_region
        %v829 = vld [vmem:[#allocation2] sm:$0xff]
        %v830 = vld [vmem:[#allocation2 + $0x8] sm:$0xff]
        %v831 = vld [vmem:[#allocation2 + $0x10] sm:$0xff]
        %v832 = vld [vmem:[#allocation2 + $0x18] sm:$0xff]
        %v833 = vld [vmem:[#allocation2 + $0x20] sm:$0xff]
        %v834 = vld [vmem:[#allocation2 + $0x28] sm:$0xff]
        %v835 = vld [vmem:[#allocation2 + $0x30] sm:$0xff]
        %v836 = vld [vmem:[#allocation2 + $0x38] sm:$0xff]
        %v837 = vld [vmem:[#allocation2 + $0x40] sm:$0xff]
        %v838 = vld [vmem:[#allocation2 + $0x48] sm:$0xff]
        %v839 = vld [vmem:[#allocation2 + $0x50] sm:$0xff]
        %v840 = vld [vmem:[#allocation2 + $0x58] sm:$0xff]
        %v841 = vld [vmem:[#allocation2 + $0x60] sm:$0xff]
        %v842 = vld [vmem:[#allocation2 + $0x68] sm:$0xff]
        %v843 = vld [vmem:[#allocation2 + $0x70] sm:$0xff]
        %v844 = vld [vmem:[#allocation2 + $0x78] sm:$0xff]
        %v845 = vld [vmem:[#allocation2 + $0x80] sm:$0xff]
        %v846 = vld [vmem:[#allocation2 + $0x88] sm:$0xff]
        %v847 = vld [vmem:[#allocation2 + $0x90] sm:$0xff]
        %v848 = vld [vmem:[#allocation2 + $0x98] sm:$0xff]
        %v849 = vld [vmem:[#allocation2 + $0xa0] sm:$0xff]
        %v850 = vld [vmem:[#allocation2 + $0xa8] sm:$0xff]
        %v851 = vld [vmem:[#allocation2 + $0xb0] sm:$0xff]
        %v852 = vld [vmem:[#allocation2 + $0xb8] sm:$0xff]
        %v853 = vld [vmem:[#allocation2 + $0xc0] sm:$0xff]
        %v854 = vld [vmem:[#allocation2 + $0xc8] sm:$0xff]
        %v855 = vld [vmem:[#allocation2 + $0xd0] sm:$0xff]
        %v856 = vld [vmem:[#allocation2 + $0xd8] sm:$0xff]
        %v857 = vld [vmem:[#allocation2 + $0xe0] sm:$0xff]
        %v858 = vld [vmem:[#allocation2 + $0xe8] sm:$0xff]
        %v859 = vld [vmem:[#allocation2 + $0xf0] sm:$0xff]
        %v860 = vld [vmem:[#allocation2 + $0xf8] sm:$0xff]
        %v861 = vsel %vm793, %v829, 0.0
        %v862 = vsel %vm793, %v830, 0.0
        %v863 = vadd.f32 %v861, %v862
        %v864 = vsel %vm793, %v831, 0.0
        %v865 = vadd.f32 %v863, %v864
        %v866 = vsel %vm793, %v832, 0.0
        %v867 = vadd.f32 %v865, %v866
        %v868 = vsel %vm793, %v833, 0.0
        %v869 = vadd.f32 %v867, %v868
        %v870 = vsel %vm793, %v834, 0.0
        %v871 = vadd.f32 %v869, %v870
        %v872 = vsel %vm793, %v835, 0.0
        %v873 = vadd.f32 %v871, %v872
        %v874 = vsel %vm793, %v836, 0.0
        %v875 = vadd.f32 %v873, %v874
        %v876 = vsel %vm793, %v837, 0.0
        %v877 = vadd.f32 %v875, %v876
        %v878 = vsel %vm793, %v838, 0.0
        %v879 = vadd.f32 %v877, %v878
        %v880 = vsel %vm793, %v839, 0.0
        %v881 = vadd.f32 %v879, %v880
        %v882 = vsel %vm793, %v840, 0.0
        %v883 = vadd.f32 %v881, %v882
        %v884 = vsel %vm793, %v841, 0.0
        %v885 = vadd.f32 %v883, %v884
        %v886 = vsel %vm793, %v842, 0.0
        %v887 = vadd.f32 %v885, %v886
        %v888 = vsel %vm793, %v843, 0.0
        %v889 = vadd.f32 %v887, %v888
        %v890 = vsel %vm793, %v844, 0.0
        %v891 = vadd.f32 %v889, %v890
        %v892 = vsel %vm793, %v845, 0.0
        %v893 = vadd.f32 %v891, %v892
        %v894 = vsel %vm793, %v846, 0.0
        %v895 = vadd.f32 %v893, %v894
        %v896 = vsel %vm793, %v847, 0.0
        %v897 = vadd.f32 %v895, %v896
        %v898 = vsel %vm793, %v848, 0.0
        %v899 = vadd.f32 %v897, %v898
        %v900 = vsel %vm793, %v849, 0.0
        %v901 = vadd.f32 %v899, %v900
        %v902 = vsel %vm793, %v850, 0.0
        %v903 = vadd.f32 %v901, %v902
        %v904 = vsel %vm793, %v851, 0.0
        %v905 = vadd.f32 %v903, %v904
        %v906 = vsel %vm793, %v852, 0.0
        %v907 = vadd.f32 %v905, %v906
        %v908 = vsel %vm793, %v853, 0.0
        %v909 = vadd.f32 %v907, %v908
        %v910 = vsel %vm793, %v854, 0.0
        %v911 = vadd.f32 %v909, %v910
        %v912 = vsel %vm793, %v855, 0.0
        %v913 = vadd.f32 %v911, %v912
        %v914 = vsel %vm793, %v856, 0.0
        %v915 = vadd.f32 %v913, %v914
        %v916 = vsel %vm793, %v857, 0.0
        %v917 = vadd.f32 %v915, %v916
        %v918 = vsel %vm793, %v858, 0.0
        %v919 = vadd.f32 %v917, %v918
        %v920 = vsel %vm793, %v859, 0.0
        %v921 = vadd.f32 %v919, %v920
        %v922 = vsel %vm793, %v860, 0.0
        %v923 = vadd.f32 %v921, %v922
        %v924 = vrot.slane %v923, 4
        %v925 = vadd.f32 %v923, %v924
        %v926 = vrot.slane %v925, 2
        %v927 = vadd.f32 %v925, %v926
        %v928 = vrot.slane %v927, 1
        %v929 = vadd.f32 %v927, %v928
        %v930 = vmul.f32 %v929, 0.00390625
        %v931 = vmul.f32 %v829, %v829
        %v932 = vmul.f32 %v830, %v830
        %v933 = vmul.f32 %v831, %v831
        %v934 = vmul.f32 %v832, %v832
        %v935 = vmul.f32 %v833, %v833
        %v936 = vmul.f32 %v834, %v834
        %v937 = vmul.f32 %v835, %v835
        %v938 = vmul.f32 %v836, %v836
        %v939 = vmul.f32 %v837, %v837
        %v940 = vmul.f32 %v838, %v838
        %v941 = vmul.f32 %v839, %v839
        %v942 = vmul.f32 %v840, %v840
        %v943 = vmul.f32 %v841, %v841
        %v944 = vmul.f32 %v842, %v842
        %v945 = vmul.f32 %v843, %v843
        %v946 = vmul.f32 %v844, %v844
        %v947 = vmul.f32 %v845, %v845
        %v948 = vmul.f32 %v846, %v846
        %v949 = vmul.f32 %v847, %v847
        %v950 = vmul.f32 %v848, %v848
        %v951 = vmul.f32 %v849, %v849
        %v952 = vmul.f32 %v850, %v850
        %v953 = vmul.f32 %v851, %v851
        %v954 = vmul.f32 %v852, %v852
        %v955 = vmul.f32 %v853, %v853
        %v956 = vmul.f32 %v854, %v854
        %v957 = vmul.f32 %v855, %v855
        %v958 = vmul.f32 %v856, %v856
        %v959 = vmul.f32 %v857, %v857
        %v960 = vmul.f32 %v858, %v858
        %v961 = vmul.f32 %v859, %v859
        %v962 = vmul.f32 %v860, %v860
        %v963 = vsel %vm793, %v931, 0.0
        %v964 = vsel %vm793, %v932, 0.0
        %v965 = vadd.f32 %v963, %v964
        %v966 = vsel %vm793, %v933, 0.0
        %v967 = vadd.f32 %v965, %v966
        %v968 = vsel %vm793, %v934, 0.0
        %v969 = vadd.f32 %v967, %v968
        %v970 = vsel %vm793, %v935, 0.0
        %v971 = vadd.f32 %v969, %v970
        %v972 = vsel %vm793, %v936, 0.0
        %v973 = vadd.f32 %v971, %v972
        %v974 = vsel %vm793, %v937, 0.0
        %v975 = vadd.f32 %v973, %v974
        %v976 = vsel %vm793, %v938, 0.0
        %v977 = vadd.f32 %v975, %v976
        %v978 = vsel %vm793, %v939, 0.0
        %v979 = vadd.f32 %v977, %v978
        %v980 = vsel %vm793, %v940, 0.0
        %v981 = vadd.f32 %v979, %v980
        %v982 = vsel %vm793, %v941, 0.0
        %v983 = vadd.f32 %v981, %v982
        %v984 = vsel %vm793, %v942, 0.0
        %v985 = vadd.f32 %v983, %v984
        %v986 = vsel %vm793, %v943, 0.0
        %v987 = vadd.f32 %v985, %v986
        %v988 = vsel %vm793, %v944, 0.0
        %v989 = vadd.f32 %v987, %v988
        %v990 = vsel %vm793, %v945, 0.0
        %v991 = vadd.f32 %v989, %v990
        %v992 = vsel %vm793, %v946, 0.0
        %v993 = vadd.f32 %v991, %v992
        %v994 = vsel %vm793, %v947, 0.0
        %v995 = vadd.f32 %v993, %v994
        %v996 = vsel %vm793, %v948, 0.0
        %v997 = vadd.f32 %v995, %v996
        %v998 = vsel %vm793, %v949, 0.0
        %v999 = vadd.f32 %v997, %v998
        %v1000 = vsel %vm793, %v950, 0.0
        %v1001 = vadd.f32 %v999, %v1000
        %v1002 = vsel %vm793, %v951, 0.0
        %v1003 = vadd.f32 %v1001, %v1002
        %v1004 = vsel %vm793, %v952, 0.0
        %v1005 = vadd.f32 %v1003, %v1004
        %v1006 = vsel %vm793, %v953, 0.0
        %v1007 = vadd.f32 %v1005, %v1006
        %v1008 = vsel %vm793, %v954, 0.0
        %v1009 = vadd.f32 %v1007, %v1008
        %v1010 = vsel %vm793, %v955, 0.0
        %v1011 = vadd.f32 %v1009, %v1010
        %v1012 = vsel %vm793, %v956, 0.0
        %v1013 = vadd.f32 %v1011, %v1012
        %v1014 = vsel %vm793, %v957, 0.0
        %v1015 = vadd.f32 %v1013, %v1014
        %v1016 = vsel %vm793, %v958, 0.0
        %v1017 = vadd.f32 %v1015, %v1016
        %v1018 = vsel %vm793, %v959, 0.0
        %v1019 = vadd.f32 %v1017, %v1018
        %v1020 = vsel %vm793, %v960, 0.0
        %v1021 = vadd.f32 %v1019, %v1020
        %v1022 = vsel %vm793, %v961, 0.0
        %v1023 = vadd.f32 %v1021, %v1022
        %v1024 = vsel %vm793, %v962, 0.0
        %v1025 = vadd.f32 %v1023, %v1024
        %v1026 = vrot.slane %v1025, 4
        %v1027 = vadd.f32 %v1025, %v1026
        %v1028 = vrot.slane %v1027, 2
        %v1029 = vadd.f32 %v1027, %v1028
        %v1030 = vrot.slane %v1029, 1
        %v1031 = vadd.f32 %v1029, %v1030
        %v1032 = vmul.f32 %v1031, 0.00390625
        %v1033 = vmul.f32 %v930, %v930
        %v1034 = vsub.f32 %v1032, %v1033
        %v1035 = vmax.f32 %v1034, 0.0
        %v1036 = vsub.f32 %v829, %v930
        %v1037 = vsub.f32 %v830, %v930
        %v1038 = vsub.f32 %v831, %v930
        %v1039 = vsub.f32 %v832, %v930
        %v1040 = vsub.f32 %v833, %v930
        %v1041 = vsub.f32 %v834, %v930
        %v1042 = vsub.f32 %v835, %v930
        %v1043 = vsub.f32 %v836, %v930
        %v1044 = vsub.f32 %v837, %v930
        %v1045 = vsub.f32 %v838, %v930
        %v1046 = vsub.f32 %v839, %v930
        %v1047 = vsub.f32 %v840, %v930
        %v1048 = vsub.f32 %v841, %v930
        %v1049 = vsub.f32 %v842, %v930
        %v1050 = vsub.f32 %v843, %v930
        %v1051 = vsub.f32 %v844, %v930
        %v1052 = vsub.f32 %v845, %v930
        %v1053 = vsub.f32 %v846, %v930
        %v1054 = vsub.f32 %v847, %v930
        %v1055 = vsub.f32 %v848, %v930
        %v1056 = vsub.f32 %v849, %v930
        %v1057 = vsub.f32 %v850, %v930
        %v1058 = vsub.f32 %v851, %v930
        %v1059 = vsub.f32 %v852, %v930
        %v1060 = vsub.f32 %v853, %v930
        %v1061 = vsub.f32 %v854, %v930
        %v1062 = vsub.f32 %v855, %v930
        %v1063 = vsub.f32 %v856, %v930
        %v1064 = vsub.f32 %v857, %v930
        %v1065 = vsub.f32 %v858, %v930
        %v1066 = vsub.f32 %v859, %v930
        %v1067 = vsub.f32 %v860, %v930
        %v1068 = vadd.f32 %v1035, 1e-05
        %v1069 = vrsqrt.pop %v1068
        %v1070 = vmul.f32 %v1069, %v1068
        %v1071 = vmul.f32 %v1070, %v1069
        %v1072 = vmul.f32 0.5, %v1071
        %v1073 = vsub.f32 1.5, %v1072
        %v1074 = vmul.f32 %v1069, %v1073
        %vm1075 = vweird.f32 %v1068
        %vm1076 = vweird.f32 %v1069
        %vm1077 = vmor %vm1075, %vm1076
        %v1078 = vsel %vm1077, %v1069, %v1074
        %v1079 = vmul.f32 %v1036, %v1078
        %v1080 = vmul.f32 %v1037, %v1078
        %v1081 = vmul.f32 %v1038, %v1078
        %v1082 = vmul.f32 %v1039, %v1078
        %v1083 = vmul.f32 %v1040, %v1078
        %v1084 = vmul.f32 %v1041, %v1078
        %v1085 = vmul.f32 %v1042, %v1078
        %v1086 = vmul.f32 %v1043, %v1078
        %v1087 = vmul.f32 %v1044, %v1078
        %v1088 = vmul.f32 %v1045, %v1078
        %v1089 = vmul.f32 %v1046, %v1078
        %v1090 = vmul.f32 %v1047, %v1078
        %v1091 = vmul.f32 %v1048, %v1078
        %v1092 = vmul.f32 %v1049, %v1078
        %v1093 = vmul.f32 %v1050, %v1078
        %v1094 = vmul.f32 %v1051, %v1078
        %v1095 = vmul.f32 %v1052, %v1078
        %v1096 = vmul.f32 %v1053, %v1078
        %v1097 = vmul.f32 %v1054, %v1078
        %v1098 = vmul.f32 %v1055, %v1078
        %v1099 = vmul.f32 %v1056, %v1078
        %v1100 = vmul.f32 %v1057, %v1078
        %v1101 = vmul.f32 %v1058, %v1078
        %v1102 = vmul.f32 %v1059, %v1078
        %v1103 = vmul.f32 %v1060, %v1078
        %v1104 = vmul.f32 %v1061, %v1078
        %v1105 = vmul.f32 %v1062, %v1078
        %v1106 = vmul.f32 %v1063, %v1078
        %v1107 = vmul.f32 %v1064, %v1078
        %v1108 = vmul.f32 %v1065, %v1078
        %v1109 = vmul.f32 %v1066, %v1078
        %v1110 = vmul.f32 %v1067, %v1078
        %v1111 = vmax.f32 %v1079, 0.0
        %v1112 = vmax.f32 %v1080, 0.0
        %v1113 = vmax.f32 %v1081, 0.0
        %v1114 = vmax.f32 %v1082, 0.0
        %v1115 = vmax.f32 %v1083, 0.0
        %v1116 = vmax.f32 %v1084, 0.0
        %v1117 = vmax.f32 %v1085, 0.0
        %v1118 = vmax.f32 %v1086, 0.0
        %v1119 = vmax.f32 %v1087, 0.0
        %v1120 = vmax.f32 %v1088, 0.0
        %v1121 = vmax.f32 %v1089, 0.0
        %v1122 = vmax.f32 %v1090, 0.0
        %v1123 = vmax.f32 %v1091, 0.0
        %v1124 = vmax.f32 %v1092, 0.0
        %v1125 = vmax.f32 %v1093, 0.0
        %v1126 = vmax.f32 %v1094, 0.0
        %v1127 = vmax.f32 %v1095, 0.0
        %v1128 = vmax.f32 %v1096, 0.0
        %v1129 = vmax.f32 %v1097, 0.0
        %v1130 = vmax.f32 %v1098, 0.0
        %v1131 = vmax.f32 %v1099, 0.0
        %v1132 = vmax.f32 %v1100, 0.0
        %v1133 = vmax.f32 %v1101, 0.0
        %v1134 = vmax.f32 %v1102, 0.0
        %v1135 = vmax.f32 %v1103, 0.0
        %v1136 = vmax.f32 %v1104, 0.0
        %v1137 = vmax.f32 %v1105, 0.0
        %v1138 = vmax.f32 %v1106, 0.0
        %v1139 = vmax.f32 %v1107, 0.0
        %v1140 = vmax.f32 %v1108, 0.0
        %v1141 = vmax.f32 %v1109, 0.0
        %v1142 = vmax.f32 %v1110, 0.0
        %1143 = vst.msk [vmem:[%s193] sm:$0xff] %vm793, %v1111
        %1144 = vst.msk [vmem:[%s193 + $0x8] sm:$0xff] %vm793, %v1112
        %1145 = vst.msk [vmem:[%s193 + $0x10] sm:$0xff] %vm793, %v1113
        %1146 = vst.msk [vmem:[%s193 + $0x18] sm:$0xff] %vm793, %v1114
        %1147 = vst.msk [vmem:[%s193 + $0x20] sm:$0xff] %vm793, %v1115
        %1148 = vst.msk [vmem:[%s193 + $0x28] sm:$0xff] %vm793, %v1116
        %1149 = vst.msk [vmem:[%s193 + $0x30] sm:$0xff] %vm793, %v1117
        %1150 = vst.msk [vmem:[%s193 + $0x38] sm:$0xff] %vm793, %v1118
        %1151 = vst.msk [vmem:[%s193 + $0x40] sm:$0xff] %vm793, %v1119
        %1152 = vst.msk [vmem:[%s193 + $0x48] sm:$0xff] %vm793, %v1120
        %1153 = vst.msk [vmem:[%s193 + $0x50] sm:$0xff] %vm793, %v1121
        %1154 = vst.msk [vmem:[%s193 + $0x58] sm:$0xff] %vm793, %v1122
        %1155 = vst.msk [vmem:[%s193 + $0x60] sm:$0xff] %vm793, %v1123
        %1156 = vst.msk [vmem:[%s193 + $0x68] sm:$0xff] %vm793, %v1124
        %1157 = vst.msk [vmem:[%s193 + $0x70] sm:$0xff] %vm793, %v1125
        %1158 = vst.msk [vmem:[%s193 + $0x78] sm:$0xff] %vm793, %v1126
        %1159 = vst.msk [vmem:[%s193 + $0x80] sm:$0xff] %vm793, %v1127
        %1160 = vst.msk [vmem:[%s193 + $0x88] sm:$0xff] %vm793, %v1128
        %1161 = vst.msk [vmem:[%s193 + $0x90] sm:$0xff] %vm793, %v1129
        %1162 = vst.msk [vmem:[%s193 + $0x98] sm:$0xff] %vm793, %v1130
        %1163 = vst.msk [vmem:[%s193 + $0xa0] sm:$0xff] %vm793, %v1131
        %1164 = vst.msk [vmem:[%s193 + $0xa8] sm:$0xff] %vm793, %v1132
        %1165 = vst.msk [vmem:[%s193 + $0xb0] sm:$0xff] %vm793, %v1133
        %1166 = vst.msk [vmem:[%s193 + $0xb8] sm:$0xff] %vm793, %v1134
        %1167 = vst.msk [vmem:[%s193 + $0xc0] sm:$0xff] %vm793, %v1135
        %1168 = vst.msk [vmem:[%s193 + $0xc8] sm:$0xff] %vm793, %v1136
        %1169 = vst.msk [vmem:[%s193 + $0xd0] sm:$0xff] %vm793, %v1137
        %1170 = vst.msk [vmem:[%s193 + $0xd8] sm:$0xff] %vm793, %v1138
        %1171 = vst.msk [vmem:[%s193 + $0xe0] sm:$0xff] %vm793, %v1139
        %1172 = vst.msk [vmem:[%s193 + $0xe8] sm:$0xff] %vm793, %v1140
        %1173 = vst.msk [vmem:[%s193 + $0xf0] sm:$0xff] %vm793, %v1141
        %1174 = vst.msk [vmem:[%s193 + $0xf8] sm:$0xff] %vm793, %v1142
      $region36: #{generator_resnet_forward.10} parent=27 // pred_fallthru
        _
      %p1175 = scmp.lt.s32.totalorder %s17, 1
      %s1176 = scalar_select %p1175, %s17, 1
      %s1177 = smul.addr %s1176, 32
      %s1178 = smul.addr %s1177, 8
      %s1179 = scalar_lea.vmem %s2, %s1178
      // Predicated region
      $region37: #{generator_resnet_forward.10} parent=27 // pred_check
        %p1180 = pneg %p97
      $region38: #{generator_resnet_forward.10} parent=27 // pred_check_branch
        %1182 = sbr.rel (%p1180) target = $region40
      $region39: #{generator_resnet_forward.10} parent=27 // pred_region
        _
      $region40: #{generator_resnet_forward.10} parent=27 // pred_fallthru
        _
    $region28: #{generator_resnet_forward.10} parent=5 // pred_fallthru
      _
    %p1183 = scmp.le.s32.totalorder 2, %s8
    // Predicated region
    $region41: #{generator_resnet_forward.10} parent=5 // pred_check
      %p1184 = pneg %p1183
    $region42: #{generator_resnet_forward.10} parent=5 // pred_check_branch
      %1186 = sbr.rel (%p1184) target = $region44
    $region43: #{generator_resnet_forward.10} parent=5 // pred_region
      %s1187 = ssub.s32 %s8, 2
      // Predicated region
      $region45: #{generator_resnet_forward.10} parent=43 // pred_check
        %p1188 = pneg %p103
      $region46: #{generator_resnet_forward.10} parent=43 // pred_check_branch
        %1190 = sbr.rel (%p1188) target = $region48
      $region47: #{generator_resnet_forward.10} parent=43 // pred_region
        %p1191 = scmp.lt.s32.totalorder %s19, 1
        %s1192 = scalar_select %p1191, %s19, 1
        %s1193 = smul.addr %s1192, 32
        %s1194 = smul.addr %s1193, 8
        %s1195 = scalar_lea.vmem %s2, %s1194
      $region48: #{generator_resnet_forward.10} parent=43 // pred_fallthru
        _
    $region44: #{generator_resnet_forward.10} parent=5 // pred_fallthru
      _
  $region6: #{generator_resnet_forward.10} parent=0 // loop_footer
    %s12 = sadd.s32 1, %s8
  $region7: #{generator_resnet_forward.10} parent=0 // loop_footer_branch
    %7 = sbr.rel target = $region3
  $region8: #{generator_resnet_forward.10} parent=0 // loop_exit
    _

// kernel: generator_resnet_forward.11
$region0: #{generator_resnet_forward.11}
  #allocation0 [shape = 'u32[]', space=smem, size = 0x4, offset = 0x4, fixed_abs, tag = 'smem constant byte address 0x4 - core index']
  #allocation1 [shape = 'u32[72,128]{1,0:T(1,128)}', space=vmem, size = 0x9000, scoped, tag = 'internal scratch']
  #allocation2 [shape = 'f32[64,128]{1,0:T(8,128)}', space=vmem, size = 0x8000, scoped, tag = 'scratch operand']
  %s0 = inlined_call_operand.vmem [shape: bf16[2,64,640], index: 0, kind: input, shape index: {}]
  %s1 = inlined_call_operand.vmem [shape: bf16[640,128], index: 1, kind: input, shape index: {}]
  %s2 = inlined_call_operand.vmem [shape: f32[2,64,128], index: 2, kind: output, shape index: {}]
  %s3 = sld [smem:[#allocation0]]
  $region49: #{generator_resnet_forward.11} parent=0
    _
  %s5 = ssub.s32 1, %s3
  %s6 = scalar_select 0, %s5, %s3
  loop: start=0, step=1, limit=4
  $region2: #{generator_resnet_forward.11} parent=0 // loop_pre_header
    _
  $region3: #{generator_resnet_forward.11} parent=0 // loop_header
    %s8 = sphi 0, %s12
    %p9 = scmp.ge.s32.totalorder %s8, 4
    %s15 = sphi 0, %s27
    %s16 = sphi 0, %s23
    %s17 = sphi 0, %s15
    %s18 = sphi 0, %s16
    %s19 = sphi 0, %s17
    %s20 = sphi 0, %s18
    %s32 = sphi 0, %s34
    %s35 = sphi 0, %s32
    %s36 = sphi 0, %s35
    %s52 = sphi 0, %s36
    %s58 = sphi 0, %s60
    %s61 = sphi 0, %s58
    %s62 = sphi 0, %s61
    %s78 = sphi 0, %s62
    %s84 = sphi 0, %s86
    %s87 = sphi 0, %s84
    %s88 = sphi 0, %s87
    %s104 = sphi 0, %s88
  $region4: #{generator_resnet_forward.11} parent=0 // loop_header_branch
    %11 = sbr.rel (%p9) target = $region8
  $region5: #{generator_resnet_forward.11} parent=0 // loop_body
    %s13 = ssub.s32 %s8, 1
    %s14 = ssub.s32 %s8, 2
    %s21 = sadd.s32 1, %s16
    %p22 = scmp.ge.s32.totalorder %s21, 1
    %s23 = scalar_select %p22, 0, %s21
    %s24 = sadd.s32 1, %s15
    %s25 = scalar_select %p22, %s24, %s15
    %p26 = scmp.ge.s32.totalorder %s25, 2
    %s27 = scalar_select %p26, 0, %s25
    %s28 = ssub.s32 %s15, %s27
    %s29 = ssub.s32 %s16, %s23
    %s30 = sor.u32 %s28, %s29
    %p31 = scmp.eq.s32.totalorder %s30, 0
    %s33 = sadd.s32 %s32, 1
    %s34 = scalar_select %p31, %s32, %s33
    %p37 = pneg %p31
    %p38 = scmp.eq.s32.totalorder %s8, 1
    %p39 = por %p37, %p38
    %p40 = scmp.ne.s32.totalorder %s32, %s35
    %p41 = scmp.eq.s32.totalorder %s8, 0
    %p42 = por %p40, %p41
    %p43 = scmp.ne.s32.totalorder %s32, %s35
    %p44 = scmp.eq.s32.totalorder %s13, 1
    %p45 = por %p43, %p44
    %p46 = scmp.ne.s32.totalorder %s35, %s36
    %p47 = scmp.eq.s32.totalorder %s13, 0
    %p48 = por %p46, %p47
    %p49 = scmp.ne.s32.totalorder %s35, %s36
    %p50 = scmp.eq.s32.totalorder %s14, 1
    %p51 = por %p49, %p50
    %p53 = scmp.ne.s32.totalorder %s36, %s52
    %p54 = scmp.eq.s32.totalorder %s14, 0
    %p55 = por %p53, %p54
    %s56 = ssub.s32 %s16, %s23
    %p57 = scmp.eq.s32.totalorder %s56, 0
    %s59 = sadd.s32 %s58, 1
    %s60 = scalar_select %p57, %s58, %s59
    %p63 = pneg %p57
    %p64 = scmp.eq.s32.totalorder %s8, 1
    %p65 = por %p63, %p64
    %p66 = scmp.ne.s32.totalorder %s58, %s61
    %p67 = scmp.eq.s32.totalorder %s8, 0
    %p68 = por %p66, %p67
    %p69 = scmp.ne.s32.totalorder %s58, %s61
    %p70 = scmp.eq.s32.totalorder %s13, 1
    %p71 = por %p69, %p70
    %p72 = scmp.ne.s32.totalorder %s61, %s62
    %p73 = scmp.eq.s32.totalorder %s13, 0
    %p74 = por %p72, %p73
    %p75 = scmp.ne.s32.totalorder %s61, %s62
    %p76 = scmp.eq.s32.totalorder %s14, 1
    %p77 = por %p75, %p76
    %p79 = scmp.ne.s32.totalorder %s62, %s78
    %p80 = scmp.eq.s32.totalorder %s14, 0
    %p81 = por %p79, %p80
    %s82 = ssub.s32 %s15, %s27
    %p83 = scmp.eq.s32.totalorder %s82, 0
    %s85 = sadd.s32 %s84, 1
    %s86 = scalar_select %p83, %s84, %s85
    %p89 = pneg %p83
    %p90 = scmp.eq.s32.totalorder %s8, 1
    %p91 = por %p89, %p90
    %p92 = scmp.ne.s32.totalorder %s84, %s87
    %p93 = scmp.eq.s32.totalorder %s8, 0
    %p94 = por %p92, %p93
    %p95 = scmp.ne.s32.totalorder %s84, %s87
    %p96 = scmp.eq.s32.totalorder %s13, 1
    %p97 = por %p95, %p96
    %p98 = scmp.ne.s32.totalorder %s87, %s88
    %p99 = scmp.eq.s32.totalorder %s13, 0
    %p100 = por %p98, %p99
    %p101 = scmp.ne.s32.totalorder %s87, %s88
    %p102 = scmp.eq.s32.totalorder %s14, 1
    %p103 = por %p101, %p102
    %p105 = scmp.ne.s32.totalorder %s88, %s104
    %p106 = scmp.eq.s32.totalorder %s14, 0
    %p107 = por %p105, %p106
    %p108 = scmp.le.s32.totalorder 1, %s8
    %p109 = scmp.lt.s32.totalorder %s8, 3
    %p110 = pnand %p108, %p109
    %p111 = pneg %p110
    // Predicated region
    $region9: #{generator_resnet_forward.11} parent=5 // pred_check
      _
    $region10: #{generator_resnet_forward.11} parent=5 // pred_check_branch
      %113 = sbr.rel (%p110) target = $region12
    $region11: #{generator_resnet_forward.11} parent=5 // pred_region
      %s114 = ssub.s32 %s8, 1
      // Predicated region
      $region13: #{generator_resnet_forward.11} parent=11 // pred_check
        %p115 = pneg %p74
      $region14: #{generator_resnet_forward.11} parent=11 // pred_check_branch
        %117 = sbr.rel (%p115) target = $region16
      $region15: #{generator_resnet_forward.11} parent=11 // pred_region
        %s118 = smul.u32 80, %s18
        %p119 = scmp.lt.s32.totalorder %s118, 79
        %s120 = scalar_select %p119, %s118, 79
        %s121 = smul.addr %s120, 4
        %s122 = scalar_lea.vmem %s1, %s121
        %s123 = smul.u32 80, %s18
      $region16: #{generator_resnet_forward.11} parent=11 // pred_fallthru
        _
    $region12: #{generator_resnet_forward.11} parent=5 // pred_fallthru
      _
    %p124 = scmp.lt.s32.totalorder %s8, 2
    // Predicated region
    $region17: #{generator_resnet_forward.11} parent=5 // pred_check
      %p125 = pneg %p124
    $region18: #{generator_resnet_forward.11} parent=5 // pred_check_branch
      %127 = sbr.rel (%p125) target = $region20
    $region19: #{generator_resnet_forward.11} parent=5 // pred_region
      // Predicated region
      $region21: #{generator_resnet_forward.11} parent=19 // pred_check
        %p128 = pneg %p42
      $region22: #{generator_resnet_forward.11} parent=19 // pred_check_branch
        %130 = sbr.rel (%p128) target = $region24
      $region23: #{generator_resnet_forward.11} parent=19 // pred_region
        %s131 = smul.u32 5, %s16
        %p132 = scmp.lt.s32.totalorder %s15, 1
        %s133 = scalar_select %p132, %s15, 1
        %p134 = scmp.lt.s32.totalorder %s131, 4
        %s135 = scalar_select %p134, %s131, 4
        %s136 = smul.addr %s133, 40
        %s137 = sadd.s32 %s135, %s136
        %s138 = smul.addr %s137, 4
        %s139 = scalar_lea.vmem %s0, %s138
        %s140 = smul.u32 5, %s16
      $region24: #{generator_resnet_forward.11} parent=19 // pred_fallthru
        _
    $region20: #{generator_resnet_forward.11} parent=5 // pred_fallthru
      _
    %p141 = scmp.le.s32.totalorder 1, %s8
    %p142 = scmp.lt.s32.totalorder %s8, 3
    %p143 = pnand %p141, %p142
    %p144 = pneg %p143
    // Predicated region
    $region25: #{generator_resnet_forward.11} parent=5 // pred_check
      _
    $region26: #{generator_resnet_forward.11} parent=5 // pred_check_branch
      %146 = sbr.rel (%p143) target = $region28
    $region27: #{generator_resnet_forward.11} parent=5 // pred_region
      %s147 = ssub.s32 %s8, 1
      %s148 = smul.u32 5, %s18
      %p149 = scmp.lt.s32.totalorder %s17, 1
      %s150 = scalar_select %p149, %s17, 1
      %p151 = scmp.lt.s32.totalorder %s148, 4
      %s152 = scalar_select %p151, %s148, 4
      %s153 = smul.addr %s150, 40
      %s154 = sadd.s32 %s152, %s153
      %s155 = smul.addr %s154, 4
      %s156 = scalar_lea.vmem %s0, %s155
      %p157 = pneg %p48
      %p158 = pneg %p45
      %s159 = smul.u32 80, %s18
      %p160 = scmp.lt.s32.totalorder %s159, 79
      %s161 = scalar_select %p160, %s159, 79
      %s162 = smul.addr %s161, 4
      %s163 = scalar_lea.vmem %s1, %s162
      %p164 = pneg %p74
      %p165 = pneg %p71
      %p166 = pneg %p100
      %p167 = pneg %p97
      %p168 = scmp.lt.s32.totalorder %s17, 1
      %s169 = scalar_select %p168, %s17, 1
      %s170 = smul.addr %s169, 8
      %s171 = smul.addr %s170, 8
      %s172 = scalar_lea.vmem %s2, %s171
      %s173 = smul.u32 5, %s18
      %p174 = scmp.lt.s32.totalorder %s17, 1
      %s175 = scalar_select %p174, %s17, 1
      %p176 = scmp.lt.s32.totalorder %s173, 4
      %s177 = scalar_select %p176, %s173, 4
      %s178 = smul.addr %s175, 40
      %s179 = sadd.s32 %s177, %s178
      %s180 = smul.addr %s179, 4
      %s181 = scalar_lea.vmem %s0, %s180
      %s182 = smul.u32 5, %s18
      %s183 = smul.u32 80, %s18
      %p184 = scmp.lt.s32.totalorder %s183, 79
      %s185 = scalar_select %p184, %s183, 79
      %s186 = smul.addr %s185, 4
      %s187 = scalar_lea.vmem %s1, %s186
      %s188 = smul.u32 80, %s18
      %p189 = scmp.lt.s32.totalorder %s17, 1
      %s190 = scalar_select %p189, %s17, 1
      %s191 = smul.addr %s190, 8
      %s192 = smul.addr %s191, 8
      %s193 = scalar_lea.vmem %s2, %s192
      %p194 = scmp.eq.s32.totalorder %s18, 0
      // Predicated region
      $region29: #{generator_resnet_forward.11} parent=27 // pred_check
        %p195 = pneg %p194
      $region30: #{generator_resnet_forward.11} parent=27 // pred_check_branch
        %197 = sbr.rel (%p195) target = $region32
      $region31: #{generator_resnet_forward.11} parent=27 // pred_region
        %198 = vst [vmem:[#allocation2] sm:$0xff] 0.0
        %199 = vst [vmem:[#allocation2 + $0x8] sm:$0xff] 0.0
        %200 = vst [vmem:[#allocation2 + $0x10] sm:$0xff] 0.0
        %201 = vst [vmem:[#allocation2 + $0x18] sm:$0xff] 0.0
        %202 = vst [vmem:[#allocation2 + $0x20] sm:$0xff] 0.0
        %203 = vst [vmem:[#allocation2 + $0x28] sm:$0xff] 0.0
        %204 = vst [vmem:[#allocation2 + $0x30] sm:$0xff] 0.0
        %205 = vst [vmem:[#allocation2 + $0x38] sm:$0xff] 0.0
      $region32: #{generator_resnet_forward.11} parent=27 // pred_fallthru
        _
      %v206 = vld [vmem:[#allocation2] sm:$0xff]
      %v207 = vld [vmem:[#allocation2 + $0x8] sm:$0xff]
      %v208 = vld [vmem:[#allocation2 + $0x10] sm:$0xff]
      %v209 = vld [vmem:[#allocation2 + $0x18] sm:$0xff]
      %v210 = vld [vmem:[#allocation2 + $0x20] sm:$0xff]
      %v211 = vld [vmem:[#allocation2 + $0x28] sm:$0xff]
      %v212 = vld [vmem:[#allocation2 + $0x30] sm:$0xff]
      %v213 = vld [vmem:[#allocation2 + $0x38] sm:$0xff]
      %v214 = vld [vmem:[%s181] sm:$0xff]
      %v215 = vld [vmem:[%s181 + $0x8] sm:$0xff]
      %v216 = vld [vmem:[%s181 + $0x10] sm:$0xf]
      %v217 = vld [vmem:[%s181 + $0x14] sm:$0xff]
      %v218 = vld [vmem:[%s181 + $0x1c] sm:$0xff]
      %v219 = vld [vmem:[%s181 + $0x24] sm:$0xf]
      %v220 = vld [vmem:[%s181 + $0x28] sm:$0xff]
      %v221 = vld [vmem:[%s181 + $0x30] sm:$0xff]
      %v222 = vld [vmem:[%s181 + $0x38] sm:$0xf]
      %v223 = vld [vmem:[%s181 + $0x3c] sm:$0xff]
      %v224 = vld [vmem:[%s181 + $0x44] sm:$0xff]
      %v225 = vld [vmem:[%s181 + $0x4c] sm:$0xf]
      %v226 = vld [vmem:[%s181 + $0x50] sm:$0xff]
      %v227 = vld [vmem:[%s181 + $0x58] sm:$0xff]
      %v228 = vld [vmem:[%s181 + $0x60] sm:$0xf]
      %v229 = vld [vmem:[%s181 + $0x64] sm:$0xff]
      %v230 = vld [vmem:[%s181 + $0x6c] sm:$0xff]
      %v231 = vld [vmem:[%s181 + $0x74] sm:$0xf]
      %v232 = vld [vmem:[%s181 + $0x78] sm:$0xff]
      %v233 = vld [vmem:[%s181 + $0x80] sm:$0xff]
      %v234 = vld [vmem:[%s181 + $0x88] sm:$0xf]
      %v235 = vld [vmem:[%s181 + $0x8c] sm:$0xff]
      %v236 = vld [vmem:[%s181 + $0x94] sm:$0xff]
      %v237 = vld [vmem:[%s181 + $0x9c] sm:$0xf]
      %v238 = vld [vmem:[%s187] sm:$0xf]
      %v239 = vld [vmem:[%s187 + $0x4] sm:$0xf]
      %v240 = vld [vmem:[%s187 + $0x8] sm:$0xf]
      %v241 = vld [vmem:[%s187 + $0xc] sm:$0xf]
      %v242 = vld [vmem:[%s187 + $0x10] sm:$0xf]
      %v243 = vld [vmem:[%s187 + $0x14] sm:$0xf]
      %v244 = vld [vmem:[%s187 + $0x18] sm:$0xf]
      %v245 = vld [vmem:[%s187 + $0x1c] sm:$0xf]
      %v246 = vld [vmem:[%s187 + $0x20] sm:$0xf]
      %v247 = vld [vmem:[%s187 + $0x24] sm:$0xf]
      %v248 = vld [vmem:[%s187 + $0x28] sm:$0xf]
      %v249 = vld [vmem:[%s187 + $0x2c] sm:$0xf]
      %v250 = vld [vmem:[%s187 + $0x30] sm:$0xf]
      %v251 = vld [vmem:[%s187 + $0x34] sm:$0xf]
      %v252 = vld [vmem:[%s187 + $0x38] sm:$0xf]
      %v253 = vld [vmem:[%s187 + $0x3c] sm:$0xf]
      %v254 = vld [vmem:[%s187 + $0x40] sm:$0xf]
      %v255 = vld [vmem:[%s187 + $0x44] sm:$0xf]
      %v256 = vld [vmem:[%s187 + $0x48] sm:$0xf]
      %v257 = vld [vmem:[%s187 + $0x4c] sm:$0xf]
      %v258 = vld [vmem:[%s187 + $0x50] sm:$0xf]
      %v259 = vld [vmem:[%s187 + $0x54] sm:$0xf]
      %v260 = vld [vmem:[%s187 + $0x58] sm:$0xf]
      %v261 = vld [vmem:[%s187 + $0x5c] sm:$0xf]
      %v262 = vld [vmem:[%s187 + $0x60] sm:$0xf]
      %v263 = vld [vmem:[%s187 + $0x64] sm:$0xf]
      %v264 = vld [vmem:[%s187 + $0x68] sm:$0xf]
      %v265 = vld [vmem:[%s187 + $0x6c] sm:$0xf]
      %v266 = vld [vmem:[%s187 + $0x70] sm:$0xf]
      %v267 = vld [vmem:[%s187 + $0x74] sm:$0xf]
      %v268 = vld [vmem:[%s187 + $0x78] sm:$0xf]
      %v269 = vld [vmem:[%s187 + $0x7c] sm:$0xf]
      %v270 = vld [vmem:[%s187 + $0x80] sm:$0xf]
      %v271 = vld [vmem:[%s187 + $0x84] sm:$0xf]
      %v272 = vld [vmem:[%s187 + $0x88] sm:$0xf]
      %v273 = vld [vmem:[%s187 + $0x8c] sm:$0xf]
      %v274 = vld [vmem:[%s187 + $0x90] sm:$0xf]
      %v275 = vld [vmem:[%s187 + $0x94] sm:$0xf]
      %v276 = vld [vmem:[%s187 + $0x98] sm:$0xf]
      %v277 = vld [vmem:[%s187 + $0x9c] sm:$0xf]
      %v278 = vld [vmem:[%s187 + $0xa0] sm:$0xf]
      %v279 = vld [vmem:[%s187 + $0xa4] sm:$0xf]
      %v280 = vld [vmem:[%s187 + $0xa8] sm:$0xf]
      %v281 = vld [vmem:[%s187 + $0xac] sm:$0xf]
      %v282 = vld [vmem:[%s187 + $0xb0] sm:$0xf]
      %v283 = vld [vmem:[%s187 + $0xb4] sm:$0xf]
      %v284 = vld [vmem:[%s187 + $0xb8] sm:$0xf]
      %v285 = vld [vmem:[%s187 + $0xbc] sm:$0xf]
      %v286 = vld [vmem:[%s187 + $0xc0] sm:$0xf]
      %v287 = vld [vmem:[%s187 + $0xc4] sm:$0xf]
      %v288 = vld [vmem:[%s187 + $0xc8] sm:$0xf]
      %v289 = vld [vmem:[%s187 + $0xcc] sm:$0xf]
      %v290 = vld [vmem:[%s187 + $0xd0] sm:$0xf]
      %v291 = vld [vmem:[%s187 + $0xd4] sm:$0xf]
      %v292 = vld [vmem:[%s187 + $0xd8] sm:$0xf]
      %v293 = vld [vmem:[%s187 + $0xdc] sm:$0xf]
      %v294 = vld [vmem:[%s187 + $0xe0] sm:$0xf]
      %v295 = vld [vmem:[%s187 + $0xe4] sm:$0xf]
      %v296 = vld [vmem:[%s187 + $0xe8] sm:$0xf]
      %v297 = vld [vmem:[%s187 + $0xec] sm:$0xf]
      %v298 = vld [vmem:[%s187 + $0xf0] sm:$0xf]
      %v299 = vld [vmem:[%s187 + $0xf4] sm:$0xf]
      %v300 = vld [vmem:[%s187 + $0xf8] sm:$0xf]
      %v301 = vld [vmem:[%s187 + $0xfc] sm:$0xf]
      %v302 = vld [vmem:[%s187 + $0x100] sm:$0xf]
      %v303 = vld [vmem:[%s187 + $0x104] sm:$0xf]
      %v304 = vld [vmem:[%s187 + $0x108] sm:$0xf]
      %v305 = vld [vmem:[%s187 + $0x10c] sm:$0xf]
      %v306 = vld [vmem:[%s187 + $0x110] sm:$0xf]
      %v307 = vld [vmem:[%s187 + $0x114] sm:$0xf]
      %v308 = vld [vmem:[%s187 + $0x118] sm:$0xf]
      %v309 = vld [vmem:[%s187 + $0x11c] sm:$0xf]
      %v310 = vld [vmem:[%s187 + $0x120] sm:$0xf]
      %v311 = vld [vmem:[%s187 + $0x124] sm:$0xf]
      %v312 = vld [vmem:[%s187 + $0x128] sm:$0xf]
      %v313 = vld [vmem:[%s187 + $0x12c] sm:$0xf]
      %v314 = vld [vmem:[%s187 + $0x130] sm:$0xf]
      %v315 = vld [vmem:[%s187 + $0x134] sm:$0xf]
      %v316 = vld [vmem:[%s187 + $0x138] sm:$0xf]
      %v317 = vld [vmem:[%s187 + $0x13c] sm:$0xf]
      %v342 = vunpack.c.l.b16 %v214
      %v343 = vunpack.c.h.b16 %v214
      %v344 = vunpack.c.l.b16 %v215
      %v345 = vunpack.c.h.b16 %v215
      %v346 = vunpack.c.l.b16 %v216
      %v347 = vunpack.c.l.b16 %v217
      %v348 = vunpack.c.h.b16 %v217
      %v349 = vunpack.c.l.b16 %v218
      %v350 = vunpack.c.h.b16 %v218
      %v351 = vunpack.c.l.b16 %v219
      %v352 = vunpack.c.l.b16 %v220
      %v353 = vunpack.c.h.b16 %v220
      %v354 = vunpack.c.l.b16 %v221
      %v355 = vunpack.c.h.b16 %v221
      %v356 = vunpack.c.l.b16 %v222
      %v357 = vunpack.c.l.b16 %v223
      %v358 = vunpack.c.h.b16 %v223
      %v359 = vunpack.c.l.b16 %v224
      %v360 = vunpack.c.h.b16 %v224
      %v361 = vunpack.c.l.b16 %v225
      %v362 = vunpack.c.l.b16 %v226
      %v363 = vunpack.c.h.b16 %v226
      %v364 = vunpack.c.l.b16 %v227
      %v365 = vunpack.c.h.b16 %v227
      %v366 = vunpack.c.l.b16 %v228
      %v367 = vunpack.c.l.b16 %v229
      %v368 = vunpack.c.h.b16 %v229
      %v369 = vunpack.c.l.b16 %v230
      %v370 = vunpack.c.h.b16 %v230
      %v371 = vunpack.c.l.b16 %v231
      %v372 = vunpack.c.l.b16 %v232
      %v373 = vunpack.c.h.b16 %v232
      %v374 = vunpack.c.l.b16 %v233
      %v375 = vunpack.c.h.b16 %v233
      %v376 = vunpack.c.l.b16 %v234
      %v377 = vunpack.c.l.b16 %v235
      %v378 = vunpack.c.h.b16 %v235
      %v379 = vunpack.c.l.b16 %v236
      %v380 = vunpack.c.h.b16 %v236
      %v381 = vunpack.c.l.b16 %v237
      %v382 = vpack.c.b16 %v347, %v342
      %v383 = vpack.c.b16 %v348, %v343
      %v384 = vpack.c.b16 %v349, %v344
      %v385 = vpack.c.b16 %v350, %v345
      %v386 = vpack.c.b16 %v351, %v346
      %v387 = vpack.c.b16 %v357, %v352
      %v388 = vpack.c.b16 %v358, %v353
      %v389 = vpack.c.b16 %v359, %v354
      %v390 = vpack.c.b16 %v360, %v355
      %v391 = vpack.c.b16 %v361, %v356
      %v392 = vpack.c.b16 %v367, %v362
      %v393 = vpack.c.b16 %v368, %v363
      %v394 = vpack.c.b16 %v369, %v364
      %v395 = vpack.c.b16 %v370, %v365
      %v396 = vpack.c.b16 %v371, %v366
      %v397 = vpack.c.b16 %v377, %v372
      %v398 = vpack.c.b16 %v378, %v373
      %v399 = vpack.c.b16 %v379, %v374
      %v400 = vpack.c.b16 %v380, %v375
      %v401 = vpack.c.b16 %v381, %v376
      %v502 = vunpack.c.l.b16 %v238
      %v503 = vunpack.c.l.b16 %v239
      %v504 = vunpack.c.l.b16 %v240
      %v505 = vunpack.c.l.b16 %v241
      %v506 = vunpack.c.l.b16 %v242
      %v507 = vunpack.c.l.b16 %v243
      %v508 = vunpack.c.l.b16 %v244
      %v509 = vunpack.c.l.b16 %v245
      %v510 = vunpack.c.l.b16 %v246
      %v511 = vunpack.c.l.b16 %v247
      %v512 = vunpack.c.l.b16 %v248
      %v513 = vunpack.c.l.b16 %v249
      %v514 = vunpack.c.l.b16 %v250
      %v515 = vunpack.c.l.b16 %v251
      %v516 = vunpack.c.l.b16 %v252
      %v517 = vunpack.c.l.b16 %v253
      %v518 = vunpack.c.l.b16 %v254
      %v519 = vunpack.c.l.b16 %v255
      %v520 = vunpack.c.l.b16 %v256
      %v521 = vunpack.c.l.b16 %v257
      %v522 = vunpack.c.l.b16 %v258
      %v523 = vunpack.c.l.b16 %v259
      %v524 = vunpack.c.l.b16 %v260
      %v525 = vunpack.c.l.b16 %v261
      %v526 = vunpack.c.l.b16 %v262
      %v527 = vunpack.c.l.b16 %v263
      %v528 = vunpack.c.l.b16 %v264
      %v529 = vunpack.c.l.b16 %v265
      %v530 = vunpack.c.l.b16 %v266
      %v531 = vunpack.c.l.b16 %v267
      %v532 = vunpack.c.l.b16 %v268
      %v533 = vunpack.c.l.b16 %v269
      %v534 = vunpack.c.l.b16 %v270
      %v535 = vunpack.c.l.b16 %v271
      %v536 = vunpack.c.l.b16 %v272
      %v537 = vunpack.c.l.b16 %v273
      %v538 = vunpack.c.l.b16 %v274
      %v539 = vunpack.c.l.b16 %v275
      %v540 = vunpack.c.l.b16 %v276
      %v541 = vunpack.c.l.b16 %v277
      %v542 = vunpack.c.l.b16 %v278
      %v543 = vunpack.c.l.b16 %v279
      %v544 = vunpack.c.l.b16 %v280
      %v545 = vunpack.c.l.b16 %v281
      %v546 = vunpack.c.l.b16 %v282
      %v547 = vunpack.c.l.b16 %v283
      %v548 = vunpack.c.l.b16 %v284
      %v549 = vunpack.c.l.b16 %v285
      %v550 = vunpack.c.l.b16 %v286
      %v551 = vunpack.c.l.b16 %v287
      %v552 = vunpack.c.l.b16 %v288
      %v553 = vunpack.c.l.b16 %v289
      %v554 = vunpack.c.l.b16 %v290
      %v555 = vunpack.c.l.b16 %v291
      %v556 = vunpack.c.l.b16 %v292
      %v557 = vunpack.c.l.b16 %v293
      %v558 = vunpack.c.l.b16 %v294
      %v559 = vunpack.c.l.b16 %v295
      %v560 = vunpack.c.l.b16 %v296
      %v561 = vunpack.c.l.b16 %v297
      %v562 = vunpack.c.l.b16 %v298
      %v563 = vunpack.c.l.b16 %v299
      %v564 = vunpack.c.l.b16 %v300
      %v565 = vunpack.c.l.b16 %v301
      %v566 = vunpack.c.l.b16 %v302
      %v567 = vunpack.c.l.b16 %v303
      %v568 = vunpack.c.l.b16 %v304
      %v569 = vunpack.c.l.b16 %v305
      %v570 = vunpack.c.l.b16 %v306
      %v571 = vunpack.c.l.b16 %v307
      %v572 = vunpack.c.l.b16 %v308
      %v573 = vunpack.c.l.b16 %v309
      %v574 = vunpack.c.l.b16 %v310
      %v575 = vunpack.c.l.b16 %v311
      %v576 = vunpack.c.l.b16 %v312
      %v577 = vunpack.c.l.b16 %v313
      %v578 = vunpack.c.l.b16 %v314
      %v579 = vunpack.c.l.b16 %v315
      %v580 = vunpack.c.l.b16 %v316
      %v581 = vunpack.c.l.b16 %v317
      %v582 = vpack.c.b16 %v503, %v502
      %v583 = vpack.c.b16 %v505, %v504
      %v584 = vpack.c.b16 %v507, %v506
      %v585 = vpack.c.b16 %v509, %v508
      %v586 = vpack.c.b16 %v511, %v510
      %v587 = vpack.c.b16 %v513, %v512
      %v588 = vpack.c.b16 %v515, %v514
      %v589 = vpack.c.b16 %v517, %v516
      %v590 = vpack.c.b16 %v519, %v518
      %v591 = vpack.c.b16 %v521, %v520
      %v592 = vpack.c.b16 %v523, %v522
      %v593 = vpack.c.b16 %v525, %v524
      %v594 = vpack.c.b16 %v527, %v526
      %v595 = vpack.c.b16 %v529, %v528
      %v596 = vpack.c.b16 %v531, %v530
      %v597 = vpack.c.b16 %v533, %v532
      %v598 = vpack.c.b16 %v535, %v534
      %v599 = vpack.c.b16 %v537, %v536
      %v600 = vpack.c.b16 %v539, %v538
      %v601 = vpack.c.b16 %v541, %v540
      %v602 = vpack.c.b16 %v543, %v542
      %v603 = vpack.c.b16 %v545, %v544
      %v604 = vpack.c.b16 %v547, %v546
      %v605 = vpack.c.b16 %v549, %v548
      %v606 = vpack.c.b16 %v551, %v550
      %v607 = vpack.c.b16 %v553, %v552
      %v608 = vpack.c.b16 %v555, %v554
      %v609 = vpack.c.b16 %v557, %v556
      %v610 = vpack.c.b16 %v559, %v558
      %v611 = vpack.c.b16 %v561, %v560
      %v612 = vpack.c.b16 %v563, %v562
      %v613 = vpack.c.b16 %v565, %v564
      %v614 = vpack.c.b16 %v567, %v566
      %v615 = vpack.c.b16 %v569, %v568
      %v616 = vpack.c.b16 %v571, %v570
      %v617 = vpack.c.b16 %v573, %v572
      %v618 = vpack.c.b16 %v575, %v574
      %v619 = vpack.c.b16 %v577, %v576
      %v620 = vpack.c.b16 %v579, %v578
      %v621 = vpack.c.b16 %v581, %v580
      %662 = vmatpush.bf16.msra.mxu0 %v589
      %663 = vmatpush.bf16.msra.mxu0 %v588
      %664 = vmatpush.bf16.msra.mxu0 %v587
      %665 = vmatpush.bf16.msra.mxu0 %v586
      %666 = vmatpush.bf16.msra.mxu0 %v585
      %667 = vmatpush.bf16.msra.mxu0 %v584
      %668 = vmatpush.bf16.msra.mxu0 %v583
      %669 = vmatpush.bf16.msra.mxu0 %v582
      %670 = vmatmul.bf16.gmra.mxu0 %v382
      %v671 = vpop.f32.mrf.mxu0
      %v672 = vadd.f32 0.0, %v671
      %v673 = vpop.f32.mrf.mxu0
      %v674 = vadd.f32 0.0, %v673
      %675 = vmatmul.bf16.gmra.mxu0 %v387
      %v676 = vpop.f32.mrf.mxu0
      %v677 = vadd.f32 0.0, %v676
      %v678 = vpop.f32.mrf.mxu0
      %v679 = vadd.f32 0.0, %v678
      %680 = vmatmul.bf16.gmra.mxu0 %v392
      %v681 = vpop.f32.mrf.mxu0
      %v682 = vadd.f32 0.0, %v681
      %v683 = vpop.f32.mrf.mxu0
      %v684 = vadd.f32 0.0, %v683
      %685 = vmatmul.bf16.gmra.mxu0 %v397
      %v686 = vpop.f32.mrf.mxu0
      %v687 = vadd.f32 0.0, %v686
      %v688 = vpop.f32.mrf.mxu0
      %v689 = vadd.f32 0.0, %v688
      %690 = vdwg.mxu0
      %691 = vmatpush.bf16.msra.mxu0 %v597
      %692 = vmatpush.bf16.msra.mxu0 %v596
      %693 = vmatpush.bf16.msra.mxu0 %v595
      %694 = vmatpush.bf16.msra.mxu0 %v594
      %695 = vmatpush.bf16.msra.mxu0 %v593
      %696 = vmatpush.bf16.msra.mxu0 %v592
      %697 = vmatpush.bf16.msra.mxu0 %v591
      %698 = vmatpush.bf16.msra.mxu0 %v590
      %699 = vmatmul.bf16.gmra.mxu0 %v383
      %v700 = vpop.f32.mrf.mxu0
      %v701 = vadd.f32 %v672, %v700
      %v702 = vpop.f32.mrf.mxu0
      %v703 = vadd.f32 %v674, %v702
      %704 = vmatmul.bf16.gmra.mxu0 %v388
      %v705 = vpop.f32.mrf.mxu0
      %v706 = vadd.f32 %v677, %v705
      %v707 = vpop.f32.mrf.mxu0
      %v708 = vadd.f32 %v679, %v707
      %709 = vmatmul.bf16.gmra.mxu0 %v393
      %v710 = vpop.f32.mrf.mxu0
      %v711 = vadd.f32 %v682, %v710
      %v712 = vpop.f32.mrf.mxu0
      %v713 = vadd.f32 %v684, %v712
      %714 = vmatmul.bf16.gmra.mxu0 %v398
      %v715 = vpop.f32.mrf.mxu0
      %v716 = vadd.f32 %v687, %v715
      %v717 = vpop.f32.mrf.mxu0
      %v718 = vadd.f32 %v689, %v717
      %719 = vdwg.mxu0
      %720 = vmatpush.bf16.msra.mxu0 %v605
      %721 = vmatpush.bf16.msra.mxu0 %v604
      %722 = vmatpush.bf16.msra.mxu0 %v603
      %723 = vmatpush.bf16.msra.mxu0 %v602
      %724 = vmatpush.bf16.msra.mxu0 %v601
      %725 = vmatpush.bf16.msra.mxu0 %v600
      %726 = vmatpush.bf16.msra.mxu0 %v599
      %727 = vmatpush.bf16.msra.mxu0 %v598
      %728 = vmatmul.bf16.gmra.mxu0 %v384
      %v729 = vpop.f32.mrf.mxu0
      %v730 = vadd.f32 %v701, %v729
      %v731 = vpop.f32.mrf.mxu0
      %v732 = vadd.f32 %v703, %v731
      %733 = vmatmul.bf16.gmra.mxu0 %v389
      %v734 = vpop.f32.mrf.mxu0
      %v735 = vadd.f32 %v706, %v734
      %v736 = vpop.f32.mrf.mxu0
      %v737 = vadd.f32 %v708, %v736
      %738 = vmatmul.bf16.gmra.mxu0 %v394
      %v739 = vpop.f32.mrf.mxu0
      %v740 = vadd.f32 %v711, %v739
      %v741 = vpop.f32.mrf.mxu0
      %v742 = vadd.f32 %v713, %v741
      %743 = vmatmul.bf16.gmra.mxu0 %v399
      %v744 = vpop.f32.mrf.mxu0
      %v745 = vadd.f32 %v716, %v744
      %v746 = vpop.f32.mrf.mxu0
      %v747 = vadd.f32 %v718, %v746
      %748 = vdwg.mxu0
      %749 = vmatpush.bf16.msra.mxu0 %v613
      %750 = vmatpush.bf16.msra.mxu0 %v612
      %751 = vmatpush.bf16.msra.mxu0 %v611
      %752 = vmatpush.bf16.msra.mxu0 %v610
      %753 = vmatpush.bf16.msra.mxu0 %v609
      %754 = vmatpush.bf16.msra.mxu0 %v608
      %755 = vmatpush.bf16.msra.mxu0 %v607
      %756 = vmatpush.bf16.msra.mxu0 %v606
      %757 = vmatmul.bf16.gmra.mxu0 %v385
      %v758 = vpop.f32.mrf.mxu0
      %v759 = vadd.f32 %v730, %v758
      %v760 = vpop.f32.mrf.mxu0
      %v761 = vadd.f32 %v732, %v760
      %762 = vmatmul.bf16.gmra.mxu0 %v390
      %v763 = vpop.f32.mrf.mxu0
      %v764 = vadd.f32 %v735, %v763
      %v765 = vpop.f32.mrf.mxu0
      %v766 = vadd.f32 %v737, %v765
      %767 = vmatmul.bf16.gmra.mxu0 %v395
      %v768 = vpop.f32.mrf.mxu0
      %v769 = vadd.f32 %v740, %v768
      %v770 = vpop.f32.mrf.mxu0
      %v771 = vadd.f32 %v742, %v770
      %772 = vmatmul.bf16.gmra.mxu0 %v400
      %v773 = vpop.f32.mrf.mxu0
      %v774 = vadd.f32 %v745, %v773
      %v775 = vpop.f32.mrf.mxu0
      %v776 = vadd.f32 %v747, %v775
      %777 = vdwg.mxu0
      %778 = vmatpush.bf16.msra.mxu0 %v621
      %779 = vmatpush.bf16.msra.mxu0 %v620
      %780 = vmatpush.bf16.msra.mxu0 %v619
      %781 = vmatpush.bf16.msra.mxu0 %v618
      %782 = vmatpush.bf16.msra.mxu0 %v617
      %783 = vmatpush.bf16.msra.mxu0 %v616
      %784 = vmatpush.bf16.msra.mxu0 %v615
      %785 = vmatpush.bf16.msra.mxu0 %v614
      %786 = vmatmul.bf16.gmra.mxu0 %v386
      %v787 = vpop.f32.mrf.mxu0
      %v788 = vadd.f32 %v759, %v787
      %v789 = vpop.f32.mrf.mxu0
      %v790 = vadd.f32 %v761, %v789
      %791 = vmatmul.bf16.gmra.mxu0 %v391
      %v792 = vpop.f32.mrf.mxu0
      %v793 = vadd.f32 %v764, %v792
      %v794 = vpop.f32.mrf.mxu0
      %v795 = vadd.f32 %v766, %v794
      %796 = vmatmul.bf16.gmra.mxu0 %v396
      %v797 = vpop.f32.mrf.mxu0
      %v798 = vadd.f32 %v769, %v797
      %v799 = vpop.f32.mrf.mxu0
      %v800 = vadd.f32 %v771, %v799
      %801 = vmatmul.bf16.gmra.mxu0 %v401
      %v802 = vpop.f32.mrf.mxu0
      %v803 = vadd.f32 %v774, %v802
      %v804 = vpop.f32.mrf.mxu0
      %v805 = vadd.f32 %v776, %v804
      %806 = vdwg.mxu0
      %v807 = vadd.f32 %v206, %v788
      %v808 = vadd.f32 %v207, %v790
      %v809 = vadd.f32 %v208, %v793
      %v810 = vadd.f32 %v209, %v795
      %v811 = vadd.f32 %v210, %v798
      %v812 = vadd.f32 %v211, %v800
      %v813 = vadd.f32 %v212, %v803
      %v814 = vadd.f32 %v213, %v805
      %815 = vst [vmem:[#allocation2] sm:$0xff] %v807
      %816 = vst [vmem:[#allocation2 + $0x8] sm:$0xff] %v808
      %817 = vst [vmem:[#allocation2 + $0x10] sm:$0xff] %v809
      %818 = vst [vmem:[#allocation2 + $0x18] sm:$0xff] %v810
      %819 = vst [vmem:[#allocation2 + $0x20] sm:$0xff] %v811
      %820 = vst [vmem:[#allocation2 + $0x28] sm:$0xff] %v812
      %821 = vst [vmem:[#allocation2 + $0x30] sm:$0xff] %v813
      %822 = vst [vmem:[#allocation2 + $0x38] sm:$0xff] %v814
      // Predicated region
      $region33: #{generator_resnet_forward.11} parent=27 // pred_check
        %p823 = pneg %p194
      $region34: #{generator_resnet_forward.11} parent=27 // pred_check_branch
        %825 = sbr.rel (%p823) target = $region36
      $region35: #{generator_resnet_forward.11} parent=27 // pred_region
        %v826 = vld [vmem:[#allocation2] sm:$0xff]
        %v827 = vld [vmem:[#allocation2 + $0x8] sm:$0xff]
        %v828 = vld [vmem:[#allocation2 + $0x10] sm:$0xff]
        %v829 = vld [vmem:[#allocation2 + $0x18] sm:$0xff]
        %v830 = vld [vmem:[#allocation2 + $0x20] sm:$0xff]
        %v831 = vld [vmem:[#allocation2 + $0x28] sm:$0xff]
        %v832 = vld [vmem:[#allocation2 + $0x30] sm:$0xff]
        %v833 = vld [vmem:[#allocation2 + $0x38] sm:$0xff]
        %v834 = vadd.f32 %v826, %v827
        %v835 = vadd.f32 %v834, %v828
        %v836 = vadd.f32 %v835, %v829
        %v837 = vadd.f32 %v836, %v830
        %v838 = vadd.f32 %v837, %v831
        %v839 = vadd.f32 %v838, %v832
        %v840 = vadd.f32 %v839, %v833
        %v841 = vrot.slane %v840, 4
        %v842 = vadd.f32 %v840, %v841
        %v843 = vrot.slane %v842, 2
        %v844 = vadd.f32 %v842, %v843
        %v845 = vrot.slane %v844, 1
        %v846 = vadd.f32 %v844, %v845
        %v847 = vmul.f32 %v846, 0.015625
        %v848 = vmul.f32 %v826, %v826
        %v849 = vmul.f32 %v827, %v827
        %v850 = vmul.f32 %v828, %v828
        %v851 = vmul.f32 %v829, %v829
        %v852 = vmul.f32 %v830, %v830
        %v853 = vmul.f32 %v831, %v831
        %v854 = vmul.f32 %v832, %v832
        %v855 = vmul.f32 %v833, %v833
        %v856 = vadd.f32 %v848, %v849
        %v857 = vadd.f32 %v856, %v850
        %v858 = vadd.f32 %v857, %v851
        %v859 = vadd.f32 %v858, %v852
        %v860 = vadd.f32 %v859, %v853
        %v861 = vadd.f32 %v860, %v854
        %v862 = vadd.f32 %v861, %v855
        %v863 = vrot.slane %v862, 4
        %v864 = vadd.f32 %v862, %v863
        %v865 = vrot.slane %v864, 2
        %v866 = vadd.f32 %v864, %v865
        %v867 = vrot.slane %v866, 1
        %v868 = vadd.f32 %v866, %v867
        %v869 = vmul.f32 %v868, 0.015625
        %v870 = vmul.f32 %v847, %v847
        %v871 = vsub.f32 %v869, %v870
        %v872 = vmax.f32 %v871, 0.0
        %v873 = vsub.f32 %v826, %v847
        %v874 = vsub.f32 %v827, %v847
        %v875 = vsub.f32 %v828, %v847
        %v876 = vsub.f32 %v829, %v847
        %v877 = vsub.f32 %v830, %v847
        %v878 = vsub.f32 %v831, %v847
        %v879 = vsub.f32 %v832, %v847
        %v880 = vsub.f32 %v833, %v847
        %v881 = vadd.f32 %v872, 1e-05
        %v882 = vrsqrt.pop %v881
        %v883 = vmul.f32 %v882, %v881
        %v884 = vmul.f32 %v883, %v882
        %v885 = vmul.f32 0.5, %v884
        %v886 = vsub.f32 1.5, %v885
        %v887 = vmul.f32 %v882, %v886
        %vm888 = vweird.f32 %v881
        %vm889 = vweird.f32 %v882
        %vm890 = vmor %vm888, %vm889
        %v891 = vsel %vm890, %v882, %v887
        %v892 = vmul.f32 %v873, %v891
        %v893 = vmul.f32 %v874, %v891
        %v894 = vmul.f32 %v875, %v891
        %v895 = vmul.f32 %v876, %v891
        %v896 = vmul.f32 %v877, %v891
        %v897 = vmul.f32 %v878, %v891
        %v898 = vmul.f32 %v879, %v891
        %v899 = vmul.f32 %v880, %v891
        %v900 = vmax.f32 %v892, 0.0
        %v901 = vmax.f32 %v893, 0.0
        %v902 = vmax.f32 %v894, 0.0
        %v903 = vmax.f32 %v895, 0.0
        %v904 = vmax.f32 %v896, 0.0
        %v905 = vmax.f32 %v897, 0.0
        %v906 = vmax.f32 %v898, 0.0
        %v907 = vmax.f32 %v899, 0.0
        %908 = vst [vmem:[%s193] sm:$0xff] %v900
        %909 = vst [vmem:[%s193 + $0x8] sm:$0xff] %v901
        %910 = vst [vmem:[%s193 + $0x10] sm:$0xff] %v902
        %911 = vst [vmem:[%s193 + $0x18] sm:$0xff] %v903
        %912 = vst [vmem:[%s193 + $0x20] sm:$0xff] %v904
        %913 = vst [vmem:[%s193 + $0x28] sm:$0xff] %v905
        %914 = vst [vmem:[%s193 + $0x30] sm:$0xff] %v906
        %915 = vst [vmem:[%s193 + $0x38] sm:$0xff] %v907
      $region36: #{generator_resnet_forward.11} parent=27 // pred_fallthru
        _
      %p916 = scmp.lt.s32.totalorder %s17, 1
      %s917 = scalar_select %p916, %s17, 1
      %s918 = smul.addr %s917, 8
      %s919 = smul.addr %s918, 8
      %s920 = scalar_lea.vmem %s2, %s919
      // Predicated region
      $region37: #{generator_resnet_forward.11} parent=27 // pred_check
        %p921 = pneg %p97
      $region38: #{generator_resnet_forward.11} parent=27 // pred_check_branch
        %923 = sbr.rel (%p921) target = $region40
      $region39: #{generator_resnet_forward.11} parent=27 // pred_region
        _
      $region40: #{generator_resnet_forward.11} parent=27 // pred_fallthru
        _
    $region28: #{generator_resnet_forward.11} parent=5 // pred_fallthru
      _
    %p924 = scmp.le.s32.totalorder 2, %s8
    // Predicated region
    $region41: #{generator_resnet_forward.11} parent=5 // pred_check
      %p925 = pneg %p924
    $region42: #{generator_resnet_forward.11} parent=5 // pred_check_branch
      %927 = sbr.rel (%p925) target = $region44
    $region43: #{generator_resnet_forward.11} parent=5 // pred_region
      %s928 = ssub.s32 %s8, 2
      // Predicated region
      $region45: #{generator_resnet_forward.11} parent=43 // pred_check
        %p929 = pneg %p103
      $region46: #{generator_resnet_forward.11} parent=43 // pred_check_branch
        %931 = sbr.rel (%p929) target = $region48
      $region47: #{generator_resnet_forward.11} parent=43 // pred_region
        %p932 = scmp.lt.s32.totalorder %s19, 1
        %s933 = scalar_select %p932, %s19, 1
        %s934 = smul.addr %s933, 8
        %s935 = smul.addr %s934, 8
        %s936 = scalar_lea.vmem %s2, %s935
      $region48: #{generator_resnet_forward.11} parent=43 // pred_fallthru
        _
    $region44: #{generator_resnet_forward.11} parent=5 // pred_fallthru
      _
  $region6: #{generator_resnet_forward.11} parent=0 // loop_footer
    %s12 = sadd.s32 1, %s8
  $region7: #{generator_resnet_forward.11} parent=0 // loop_footer_branch
    %7 = sbr.rel target = $region3
  $region8: #{generator_resnet_forward.11} parent=0 // loop_exit
    _

// kernel: generator_resnet_forward.12
$region0: #{generator_resnet_forward.12}
  #allocation0 [shape = 'u32[]', space=smem, size = 0x4, offset = 0x4, fixed_abs, tag = 'smem constant byte address 0x4 - core index']
  #allocation1 [shape = 'u32[72,128]{1,0:T(1,128)}', space=vmem, size = 0x9000, scoped, tag = 'internal scratch']
  #allocation2 [shape = 'f32[16,256]{1,0:T(8,128)}', space=vmem, size = 0x4000, scoped, tag = 'scratch operand']
  %s0 = inlined_call_operand.vmem [shape: bf16[2,16,1152], index: 0, kind: input, shape index: {}]
  %s1 = inlined_call_operand.vmem [shape: bf16[1152,256], index: 1, kind: input, shape index: {}]
  %s2 = inlined_call_operand.vmem [shape: f32[2,16,256], index: 2, kind: output, shape index: {}]
  %s3 = sld [smem:[#allocation0]]
  $region75: #{generator_resnet_forward.12} parent=0
    _
  %s5 = ssub.s32 1, %s3
  %s6 = scalar_select 0, %s5, %s3
  $region1: #{generator_resnet_forward.12} parent=0
    #allocation3 [shape = 'u8[24576]{0}', space=vmem, size = 0x6000, scoped, tag = 'input window, operand 0']
    loop: start=0, step=1, limit=8
    $region2: #{generator_resnet_forward.12} parent=1 // loop_pre_header
      _
    $region3: #{generator_resnet_forward.12} parent=1 // loop_header
      %s8 = sphi 0, %s12
      %p9 = scmp.ge.s32.totalorder %s8, 8
      %s15 = sphi 0, %s27
      %s16 = sphi 0, %s23
      %s17 = sphi 0, %s15
      %s18 = sphi 0, %s16
      %s19 = sphi 0, %s17
      %s20 = sphi 0, %s18
      %s32 = sphi 0, %s34
      %s35 = sphi 0, %s32
      %s36 = sphi 0, %s35
      %s52 = sphi 0, %s36
      %s58 = sphi 0, %s60
      %s61 = sphi 0, %s58
      %s62 = sphi 0, %s61
      %s78 = sphi 0, %s62
      %s84 = sphi 0, %s86
      %s87 = sphi 0, %s84
      %s88 = sphi 0, %s87
      %s104 = sphi 0, %s88
    $region4: #{generator_resnet_forward.12} parent=1 // loop_header_branch
      %11 = sbr.rel (%p9) target = $region8
    $region5: #{generator_resnet_forward.12} parent=1 // loop_body
      %s13 = ssub.s32 %s8, 1
      %s14 = ssub.s32 %s8, 2
      %s21 = sadd.s32 1, %s16
      %p22 = scmp.ge.s32.totalorder %s21, 3
      %s23 = scalar_select %p22, 0, %s21
      %s24 = sadd.s32 1, %s15
      %s25 = scalar_select %p22, %s24, %s15
      %p26 = scmp.ge.s32.totalorder %s25, 2
      %s27 = scalar_select %p26, 0, %s25
      %s28 = ssub.s32 %s15, %s27
      %s29 = ssub.s32 %s16, %s23
      %s30 = sor.u32 %s28, %s29
      %p31 = scmp.eq.s32.totalorder %s30, 0
      %s33 = sadd.s32 %s32, 1
      %s34 = scalar_select %p31, %s32, %s33
      %p37 = pneg %p31
      %p38 = scmp.eq.s32.totalorder %s8, 5
      %p39 = por %p37, %p38
      %p40 = scmp.ne.s32.totalorder %s32, %s35
      %p41 = scmp.eq.s32.totalorder %s8, 0
      %p42 = por %p40, %p41
      %p43 = scmp.ne.s32.totalorder %s32, %s35
      %p44 = scmp.eq.s32.totalorder %s13, 5
      %p45 = por %p43, %p44
      %p46 = scmp.ne.s32.totalorder %s35, %s36
      %p47 = scmp.eq.s32.totalorder %s13, 0
      %p48 = por %p46, %p47
      %p49 = scmp.ne.s32.totalorder %s35, %s36
      %p50 = scmp.eq.s32.totalorder %s14, 5
      %p51 = por %p49, %p50
      %p53 = scmp.ne.s32.totalorder %s36, %s52
      %p54 = scmp.eq.s32.totalorder %s14, 0
      %p55 = por %p53, %p54
      %s56 = ssub.s32 %s16, %s23
      %p57 = scmp.eq.s32.totalorder %s56, 0
      %s59 = sadd.s32 %s58, 1
      %s60 = scalar_select %p57, %s58, %s59
      %p63 = pneg %p57
      %p64 = scmp.eq.s32.totalorder %s8, 5
      %p65 = por %p63, %p64
      %p66 = scmp.ne.s32.totalorder %s58, %s61
      %p67 = scmp.eq.s32.totalorder %s8, 0
      %p68 = por %p66, %p67
      %p69 = scmp.ne.s32.totalorder %s58, %s61
      %p70 = scmp.eq.s32.totalorder %s13, 5
      %p71 = por %p69, %p70
      %p72 = scmp.ne.s32.totalorder %s61, %s62
      %p73 = scmp.eq.s32.totalorder %s13, 0
      %p74 = por %p72, %p73
      %p75 = scmp.ne.s32.totalorder %s61, %s62
      %p76 = scmp.eq.s32.totalorder %s14, 5
      %p77 = por %p75, %p76
      %p79 = scmp.ne.s32.totalorder %s62, %s78
      %p80 = scmp.eq.s32.totalorder %s14, 0
      %p81 = por %p79, %p80
      %s82 = ssub.s32 %s15, %s27
      %p83 = scmp.eq.s32.totalorder %s82, 0
      %s85 = sadd.s32 %s84, 1
      %s86 = scalar_select %p83, %s84, %s85
      %p89 = pneg %p83
      %p90 = scmp.eq.s32.totalorder %s8, 5
      %p91 = por %p89, %p90
      %p92 = scmp.ne.s32.totalorder %s84, %s87
      %p93 = scmp.eq.s32.totalorder %s8, 0
      %p94 = por %p92, %p93
      %p95 = scmp.ne.s32.totalorder %s84, %s87
      %p96 = scmp.eq.s32.totalorder %s13, 5
      %p97 = por %p95, %p96
      %p98 = scmp.ne.s32.totalorder %s87, %s88
      %p99 = scmp.eq.s32.totalorder %s13, 0
      %p100 = por %p98, %p99
      %p101 = scmp.ne.s32.totalorder %s87, %s88
      %p102 = scmp.eq.s32.totalorder %s14, 5
      %p103 = por %p101, %p102
      %p105 = scmp.ne.s32.totalorder %s88, %s104
      %p106 = scmp.eq.s32.totalorder %s14, 0
      %p107 = por %p105, %p106
      %p108 = scmp.le.s32.totalorder 1, %s8
      %p109 = scmp.lt.s32.totalorder %s8, 7
      %p110 = pnand %p108, %p109
      %p111 = pneg %p110
      // Predicated region
      $region9: #{generator_resnet_forward.12} parent=5 // pred_check
        _
      $region10: #{generator_resnet_forward.12} parent=5 // pred_check_branch
        %113 = sbr.rel (%p110) target = $region12
      $region11: #{generator_resnet_forward.12} parent=5 // pred_region
        %s114 = ssub.s32 %s8, 1
      $region12: #{generator_resnet_forward.12} parent=5 // pred_fallthru
        _
      %p115 = scmp.lt.s32.totalorder %s8, 6
      // Predicated region
      $region13: #{generator_resnet_forward.12} parent=5 // pred_check
        %p116 = pneg %p115
      $region14: #{generator_resnet_forward.12} parent=5 // pred_check_branch
        %118 = sbr.rel (%p116) target = $region16
      $region15: #{generator_resnet_forward.12} parent=5 // pred_region
        // Predicated region
        $region17: #{generator_resnet_forward.12} parent=15 // pred_check
          %p119 = pneg %p42
        $region18: #{generator_resnet_forward.12} parent=15 // pred_check_branch
          %121 = sbr.rel (%p119) target = $region20
        $region19: #{generator_resnet_forward.12} parent=15 // pred_region
          %s122 = sand.u32 %s32, 1
          %s123 = sand.u32 %s32, 1
          %s124 = smul.addr %s123, 24
          %s125 = scalar_lea.vmem [#allocation3], %s124
          %s126 = smul.u32 3, %s16
          %s127 = smul.addr %s15, 18
          %s128 = sadd.s32 %s126, %s127
          %s129 = smul.addr %s128, 4
          %s130 = scalar_lea.vmem %s0, %s129
          // Predicated region
          $region21: #{generator_resnet_forward.12} parent=19 // pred_check
            _
          $region22: #{generator_resnet_forward.12} parent=19 // pred_check_branch
            %132 = sbr.rel (0) target = $region24
          $region23: #{generator_resnet_forward.12} parent=19 // pred_region
            // Predicated region
            $region25: #{generator_resnet_forward.12} parent=23 // pred_check
              _
            $region26: #{generator_resnet_forward.12} parent=23 // pred_check_branch
              %134 = sbr.rel (0) target = $region28
            $region27: #{generator_resnet_forward.12} parent=23 // pred_region
              %s135 = scalar_lea.vmem %s130, 8
              %s136 = scalar_lea.vmem %s125, 8 [#allocation3]
              loop: start=0, step=1, limit=1
              $region29: #{generator_resnet_forward.12} parent=27 // loop_pre_header
                _
              $region30: #{generator_resnet_forward.12} parent=27 // loop_header
                %s138 = sphi 0, %s142
                %p139 = scmp.ge.s32.totalorder %s138, 1
                %s143 = sphi %s130, %s130
                %s144 = sphi %s125, %s125
              $region31: #{generator_resnet_forward.12} parent=27 // loop_header_branch
                %141 = sbr.rel (%p139) target = $region35
              $region32: #{generator_resnet_forward.12} parent=27 // loop_body
                %v145 = vld [vmem:[%s143] sm:$0xff]
                %146 = vst [vmem:[%s144] sm:$0xff] %v145
                %v147 = vld [vmem:[%s143 + $0x24] sm:$0xff]
                %148 = vst [vmem:[%s144 + $0xc] sm:$0xff] %v147
              $region33: #{generator_resnet_forward.12} parent=27 // loop_footer
                %s142 = sadd.s32 1, %s138
              $region34: #{generator_resnet_forward.12} parent=27 // loop_footer_branch
                %137 = sbr.rel target = $region30
              $region35: #{generator_resnet_forward.12} parent=27 // loop_exit
                _
              %s150 = ssub.s32 16, 1
              loop: start=0, step=1, limit=1
              $region36: #{generator_resnet_forward.12} parent=27 // loop_pre_header
                _
              $region37: #{generator_resnet_forward.12} parent=27 // loop_header
                %s152 = sphi 0, %s156
                %p153 = scmp.ge.s32.totalorder %s152, 1
                %s157 = sphi %s135, %s135
                %s158 = sphi %s136, %s136
              $region38: #{generator_resnet_forward.12} parent=27 // loop_header_branch
                %155 = sbr.rel (%p153) target = $region42
              $region39: #{generator_resnet_forward.12} parent=27 // loop_body
                %v159 = vld [vmem:[%s157] sm:%s150]
                %160 = vst [vmem:[%s158] sm:%s150] %v159
                %v161 = vld [vmem:[%s157 + $0x24] sm:%s150]
                %162 = vst [vmem:[%s158 + $0xc] sm:%s150] %v161
              $region40: #{generator_resnet_forward.12} parent=27 // loop_footer
                %s156 = sadd.s32 1, %s152
              $region41: #{generator_resnet_forward.12} parent=27 // loop_footer_branch
                %151 = sbr.rel target = $region37
              $region42: #{generator_resnet_forward.12} parent=27 // loop_exit
                _
            $region28: #{generator_resnet_forward.12} parent=23 // pred_fallthru
              _
          $region24: #{generator_resnet_forward.12} parent=19 // pred_fallthru
            _
          %163 = vnop
        $region20: #{generator_resnet_forward.12} parent=15 // pred_fallthru
          _
        // Predicated region
        $region43: #{generator_resnet_forward.12} parent=15 // pred_check
          %p164 = pneg %p68
        $region44: #{generator_resnet_forward.12} parent=15 // pred_check_branch
          %166 = sbr.rel (%p164) target = $region46
        $region45: #{generator_resnet_forward.12} parent=15 // pred_region
          %s167 = smul.u32 48, %s16
          %p168 = scmp.lt.s32.totalorder %s167, 143
          %s169 = scalar_select %p168, %s167, 143
          %s170 = smul.addr %s169, 2
          %s171 = smul.addr %s170, 4
          %s172 = scalar_lea.vmem %s1, %s171
          %s173 = smul.u32 48, %s16
        $region46: #{generator_resnet_forward.12} parent=15 // pred_fallthru
          _
      $region16: #{generator_resnet_forward.12} parent=5 // pred_fallthru
        _
      %p174 = scmp.le.s32.totalorder 1, %s8
      %p175 = scmp.lt.s32.totalorder %s8, 7
      %p176 = pnand %p174, %p175
      %p177 = pneg %p176
      // Predicated region
      $region47: #{generator_resnet_forward.12} parent=5 // pred_check
        _
      $region48: #{generator_resnet_forward.12} parent=5 // pred_check_branch
        %179 = sbr.rel (%p176) target = $region50
      $region49: #{generator_resnet_forward.12} parent=5 // pred_region
        %s180 = ssub.s32 %s8, 1
        %s181 = sand.u32 %s35, 1
        %s182 = sand.u32 %s35, 1
        %s183 = smul.addr %s182, 24
        %s184 = scalar_lea.vmem [#allocation3], %s183
        // Predicated region
        $region51: #{generator_resnet_forward.12} parent=49 // pred_check
          %p185 = pneg %p48
        $region52: #{generator_resnet_forward.12} parent=49 // pred_check_branch
          %187 = sbr.rel (%p185) target = $region54
        $region53: #{generator_resnet_forward.12} parent=49 // pred_region
          _
        $region54: #{generator_resnet_forward.12} parent=49 // pred_fallthru
          _
        %s188 = sand.u32 %s35, 1
        %s189 = sand.u32 %s35, 1
        %s190 = smul.addr %s189, 24
        %s191 = scalar_lea.vmem [#allocation3], %s190
        %p192 = pneg %p48
        %p193 = pneg %p45
        %s194 = smul.u32 48, %s18
        %p195 = scmp.lt.s32.totalorder %s194, 143
        %s196 = scalar_select %p195, %s194, 143
        %s197 = smul.addr %s196, 2
        %s198 = smul.addr %s197, 4
        %s199 = scalar_lea.vmem %s1, %s198
        %p200 = pneg %p74
        %p201 = pneg %p71
        %p202 = pneg %p100
        %p203 = pneg %p97
        %p204 = scmp.lt.s32.totalorder %s17, 1
        %s205 = scalar_select %p204, %s17, 1
        %s206 = smul.addr %s205, 4
        %s207 = smul.addr %s206, 8
        %s208 = scalar_lea.vmem %s2, %s207
        %s209 = smul.u32 3, %s18
        %s210 = smul.u32 48, %s18
        %p211 = scmp.lt.s32.totalorder %s210, 143
        %s212 = scalar_select %p211, %s210, 143
        %s213 = smul.addr %s212, 2
        %s214 = smul.addr %s213, 4
        %s215 = scalar_lea.vmem %s1, %s214
        %s216 = smul.u32 48, %s18
        %p217 = scmp.lt.s32.totalorder %s17, 1
        %s218 = scalar_select %p217, %s17, 1
        %s219 = smul.addr %s218, 4
        %s220 = smul.addr %s219, 8
        %s221 = scalar_lea.vmem %s2, %s220
        %p222 = scmp.eq.s32.totalorder %s18, 0
        // Predicated region
        $region55: #{generator_resnet_forward.12} parent=49 // pred_check
          %p223 = pneg %p222
        $region56: #{generator_resnet_forward.12} parent=49 // pred_check_branch
          %225 = sbr.rel (%p223) target = $region58
        $region57: #{generator_resnet_forward.12} parent=49 // pred_region
          %226 = vst [vmem:[#allocation2] sm:$0xff] 0.0
          %227 = vst [vmem:[#allocation2 + $0x8] sm:$0xff] 0.0
          %228 = vst [vmem:[#allocation2 + $0x10] sm:$0xff] 0.0
          %229 = vst [vmem:[#allocation2 + $0x18] sm:$0xff] 0.0
        $region58: #{generator_resnet_forward.12} parent=49 // pred_fallthru
          _
        %v230 = vld [vmem:[#allocation2] sm:$0xff]
        %v231 = vld [vmem:[#allocation2 + $0x8] sm:$0xff]
        %v232 = vld [vmem:[#allocation2 + $0x10] sm:$0xff]
        %v233 = vld [vmem:[#allocation2 + $0x18] sm:$0xff]
        %v234 = vld [vmem:[%s184] sm:$0xff]
        %v235 = vld [vmem:[%s184 + $0x8] sm:$0xf]
        %v236 = vld [vmem:[%s184 + $0xc] sm:$0xff]
        %v237 = vld [vmem:[%s184 + $0x14] sm:$0xf]
        %v238 = vld [vmem:[%s215] sm:$0xff]
        %v239 = vld [vmem:[%s215 + $0x8] sm:$0xff]
        %v240 = vld [vmem:[%s215 + $0x10] sm:$0xff]
        %v241 = vld [vmem:[%s215 + $0x18] sm:$0xff]
        %v242 = vld [vmem:[%s215 + $0x20] sm:$0xff]
        %v243 = vld [vmem:[%s215 + $0x28] sm:$0xff]
        %v244 = vld [vmem:[%s215 + $0x30] sm:$0xff]
        %v245 = vld [vmem:[%s215 + $0x38] sm:$0xff]
        %v246 = vld [vmem:[%s215 + $0x40] sm:$0xff]
        %v247 = vld [vmem:[%s215 + $0x48] sm:$0xff]
        %v248 = vld [vmem:[%s215 + $0x50] sm:$0xff]
        %v249 = vld [vmem:[%s215 + $0x58] sm:$0xff]
        %v250 = vld [vmem:[%s215 + $0x60] sm:$0xff]
        %v251 = vld [vmem:[%s215 + $0x68] sm:$0xff]
        %v252 = vld [vmem:[%s215 + $0x70] sm:$0xff]
        %v253 = vld [vmem:[%s215 + $0x78] sm:$0xff]
        %v254 = vld [vmem:[%s215 + $0x80] sm:$0xff]
        %v255 = vld [vmem:[%s215 + $0x88] sm:$0xff]
        %v256 = vld [vmem:[%s215 + $0x90] sm:$0xff]
        %v257 = vld [vmem:[%s215 + $0x98] sm:$0xff]
        %v258 = vld [vmem:[%s215 + $0xa0] sm:$0xff]
        %v259 = vld [vmem:[%s215 + $0xa8] sm:$0xff]
        %v260 = vld [vmem:[%s215 + $0xb0] sm:$0xff]
        %v261 = vld [vmem:[%s215 + $0xb8] sm:$0xff]
        %v262 = vld [vmem:[%s215 + $0xc0] sm:$0xff]
        %v263 = vld [vmem:[%s215 + $0xc8] sm:$0xff]
        %v264 = vld [vmem:[%s215 + $0xd0] sm:$0xff]
        %v265 = vld [vmem:[%s215 + $0xd8] sm:$0xff]
        %v266 = vld [vmem:[%s215 + $0xe0] sm:$0xff]
        %v267 = vld [vmem:[%s215 + $0xe8] sm:$0xff]
        %v268 = vld [vmem:[%s215 + $0xf0] sm:$0xff]
        %v269 = vld [vmem:[%s215 + $0xf8] sm:$0xff]
        %v270 = vld [vmem:[%s215 + $0x100] sm:$0xff]
        %v271 = vld [vmem:[%s215 + $0x108] sm:$0xff]
        %v272 = vld [vmem:[%s215 + $0x110] sm:$0xff]
        %v273 = vld [vmem:[%s215 + $0x118] sm:$0xff]
        %v274 = vld [vmem:[%s215 + $0x120] sm:$0xff]
        %v275 = vld [vmem:[%s215 + $0x128] sm:$0xff]
        %v276 = vld [vmem:[%s215 + $0x130] sm:$0xff]
        %v277 = vld [vmem:[%s215 + $0x138] sm:$0xff]
        %v278 = vld [vmem:[%s215 + $0x140] sm:$0xff]
        %v279 = vld [vmem:[%s215 + $0x148] sm:$0xff]
        %v280 = vld [vmem:[%s215 + $0x150] sm:$0xff]
        %v281 = vld [vmem:[%s215 + $0x158] sm:$0xff]
        %v282 = vld [vmem:[%s215 + $0x160] sm:$0xff]
        %v283 = vld [vmem:[%s215 + $0x168] sm:$0xff]
        %v284 = vld [vmem:[%s215 + $0x170] sm:$0xff]
        %v285 = vld [vmem:[%s215 + $0x178] sm:$0xff]
        %v290 = vunpack.c.l.b16 %v234
        %v291 = vunpack.c.h.b16 %v234
        %v292 = vunpack.c.l.b16 %v235
        %v293 = vunpack.c.l.b16 %v236
        %v294 = vunpack.c.h.b16 %v236
        %v295 = vunpack.c.l.b16 %v237
        %v296 = vpack.c.b16 %v293, %v290
        %v297 = vpack.c.b16 %v294, %v291
        %v298 = vpack.c.b16 %v295, %v292
        %v350 = vunpack.c.l.b16 %v238
        %v351 = vunpack.c.h.b16 %v238
        %v352 = vunpack.c.l.b16 %v239
        %v353 = vunpack.c.h.b16 %v239
        %v354 = vunpack.c.l.b16 %v240
        %v355 = vunpack.c.h.b16 %v240
        %v356 = vunpack.c.l.b16 %v241
        %v357 = vunpack.c.h.b16 %v241
        %v358 = vunpack.c.l.b16 %v242
        %v359 = vunpack.c.h.b16 %v242
        %v360 = vunpack.c.l.b16 %v243
        %v361 = vunpack.c.h.b16 %v243
        %v362 = vunpack.c.l.b16 %v244
        %v363 = vunpack.c.h.b16 %v244
        %v364 = vunpack.c.l.b16 %v245
        %v365 = vunpack.c.h.b16 %v245
        %v366 = vunpack.c.l.b16 %v246
        %v367 = vunpack.c.h.b16 %v246
        %v368 = vunpack.c.l.b16 %v247
        %v369 = vunpack.c.h.b16 %v247
        %v370 = vunpack.c.l.b16 %v248
        %v371 = vunpack.c.h.b16 %v248
        %v372 = vunpack.c.l.b16 %v249
        %v373 = vunpack.c.h.b16 %v249
        %v374 = vunpack.c.l.b16 %v250
        %v375 = vunpack.c.h.b16 %v250
        %v376 = vunpack.c.l.b16 %v251
        %v377 = vunpack.c.h.b16 %v251
        %v378 = vunpack.c.l.b16 %v252
        %v379 = vunpack.c.h.b16 %v252
        %v380 = vunpack.c.l.b16 %v253
        %v381 = vunpack.c.h.b16 %v253
        %v382 = vunpack.c.l.b16 %v254
        %v383 = vunpack.c.h.b16 %v254
        %v384 = vunpack.c.l.b16 %v255
        %v385 = vunpack.c.h.b16 %v255
        %v386 = vunpack.c.l.b16 %v256
        %v387 = vunpack.c.h.b16 %v256
        %v388 = vunpack.c.l.b16 %v257
        %v389 = vunpack.c.h.b16 %v257
        %v390 = vunpack.c.l.b16 %v258
        %v391 = vunpack.c.h.b16 %v258
        %v392 = vunpack.c.l.b16 %v259
        %v393 = vunpack.c.h.b16 %v259
        %v394 = vunpack.c.l.b16 %v260
        %v395 = vunpack.c.h.b16 %v260
        %v396 = vunpack.c.l.b16 %v261
        %v397 = vunpack.c.h.b16 %v261
        %v398 = vunpack.c.l.b16 %v262
        %v399 = vunpack.c.h.b16 %v262
        %v400 = vunpack.c.l.b16 %v263
        %v401 = vunpack.c.h.b16 %v263
        %v402 = vunpack.c.l.b16 %v264
        %v403 = vunpack.c.h.b16 %v264
        %v404 = vunpack.c.l.b16 %v265
        %v405 = vunpack.c.h.b16 %v265
        %v406 = vunpack.c.l.b16 %v266
        %v407 = vunpack.c.h.b16 %v266
        %v408 = vunpack.c.l.b16 %v267
        %v409 = vunpack.c.h.b16 %v267
        %v410 = vunpack.c.l.b16 %v268
        %v411 = vunpack.c.h.b16 %v268
        %v412 = vunpack.c.l.b16 %v269
        %v413 = vunpack.c.h.b16 %v269
        %v414 = vunpack.c.l.b16 %v270
        %v415 = vunpack.c.h.b16 %v270
        %v416 = vunpack.c.l.b16 %v271
        %v417 = vunpack.c.h.b16 %v271
        %v418 = vunpack.c.l.b16 %v272
        %v419 = vunpack.c.h.b16 %v272
        %v420 = vunpack.c.l.b16 %v273
        %v421 = vunpack.c.h.b16 %v273
        %v422 = vunpack.c.l.b16 %v274
        %v423 = vunpack.c.h.b16 %v274
        %v424 = vunpack.c.l.b16 %v275
        %v425 = vunpack.c.h.b16 %v275
        %v426 = vunpack.c.l.b16 %v276
        %v427 = vunpack.c.h.b16 %v276
        %v428 = vunpack.c.l.b16 %v277
        %v429 = vunpack.c.h.b16 %v277
        %v430 = vunpack.c.l.b16 %v278
        %v431 = vunpack.c.h.b16 %v278
        %v432 = vunpack.c.l.b16 %v279
        %v433 = vunpack.c.h.b16 %v279
        %v434 = vunpack.c.l.b16 %v280
        %v435 = vunpack.c.h.b16 %v280
        %v436 = vunpack.c.l.b16 %v281
        %v437 = vunpack.c.h.b16 %v281
        %v438 = vunpack.c.l.b16 %v282
        %v439 = vunpack.c.h.b16 %v282
        %v440 = vunpack.c.l.b16 %v283
        %v441 = vunpack.c.h.b16 %v283
        %v442 = vunpack.c.l.b16 %v284
        %v443 = vunpack.c.h.b16 %v284
        %v444 = vunpack.c.l.b16 %v285
        %v445 = vunpack.c.h.b16 %v285
        %v446 = vpack.c.b16 %v352, %v350
        %v447 = vpack.c.b16 %v353, %v351
        %v448 = vpack.c.b16 %v356, %v354
        %v449 = vpack.c.b16 %v357, %v355
        %v450 = vpack.c.b16 %v360, %v358
        %v451 = vpack.c.b16 %v361, %v359
        %v452 = vpack.c.b16 %v364, %v362
        %v453 = vpack.c.b16 %v365, %v363
        %v454 = vpack.c.b16 %v368, %v366
        %v455 = vpack.c.b16 %v369, %v367
        %v456 = vpack.c.b16 %v372, %v370
        %v457 = vpack.c.b16 %v373, %v371
        %v458 = vpack.c.b16 %v376, %v374
        %v459 = vpack.c.b16 %v377, %v375
        %v460 = vpack.c.b16 %v380, %v378
        %v461 = vpack.c.b16 %v381, %v379
        %v462 = vpack.c.b16 %v384, %v382
        %v463 = vpack.c.b16 %v385, %v383
        %v464 = vpack.c.b16 %v388, %v386
        %v465 = vpack.c.b16 %v389, %v387
        %v466 = vpack.c.b16 %v392, %v390
        %v467 = vpack.c.b16 %v393, %v391
        %v468 = vpack.c.b16 %v396, %v394
        %v469 = vpack.c.b16 %v397, %v395
        %v470 = vpack.c.b16 %v400, %v398
        %v471 = vpack.c.b16 %v401, %v399
        %v472 = vpack.c.b16 %v404, %v402
        %v473 = vpack.c.b16 %v405, %v403
        %v474 = vpack.c.b16 %v408, %v406
        %v475 = vpack.c.b16 %v409, %v407
        %v476 = vpack.c.b16 %v412, %v410
        %v477 = vpack.c.b16 %v413, %v411
        %v478 = vpack.c.b16 %v416, %v414
        %v479 = vpack.c.b16 %v417, %v415
        %v480 = vpack.c.b16 %v420, %v418
        %v481 = vpack.c.b16 %v421, %v419
        %v482 = vpack.c.b16 %v424, %v422
        %v483 = vpack.c.b16 %v425, %v423
        %v484 = vpack.c.b16 %v428, %v426
        %v485 = vpack.c.b16 %v429, %v427
        %v486 = vpack.c.b16 %v432, %v430
        %v487 = vpack.c.b16 %v433, %v431
        %v488 = vpack.c.b16 %v436, %v434
        %v489 = vpack.c.b16 %v437, %v435
        %v490 = vpack.c.b16 %v440, %v438
        %v491 = vpack.c.b16 %v441, %v439
        %v492 = vpack.c.b16 %v444, %v442
        %v493 = vpack.c.b16 %v445, %v443
        %542 = vmatpush.bf16.msra.mxu0 %v460
        %543 = vmatpush.bf16.msra.mxu0 %v458
        %544 = vmatpush.bf16.msra.mxu0 %v456
        %545 = vmatpush.bf16.msra.mxu0 %v454
        %546 = vmatpush.bf16.msra.mxu0 %v452
        %547 = vmatpush.bf16.msra.mxu0 %v450
        %548 = vmatpush.bf16.msra.mxu0 %v448
        %549 = vmatpush.bf16.msra.mxu0 %v446
        %550 = vmatmul.bf16.gmra.mxu0 %v296
        %v551 = vpop.f32.mrf.mxu0
        %v552 = vadd.f32 0.0, %v551
        %v553 = vpop.f32.mrf.mxu0
        %v554 = vadd.f32 0.0, %v553
        %555 = vdwg.mxu0
        %556 = vmatpush.bf16.msra.mxu0 %v476
        %557 = vmatpush.bf16.msra.mxu0 %v474
        %558 = vmatpush.bf16.msra.mxu0 %v472
        %559 = vmatpush.bf16.msra.mxu0 %v470
        %560 = vmatpush.bf16.msra.mxu0 %v468
        %561 = vmatpush.bf16.msra.mxu0 %v466
        %562 = vmatpush.bf16.msra.mxu0 %v464
        %563 = vmatpush.bf16.msra.mxu0 %v462
        %564 = vmatmul.bf16.gmra.mxu0 %v297
        %v565 = vpop.f32.mrf.mxu0
        %v566 = vadd.f32 %v552, %v565
        %v567 = vpop.f32.mrf.mxu0
        %v568 = vadd.f32 %v554, %v567
        %569 = vdwg.mxu0
        %570 = vmatpush.bf16.msra.mxu0 %v492
        %571 = vmatpush.bf16.msra.mxu0 %v490
        %572 = vmatpush.bf16.msra.mxu0 %v488
        %573 = vmatpush.bf16.msra.mxu0 %v486
        %574 = vmatpush.bf16.msra.mxu0 %v484
        %575 = vmatpush.bf16.msra.mxu0 %v482
        %576 = vmatpush.bf16.msra.mxu0 %v480
        %577 = vmatpush.bf16.msra.mxu0 %v478
        %578 = vmatmul.bf16.gmra.mxu0 %v298
        %v579 = vpop.f32.mrf.mxu0
        %v580 = vadd.f32 %v566, %v579
        %v581 = vpop.f32.mrf.mxu0
        %v582 = vadd.f32 %v568, %v581
        %583 = vdwg.mxu0
        %584 = vmatpush.bf16.msra.mxu0 %v461
        %585 = vmatpush.bf16.msra.mxu0 %v459
        %586 = vmatpush.bf16.msra.mxu0 %v457
        %587 = vmatpush.bf16.msra.mxu0 %v455
        %588 = vmatpush.bf16.msra.mxu0 %v453
        %589 = vmatpush.bf16.msra.mxu0 %v451
        %590 = vmatpush.bf16.msra.mxu0 %v449
        %591 = vmatpush.bf16.msra.mxu0 %v447
        %592 = vmatmul.bf16.gmra.mxu0 %v296
        %v593 = vpop.f32.mrf.mxu0
        %v594 = vadd.f32 0.0, %v593
        %v595 = vpop.f32.mrf.mxu0
        %v596 = vadd.f32 0.0, %v595
        %597 = vdwg.mxu0
        %598 = vmatpush.bf16.msra.mxu0 %v477
        %599 = vmatpush.bf16.msra.mxu0 %v475
        %600 = vmatpush.bf16.msra.mxu0 %v473
        %601 = vmatpush.bf16.msra.mxu0 %v471
        %602 = vmatpush.bf16.msra.mxu0 %v469
        %603 = vmatpush.bf16.msra.mxu0 %v467
        %604 = vmatpush.bf16.msra.mxu0 %v465
        %605 = vmatpush.bf16.msra.mxu0 %v463
        %606 = vmatmul.bf16.gmra.mxu0 %v297
        %v607 = vpop.f32.mrf.mxu0
        %v608 = vadd.f32 %v594, %v607
        %v609 = vpop.f32.mrf.mxu0
        %v610 = vadd.f32 %v596, %v609
        %611 = vdwg.mxu0
        %612 = vmatpush.bf16.msra.mxu0 %v493
        %613 = vmatpush.bf16.msra.mxu0 %v491
        %614 = vmatpush.bf16.msra.mxu0 %v489
        %615 = vmatpush.bf16.msra.mxu0 %v487
        %616 = vmatpush.bf16.msra.mxu0 %v485
        %617 = vmatpush.bf16.msra.mxu0 %v483
        %618 = vmatpush.bf16.msra.mxu0 %v481
        %619 = vmatpush.bf16.msra.mxu0 %v479
        %620 = vmatmul.bf16.gmra.mxu0 %v298
        %v621 = vpop.f32.mrf.mxu0
        %v622 = vadd.f32 %v608, %v621
        %v623 = vpop.f32.mrf.mxu0
        %v624 = vadd.f32 %v610, %v623
        %625 = vdwg.mxu0
        %v626 = vadd.f32 %v230, %v580
        %v627 = vadd.f32 %v231, %v622
        %v628 = vadd.f32 %v232, %v582
        %v629 = vadd.f32 %v233, %v624
        %630 = vst [vmem:[#allocation2] sm:$0xff] %v626
        %631 = vst [vmem:[#allocation2 + $0x8] sm:$0xff] %v627
        %632 = vst [vmem:[#allocation2 + $0x10] sm:$0xff] %v628
        %633 = vst [vmem:[#allocation2 + $0x18] sm:$0xff] %v629
        %p634 = scmp.eq.s32.totalorder %s18, 2
        // Predicated region
        $region59: #{generator_resnet_forward.12} parent=49 // pred_check
          %p635 = pneg %p634
        $region60: #{generator_resnet_forward.12} parent=49 // pred_check_branch
          %637 = sbr.rel (%p635) target = $region62
        $region61: #{generator_resnet_forward.12} parent=49 // pred_region
          %v638 = vld [vmem:[#allocation2] sm:$0xff]
          %v639 = vld [vmem:[#allocation2 + $0x8] sm:$0xff]
          %v640 = vld [vmem:[#allocation2 + $0x10] sm:$0xff]
          %v641 = vld [vmem:[#allocation2 + $0x18] sm:$0xff]
          %v642 = vadd.f32 %v638, %v640
          %v643 = vrot.slane %v642, 4
          %v644 = vadd.f32 %v642, %v643
          %v645 = vrot.slane %v644, 2
          %v646 = vadd.f32 %v644, %v645
          %v647 = vrot.slane %v646, 1
          %v648 = vadd.f32 %v646, %v647
          %v649 = vadd.f32 %v639, %v641
          %v650 = vrot.slane %v649, 4
          %v651 = vadd.f32 %v649, %v650
          %v652 = vrot.slane %v651, 2
          %v653 = vadd.f32 %v651, %v652
          %v654 = vrot.slane %v653, 1
          %v655 = vadd.f32 %v653, %v654
          %v656 = vmul.f32 %v648, 0.0625
          %v657 = vmul.f32 %v655, 0.0625
          %v658 = vmul.f32 %v638, %v638
          %v659 = vmul.f32 %v639, %v639
          %v660 = vmul.f32 %v640, %v640
          %v661 = vmul.f32 %v641, %v641
          %v662 = vadd.f32 %v658, %v660
          %v663 = vrot.slane %v662, 4
          %v664 = vadd.f32 %v662, %v663
          %v665 = vrot.slane %v664, 2
          %v666 = vadd.f32 %v664, %v665
          %v667 = vrot.slane %v666, 1
          %v668 = vadd.f32 %v666, %v667
          %v669 = vadd.f32 %v659, %v661
          %v670 = vrot.slane %v669, 4
          %v671 = vadd.f32 %v669, %v670
          %v672 = vrot.slane %v671, 2
          %v673 = vadd.f32 %v671, %v672
          %v674 = vrot.slane %v673, 1
          %v675 = vadd.f32 %v673, %v674
          %v676 = vmul.f32 %v668, 0.0625
          %v677 = vmul.f32 %v675, 0.0625
          %v678 = vmul.f32 %v656, %v656
          %v679 = vmul.f32 %v657, %v657
          %v680 = vsub.f32 %v676, %v678
          %v681 = vsub.f32 %v677, %v679
          %v682 = vmax.f32 %v680, 0.0
          %v683 = vmax.f32 %v681, 0.0
          %v684 = vsub.f32 %v638, %v656
          %v685 = vsub.f32 %v639, %v657
          %v686 = vsub.f32 %v640, %v656
          %v687 = vsub.f32 %v641, %v657
          %v688 = vadd.f32 %v682, 1e-05
          %v689 = vadd.f32 %v683, 1e-05
          %v690 = vrsqrt.pop %v688
          %v691 = vmul.f32 %v690, %v688
          %v692 = vmul.f32 %v691, %v690
          %v693 = vmul.f32 0.5, %v692
          %v694 = vsub.f32 1.5, %v693
          %v695 = vmul.f32 %v690, %v694
          %vm696 = vweird.f32 %v688
          %vm697 = vweird.f32 %v690
          %vm698 = vmor %vm696, %vm697
          %v699 = vsel %vm698, %v690, %v695
          %v700 = vrsqrt.pop %v689
          %v701 = vmul.f32 %v700, %v689
          %v702 = vmul.f32 %v701, %v700
          %v703 = vmul.f32 0.5, %v702
          %v704 = vsub.f32 1.5, %v703
          %v705 = vmul.f32 %v700, %v704
          %vm706 = vweird.f32 %v689
          %vm707 = vweird.f32 %v700
          %vm708 = vmor %vm706, %vm707
          %v709 = vsel %vm708, %v700, %v705
          %v710 = vmul.f32 %v684, %v699
          %v711 = vmul.f32 %v685, %v709
          %v712 = vmul.f32 %v686, %v699
          %v713 = vmul.f32 %v687, %v709
          %v714 = vmax.f32 %v710, 0.0
          %v715 = vmax.f32 %v711, 0.0
          %v716 = vmax.f32 %v712, 0.0
          %v717 = vmax.f32 %v713, 0.0
          %718 = vst [vmem:[%s221] sm:$0xff] %v714
          %719 = vst [vmem:[%s221 + $0x8] sm:$0xff] %v715
          %720 = vst [vmem:[%s221 + $0x10] sm:$0xff] %v716
          %721 = vst [vmem:[%s221 + $0x18] sm:$0xff] %v717
        $region62: #{generator_resnet_forward.12} parent=49 // pred_fallthru
          _
        %p722 = scmp.lt.s32.totalorder %s17, 1
        %s723 = scalar_select %p722, %s17, 1
        %s724 = smul.addr %s723, 4
        %s725 = smul.addr %s724, 8
        %s726 = scalar_lea.vmem %s2, %s725
        // Predicated region
        $region63: #{generator_resnet_forward.12} parent=49 // pred_check
          %p727 = pneg %p97
        $region64: #{generator_resnet_forward.12} parent=49 // pred_check_branch
          %729 = sbr.rel (%p727) target = $region66
        $region65: #{generator_resnet_forward.12} parent=49 // pred_region
          _
        $region66: #{generator_resnet_forward.12} parent=49 // pred_fallthru
          _
      $region50: #{generator_resnet_forward.12} parent=5 // pred_fallthru
        _
      %p730 = scmp.le.s32.totalorder 2, %s8
      // Predicated region
      $region67: #{generator_resnet_forward.12} parent=5 // pred_check
        %p731 = pneg %p730
      $region68: #{generator_resnet_forward.12} parent=5 // pred_check_branch
        %733 = sbr.rel (%p731) target = $region70
      $region69: #{generator_resnet_forward.12} parent=5 // pred_region
        %s734 = ssub.s32 %s8, 2
        // Predicated region
        $region71: #{generator_resnet_forward.12} parent=69 // pred_check
          %p735 = pneg %p103
        $region72: #{generator_resnet_forward.12} parent=69 // pred_check_branch
          %737 = sbr.rel (%p735) target = $region74
        $region73: #{generator_resnet_forward.12} parent=69 // pred_region
          %p738 = scmp.lt.s32.totalorder %s19, 1
          %s739 = scalar_select %p738, %s19, 1
          %s740 = smul.addr %s739, 4
          %s741 = smul.addr %s740, 8
          %s742 = scalar_lea.vmem %s2, %s741
        $region74: #{generator_resnet_forward.12} parent=69 // pred_fallthru
          _
      $region70: #{generator_resnet_forward.12} parent=5 // pred_fallthru
        _
    $region6: #{generator_resnet_forward.12} parent=1 // loop_footer
      %s12 = sadd.s32 1, %s8
    $region7: #{generator_resnet_forward.12} parent=1 // loop_footer_branch
      %7 = sbr.rel target = $region3
    $region8: #{generator_resnet_forward.12} parent=1 // loop_exit
      _

// kernel: generator_resnet_forward.14
$region0: #{generator_resnet_forward.14}
  #allocation0 [shape = 'u32[]', space=smem, size = 0x4, offset = 0x4, fixed_abs, tag = 'smem constant byte address 0x4 - core index']
  #allocation1 [shape = 'u32[72,128]{1,0:T(1,128)}', space=vmem, size = 0x9000, scoped, tag = 'internal scratch']
  #allocation2 [shape = 'f32[16,256]{1,0:T(8,128)}', space=vmem, size = 0x4000, scoped, tag = 'scratch operand']
  %s0 = inlined_call_operand.vmem [shape: bf16[2,16,2304], index: 0, kind: input, shape index: {}]
  %s1 = inlined_call_operand.vmem [shape: bf16[2304,256], index: 1, kind: input, shape index: {}]
  %s2 = inlined_call_operand.vmem [shape: f32[2,16,256], index: 2, kind: input, shape index: {}]
  %s3 = inlined_call_operand.vmem [shape: f32[2,16,256], index: 3, kind: output, shape index: {}]
  %s4 = sld [smem:[#allocation0]]
  $region76: #{generator_resnet_forward.14} parent=0
    _
  %s6 = ssub.s32 1, %s4
  %s7 = scalar_select 0, %s6, %s4
  $region1: #{generator_resnet_forward.14} parent=0
    #allocation3 [shape = 'u8[49152]{0}', space=vmem, size = 0xc000, scoped, tag = 'input window, operand 0']
    loop: start=0, step=1, limit=8
    $region2: #{generator_resnet_forward.14} parent=1 // loop_pre_header
      _
    $region3: #{generator_resnet_forward.14} parent=1 // loop_header
      %s9 = sphi 0, %s13
      %p10 = scmp.ge.s32.totalorder %s9, 8
      %s16 = sphi 0, %s28
      %s17 = sphi 0, %s24
      %s18 = sphi 0, %s16
      %s19 = sphi 0, %s17
      %s20 = sphi 0, %s18
      %s21 = sphi 0, %s19
      %s33 = sphi 0, %s35
      %s36 = sphi 0, %s33
      %s37 = sphi 0, %s36
      %s53 = sphi 0, %s37
      %s59 = sphi 0, %s61
      %s62 = sphi 0, %s59
      %s63 = sphi 0, %s62
      %s79 = sphi 0, %s63
      %s85 = sphi 0, %s87
      %s88 = sphi 0, %s85
      %s89 = sphi 0, %s88
      %s105 = sphi 0, %s89
      %s111 = sphi 0, %s113
      %s114 = sphi 0, %s111
      %s115 = sphi 0, %s114
      %s131 = sphi 0, %s115
    $region4: #{generator_resnet_forward.14} parent=1 // loop_header_branch
      %12 = sbr.rel (%p10) target = $region8
    $region5: #{generator_resnet_forward.14} parent=1 // loop_body
      %s14 = ssub.s32 %s9, 1
      %s15 = ssub.s32 %s9, 2
      %s22 = sadd.s32 1, %s17
      %p23 = scmp.ge.s32.totalorder %s22, 3
      %s24 = scalar_select %p23, 0, %s22
      %s25 = sadd.s32 1, %s16
      %s26 = scalar_select %p23, %s25, %s16
      %p27 = scmp.ge.s32.totalorder %s26, 2
      %s28 = scalar_select %p27, 0, %s26
      %s29 = ssub.s32 %s16, %s28
      %s30 = ssub.s32 %s17, %s24
      %s31 = sor.u32 %s29, %s30
      %p32 = scmp.eq.s32.totalorder %s31, 0
      %s34 = sadd.s32 %s33, 1
      %s35 = scalar_select %p32, %s33, %s34
      %p38 = pneg %p32
      %p39 = scmp.eq.s32.totalorder %s9, 5
      %p40 = por %p38, %p39
      %p41 = scmp.ne.s32.totalorder %s33, %s36
      %p42 = scmp.eq.s32.totalorder %s9, 0
      %p43 = por %p41, %p42
      %p44 = scmp.ne.s32.totalorder %s33, %s36
      %p45 = scmp.eq.s32.totalorder %s14, 5
      %p46 = por %p44, %p45
      %p47 = scmp.ne.s32.totalorder %s36, %s37
      %p48 = scmp.eq.s32.totalorder %s14, 0
      %p49 = por %p47, %p48
      %p50 = scmp.ne.s32.totalorder %s36, %s37
      %p51 = scmp.eq.s32.totalorder %s15, 5
      %p52 = por %p50, %p51
      %p54 = scmp.ne.s32.totalorder %s37, %s53
      %p55 = scmp.eq.s32.totalorder %s15, 0
      %p56 = por %p54, %p55
      %s57 = ssub.s32 %s17, %s24
      %p58 = scmp.eq.s32.totalorder %s57, 0
      %s60 = sadd.s32 %s59, 1
      %s61 = scalar_select %p58, %s59, %s60
      %p64 = pneg %p58
      %p65 = scmp.eq.s32.totalorder %s9, 5
      %p66 = por %p64, %p65
      %p67 = scmp.ne.s32.totalorder %s59, %s62
      %p68 = scmp.eq.s32.totalorder %s9, 0
      %p69 = por %p67, %p68
      %p70 = scmp.ne.s32.totalorder %s59, %s62
      %p71 = scmp.eq.s32.totalorder %s14, 5
      %p72 = por %p70, %p71
      %p73 = scmp.ne.s32.totalorder %s62, %s63
      %p74 = scmp.eq.s32.totalorder %s14, 0
      %p75 = por %p73, %p74
      %p76 = scmp.ne.s32.totalorder %s62, %s63
      %p77 = scmp.eq.s32.totalorder %s15, 5
      %p78 = por %p76, %p77
      %p80 = scmp.ne.s32.totalorder %s63, %s79
      %p81 = scmp.eq.s32.totalorder %s15, 0
      %p82 = por %p80, %p81
      %s83 = ssub.s32 %s16, %s28
      %p84 = scmp.eq.s32.totalorder %s83, 0
      %s86 = sadd.s32 %s85, 1
      %s87 = scalar_select %p84, %s85, %s86
      %p90 = pneg %p84
      %p91 = scmp.eq.s32.totalorder %s9, 5
      %p92 = por %p90, %p91
      %p93 = scmp.ne.s32.totalorder %s85, %s88
      %p94 = scmp.eq.s32.totalorder %s9, 0
      %p95 = por %p93, %p94
      %p96 = scmp.ne.s32.totalorder %s85, %s88
      %p97 = scmp.eq.s32.totalorder %s14, 5
      %p98 = por %p96, %p97
      %p99 = scmp.ne.s32.totalorder %s88, %s89
      %p100 = scmp.eq.s32.totalorder %s14, 0
      %p101 = por %p99, %p100
      %p102 = scmp.ne.s32.totalorder %s88, %s89
      %p103 = scmp.eq.s32.totalorder %s15, 5
      %p104 = por %p102, %p103
      %p106 = scmp.ne.s32.totalorder %s89, %s105
      %p107 = scmp.eq.s32.totalorder %s15, 0
      %p108 = por %p106, %p107
      %s109 = ssub.s32 %s16, %s28
      %p110 = scmp.eq.s32.totalorder %s109, 0
      %s112 = sadd.s32 %s111, 1
      %s113 = scalar_select %p110, %s111, %s112
      %p116 = pneg %p110
      %p117 = scmp.eq.s32.totalorder %s9, 5
      %p118 = por %p116, %p117
      %p119 = scmp.ne.s32.totalorder %s111, %s114
      %p120 = scmp.eq.s32.totalorder %s9, 0
      %p121 = por %p119, %p120
      %p122 = scmp.ne.s32.totalorder %s111, %s114
      %p123 = scmp.eq.s32.totalorder %s14, 5
      %p124 = por %p122, %p123
      %p125 = scmp.ne.s32.totalorder %s114, %s115
      %p126 = scmp.eq.s32.totalorder %s14, 0
      %p127 = por %p125, %p126
      %p128 = scmp.ne.s32.totalorder %s114, %s115
      %p129 = scmp.eq.s32.totalorder %s15, 5
      %p130 = por %p128, %p129
      %p132 = scmp.ne.s32.totalorder %s115, %s131
      %p133 = scmp.eq.s32.totalorder %s15, 0
      %p134 = por %p132, %p133
      %p135 = scmp.le.s32.totalorder 1, %s9
      %p136 = scmp.lt.s32.totalorder %s9, 7
      %p137 = pnand %p135, %p136
      %p138 = pneg %p137
      // Predicated region
      $region9: #{generator_resnet_forward.14} parent=5 // pred_check
        _
      $region10: #{generator_resnet_forward.14} parent=5 // pred_check_branch
        %140 = sbr.rel (%p137) target = $region12
      $region11: #{generator_resnet_forward.14} parent=5 // pred_region
        %s141 = ssub.s32 %s9, 1
      $region12: #{generator_resnet_forward.14} parent=5 // pred_fallthru
        _
      %p142 = scmp.lt.s32.totalorder %s9, 6
      // Predicated region
      $region13: #{generator_resnet_forward.14} parent=5 // pred_check
        %p143 = pneg %p142
      $region14: #{generator_resnet_forward.14} parent=5 // pred_check_branch
        %145 = sbr.rel (%p143) target = $region16
      $region15: #{generator_resnet_forward.14} parent=5 // pred_region
        // Predicated region
        $region17: #{generator_resnet_forward.14} parent=15 // pred_check
          %p146 = pneg %p43
        $region18: #{generator_resnet_forward.14} parent=15 // pred_check_branch
          %148 = sbr.rel (%p146) target = $region20
        $region19: #{generator_resnet_forward.14} parent=15 // pred_region
          %s149 = sand.u32 %s33, 1
          %s150 = sand.u32 %s33, 1
          %s151 = smul.addr %s150, 48
          %s152 = scalar_lea.vmem [#allocation3], %s151
          %s153 = smul.u32 6, %s17
          %s154 = smul.addr %s16, 36
          %s155 = sadd.s32 %s153, %s154
          %s156 = smul.addr %s155, 4
          %s157 = scalar_lea.vmem %s0, %s156
          // Predicated region
          $region21: #{generator_resnet_forward.14} parent=19 // pred_check
            _
          $region22: #{generator_resnet_forward.14} parent=19 // pred_check_branch
            %159 = sbr.rel (0) target = $region24
          $region23: #{generator_resnet_forward.14} parent=19 // pred_region
            // Predicated region
            $region25: #{generator_resnet_forward.14} parent=23 // pred_check
              _
            $region26: #{generator_resnet_forward.14} parent=23 // pred_check_branch
              %161 = sbr.rel (0) target = $region28
            $region27: #{generator_resnet_forward.14} parent=23 // pred_region
              loop: start=0, step=1, limit=1
              $region29: #{generator_resnet_forward.14} parent=27 // loop_pre_header
                _
              $region30: #{generator_resnet_forward.14} parent=27 // loop_header
                %s163 = sphi 0, %s167
                %p164 = scmp.ge.s32.totalorder %s163, 1
                %s168 = sphi %s157, %s157
                %s169 = sphi %s152, %s152
              $region31: #{generator_resnet_forward.14} parent=27 // loop_header_branch
                %166 = sbr.rel (%p164) target = $region35
              $region32: #{generator_resnet_forward.14} parent=27 // loop_body
                %v170 = vld [vmem:[%s168] sm:$0xff]
                %171 = vst [vmem:[%s169] sm:$0xff] %v170
                %v172 = vld [vmem:[%s168 + $0x8] sm:$0xff]
                %173 = vst [vmem:[%s169 + $0x8] sm:$0xff] %v172
                %v174 = vld [vmem:[%s168 + $0x10] sm:$0xff]
                %175 = vst [vmem:[%s169 + $0x10] sm:$0xff] %v174
                %v176 = vld [vmem:[%s168 + $0x48] sm:$0xff]
                %177 = vst [vmem:[%s169 + $0x18] sm:$0xff] %v176
                %v178 = vld [vmem:[%s168 + $0x50] sm:$0xff]
                %179 = vst [vmem:[%s169 + $0x20] sm:$0xff] %v178
                %v180 = vld [vmem:[%s168 + $0x58] sm:$0xff]
                %181 = vst [vmem:[%s169 + $0x28] sm:$0xff] %v180
              $region33: #{generator_resnet_forward.14} parent=27 // loop_footer
                %s167 = sadd.s32 1, %s163
              $region34: #{generator_resnet_forward.14} parent=27 // loop_footer_branch
                %162 = sbr.rel target = $region30
              $region35: #{generator_resnet_forward.14} parent=27 // loop_exit
                _
            $region28: #{generator_resnet_forward.14} parent=23 // pred_fallthru
              _
            // Predicated region
            $region36: #{generator_resnet_forward.14} parent=23 // pred_check
              _
            $region37: #{generator_resnet_forward.14} parent=23 // pred_check_branch
              %183 = sbr.rel target = $region39
            $region38: #{generator_resnet_forward.14} parent=23 // pred_region
              _
            $region39: #{generator_resnet_forward.14} parent=23 // pred_fallthru
              _
          $region24: #{generator_resnet_forward.14} parent=19 // pred_fallthru
            _
          %184 = vnop
        $region20: #{generator_resnet_forward.14} parent=15 // pred_fallthru
          _
        // Predicated region
        $region40: #{generator_resnet_forward.14} parent=15 // pred_check
          %p185 = pneg %p69
        $region41: #{generator_resnet_forward.14} parent=15 // pred_check_branch
          %187 = sbr.rel (%p185) target = $region43
        $region42: #{generator_resnet_forward.14} parent=15 // pred_region
          %s188 = smul.u32 96, %s17
          %p189 = scmp.lt.s32.totalorder %s188, 287
          %s190 = scalar_select %p189, %s188, 287
          %s191 = smul.addr %s190, 2
          %s192 = smul.addr %s191, 4
          %s193 = scalar_lea.vmem %s1, %s192
          %s194 = smul.u32 96, %s17
        $region43: #{generator_resnet_forward.14} parent=15 // pred_fallthru
          _
        // Predicated region
        $region44: #{generator_resnet_forward.14} parent=15 // pred_check
          %p195 = pneg %p95
        $region45: #{generator_resnet_forward.14} parent=15 // pred_check_branch
          %197 = sbr.rel (%p195) target = $region47
        $region46: #{generator_resnet_forward.14} parent=15 // pred_region
          %p198 = scmp.lt.s32.totalorder %s16, 1
          %s199 = scalar_select %p198, %s16, 1
          %s200 = smul.addr %s199, 4
          %s201 = smul.addr %s200, 8
          %s202 = scalar_lea.vmem %s2, %s201
        $region47: #{generator_resnet_forward.14} parent=15 // pred_fallthru
          _
      $region16: #{generator_resnet_forward.14} parent=5 // pred_fallthru
        _
      %p203 = scmp.le.s32.totalorder 1, %s9
      %p204 = scmp.lt.s32.totalorder %s9, 7
      %p205 = pnand %p203, %p204
      %p206 = pneg %p205
      // Predicated region
      $region48: #{generator_resnet_forward.14} parent=5 // pred_check
        _
      $region49: #{generator_resnet_forward.14} parent=5 // pred_check_branch
        %208 = sbr.rel (%p205) target = $region51
      $region50: #{generator_resnet_forward.14} parent=5 // pred_region
        %s209 = ssub.s32 %s9, 1
        %s210 = sand.u32 %s36, 1
        %s211 = sand.u32 %s36, 1
        %s212 = smul.addr %s211, 48
        %s213 = scalar_lea.vmem [#allocation3], %s212
        // Predicated region
        $region52: #{generator_resnet_forward.14} parent=50 // pred_check
          %p214 = pneg %p49
        $region53: #{generator_resnet_forward.14} parent=50 // pred_check_branch
          %216 = sbr.rel (%p214) target = $region55
        $region54: #{generator_resnet_forward.14} parent=50 // pred_region
          _
        $region55: #{generator_resnet_forward.14} parent=50 // pred_fallthru
          _
        %s217 = sand.u32 %s36, 1
        %s218 = sand.u32 %s36, 1
        %s219 = smul.addr %s218, 48
        %s220 = scalar_lea.vmem [#allocation3], %s219
        %p221 = pneg %p49
        %p222 = pneg %p46
        %s223 = smul.u32 96, %s19
        %p224 = scmp.lt.s32.totalorder %s223, 287
        %s225 = scalar_select %p224, %s223, 287
        %s226 = smul.addr %s225, 2
        %s227 = smul.addr %s226, 4
        %s228 = scalar_lea.vmem %s1, %s227
        %p229 = pneg %p75
        %p230 = pneg %p72
        %p231 = scmp.lt.s32.totalorder %s18, 1
        %s232 = scalar_select %p231, %s18, 1
        %s233 = smul.addr %s232, 4
        %s234 = smul.addr %s233, 8
        %s235 = scalar_lea.vmem %s2, %s234
        %p236 = pneg %p101
        %p237 = pneg %p98
        %p238 = pneg %p127
        %p239 = pneg %p124
        %p240 = scmp.lt.s32.totalorder %s18, 1
        %s241 = scalar_select %p240, %s18, 1
        %s242 = smul.addr %s241, 4
        %s243 = smul.addr %s242, 8
        %s244 = scalar_lea.vmem %s3, %s243
        %s245 = smul.u32 6, %s19
        %s246 = smul.u32 96, %s19
        %p247 = scmp.lt.s32.totalorder %s246, 287
        %s248 = scalar_select %p247, %s246, 287
        %s249 = smul.addr %s248, 2
        %s250 = smul.addr %s249, 4
        %s251 = scalar_lea.vmem %s1, %s250
        %s252 = smul.u32 96, %s19
        %p253 = scmp.lt.s32.totalorder %s18, 1
        %s254 = scalar_select %p253, %s18, 1
        %s255 = smul.addr %s254, 4
        %s256 = smul.addr %s255, 8
        %s257 = scalar_lea.vmem %s2, %s256
        %p258 = scmp.lt.s32.totalorder %s18, 1
        %s259 = scalar_select %p258, %s18, 1
        %s260 = smul.addr %s259, 4
        %s261 = smul.addr %s260, 8
        %s262 = scalar_lea.vmem %s3, %s261
        %p263 = scmp.eq.s32.totalorder %s19, 0
        // Predicated region
        $region56: #{generator_resnet_forward.14} parent=50 // pred_check
          %p264 = pneg %p263
        $region57: #{generator_resnet_forward.14} parent=50 // pred_check_branch
          %266 = sbr.rel (%p264) target = $region59
        $region58: #{generator_resnet_forward.14} parent=50 // pred_region
          %267 = vst [vmem:[#allocation2] sm:$0xff] 0.0
          %268 = vst [vmem:[#allocation2 + $0x8] sm:$0xff] 0.0
          %269 = vst [vmem:[#allocation2 + $0x10] sm:$0xff] 0.0
          %270 = vst [vmem:[#allocation2 + $0x18] sm:$0xff] 0.0
        $region59: #{generator_resnet_forward.14} parent=50 // pred_fallthru
          _
        %v271 = vld [vmem:[#allocation2] sm:$0xff]
        %v272 = vld [vmem:[#allocation2 + $0x8] sm:$0xff]
        %v273 = vld [vmem:[#allocation2 + $0x10] sm:$0xff]
        %v274 = vld [vmem:[#allocation2 + $0x18] sm:$0xff]
        %v275 = vld [vmem:[%s213] sm:$0xff]
        %v276 = vld [vmem:[%s213 + $0x8] sm:$0xff]
        %v277 = vld [vmem:[%s213 + $0x10] sm:$0xff]
        %v278 = vld [vmem:[%s213 + $0x18] sm:$0xff]
        %v279 = vld [vmem:[%s213 + $0x20] sm:$0xff]
        %v280 = vld [vmem:[%s213 + $0x28] sm:$0xff]
        %v281 = vld [vmem:[%s251] sm:$0xff]
        %v282 = vld [vmem:[%s251 + $0x8] sm:$0xff]
        %v283 = vld [vmem:[%s251 + $0x10] sm:$0xff]
        %v284 = vld [vmem:[%s251 + $0x18] sm:$0xff]
        %v285 = vld [vmem:[%s251 + $0x20] sm:$0xff]
        %v286 = vld [vmem:[%s251 + $0x28] sm:$0xff]
        %v287 = vld [vmem:[%s251 + $0x30] sm:$0xff]
        %v288 = vld [vmem:[%s251 + $0x38] sm:$0xff]
        %v289 = vld [vmem:[%s251 + $0x40] sm:$0xff]
        %v290 = vld [vmem:[%s251 + $0x48] sm:$0xff]
        %v291 = vld [vmem:[%s251 + $0x50] sm:$0xff]
        %v292 = vld [vmem:[%s251 + $0x58] sm:$0xff]
        %v293 = vld [vmem:[%s251 + $0x60] sm:$0xff]
        %v294 = vld [vmem:[%s251 + $0x68] sm:$0xff]
        %v295 = vld [vmem:[%s251 + $0x70] sm:$0xff]
        %v296 = vld [vmem:[%s251 + $0x78] sm:$0xff]
        %v297 = vld [vmem:[%s251 + $0x80] sm:$0xff]
        %v298 = vld [vmem:[%s251 + $0x88] sm:$0xff]
        %v299 = vld [vmem:[%s251 + $0x90] sm:$0xff]
        %v300 = vld [vmem:[%s251 + $0x98] sm:$0xff]
        %v301 = vld [vmem:[%s251 + $0xa0] sm:$0xff]
        %v302 = vld [vmem:[%s251 + $0xa8] sm:$0xff]
        %v303 = vld [vmem:[%s251 + $0xb0] sm:$0xff]
        %v304 = vld [vmem:[%s251 + $0xb8] sm:$0xff]
        %v305 = vld [vmem:[%s251 + $0xc0] sm:$0xff]
        %v306 = vld [vmem:[%s251 + $0xc8] sm:$0xff]
        %v307 = vld [vmem:[%s251 + $0xd0] sm:$0xff]
        %v308 = vld [vmem:[%s251 + $0xd8] sm:$0xff]
        %v309 = vld [vmem:[%s251 + $0xe0] sm:$0xff]
        %v310 = vld [vmem:[%s251 + $0xe8] sm:$0xff]
        %v311 = vld [vmem:[%s251 + $0xf0] sm:$0xff]
        %v312 = vld [vmem:[%s251 + $0xf8] sm:$0xff]
        %v313 = vld [vmem:[%s251 + $0x100] sm:$0xff]
        %v314 = vld [vmem:[%s251 + $0x108] sm:$0xff]
        %v315 = vld [vmem:[%s251 + $0x110] sm:$0xff]
        %v316 = vld [vmem:[%s251 + $0x118] sm:$0xff]
        %v317 = vld [vmem:[%s251 + $0x120] sm:$0xff]
        %v318 = vld [vmem:[%s251 + $0x128] sm:$0xff]
        %v319 = vld [vmem:[%s251 + $0x130] sm:$0xff]
        %v320 = vld [vmem:[%s251 + $0x138] sm:$0xff]
        %v321 = vld [vmem:[%s251 + $0x140] sm:$0xff]
        %v322 = vld [vmem:[%s251 + $0x148] sm:$0xff]
        %v323 = vld [vmem:[%s251 + $0x150] sm:$0xff]
        %v324 = vld [vmem:[%s251 + $0x158] sm:$0xff]
        %v325 = vld [vmem:[%s251 + $0x160] sm:$0xff]
        %v326 = vld [vmem:[%s251 + $0x168] sm:$0xff]
        %v327 = vld [vmem:[%s251 + $0x170] sm:$0xff]
        %v328 = vld [vmem:[%s251 + $0x178] sm:$0xff]
        %v329 = vld [vmem:[%s251 + $0x180] sm:$0xff]
        %v330 = vld [vmem:[%s251 + $0x188] sm:$0xff]
        %v331 = vld [vmem:[%s251 + $0x190] sm:$0xff]
        %v332 = vld [vmem:[%s251 + $0x198] sm:$0xff]
        %v333 = vld [vmem:[%s251 + $0x1a0] sm:$0xff]
        %v334 = vld [vmem:[%s251 + $0x1a8] sm:$0xff]
        %v335 = vld [vmem:[%s251 + $0x1b0] sm:$0xff]
        %v336 = vld [vmem:[%s251 + $0x1b8] sm:$0xff]
        %v337 = vld [vmem:[%s251 + $0x1c0] sm:$0xff]
        %v338 = vld [vmem:[%s251 + $0x1c8] sm:$0xff]
        %v339 = vld [vmem:[%s251 + $0x1d0] sm:$0xff]
        %v340 = vld [vmem:[%s251 + $0x1d8] sm:$0xff]
        %v341 = vld [vmem:[%s251 + $0x1e0] sm:$0xff]
        %v342 = vld [vmem:[%s251 + $0x1e8] sm:$0xff]
        %v343 = vld [vmem:[%s251 + $0x1f0] sm:$0xff]
        %v344 = vld [vmem:[%s251 + $0x1f8] sm:$0xff]
        %v345 = vld [vmem:[%s251 + $0x200] sm:$0xff]
        %v346 = vld [vmem:[%s251 + $0x208] sm:$0xff]
        %v347 = vld [vmem:[%s251 + $0x210] sm:$0xff]
        %v348 = vld [vmem:[%s251 + $0x218] sm:$0xff]
        %v349 = vld [vmem:[%s251 + $0x220] sm:$0xff]
        %v350 = vld [vmem:[%s251 + $0x228] sm:$0xff]
        %v351 = vld [vmem:[%s251 + $0x230] sm:$0xff]
        %v352 = vld [vmem:[%s251 + $0x238] sm:$0xff]
        %v353 = vld [vmem:[%s251 + $0x240] sm:$0xff]
        %v354 = vld [vmem:[%s251 + $0x248] sm:$0xff]
        %v355 = vld [vmem:[%s251 + $0x250] sm:$0xff]
        %v356 = vld [vmem:[%s251 + $0x258] sm:$0xff]
        %v357 = vld [vmem:[%s251 + $0x260] sm:$0xff]
        %v358 = vld [vmem:[%s251 + $0x268] sm:$0xff]
        %v359 = vld [vmem:[%s251 + $0x270] sm:$0xff]
        %v360 = vld [vmem:[%s251 + $0x278] sm:$0xff]
        %v361 = vld [vmem:[%s251 + $0x280] sm:$0xff]
        %v362 = vld [vmem:[%s251 + $0x288] sm:$0xff]
        %v363 = vld [vmem:[%s251 + $0x290] sm:$0xff]
        %v364 = vld [vmem:[%s251 + $0x298] sm:$0xff]
        %v365 = vld [vmem:[%s251 + $0x2a0] sm:$0xff]
        %v366 = vld [vmem:[%s251 + $0x2a8] sm:$0xff]
        %v367 = vld [vmem:[%s251 + $0x2b0] sm:$0xff]
        %v368 = vld [vmem:[%s251 + $0x2b8] sm:$0xff]
        %v369 = vld [vmem:[%s251 + $0x2c0] sm:$0xff]
        %v370 = vld [vmem:[%s251 + $0x2c8] sm:$0xff]
        %v371 = vld [vmem:[%s251 + $0x2d0] sm:$0xff]
        %v372 = vld [vmem:[%s251 + $0x2d8] sm:$0xff]
        %v373 = vld [vmem:[%s251 + $0x2e0] sm:$0xff]
        %v374 = vld [vmem:[%s251 + $0x2e8] sm:$0xff]
        %v375 = vld [vmem:[%s251 + $0x2f0] sm:$0xff]
        %v376 = vld [vmem:[%s251 + $0x2f8] sm:$0xff]
        %v383 = vunpack.c.l.b16 %v275
        %v384 = vunpack.c.h.b16 %v275
        %v385 = vunpack.c.l.b16 %v276
        %v386 = vunpack.c.h.b16 %v276
        %v387 = vunpack.c.l.b16 %v277
        %v388 = vunpack.c.h.b16 %v277
        %v389 = vunpack.c.l.b16 %v278
        %v390 = vunpack.c.h.b16 %v278
        %v391 = vunpack.c.l.b16 %v279
        %v392 = vunpack.c.h.b16 %v279
        %v393 = vunpack.c.l.b16 %v280
        %v394 = vunpack.c.h.b16 %v280
        %v395 = vpack.c.b16 %v389, %v383
        %v396 = vpack.c.b16 %v390, %v384
        %v397 = vpack.c.b16 %v391, %v385
        %v398 = vpack.c.b16 %v392, %v386
        %v399 = vpack.c.b16 %v393, %v387
        %v400 = vpack.c.b16 %v394, %v388
        %v503 = vunpack.c.l.b16 %v281
        %v504 = vunpack.c.h.b16 %v281
        %v505 = vunpack.c.l.b16 %v282
        %v506 = vunpack.c.h.b16 %v282
        %v507 = vunpack.c.l.b16 %v283
        %v508 = vunpack.c.h.b16 %v283
        %v509 = vunpack.c.l.b16 %v284
        %v510 = vunpack.c.h.b16 %v284
        %v511 = vunpack.c.l.b16 %v285
        %v512 = vunpack.c.h.b16 %v285
        %v513 = vunpack.c.l.b16 %v286
        %v514 = vunpack.c.h.b16 %v286
        %v515 = vunpack.c.l.b16 %v287
        %v516 = vunpack.c.h.b16 %v287
        %v517 = vunpack.c.l.b16 %v288
        %v518 = vunpack.c.h.b16 %v288
        %v519 = vunpack.c.l.b16 %v289
        %v520 = vunpack.c.h.b16 %v289
        %v521 = vunpack.c.l.b16 %v290
        %v522 = vunpack.c.h.b16 %v290
        %v523 = vunpack.c.l.b16 %v291
        %v524 = vunpack.c.h.b16 %v291
        %v525 = vunpack.c.l.b16 %v292
        %v526 = vunpack.c.h.b16 %v292
        %v527 = vunpack.c.l.b16 %v293
        %v528 = vunpack.c.h.b16 %v293
        %v529 = vunpack.c.l.b16 %v294
        %v530 = vunpack.c.h.b16 %v294
        %v531 = vunpack.c.l.b16 %v295
        %v532 = vunpack.c.h.b16 %v295
        %v533 = vunpack.c.l.b16 %v296
        %v534 = vunpack.c.h.b16 %v296
        %v535 = vunpack.c.l.b16 %v297
        %v536 = vunpack.c.h.b16 %v297
        %v537 = vunpack.c.l.b16 %v298
        %v538 = vunpack.c.h.b16 %v298
        %v539 = vunpack.c.l.b16 %v299
        %v540 = vunpack.c.h.b16 %v299
        %v541 = vunpack.c.l.b16 %v300
        %v542 = vunpack.c.h.b16 %v300
        %v543 = vunpack.c.l.b16 %v301
        %v544 = vunpack.c.h.b16 %v301
        %v545 = vunpack.c.l.b16 %v302
        %v546 = vunpack.c.h.b16 %v302
        %v547 = vunpack.c.l.b16 %v303
        %v548 = vunpack.c.h.b16 %v303
        %v549 = vunpack.c.l.b16 %v304
        %v550 = vunpack.c.h.b16 %v304
        %v551 = vunpack.c.l.b16 %v305
        %v552 = vunpack.c.h.b16 %v305
        %v553 = vunpack.c.l.b16 %v306
        %v554 = vunpack.c.h.b16 %v306
        %v555 = vunpack.c.l.b16 %v307
        %v556 = vunpack.c.h.b16 %v307
        %v557 = vunpack.c.l.b16 %v308
        %v558 = vunpack.c.h.b16 %v308
        %v559 = vunpack.c.l.b16 %v309
        %v560 = vunpack.c.h.b16 %v309
        %v561 = vunpack.c.l.b16 %v310
        %v562 = vunpack.c.h.b16 %v310
        %v563 = vunpack.c.l.b16 %v311
        %v564 = vunpack.c.h.b16 %v311
        %v565 = vunpack.c.l.b16 %v312
        %v566 = vunpack.c.h.b16 %v312
        %v567 = vunpack.c.l.b16 %v313
        %v568 = vunpack.c.h.b16 %v313
        %v569 = vunpack.c.l.b16 %v314
        %v570 = vunpack.c.h.b16 %v314
        %v571 = vunpack.c.l.b16 %v315
        %v572 = vunpack.c.h.b16 %v315
        %v573 = vunpack.c.l.b16 %v316
        %v574 = vunpack.c.h.b16 %v316
        %v575 = vunpack.c.l.b16 %v317
        %v576 = vunpack.c.h.b16 %v317
        %v577 = vunpack.c.l.b16 %v318
        %v578 = vunpack.c.h.b16 %v318
        %v579 = vunpack.c.l.b16 %v319
        %v580 = vunpack.c.h.b16 %v319
        %v581 = vunpack.c.l.b16 %v320
        %v582 = vunpack.c.h.b16 %v320
        %v583 = vunpack.c.l.b16 %v321
        %v584 = vunpack.c.h.b16 %v321
        %v585 = vunpack.c.l.b16 %v322
        %v586 = vunpack.c.h.b16 %v322
        %v587 = vunpack.c.l.b16 %v323
        %v588 = vunpack.c.h.b16 %v323
        %v589 = vunpack.c.l.b16 %v324
        %v590 = vunpack.c.h.b16 %v324
        %v591 = vunpack.c.l.b16 %v325
        %v592 = vunpack.c.h.b16 %v325
        %v593 = vunpack.c.l.b16 %v326
        %v594 = vunpack.c.h.b16 %v326
        %v595 = vunpack.c.l.b16 %v327
        %v596 = vunpack.c.h.b16 %v327
        %v597 = vunpack.c.l.b16 %v328
        %v598 = vunpack.c.h.b16 %v328
        %v599 = vunpack.c.l.b16 %v329
        %v600 = vunpack.c.h.b16 %v329
        %v601 = vunpack.c.l.b16 %v330
        %v602 = vunpack.c.h.b16 %v330
        %v603 = vunpack.c.l.b16 %v331
        %v604 = vunpack.c.h.b16 %v331
        %v605 = vunpack.c.l.b16 %v332
        %v606 = vunpack.c.h.b16 %v332
        %v607 = vunpack.c.l.b16 %v333
        %v608 = vunpack.c.h.b16 %v333
        %v609 = vunpack.c.l.b16 %v334
        %v610 = vunpack.c.h.b16 %v334
        %v611 = vunpack.c.l.b16 %v335
        %v612 = vunpack.c.h.b16 %v335
        %v613 = vunpack.c.l.b16 %v336
        %v614 = vunpack.c.h.b16 %v336
        %v615 = vunpack.c.l.b16 %v337
        %v616 = vunpack.c.h.b16 %v337
        %v617 = vunpack.c.l.b16 %v338
        %v618 = vunpack.c.h.b16 %v338
        %v619 = vunpack.c.l.b16 %v339
        %v620 = vunpack.c.h.b16 %v339
        %v621 = vunpack.c.l.b16 %v340
        %v622 = vunpack.c.h.b16 %v340
        %v623 = vunpack.c.l.b16 %v341
        %v624 = vunpack.c.h.b16 %v341
        %v625 = vunpack.c.l.b16 %v342
        %v626 = vunpack.c.h.b16 %v342
        %v627 = vunpack.c.l.b16 %v343
        %v628 = vunpack.c.h.b16 %v343
        %v629 = vunpack.c.l.b16 %v344
        %v630 = vunpack.c.h.b16 %v344
        %v631 = vunpack.c.l.b16 %v345
        %v632 = vunpack.c.h.b16 %v345
        %v633 = vunpack.c.l.b16 %v346
        %v634 = vunpack.c.h.b16 %v346
        %v635 = vunpack.c.l.b16 %v347
        %v636 = vunpack.c.h.b16 %v347
        %v637 = vunpack.c.l.b16 %v348
        %v638 = vunpack.c.h.b16 %v348
        %v639 = vunpack.c.l.b16 %v349
        %v640 = vunpack.c.h.b16 %v349
        %v641 = vunpack.c.l.b16 %v350
        %v642 = vunpack.c.h.b16 %v350
        %v643 = vunpack.c.l.b16 %v351
        %v644 = vunpack.c.h.b16 %v351
        %v645 = vunpack.c.l.b16 %v352
        %v646 = vunpack.c.h.b16 %v352
        %v647 = vunpack.c.l.b16 %v353
        %v648 = vunpack.c.h.b16 %v353
        %v649 = vunpack.c.l.b16 %v354
        %v650 = vunpack.c.h.b16 %v354
        %v651 = vunpack.c.l.b16 %v355
        %v652 = vunpack.c.h.b16 %v355
        %v653 = vunpack.c.l.b16 %v356
        %v654 = vunpack.c.h.b16 %v356
        %v655 = vunpack.c.l.b16 %v357
        %v656 = vunpack.c.h.b16 %v357
        %v657 = vunpack.c.l.b16 %v358
        %v658 = vunpack.c.h.b16 %v358
        %v659 = vunpack.c.l.b16 %v359
        %v660 = vunpack.c.h.b16 %v359
        %v661 = vunpack.c.l.b16 %v360
        %v662 = vunpack.c.h.b16 %v360
        %v663 = vunpack.c.l.b16 %v361
        %v664 = vunpack.c.h.b16 %v361
        %v665 = vunpack.c.l.b16 %v362
        %v666 = vunpack.c.h.b16 %v362
        %v667 = vunpack.c.l.b16 %v363
        %v668 = vunpack.c.h.b16 %v363
        %v669 = vunpack.c.l.b16 %v364
        %v670 = vunpack.c.h.b16 %v364
        %v671 = vunpack.c.l.b16 %v365
        %v672 = vunpack.c.h.b16 %v365
        %v673 = vunpack.c.l.b16 %v366
        %v674 = vunpack.c.h.b16 %v366
        %v675 = vunpack.c.l.b16 %v367
        %v676 = vunpack.c.h.b16 %v367
        %v677 = vunpack.c.l.b16 %v368
        %v678 = vunpack.c.h.b16 %v368
        %v679 = vunpack.c.l.b16 %v369
        %v680 = vunpack.c.h.b16 %v369
        %v681 = vunpack.c.l.b16 %v370
        %v682 = vunpack.c.h.b16 %v370
        %v683 = vunpack.c.l.b16 %v371
        %v684 = vunpack.c.h.b16 %v371
        %v685 = vunpack.c.l.b16 %v372
        %v686 = vunpack.c.h.b16 %v372
        %v687 = vunpack.c.l.b16 %v373
        %v688 = vunpack.c.h.b16 %v373
        %v689 = vunpack.c.l.b16 %v374
        %v690 = vunpack.c.h.b16 %v374
        %v691 = vunpack.c.l.b16 %v375
        %v692 = vunpack.c.h.b16 %v375
        %v693 = vunpack.c.l.b16 %v376
        %v694 = vunpack.c.h.b16 %v376
        %v695 = vpack.c.b16 %v505, %v503
        %v696 = vpack.c.b16 %v506, %v504
        %v697 = vpack.c.b16 %v509, %v507
        %v698 = vpack.c.b16 %v510, %v508
        %v699 = vpack.c.b16 %v513, %v511
        %v700 = vpack.c.b16 %v514, %v512
        %v701 = vpack.c.b16 %v517, %v515
        %v702 = vpack.c.b16 %v518, %v516
        %v703 = vpack.c.b16 %v521, %v519
        %v704 = vpack.c.b16 %v522, %v520
        %v705 = vpack.c.b16 %v525, %v523
        %v706 = vpack.c.b16 %v526, %v524
        %v707 = vpack.c.b16 %v529, %v527
        %v708 = vpack.c.b16 %v530, %v528
        %v709 = vpack.c.b16 %v533, %v531
        %v710 = vpack.c.b16 %v534, %v532
        %v711 = vpack.c.b16 %v537, %v535
        %v712 = vpack.c.b16 %v538, %v536
        %v713 = vpack.c.b16 %v541, %v539
        %v714 = vpack.c.b16 %v542, %v540
        %v715 = vpack.c.b16 %v545, %v543
        %v716 = vpack.c.b16 %v546, %v544
        %v717 = vpack.c.b16 %v549, %v547
        %v718 = vpack.c.b16 %v550, %v548
        %v719 = vpack.c.b16 %v553, %v551
        %v720 = vpack.c.b16 %v554, %v552
        %v721 = vpack.c.b16 %v557, %v555
        %v722 = vpack.c.b16 %v558, %v556
        %v723 = vpack.c.b16 %v561, %v559
        %v724 = vpack.c.b16 %v562, %v560
        %v725 = vpack.c.b16 %v565, %v563
        %v726 = vpack.c.b16 %v566, %v564
        %v727 = vpack.c.b16 %v569, %v567
        %v728 = vpack.c.b16 %v570, %v568
        %v729 = vpack.c.b16 %v573, %v571
        %v730 = vpack.c.b16 %v574, %v572
        %v731 = vpack.c.b16 %v577, %v575
        %v732 = vpack.c.b16 %v578, %v576
        %v733 = vpack.c.b16 %v581, %v579
        %v734 = vpack.c.b16 %v582, %v580
        %v735 = vpack.c.b16 %v585, %v583
        %v736 = vpack.c.b16 %v586, %v584
        %v737 = vpack.c.b16 %v589, %v587
        %v738 = vpack.c.b16 %v590, %v588
        %v739 = vpack.c.b16 %v593, %v591
        %v740 = vpack.c.b16 %v594, %v592
        %v741 = vpack.c.b16 %v597, %v595
        %v742 = vpack.c.b16 %v598, %v596
        %v743 = vpack.c.b16 %v601, %v599
        %v744 = vpack.c.b16 %v602, %v600
        %v745 = vpack.c.b16 %v605, %v603
        %v746 = vpack.c.b16 %v606, %v604
        %v747 = vpack.c.b16 %v609, %v607
        %v748 = vpack.c.b16 %v610, %v608
        %v749 = vpack.c.b16 %v613, %v611
        %v750 = vpack.c.b16 %v614, %v612
        %v751 = vpack.c.b16 %v617, %v615
        %v752 = vpack.c.b16 %v618, %v616
        %v753 = vpack.c.b16 %v621, %v619
        %v754 = vpack.c.b16 %v622, %v620
        %v755 = vpack.c.b16 %v625, %v623
        %v756 = vpack.c.b16 %v626, %v624
        %v757 = vpack.c.b16 %v629, %v627
        %v758 = vpack.c.b16 %v630, %v628
        %v759 = vpack.c.b16 %v633, %v631
        %v760 = vpack.c.b16 %v634, %v632
        %v761 = vpack.c.b16 %v637, %v635
        %v762 = vpack.c.b16 %v638, %v636
        %v763 = vpack.c.b16 %v641, %v639
        %v764 = vpack.c.b16 %v642, %v640
        %v765 = vpack.c.b16 %v645, %v643
        %v766 = vpack.c.b16 %v646, %v644
        %v767 = vpack.c.b16 %v649, %v647
        %v768 = vpack.c.b16 %v650, %v648
        %v769 = vpack.c.b16 %v653, %v651
        %v770 = vpack.c.b16 %v654, %v652
        %v771 = vpack.c.b16 %v657, %v655
        %v772 = vpack.c.b16 %v658, %v656
        %v773 = vpack.c.b16 %v661, %v659
        %v774 = vpack.c.b16 %v662, %v660
        %v775 = vpack.c.b16 %v665, %v663
        %v776 = vpack.c.b16 %v666, %v664
        %v777 = vpack.c.b16 %v669, %v667
        %v778 = vpack.c.b16 %v670, %v668
        %v779 = vpack.c.b16 %v673, %v671
        %v780 = vpack.c.b16 %v674, %v672
        %v781 = vpack.c.b16 %v677, %v675
        %v782 = vpack.c.b16 %v678, %v676
        %v783 = vpack.c.b16 %v681, %v679
        %v784 = vpack.c.b16 %v682, %v680
        %v785 = vpack.c.b16 %v685, %v683
        %v786 = vpack.c.b16 %v686, %v684
        %v787 = vpack.c.b16 %v689, %v687
        %v788 = vpack.c.b16 %v690, %v688
        %v789 = vpack.c.b16 %v693, %v691
        %v790 = vpack.c.b16 %v694, %v692
        %887 = vmatpush.bf16.msra.mxu0 %v709
        %888 = vmatpush.bf16.msra.mxu0 %v707
        %889 = vmatpush.bf16.msra.mxu0 %v705
        %890 = vmatpush.bf16.msra.mxu0 %v703
        %891 = vmatpush.bf16.msra.mxu0 %v701
        %892 = vmatpush.bf16.msra.mxu0 %v699
        %893 = vmatpush.bf16.msra.mxu0 %v697
        %894 = vmatpush.bf16.msra.mxu0 %v695
        %895 = vmatmul.bf16.gmra.mxu0 %v395
        %v896 = vpop.f32.mrf.mxu0
        %v897 = vadd.f32 0.0, %v896
        %v898 = vpop.f32.mrf.mxu0
        %v899 = vadd.f32 0.0, %v898
        %900 = vdwg.mxu0
        %901 = vmatpush.bf16.msra.mxu0 %v725
        %902 = vmatpush.bf16.msra.mxu0 %v723
        %903 = vmatpush.bf16.msra.mxu0 %v721
        %904 = vmatpush.bf16.msra.mxu0 %v719
        %905 = vmatpush.bf16.msra.mxu0 %v717
        %906 = vmatpush.bf16.msra.mxu0 %v715
        %907 = vmatpush.bf16.msra.mxu0 %v713
        %908 = vmatpush.bf16.msra.mxu0 %v711
        %909 = vmatmul.bf16.gmra.mxu0 %v396
        %v910 = vpop.f32.mrf.mxu0
        %v911 = vadd.f32 %v897, %v910
        %v912 = vpop.f32.mrf.mxu0
        %v913 = vadd.f32 %v899, %v912
        %914 = vdwg.mxu0
        %915 = vmatpush.bf16.msra.mxu0 %v741
        %916 = vmatpush.bf16.msra.mxu0 %v739
        %917 = vmatpush.bf16.msra.mxu0 %v737
        %918 = vmatpush.bf16.msra.mxu0 %v735
        %919 = vmatpush.bf16.msra.mxu0 %v733
        %920 = vmatpush.bf16.msra.mxu0 %v731
        %921 = vmatpush.bf16.msra.mxu0 %v729
        %922 = vmatpush.bf16.msra.mxu0 %v727
        %923 = vmatmul.bf16.gmra.mxu0 %v397
        %v924 = vpop.f32.mrf.mxu0
        %v925 = vadd.f32 %v911, %v924
        %v926 = vpop.f32.mrf.mxu0
        %v927 = vadd.f32 %v913, %v926
        %928 = vdwg.mxu0
        %929 = vmatpush.bf16.msra.mxu0 %v757
        %930 = vmatpush.bf16.msra.mxu0 %v755
        %931 = vmatpush.bf16.msra.mxu0 %v753
        %932 = vmatpush.bf16.msra.mxu0 %v751
        %933 = vmatpush.bf16.msra.mxu0 %v749
        %934 = vmatpush.bf16.msra.mxu0 %v747
        %935 = vmatpush.bf16.msra.mxu0 %v745
        %936 = vmatpush.bf16.msra.mxu0 %v743
        %937 = vmatmul.bf16.gmra.mxu0 %v398
        %v938 = vpop.f32.mrf.mxu0
        %v939 = vadd.f32 %v925, %v938
        %v940 = vpop.f32.mrf.mxu0
        %v941 = vadd.f32 %v927, %v940
        %942 = vdwg.mxu0
        %943 = vmatpush.bf16.msra.mxu0 %v773
        %944 = vmatpush.bf16.msra.mxu0 %v771
        %945 = vmatpush.bf16.msra.mxu0 %v769
        %946 = vmatpush.bf16.msra.mxu0 %v767
        %947 = vmatpush.bf16.msra.mxu0 %v765
        %948 = vmatpush.bf16.msra.mxu0 %v763
        %949 = vmatpush.bf16.msra.mxu0 %v761
        %950 = vmatpush.bf16.msra.mxu0 %v759
        %951 = vmatmul.bf16.gmra.mxu0 %v399
        %v952 = vpop.f32.mrf.mxu0
        %v953 = vadd.f32 %v939, %v952
        %v954 = vpop.f32.mrf.mxu0
        %v955 = vadd.f32 %v941, %v954
        %956 = vdwg.mxu0
        %957 = vmatpush.bf16.msra.mxu0 %v789
        %958 = vmatpush.bf16.msra.mxu0 %v787
        %959 = vmatpush.bf16.msra.mxu0 %v785
        %960 = vmatpush.bf16.msra.mxu0 %v783
        %961 = vmatpush.bf16.msra.mxu0 %v781
        %962 = vmatpush.bf16.msra.mxu0 %v779
        %963 = vmatpush.bf16.msra.mxu0 %v777
        %964 = vmatpush.bf16.msra.mxu0 %v775
        %965 = vmatmul.bf16.gmra.mxu0 %v400
        %v966 = vpop.f32.mrf.mxu0
        %v967 = vadd.f32 %v953, %v966
        %v968 = vpop.f32.mrf.mxu0
        %v969 = vadd.f32 %v955, %v968
        %970 = vdwg.mxu0
        %971 = vmatpush.bf16.msra.mxu0 %v710
        %972 = vmatpush.bf16.msra.mxu0 %v708
        %973 = vmatpush.bf16.msra.mxu0 %v706
        %974 = vmatpush.bf16.msra.mxu0 %v704
        %975 = vmatpush.bf16.msra.mxu0 %v702
        %976 = vmatpush.bf16.msra.mxu0 %v700
        %977 = vmatpush.bf16.msra.mxu0 %v698
        %978 = vmatpush.bf16.msra.mxu0 %v696
        %979 = vmatmul.bf16.gmra.mxu0 %v395
        %v980 = vpop.f32.mrf.mxu0
        %v981 = vadd.f32 0.0, %v980
        %v982 = vpop.f32.mrf.mxu0
        %v983 = vadd.f32 0.0, %v982
        %984 = vdwg.mxu0
        %985 = vmatpush.bf16.msra.mxu0 %v726
        %986 = vmatpush.bf16.msra.mxu0 %v724
        %987 = vmatpush.bf16.msra.mxu0 %v722
        %988 = vmatpush.bf16.msra.mxu0 %v720
        %989 = vmatpush.bf16.msra.mxu0 %v718
        %990 = vmatpush.bf16.msra.mxu0 %v716
        %991 = vmatpush.bf16.msra.mxu0 %v714
        %992 = vmatpush.bf16.msra.mxu0 %v712
        %993 = vmatmul.bf16.gmra.mxu0 %v396
        %v994 = vpop.f32.mrf.mxu0
        %v995 = vadd.f32 %v981, %v994
        %v996 = vpop.f32.mrf.mxu0
        %v997 = vadd.f32 %v983, %v996
        %998 = vdwg.mxu0
        %999 = vmatpush.bf16.msra.mxu0 %v742
        %1000 = vmatpush.bf16.msra.mxu0 %v740
        %1001 = vmatpush.bf16.msra.mxu0 %v738
        %1002 = vmatpush.bf16.msra.mxu0 %v736
        %1003 = vmatpush.bf16.msra.mxu0 %v734
        %1004 = vmatpush.bf16.msra.mxu0 %v732
        %1005 = vmatpush.bf16.msra.mxu0 %v730
        %1006 = vmatpush.bf16.msra.mxu0 %v728
        %1007 = vmatmul.bf16.gmra.mxu0 %v397
        %v1008 = vpop.f32.mrf.mxu0
        %v1009 = vadd.f32 %v995, %v1008
        %v1010 = vpop.f32.mrf.mxu0
        %v1011 = vadd.f32 %v997, %v1010
        %1012 = vdwg.mxu0
        %1013 = vmatpush.bf16.msra.mxu0 %v758
        %1014 = vmatpush.bf16.msra.mxu0 %v756
        %1015 = vmatpush.bf16.msra.mxu0 %v754
        %1016 = vmatpush.bf16.msra.mxu0 %v752
        %1017 = vmatpush.bf16.msra.mxu0 %v750
        %1018 = vmatpush.bf16.msra.mxu0 %v748
        %1019 = vmatpush.bf16.msra.mxu0 %v746
        %1020 = vmatpush.bf16.msra.mxu0 %v744
        %1021 = vmatmul.bf16.gmra.mxu0 %v398
        %v1022 = vpop.f32.mrf.mxu0
        %v1023 = vadd.f32 %v1009, %v1022
        %v1024 = vpop.f32.mrf.mxu0
        %v1025 = vadd.f32 %v1011, %v1024
        %1026 = vdwg.mxu0
        %1027 = vmatpush.bf16.msra.mxu0 %v774
        %1028 = vmatpush.bf16.msra.mxu0 %v772
        %1029 = vmatpush.bf16.msra.mxu0 %v770
        %1030 = vmatpush.bf16.msra.mxu0 %v768
        %1031 = vmatpush.bf16.msra.mxu0 %v766
        %1032 = vmatpush.bf16.msra.mxu0 %v764
        %1033 = vmatpush.bf16.msra.mxu0 %v762
        %1034 = vmatpush.bf16.msra.mxu0 %v760
        %1035 = vmatmul.bf16.gmra.mxu0 %v399
        %v1036 = vpop.f32.mrf.mxu0
        %v1037 = vadd.f32 %v1023, %v1036
        %v1038 = vpop.f32.mrf.mxu0
        %v1039 = vadd.f32 %v1025, %v1038
        %1040 = vdwg.mxu0
        %1041 = vmatpush.bf16.msra.mxu0 %v790
        %1042 = vmatpush.bf16.msra.mxu0 %v788
        %1043 = vmatpush.bf16.msra.mxu0 %v786
        %1044 = vmatpush.bf16.msra.mxu0 %v784
        %1045 = vmatpush.bf16.msra.mxu0 %v782
        %1046 = vmatpush.bf16.msra.mxu0 %v780
        %1047 = vmatpush.bf16.msra.mxu0 %v778
        %1048 = vmatpush.bf16.msra.mxu0 %v776
        %1049 = vmatmul.bf16.gmra.mxu0 %v400
        %v1050 = vpop.f32.mrf.mxu0
        %v1051 = vadd.f32 %v1037, %v1050
        %v1052 = vpop.f32.mrf.mxu0
        %v1053 = vadd.f32 %v1039, %v1052
        %1054 = vdwg.mxu0
        %v1055 = vadd.f32 %v271, %v967
        %v1056 = vadd.f32 %v272, %v1051
        %v1057 = vadd.f32 %v273, %v969
        %v1058 = vadd.f32 %v274, %v1053
        %1059 = vst [vmem:[#allocation2] sm:$0xff] %v1055
        %1060 = vst [vmem:[#allocation2 + $0x8] sm:$0xff] %v1056
        %1061 = vst [vmem:[#allocation2 + $0x10] sm:$0xff] %v1057
        %1062 = vst [vmem:[#allocation2 + $0x18] sm:$0xff] %v1058
        %p1063 = scmp.eq.s32.totalorder %s19, 2
        // Predicated region
        $region60: #{generator_resnet_forward.14} parent=50 // pred_check
          %p1064 = pneg %p1063
        $region61: #{generator_resnet_forward.14} parent=50 // pred_check_branch
          %1066 = sbr.rel (%p1064) target = $region63
        $region62: #{generator_resnet_forward.14} parent=50 // pred_region
          %v1067 = vld [vmem:[#allocation2] sm:$0xff]
          %v1068 = vld [vmem:[#allocation2 + $0x8] sm:$0xff]
          %v1069 = vld [vmem:[#allocation2 + $0x10] sm:$0xff]
          %v1070 = vld [vmem:[#allocation2 + $0x18] sm:$0xff]
          %v1071 = vadd.f32 %v1067, %v1069
          %v1072 = vrot.slane %v1071, 4
          %v1073 = vadd.f32 %v1071, %v1072
          %v1074 = vrot.slane %v1073, 2
          %v1075 = vadd.f32 %v1073, %v1074
          %v1076 = vrot.slane %v1075, 1
          %v1077 = vadd.f32 %v1075, %v1076
          %v1078 = vadd.f32 %v1068, %v1070
          %v1079 = vrot.slane %v1078, 4
          %v1080 = vadd.f32 %v1078, %v1079
          %v1081 = vrot.slane %v1080, 2
          %v1082 = vadd.f32 %v1080, %v1081
          %v1083 = vrot.slane %v1082, 1
          %v1084 = vadd.f32 %v1082, %v1083
          %v1085 = vmul.f32 %v1077, 0.0625
          %v1086 = vmul.f32 %v1084, 0.0625
          %v1087 = vmul.f32 %v1067, %v1067
          %v1088 = vmul.f32 %v1068, %v1068
          %v1089 = vmul.f32 %v1069, %v1069
          %v1090 = vmul.f32 %v1070, %v1070
          %v1091 = vadd.f32 %v1087, %v1089
          %v1092 = vrot.slane %v1091, 4
          %v1093 = vadd.f32 %v1091, %v1092
          %v1094 = vrot.slane %v1093, 2
          %v1095 = vadd.f32 %v1093, %v1094
          %v1096 = vrot.slane %v1095, 1
          %v1097 = vadd.f32 %v1095, %v1096
          %v1098 = vadd.f32 %v1088, %v1090
          %v1099 = vrot.slane %v1098, 4
          %v1100 = vadd.f32 %v1098, %v1099
          %v1101 = vrot.slane %v1100, 2
          %v1102 = vadd.f32 %v1100, %v1101
          %v1103 = vrot.slane %v1102, 1
          %v1104 = vadd.f32 %v1102, %v1103
          %v1105 = vmul.f32 %v1097, 0.0625
          %v1106 = vmul.f32 %v1104, 0.0625
          %v1107 = vmul.f32 %v1085, %v1085
          %v1108 = vmul.f32 %v1086, %v1086
          %v1109 = vsub.f32 %v1105, %v1107
          %v1110 = vsub.f32 %v1106, %v1108
          %v1111 = vmax.f32 %v1109, 0.0
          %v1112 = vmax.f32 %v1110, 0.0
          %v1113 = vsub.f32 %v1067, %v1085
          %v1114 = vsub.f32 %v1068, %v1086
          %v1115 = vsub.f32 %v1069, %v1085
          %v1116 = vsub.f32 %v1070, %v1086
          %v1117 = vadd.f32 %v1111, 1e-05
          %v1118 = vadd.f32 %v1112, 1e-05
          %v1119 = vrsqrt.pop %v1117
          %v1120 = vmul.f32 %v1119, %v1117
          %v1121 = vmul.f32 %v1120, %v1119
          %v1122 = vmul.f32 0.5, %v1121
          %v1123 = vsub.f32 1.5, %v1122
          %v1124 = vmul.f32 %v1119, %v1123
          %vm1125 = vweird.f32 %v1117
          %vm1126 = vweird.f32 %v1119
          %vm1127 = vmor %vm1125, %vm1126
          %v1128 = vsel %vm1127, %v1119, %v1124
          %v1129 = vrsqrt.pop %v1118
          %v1130 = vmul.f32 %v1129, %v1118
          %v1131 = vmul.f32 %v1130, %v1129
          %v1132 = vmul.f32 0.5, %v1131
          %v1133 = vsub.f32 1.5, %v1132
          %v1134 = vmul.f32 %v1129, %v1133
          %vm1135 = vweird.f32 %v1118
          %vm1136 = vweird.f32 %v1129
          %vm1137 = vmor %vm1135, %vm1136
          %v1138 = vsel %vm1137, %v1129, %v1134
          %v1139 = vmul.f32 %v1113, %v1128
          %v1140 = vmul.f32 %v1114, %v1138
          %v1141 = vmul.f32 %v1115, %v1128
          %v1142 = vmul.f32 %v1116, %v1138
          %v1143 = vld [vmem:[%s257] sm:$0xff]
          %v1144 = vld [vmem:[%s257 + $0x8] sm:$0xff]
          %v1145 = vld [vmem:[%s257 + $0x10] sm:$0xff]
          %v1146 = vld [vmem:[%s257 + $0x18] sm:$0xff]
          %v1147 = vadd.f32 %v1139, %v1143
          %v1148 = vadd.f32 %v1140, %v1144
          %v1149 = vadd.f32 %v1141, %v1145
          %v1150 = vadd.f32 %v1142, %v1146
          %1151 = vst [vmem:[%s262] sm:$0xff] %v1147
          %1152 = vst [vmem:[%s262 + $0x8] sm:$0xff] %v1148
          %1153 = vst [vmem:[%s262 + $0x10] sm:$0xff] %v1149
          %1154 = vst [vmem:[%s262 + $0x18] sm:$0xff] %v1150
        $region63: #{generator_resnet_forward.14} parent=50 // pred_fallthru
          _
        %p1155 = scmp.lt.s32.totalorder %s18, 1
        %s1156 = scalar_select %p1155, %s18, 1
        %s1157 = smul.addr %s1156, 4
        %s1158 = smul.addr %s1157, 8
        %s1159 = scalar_lea.vmem %s3, %s1158
        // Predicated region
        $region64: #{generator_resnet_forward.14} parent=50 // pred_check
          %p1160 = pneg %p124
        $region65: #{generator_resnet_forward.14} parent=50 // pred_check_branch
          %1162 = sbr.rel (%p1160) target = $region67
        $region66: #{generator_resnet_forward.14} parent=50 // pred_region
          _
        $region67: #{generator_resnet_forward.14} parent=50 // pred_fallthru
          _
      $region51: #{generator_resnet_forward.14} parent=5 // pred_fallthru
        _
      %p1163 = scmp.le.s32.totalorder 2, %s9
      // Predicated region
      $region68: #{generator_resnet_forward.14} parent=5 // pred_check
        %p1164 = pneg %p1163
      $region69: #{generator_resnet_forward.14} parent=5 // pred_check_branch
        %1166 = sbr.rel (%p1164) target = $region71
      $region70: #{generator_resnet_forward.14} parent=5 // pred_region
        %s1167 = ssub.s32 %s9, 2
        // Predicated region
        $region72: #{generator_resnet_forward.14} parent=70 // pred_check
          %p1168 = pneg %p130
        $region73: #{generator_resnet_forward.14} parent=70 // pred_check_branch
          %1170 = sbr.rel (%p1168) target = $region75
        $region74: #{generator_resnet_forward.14} parent=70 // pred_region
          %p1171 = scmp.lt.s32.totalorder %s20, 1
          %s1172 = scalar_select %p1171, %s20, 1
          %s1173 = smul.addr %s1172, 4
          %s1174 = smul.addr %s1173, 8
          %s1175 = scalar_lea.vmem %s3, %s1174
        $region75: #{generator_resnet_forward.14} parent=70 // pred_fallthru
          _
      $region71: #{generator_resnet_forward.14} parent=5 // pred_fallthru
        _
    $region6: #{generator_resnet_forward.14} parent=1 // loop_footer
      %s13 = sadd.s32 1, %s9
    $region7: #{generator_resnet_forward.14} parent=1 // loop_footer_branch
      %8 = sbr.rel target = $region3
    $region8: #{generator_resnet_forward.14} parent=1 // loop_exit
      _

// kernel: generator_resnet_forward.13
$region0: #{generator_resnet_forward.13}
  #allocation0 [shape = 'u32[]', space=smem, size = 0x4, offset = 0x4, fixed_abs, tag = 'smem constant byte address 0x4 - core index']
  #allocation1 [shape = 'u32[72,128]{1,0:T(1,128)}', space=vmem, size = 0x9000, scoped, tag = 'internal scratch']
  #allocation2 [shape = 'f32[16,256]{1,0:T(8,128)}', space=vmem, size = 0x4000, scoped, tag = 'scratch operand']
  %s0 = inlined_call_operand.vmem [shape: bf16[2,16,2304], index: 0, kind: input, shape index: {}]
  %s1 = inlined_call_operand.vmem [shape: bf16[2304,256], index: 1, kind: input, shape index: {}]
  %s2 = inlined_call_operand.vmem [shape: f32[2,16,256], index: 2, kind: output, shape index: {}]
  %s3 = sld [smem:[#allocation0]]
  $region72: #{generator_resnet_forward.13} parent=0
    _
  %s5 = ssub.s32 1, %s3
  %s6 = scalar_select 0, %s5, %s3
  $region1: #{generator_resnet_forward.13} parent=0
    #allocation3 [shape = 'u8[49152]{0}', space=vmem, size = 0xc000, scoped, tag = 'input window, operand 0']
    loop: start=0, step=1, limit=8
    $region2: #{generator_resnet_forward.13} parent=1 // loop_pre_header
      _
    $region3: #{generator_resnet_forward.13} parent=1 // loop_header
      %s8 = sphi 0, %s12
      %p9 = scmp.ge.s32.totalorder %s8, 8
      %s15 = sphi 0, %s27
      %s16 = sphi 0, %s23
      %s17 = sphi 0, %s15
      %s18 = sphi 0, %s16
      %s19 = sphi 0, %s17
      %s20 = sphi 0, %s18
      %s32 = sphi 0, %s34
      %s35 = sphi 0, %s32
      %s36 = sphi 0, %s35
      %s52 = sphi 0, %s36
      %s58 = sphi 0, %s60
      %s61 = sphi 0, %s58
      %s62 = sphi 0, %s61
      %s78 = sphi 0, %s62
      %s84 = sphi 0, %s86
      %s87 = sphi 0, %s84
      %s88 = sphi 0, %s87
      %s104 = sphi 0, %s88
    $region4: #{generator_resnet_forward.13} parent=1 // loop_header_branch
      %11 = sbr.rel (%p9) target = $region8
    $region5: #{generator_resnet_forward.13} parent=1 // loop_body
      %s13 = ssub.s32 %s8, 1
      %s14 = ssub.s32 %s8, 2
      %s21 = sadd.s32 1, %s16
      %p22 = scmp.ge.s32.totalorder %s21, 3
      %s23 = scalar_select %p22, 0, %s21
      %s24 = sadd.s32 1, %s15
      %s25 = scalar_select %p22, %s24, %s15
      %p26 = scmp.ge.s32.totalorder %s25, 2
      %s27 = scalar_select %p26, 0, %s25
      %s28 = ssub.s32 %s15, %s27
      %s29 = ssub.s32 %s16, %s23
      %s30 = sor.u32 %s28, %s29
      %p31 = scmp.eq.s32.totalorder %s30, 0
      %s33 = sadd.s32 %s32, 1
      %s34 = scalar_select %p31, %s32, %s33
      %p37 = pneg %p31
      %p38 = scmp.eq.s32.totalorder %s8, 5
      %p39 = por %p37, %p38
      %p40 = scmp.ne.s32.totalorder %s32, %s35
      %p41 = scmp.eq.s32.totalorder %s8, 0
      %p42 = por %p40, %p41
      %p43 = scmp.ne.s32.totalorder %s32, %s35
      %p44 = scmp.eq.s32.totalorder %s13, 5
      %p45 = por %p43, %p44
      %p46 = scmp.ne.s32.totalorder %s35, %s36
      %p47 = scmp.eq.s32.totalorder %s13, 0
      %p48 = por %p46, %p47
      %p49 = scmp.ne.s32.totalorder %s35, %s36
      %p50 = scmp.eq.s32.totalorder %s14, 5
      %p51 = por %p49, %p50
      %p53 = scmp.ne.s32.totalorder %s36, %s52
      %p54 = scmp.eq.s32.totalorder %s14, 0
      %p55 = por %p53, %p54
      %s56 = ssub.s32 %s16, %s23
      %p57 = scmp.eq.s32.totalorder %s56, 0
      %s59 = sadd.s32 %s58, 1
      %s60 = scalar_select %p57, %s58, %s59
      %p63 = pneg %p57
      %p64 = scmp.eq.s32.totalorder %s8, 5
      %p65 = por %p63, %p64
      %p66 = scmp.ne.s32.totalorder %s58, %s61
      %p67 = scmp.eq.s32.totalorder %s8, 0
      %p68 = por %p66, %p67
      %p69 = scmp.ne.s32.totalorder %s58, %s61
      %p70 = scmp.eq.s32.totalorder %s13, 5
      %p71 = por %p69, %p70
      %p72 = scmp.ne.s32.totalorder %s61, %s62
      %p73 = scmp.eq.s32.totalorder %s13, 0
      %p74 = por %p72, %p73
      %p75 = scmp.ne.s32.totalorder %s61, %s62
      %p76 = scmp.eq.s32.totalorder %s14, 5
      %p77 = por %p75, %p76
      %p79 = scmp.ne.s32.totalorder %s62, %s78
      %p80 = scmp.eq.s32.totalorder %s14, 0
      %p81 = por %p79, %p80
      %s82 = ssub.s32 %s15, %s27
      %p83 = scmp.eq.s32.totalorder %s82, 0
      %s85 = sadd.s32 %s84, 1
      %s86 = scalar_select %p83, %s84, %s85
      %p89 = pneg %p83
      %p90 = scmp.eq.s32.totalorder %s8, 5
      %p91 = por %p89, %p90
      %p92 = scmp.ne.s32.totalorder %s84, %s87
      %p93 = scmp.eq.s32.totalorder %s8, 0
      %p94 = por %p92, %p93
      %p95 = scmp.ne.s32.totalorder %s84, %s87
      %p96 = scmp.eq.s32.totalorder %s13, 5
      %p97 = por %p95, %p96
      %p98 = scmp.ne.s32.totalorder %s87, %s88
      %p99 = scmp.eq.s32.totalorder %s13, 0
      %p100 = por %p98, %p99
      %p101 = scmp.ne.s32.totalorder %s87, %s88
      %p102 = scmp.eq.s32.totalorder %s14, 5
      %p103 = por %p101, %p102
      %p105 = scmp.ne.s32.totalorder %s88, %s104
      %p106 = scmp.eq.s32.totalorder %s14, 0
      %p107 = por %p105, %p106
      %p108 = scmp.le.s32.totalorder 1, %s8
      %p109 = scmp.lt.s32.totalorder %s8, 7
      %p110 = pnand %p108, %p109
      %p111 = pneg %p110
      // Predicated region
      $region9: #{generator_resnet_forward.13} parent=5 // pred_check
        _
      $region10: #{generator_resnet_forward.13} parent=5 // pred_check_branch
        %113 = sbr.rel (%p110) target = $region12
      $region11: #{generator_resnet_forward.13} parent=5 // pred_region
        %s114 = ssub.s32 %s8, 1
      $region12: #{generator_resnet_forward.13} parent=5 // pred_fallthru
        _
      %p115 = scmp.lt.s32.totalorder %s8, 6
      // Predicated region
      $region13: #{generator_resnet_forward.13} parent=5 // pred_check
        %p116 = pneg %p115
      $region14: #{generator_resnet_forward.13} parent=5 // pred_check_branch
        %118 = sbr.rel (%p116) target = $region16
      $region15: #{generator_resnet_forward.13} parent=5 // pred_region
        // Predicated region
        $region17: #{generator_resnet_forward.13} parent=15 // pred_check
          %p119 = pneg %p42
        $region18: #{generator_resnet_forward.13} parent=15 // pred_check_branch
          %121 = sbr.rel (%p119) target = $region20
        $region19: #{generator_resnet_forward.13} parent=15 // pred_region
          %s122 = sand.u32 %s32, 1
          %s123 = sand.u32 %s32, 1
          %s124 = smul.addr %s123, 48
          %s125 = scalar_lea.vmem [#allocation3], %s124
          %s126 = smul.u32 6, %s16
          %s127 = smul.addr %s15, 36
          %s128 = sadd.s32 %s126, %s127
          %s129 = smul.addr %s128, 4
          %s130 = scalar_lea.vmem %s0, %s129
          // Predicated region
          $region21: #{generator_resnet_forward.13} parent=19 // pred_check
            _
          $region22: #{generator_resnet_forward.13} parent=19 // pred_check_branch
            %132 = sbr.rel (0) target = $region24
          $region23: #{generator_resnet_forward.13} parent=19 // pred_region
            // Predicated region
            $region25: #{generator_resnet_forward.13} parent=23 // pred_check
              _
            $region26: #{generator_resnet_forward.13} parent=23 // pred_check_branch
              %134 = sbr.rel (0) target = $region28
            $region27: #{generator_resnet_forward.13} parent=23 // pred_region
              loop: start=0, step=1, limit=1
              $region29: #{generator_resnet_forward.13} parent=27 // loop_pre_header
                _
              $region30: #{generator_resnet_forward.13} parent=27 // loop_header
                %s136 = sphi 0, %s140
                %p137 = scmp.ge.s32.totalorder %s136, 1
                %s141 = sphi %s130, %s130
                %s142 = sphi %s125, %s125
              $region31: #{generator_resnet_forward.13} parent=27 // loop_header_branch
                %139 = sbr.rel (%p137) target = $region35
              $region32: #{generator_resnet_forward.13} parent=27 // loop_body
                %v143 = vld [vmem:[%s141] sm:$0xff]
                %144 = vst [vmem:[%s142] sm:$0xff] %v143
                %v145 = vld [vmem:[%s141 + $0x8] sm:$0xff]
                %146 = vst [vmem:[%s142 + $0x8] sm:$0xff] %v145
                %v147 = vld [vmem:[%s141 + $0x10] sm:$0xff]
                %148 = vst [vmem:[%s142 + $0x10] sm:$0xff] %v147
                %v149 = vld [vmem:[%s141 + $0x48] sm:$0xff]
                %150 = vst [vmem:[%s142 + $0x18] sm:$0xff] %v149
                %v151 = vld [vmem:[%s141 + $0x50] sm:$0xff]
                %152 = vst [vmem:[%s142 + $0x20] sm:$0xff] %v151
                %v153 = vld [vmem:[%s141 + $0x58] sm:$0xff]
                %154 = vst [vmem:[%s142 + $0x28] sm:$0xff] %v153
              $region33: #{generator_resnet_forward.13} parent=27 // loop_footer
                %s140 = sadd.s32 1, %s136
              $region34: #{generator_resnet_forward.13} parent=27 // loop_footer_branch
                %135 = sbr.rel target = $region30
              $region35: #{generator_resnet_forward.13} parent=27 // loop_exit
                _
            $region28: #{generator_resnet_forward.13} parent=23 // pred_fallthru
              _
            // Predicated region
            $region36: #{generator_resnet_forward.13} parent=23 // pred_check
              _
            $region37: #{generator_resnet_forward.13} parent=23 // pred_check_branch
              %156 = sbr.rel target = $region39
            $region38: #{generator_resnet_forward.13} parent=23 // pred_region
              _
            $region39: #{generator_resnet_forward.13} parent=23 // pred_fallthru
              _
          $region24: #{generator_resnet_forward.13} parent=19 // pred_fallthru
            _
          %157 = vnop
        $region20: #{generator_resnet_forward.13} parent=15 // pred_fallthru
          _
        // Predicated region
        $region40: #{generator_resnet_forward.13} parent=15 // pred_check
          %p158 = pneg %p68
        $region41: #{generator_resnet_forward.13} parent=15 // pred_check_branch
          %160 = sbr.rel (%p158) target = $region43
        $region42: #{generator_resnet_forward.13} parent=15 // pred_region
          %s161 = smul.u32 96, %s16
          %p162 = scmp.lt.s32.totalorder %s161, 287
          %s163 = scalar_select %p162, %s161, 287
          %s164 = smul.addr %s163, 2
          %s165 = smul.addr %s164, 4
          %s166 = scalar_lea.vmem %s1, %s165
          %s167 = smul.u32 96, %s16
        $region43: #{generator_resnet_forward.13} parent=15 // pred_fallthru
          _
      $region16: #{generator_resnet_forward.13} parent=5 // pred_fallthru
        _
      %p168 = scmp.le.s32.totalorder 1, %s8
      %p169 = scmp.lt.s32.totalorder %s8, 7
      %p170 = pnand %p168, %p169
      %p171 = pneg %p170
      // Predicated region
      $region44: #{generator_resnet_forward.13} parent=5 // pred_check
        _
      $region45: #{generator_resnet_forward.13} parent=5 // pred_check_branch
        %173 = sbr.rel (%p170) target = $region47
      $region46: #{generator_resnet_forward.13} parent=5 // pred_region
        %s174 = ssub.s32 %s8, 1
        %s175 = sand.u32 %s35, 1
        %s176 = sand.u32 %s35, 1
        %s177 = smul.addr %s176, 48
        %s178 = scalar_lea.vmem [#allocation3], %s177
        // Predicated region
        $region48: #{generator_resnet_forward.13} parent=46 // pred_check
          %p179 = pneg %p48
        $region49: #{generator_resnet_forward.13} parent=46 // pred_check_branch
          %181 = sbr.rel (%p179) target = $region51
        $region50: #{generator_resnet_forward.13} parent=46 // pred_region
          _
        $region51: #{generator_resnet_forward.13} parent=46 // pred_fallthru
          _
        %s182 = sand.u32 %s35, 1
        %s183 = sand.u32 %s35, 1
        %s184 = smul.addr %s183, 48
        %s185 = scalar_lea.vmem [#allocation3], %s184
        %p186 = pneg %p48
        %p187 = pneg %p45
        %s188 = smul.u32 96, %s18
        %p189 = scmp.lt.s32.totalorder %s188, 287
        %s190 = scalar_select %p189, %s188, 287
        %s191 = smul.addr %s190, 2
        %s192 = smul.addr %s191, 4
        %s193 = scalar_lea.vmem %s1, %s192
        %p194 = pneg %p74
        %p195 = pneg %p71
        %p196 = pneg %p100
        %p197 = pneg %p97
        %p198 = scmp.lt.s32.totalorder %s17, 1
        %s199 = scalar_select %p198, %s17, 1
        %s200 = smul.addr %s199, 4
        %s201 = smul.addr %s200, 8
        %s202 = scalar_lea.vmem %s2, %s201
        %s203 = smul.u32 6, %s18
        %s204 = smul.u32 96, %s18
        %p205 = scmp.lt.s32.totalorder %s204, 287
        %s206 = scalar_select %p205, %s204, 287
        %s207 = smul.addr %s206, 2
        %s208 = smul.addr %s207, 4
        %s209 = scalar_lea.vmem %s1, %s208
        %s210 = smul.u32 96, %s18
        %p211 = scmp.lt.s32.totalorder %s17, 1
        %s212 = scalar_select %p211, %s17, 1
        %s213 = smul.addr %s212, 4
        %s214 = smul.addr %s213, 8
        %s215 = scalar_lea.vmem %s2, %s214
        %p216 = scmp.eq.s32.totalorder %s18, 0
        // Predicated region
        $region52: #{generator_resnet_forward.13} parent=46 // pred_check
          %p217 = pneg %p216
        $region53: #{generator_resnet_forward.13} parent=46 // pred_check_branch
          %219 = sbr.rel (%p217) target = $region55
        $region54: #{generator_resnet_forward.13} parent=46 // pred_region
          %220 = vst [vmem:[#allocation2] sm:$0xff] 0.0
          %221 = vst [vmem:[#allocation2 + $0x8] sm:$0xff] 0.0
          %222 = vst [vmem:[#allocation2 + $0x10] sm:$0xff] 0.0
          %223 = vst [vmem:[#allocation2 + $0x18] sm:$0xff] 0.0
        $region55: #{generator_resnet_forward.13} parent=46 // pred_fallthru
          _
        %v224 = vld [vmem:[#allocation2] sm:$0xff]
        %v225 = vld [vmem:[#allocation2 + $0x8] sm:$0xff]
        %v226 = vld [vmem:[#allocation2 + $0x10] sm:$0xff]
        %v227 = vld [vmem:[#allocation2 + $0x18] sm:$0xff]
        %v228 = vld [vmem:[%s178] sm:$0xff]
        %v229 = vld [vmem:[%s178 + $0x8] sm:$0xff]
        %v230 = vld [vmem:[%s178 + $0x10] sm:$0xff]
        %v231 = vld [vmem:[%s178 + $0x18] sm:$0xff]
        %v232 = vld [vmem:[%s178 + $0x20] sm:$0xff]
        %v233 = vld [vmem:[%s178 + $0x28] sm:$0xff]
        %v234 = vld [vmem:[%s209] sm:$0xff]
        %v235 = vld [vmem:[%s209 + $0x8] sm:$0xff]
        %v236 = vld [vmem:[%s209 + $0x10] sm:$0xff]
        %v237 = vld [vmem:[%s209 + $0x18] sm:$0xff]
        %v238 = vld [vmem:[%s209 + $0x20] sm:$0xff]
        %v239 = vld [vmem:[%s209 + $0x28] sm:$0xff]
        %v240 = vld [vmem:[%s209 + $0x30] sm:$0xff]
        %v241 = vld [vmem:[%s209 + $0x38] sm:$0xff]
        %v242 = vld [vmem:[%s209 + $0x40] sm:$0xff]
        %v243 = vld [vmem:[%s209 + $0x48] sm:$0xff]
        %v244 = vld [vmem:[%s209 + $0x50] sm:$0xff]
        %v245 = vld [vmem:[%s209 + $0x58] sm:$0xff]
        %v246 = vld [vmem:[%s209 + $0x60] sm:$0xff]
        %v247 = vld [vmem:[%s209 + $0x68] sm:$0xff]
        %v248 = vld [vmem:[%s209 + $0x70] sm:$0xff]
        %v249 = vld [vmem:[%s209 + $0x78] sm:$0xff]
        %v250 = vld [vmem:[%s209 + $0x80] sm:$0xff]
        %v251 = vld [vmem:[%s209 + $0x88] sm:$0xff]
        %v252 = vld [vmem:[%s209 + $0x90] sm:$0xff]
        %v253 = vld [vmem:[%s209 + $0x98] sm:$0xff]
        %v254 = vld [vmem:[%s209 + $0xa0] sm:$0xff]
        %v255 = vld [vmem:[%s209 + $0xa8] sm:$0xff]
        %v256 = vld [vmem:[%s209 + $0xb0] sm:$0xff]
        %v257 = vld [vmem:[%s209 + $0xb8] sm:$0xff]
        %v258 = vld [vmem:[%s209 + $0xc0] sm:$0xff]
        %v259 = vld [vmem:[%s209 + $0xc8] sm:$0xff]
        %v260 = vld [vmem:[%s209 + $0xd0] sm:$0xff]
        %v261 = vld [vmem:[%s209 + $0xd8] sm:$0xff]
        %v262 = vld [vmem:[%s209 + $0xe0] sm:$0xff]
        %v263 = vld [vmem:[%s209 + $0xe8] sm:$0xff]
        %v264 = vld [vmem:[%s209 + $0xf0] sm:$0xff]
        %v265 = vld [vmem:[%s209 + $0xf8] sm:$0xff]
        %v266 = vld [vmem:[%s209 + $0x100] sm:$0xff]
        %v267 = vld [vmem:[%s209 + $0x108] sm:$0xff]
        %v268 = vld [vmem:[%s209 + $0x110] sm:$0xff]
        %v269 = vld [vmem:[%s209 + $0x118] sm:$0xff]
        %v270 = vld [vmem:[%s209 + $0x120] sm:$0xff]
        %v271 = vld [vmem:[%s209 + $0x128] sm:$0xff]
        %v272 = vld [vmem:[%s209 + $0x130] sm:$0xff]
        %v273 = vld [vmem:[%s209 + $0x138] sm:$0xff]
        %v274 = vld [vmem:[%s209 + $0x140] sm:$0xff]
        %v275 = vld [vmem:[%s209 + $0x148] sm:$0xff]
        %v276 = vld [vmem:[%s209 + $0x150] sm:$0xff]
        %v277 = vld [vmem:[%s209 + $0x158] sm:$0xff]
        %v278 = vld [vmem:[%s209 + $0x160] sm:$0xff]
        %v279 = vld [vmem:[%s209 + $0x168] sm:$0xff]
        %v280 = vld [vmem:[%s209 + $0x170] sm:$0xff]
        %v281 = vld [vmem:[%s209 + $0x178] sm:$0xff]
        %v282 = vld [vmem:[%s209 + $0x180] sm:$0xff]
        %v283 = vld [vmem:[%s209 + $0x188] sm:$0xff]
        %v284 = vld [vmem:[%s209 + $0x190] sm:$0xff]
        %v285 = vld [vmem:[%s209 + $0x198] sm:$0xff]
        %v286 = vld [vmem:[%s209 + $0x1a0] sm:$0xff]
        %v287 = vld [vmem:[%s209 + $0x1a8] sm:$0xff]
        %v288 = vld [vmem:[%s209 + $0x1b0] sm:$0xff]
        %v289 = vld [vmem:[%s209 + $0x1b8] sm:$0xff]
        %v290 = vld [vmem:[%s209 + $0x1c0] sm:$0xff]
        %v291 = vld [vmem:[%s209 + $0x1c8] sm:$0xff]
        %v292 = vld [vmem:[%s209 + $0x1d0] sm:$0xff]
        %v293 = vld [vmem:[%s209 + $0x1d8] sm:$0xff]
        %v294 = vld [vmem:[%s209 + $0x1e0] sm:$0xff]
        %v295 = vld [vmem:[%s209 + $0x1e8] sm:$0xff]
        %v296 = vld [vmem:[%s209 + $0x1f0] sm:$0xff]
        %v297 = vld [vmem:[%s209 + $0x1f8] sm:$0xff]
        %v298 = vld [vmem:[%s209 + $0x200] sm:$0xff]
        %v299 = vld [vmem:[%s209 + $0x208] sm:$0xff]
        %v300 = vld [vmem:[%s209 + $0x210] sm:$0xff]
        %v301 = vld [vmem:[%s209 + $0x218] sm:$0xff]
        %v302 = vld [vmem:[%s209 + $0x220] sm:$0xff]
        %v303 = vld [vmem:[%s209 + $0x228] sm:$0xff]
        %v304 = vld [vmem:[%s209 + $0x230] sm:$0xff]
        %v305 = vld [vmem:[%s209 + $0x238] sm:$0xff]
        %v306 = vld [vmem:[%s209 + $0x240] sm:$0xff]
        %v307 = vld [vmem:[%s209 + $0x248] sm:$0xff]
        %v308 = vld [vmem:[%s209 + $0x250] sm:$0xff]
        %v309 = vld [vmem:[%s209 + $0x258] sm:$0xff]
        %v310 = vld [vmem:[%s209 + $0x260] sm:$0xff]
        %v311 = vld [vmem:[%s209 + $0x268] sm:$0xff]
        %v312 = vld [vmem:[%s209 + $0x270] sm:$0xff]
        %v313 = vld [vmem:[%s209 + $0x278] sm:$0xff]
        %v314 = vld [vmem:[%s209 + $0x280] sm:$0xff]
        %v315 = vld [vmem:[%s209 + $0x288] sm:$0xff]
        %v316 = vld [vmem:[%s209 + $0x290] sm:$0xff]
        %v317 = vld [vmem:[%s209 + $0x298] sm:$0xff]
        %v318 = vld [vmem:[%s209 + $0x2a0] sm:$0xff]
        %v319 = vld [vmem:[%s209 + $0x2a8] sm:$0xff]
        %v320 = vld [vmem:[%s209 + $0x2b0] sm:$0xff]
        %v321 = vld [vmem:[%s209 + $0x2b8] sm:$0xff]
        %v322 = vld [vmem:[%s209 + $0x2c0] sm:$0xff]
        %v323 = vld [vmem:[%s209 + $0x2c8] sm:$0xff]
        %v324 = vld [vmem:[%s209 + $0x2d0] sm:$0xff]
        %v325 = vld [vmem:[%s209 + $0x2d8] sm:$0xff]
        %v326 = vld [vmem:[%s209 + $0x2e0] sm:$0xff]
        %v327 = vld [vmem:[%s209 + $0x2e8] sm:$0xff]
        %v328 = vld [vmem:[%s209 + $0x2f0] sm:$0xff]
        %v329 = vld [vmem:[%s209 + $0x2f8] sm:$0xff]
        %v336 = vunpack.c.l.b16 %v228
        %v337 = vunpack.c.h.b16 %v228
        %v338 = vunpack.c.l.b16 %v229
        %v339 = vunpack.c.h.b16 %v229
        %v340 = vunpack.c.l.b16 %v230
        %v341 = vunpack.c.h.b16 %v230
        %v342 = vunpack.c.l.b16 %v231
        %v343 = vunpack.c.h.b16 %v231
        %v344 = vunpack.c.l.b16 %v232
        %v345 = vunpack.c.h.b16 %v232
        %v346 = vunpack.c.l.b16 %v233
        %v347 = vunpack.c.h.b16 %v233
        %v348 = vpack.c.b16 %v342, %v336
        %v349 = vpack.c.b16 %v343, %v337
        %v350 = vpack.c.b16 %v344, %v338
        %v351 = vpack.c.b16 %v345, %v339
        %v352 = vpack.c.b16 %v346, %v340
        %v353 = vpack.c.b16 %v347, %v341
        %v456 = vunpack.c.l.b16 %v234
        %v457 = vunpack.c.h.b16 %v234
        %v458 = vunpack.c.l.b16 %v235
        %v459 = vunpack.c.h.b16 %v235
        %v460 = vunpack.c.l.b16 %v236
        %v461 = vunpack.c.h.b16 %v236
        %v462 = vunpack.c.l.b16 %v237
        %v463 = vunpack.c.h.b16 %v237
        %v464 = vunpack.c.l.b16 %v238
        %v465 = vunpack.c.h.b16 %v238
        %v466 = vunpack.c.l.b16 %v239
        %v467 = vunpack.c.h.b16 %v239
        %v468 = vunpack.c.l.b16 %v240
        %v469 = vunpack.c.h.b16 %v240
        %v470 = vunpack.c.l.b16 %v241
        %v471 = vunpack.c.h.b16 %v241
        %v472 = vunpack.c.l.b16 %v242
        %v473 = vunpack.c.h.b16 %v242
        %v474 = vunpack.c.l.b16 %v243
        %v475 = vunpack.c.h.b16 %v243
        %v476 = vunpack.c.l.b16 %v244
        %v477 = vunpack.c.h.b16 %v244
        %v478 = vunpack.c.l.b16 %v245
        %v479 = vunpack.c.h.b16 %v245
        %v480 = vunpack.c.l.b16 %v246
        %v481 = vunpack.c.h.b16 %v246
        %v482 = vunpack.c.l.b16 %v247
        %v483 = vunpack.c.h.b16 %v247
        %v484 = vunpack.c.l.b16 %v248
        %v485 = vunpack.c.h.b16 %v248
        %v486 = vunpack.c.l.b16 %v249
        %v487 = vunpack.c.h.b16 %v249
        %v488 = vunpack.c.l.b16 %v250
        %v489 = vunpack.c.h.b16 %v250
        %v490 = vunpack.c.l.b16 %v251
        %v491 = vunpack.c.h.b16 %v251
        %v492 = vunpack.c.l.b16 %v252
        %v493 = vunpack.c.h.b16 %v252
        %v494 = vunpack.c.l.b16 %v253
        %v495 = vunpack.c.h.b16 %v253
        %v496 = vunpack.c.l.b16 %v254
        %v497 = vunpack.c.h.b16 %v254
        %v498 = vunpack.c.l.b16 %v255
        %v499 = vunpack.c.h.b16 %v255
        %v500 = vunpack.c.l.b16 %v256
        %v501 = vunpack.c.h.b16 %v256
        %v502 = vunpack.c.l.b16 %v257
        %v503 = vunpack.c.h.b16 %v257
        %v504 = vunpack.c.l.b16 %v258
        %v505 = vunpack.c.h.b16 %v258
        %v506 = vunpack.c.l.b16 %v259
        %v507 = vunpack.c.h.b16 %v259
        %v508 = vunpack.c.l.b16 %v260
        %v509 = vunpack.c.h.b16 %v260
        %v510 = vunpack.c.l.b16 %v261
        %v511 = vunpack.c.h.b16 %v261
        %v512 = vunpack.c.l.b16 %v262
        %v513 = vunpack.c.h.b16 %v262
        %v514 = vunpack.c.l.b16 %v263
        %v515 = vunpack.c.h.b16 %v263
        %v516 = vunpack.c.l.b16 %v264
        %v517 = vunpack.c.h.b16 %v264
        %v518 = vunpack.c.l.b16 %v265
        %v519 = vunpack.c.h.b16 %v265
        %v520 = vunpack.c.l.b16 %v266
        %v521 = vunpack.c.h.b16 %v266
        %v522 = vunpack.c.l.b16 %v267
        %v523 = vunpack.c.h.b16 %v267
        %v524 = vunpack.c.l.b16 %v268
        %v525 = vunpack.c.h.b16 %v268
        %v526 = vunpack.c.l.b16 %v269
        %v527 = vunpack.c.h.b16 %v269
        %v528 = vunpack.c.l.b16 %v270
        %v529 = vunpack.c.h.b16 %v270
        %v530 = vunpack.c.l.b16 %v271
        %v531 = vunpack.c.h.b16 %v271
        %v532 = vunpack.c.l.b16 %v272
        %v533 = vunpack.c.h.b16 %v272
        %v534 = vunpack.c.l.b16 %v273
        %v535 = vunpack.c.h.b16 %v273
        %v536 = vunpack.c.l.b16 %v274
        %v537 = vunpack.c.h.b16 %v274
        %v538 = vunpack.c.l.b16 %v275
        %v539 = vunpack.c.h.b16 %v275
        %v540 = vunpack.c.l.b16 %v276
        %v541 = vunpack.c.h.b16 %v276
        %v542 = vunpack.c.l.b16 %v277
        %v543 = vunpack.c.h.b16 %v277
        %v544 = vunpack.c.l.b16 %v278
        %v545 = vunpack.c.h.b16 %v278
        %v546 = vunpack.c.l.b16 %v279
        %v547 = vunpack.c.h.b16 %v279
        %v548 = vunpack.c.l.b16 %v280
        %v549 = vunpack.c.h.b16 %v280
        %v550 = vunpack.c.l.b16 %v281
        %v551 = vunpack.c.h.b16 %v281
        %v552 = vunpack.c.l.b16 %v282
        %v553 = vunpack.c.h.b16 %v282
        %v554 = vunpack.c.l.b16 %v283
        %v555 = vunpack.c.h.b16 %v283
        %v556 = vunpack.c.l.b16 %v284
        %v557 = vunpack.c.h.b16 %v284
        %v558 = vunpack.c.l.b16 %v285
        %v559 = vunpack.c.h.b16 %v285
        %v560 = vunpack.c.l.b16 %v286
        %v561 = vunpack.c.h.b16 %v286
        %v562 = vunpack.c.l.b16 %v287
        %v563 = vunpack.c.h.b16 %v287
        %v564 = vunpack.c.l.b16 %v288
        %v565 = vunpack.c.h.b16 %v288
        %v566 = vunpack.c.l.b16 %v289
        %v567 = vunpack.c.h.b16 %v289
        %v568 = vunpack.c.l.b16 %v290
        %v569 = vunpack.c.h.b16 %v290
        %v570 = vunpack.c.l.b16 %v291
        %v571 = vunpack.c.h.b16 %v291
        %v572 = vunpack.c.l.b16 %v292
        %v573 = vunpack.c.h.b16 %v292
        %v574 = vunpack.c.l.b16 %v293
        %v575 = vunpack.c.h.b16 %v293
        %v576 = vunpack.c.l.b16 %v294
        %v577 = vunpack.c.h.b16 %v294
        %v578 = vunpack.c.l.b16 %v295
        %v579 = vunpack.c.h.b16 %v295
        %v580 = vunpack.c.l.b16 %v296
        %v581 = vunpack.c.h.b16 %v296
        %v582 = vunpack.c.l.b16 %v297
        %v583 = vunpack.c.h.b16 %v297
        %v584 = vunpack.c.l.b16 %v298
        %v585 = vunpack.c.h.b16 %v298
        %v586 = vunpack.c.l.b16 %v299
        %v587 = vunpack.c.h.b16 %v299
        %v588 = vunpack.c.l.b16 %v300
        %v589 = vunpack.c.h.b16 %v300
        %v590 = vunpack.c.l.b16 %v301
        %v591 = vunpack.c.h.b16 %v301
        %v592 = vunpack.c.l.b16 %v302
        %v593 = vunpack.c.h.b16 %v302
        %v594 = vunpack.c.l.b16 %v303
        %v595 = vunpack.c.h.b16 %v303
        %v596 = vunpack.c.l.b16 %v304
        %v597 = vunpack.c.h.b16 %v304
        %v598 = vunpack.c.l.b16 %v305
        %v599 = vunpack.c.h.b16 %v305
        %v600 = vunpack.c.l.b16 %v306
        %v601 = vunpack.c.h.b16 %v306
        %v602 = vunpack.c.l.b16 %v307
        %v603 = vunpack.c.h.b16 %v307
        %v604 = vunpack.c.l.b16 %v308
        %v605 = vunpack.c.h.b16 %v308
        %v606 = vunpack.c.l.b16 %v309
        %v607 = vunpack.c.h.b16 %v309
        %v608 = vunpack.c.l.b16 %v310
        %v609 = vunpack.c.h.b16 %v310
        %v610 = vunpack.c.l.b16 %v311
        %v611 = vunpack.c.h.b16 %v311
        %v612 = vunpack.c.l.b16 %v312
        %v613 = vunpack.c.h.b16 %v312
        %v614 = vunpack.c.l.b16 %v313
        %v615 = vunpack.c.h.b16 %v313
        %v616 = vunpack.c.l.b16 %v314
        %v617 = vunpack.c.h.b16 %v314
        %v618 = vunpack.c.l.b16 %v315
        %v619 = vunpack.c.h.b16 %v315
        %v620 = vunpack.c.l.b16 %v316
        %v621 = vunpack.c.h.b16 %v316
        %v622 = vunpack.c.l.b16 %v317
        %v623 = vunpack.c.h.b16 %v317
        %v624 = vunpack.c.l.b16 %v318
        %v625 = vunpack.c.h.b16 %v318
        %v626 = vunpack.c.l.b16 %v319
        %v627 = vunpack.c.h.b16 %v319
        %v628 = vunpack.c.l.b16 %v320
        %v629 = vunpack.c.h.b16 %v320
        %v630 = vunpack.c.l.b16 %v321
        %v631 = vunpack.c.h.b16 %v321
        %v632 = vunpack.c.l.b16 %v322
        %v633 = vunpack.c.h.b16 %v322
        %v634 = vunpack.c.l.b16 %v323
        %v635 = vunpack.c.h.b16 %v323
        %v636 = vunpack.c.l.b16 %v324
        %v637 = vunpack.c.h.b16 %v324
        %v638 = vunpack.c.l.b16 %v325
        %v639 = vunpack.c.h.b16 %v325
        %v640 = vunpack.c.l.b16 %v326
        %v641 = vunpack.c.h.b16 %v326
        %v642 = vunpack.c.l.b16 %v327
        %v643 = vunpack.c.h.b16 %v327
        %v644 = vunpack.c.l.b16 %v328
        %v645 = vunpack.c.h.b16 %v328
        %v646 = vunpack.c.l.b16 %v329
        %v647 = vunpack.c.h.b16 %v329
        %v648 = vpack.c.b16 %v458, %v456
        %v649 = vpack.c.b16 %v459, %v457
        %v650 = vpack.c.b16 %v462, %v460
        %v651 = vpack.c.b16 %v463, %v461
        %v652 = vpack.c.b16 %v466, %v464
        %v653 = vpack.c.b16 %v467, %v465
        %v654 = vpack.c.b16 %v470, %v468
        %v655 = vpack.c.b16 %v471, %v469
        %v656 = vpack.c.b16 %v474, %v472
        %v657 = vpack.c.b16 %v475, %v473
        %v658 = vpack.c.b16 %v478, %v476
        %v659 = vpack.c.b16 %v479, %v477
        %v660 = vpack.c.b16 %v482, %v480
        %v661 = vpack.c.b16 %v483, %v481
        %v662 = vpack.c.b16 %v486, %v484
        %v663 = vpack.c.b16 %v487, %v485
        %v664 = vpack.c.b16 %v490, %v488
        %v665 = vpack.c.b16 %v491, %v489
        %v666 = vpack.c.b16 %v494, %v492
        %v667 = vpack.c.b16 %v495, %v493
        %v668 = vpack.c.b16 %v498, %v496
        %v669 = vpack.c.b16 %v499, %v497
        %v670 = vpack.c.b16 %v502, %v500
        %v671 = vpack.c.b16 %v503, %v501
        %v672 = vpack.c.b16 %v506, %v504
        %v673 = vpack.c.b16 %v507, %v505
        %v674 = vpack.c.b16 %v510, %v508
        %v675 = vpack.c.b16 %v511, %v509
        %v676 = vpack.c.b16 %v514, %v512
        %v677 = vpack.c.b16 %v515, %v513
        %v678 = vpack.c.b16 %v518, %v516
        %v679 = vpack.c.b16 %v519, %v517
        %v680 = vpack.c.b16 %v522, %v520
        %v681 = vpack.c.b16 %v523, %v521
        %v682 = vpack.c.b16 %v526, %v524
        %v683 = vpack.c.b16 %v527, %v525
        %v684 = vpack.c.b16 %v530, %v528
        %v685 = vpack.c.b16 %v531, %v529
        %v686 = vpack.c.b16 %v534, %v532
        %v687 = vpack.c.b16 %v535, %v533
        %v688 = vpack.c.b16 %v538, %v536
        %v689 = vpack.c.b16 %v539, %v537
        %v690 = vpack.c.b16 %v542, %v540
        %v691 = vpack.c.b16 %v543, %v541
        %v692 = vpack.c.b16 %v546, %v544
        %v693 = vpack.c.b16 %v547, %v545
        %v694 = vpack.c.b16 %v550, %v548
        %v695 = vpack.c.b16 %v551, %v549
        %v696 = vpack.c.b16 %v554, %v552
        %v697 = vpack.c.b16 %v555, %v553
        %v698 = vpack.c.b16 %v558, %v556
        %v699 = vpack.c.b16 %v559, %v557
        %v700 = vpack.c.b16 %v562, %v560
        %v701 = vpack.c.b16 %v563, %v561
        %v702 = vpack.c.b16 %v566, %v564
        %v703 = vpack.c.b16 %v567, %v565
        %v704 = vpack.c.b16 %v570, %v568
        %v705 = vpack.c.b16 %v571, %v569
        %v706 = vpack.c.b16 %v574, %v572
        %v707 = vpack.c.b16 %v575, %v573
        %v708 = vpack.c.b16 %v578, %v576
        %v709 = vpack.c.b16 %v579, %v577
        %v710 = vpack.c.b16 %v582, %v580
        %v711 = vpack.c.b16 %v583, %v581
        %v712 = vpack.c.b16 %v586, %v584
        %v713 = vpack.c.b16 %v587, %v585
        %v714 = vpack.c.b16 %v590, %v588
        %v715 = vpack.c.b16 %v591, %v589
        %v716 = vpack.c.b16 %v594, %v592
        %v717 = vpack.c.b16 %v595, %v593
        %v718 = vpack.c.b16 %v598, %v596
        %v719 = vpack.c.b16 %v599, %v597
        %v720 = vpack.c.b16 %v602, %v600
        %v721 = vpack.c.b16 %v603, %v601
        %v722 = vpack.c.b16 %v606, %v604
        %v723 = vpack.c.b16 %v607, %v605
        %v724 = vpack.c.b16 %v610, %v608
        %v725 = vpack.c.b16 %v611, %v609
        %v726 = vpack.c.b16 %v614, %v612
        %v727 = vpack.c.b16 %v615, %v613
        %v728 = vpack.c.b16 %v618, %v616
        %v729 = vpack.c.b16 %v619, %v617
        %v730 = vpack.c.b16 %v622, %v620
        %v731 = vpack.c.b16 %v623, %v621
        %v732 = vpack.c.b16 %v626, %v624
        %v733 = vpack.c.b16 %v627, %v625
        %v734 = vpack.c.b16 %v630, %v628
        %v735 = vpack.c.b16 %v631, %v629
        %v736 = vpack.c.b16 %v634, %v632
        %v737 = vpack.c.b16 %v635, %v633
        %v738 = vpack.c.b16 %v638, %v636
        %v739 = vpack.c.b16 %v639, %v637
        %v740 = vpack.c.b16 %v642, %v640
        %v741 = vpack.c.b16 %v643, %v641
        %v742 = vpack.c.b16 %v646, %v644
        %v743 = vpack.c.b16 %v647, %v645
        %840 = vmatpush.bf16.msra.mxu0 %v662
        %841 = vmatpush.bf16.msra.mxu0 %v660
        %842 = vmatpush.bf16.msra.mxu0 %v658
        %843 = vmatpush.bf16.msra.mxu0 %v656
        %844 = vmatpush.bf16.msra.mxu0 %v654
        %845 = vmatpush.bf16.msra.mxu0 %v652
        %846 = vmatpush.bf16.msra.mxu0 %v650
        %847 = vmatpush.bf16.msra.mxu0 %v648
        %848 = vmatmul.bf16.gmra.mxu0 %v348
        %v849 = vpop.f32.mrf.mxu0
        %v850 = vadd.f32 0.0, %v849
        %v851 = vpop.f32.mrf.mxu0
        %v852 = vadd.f32 0.0, %v851
        %853 = vdwg.mxu0
        %854 = vmatpush.bf16.msra.mxu0 %v678
        %855 = vmatpush.bf16.msra.mxu0 %v676
        %856 = vmatpush.bf16.msra.mxu0 %v674
        %857 = vmatpush.bf16.msra.mxu0 %v672
        %858 = vmatpush.bf16.msra.mxu0 %v670
        %859 = vmatpush.bf16.msra.mxu0 %v668
        %860 = vmatpush.bf16.msra.mxu0 %v666
        %861 = vmatpush.bf16.msra.mxu0 %v664
        %862 = vmatmul.bf16.gmra.mxu0 %v349
        %v863 = vpop.f32.mrf.mxu0
        %v864 = vadd.f32 %v850, %v863
        %v865 = vpop.f32.mrf.mxu0
        %v866 = vadd.f32 %v852, %v865
        %867 = vdwg.mxu0
        %868 = vmatpush.bf16.msra.mxu0 %v694
        %869 = vmatpush.bf16.msra.mxu0 %v692
        %870 = vmatpush.bf16.msra.mxu0 %v690
        %871 = vmatpush.bf16.msra.mxu0 %v688
        %872 = vmatpush.bf16.msra.mxu0 %v686
        %873 = vmatpush.bf16.msra.mxu0 %v684
        %874 = vmatpush.bf16.msra.mxu0 %v682
        %875 = vmatpush.bf16.msra.mxu0 %v680
        %876 = vmatmul.bf16.gmra.mxu0 %v350
        %v877 = vpop.f32.mrf.mxu0
        %v878 = vadd.f32 %v864, %v877
        %v879 = vpop.f32.mrf.mxu0
        %v880 = vadd.f32 %v866, %v879
        %881 = vdwg.mxu0
        %882 = vmatpush.bf16.msra.mxu0 %v710
        %883 = vmatpush.bf16.msra.mxu0 %v708
        %884 = vmatpush.bf16.msra.mxu0 %v706
        %885 = vmatpush.bf16.msra.mxu0 %v704
        %886 = vmatpush.bf16.msra.mxu0 %v702
        %887 = vmatpush.bf16.msra.mxu0 %v700
        %888 = vmatpush.bf16.msra.mxu0 %v698
        %889 = vmatpush.bf16.msra.mxu0 %v696
        %890 = vmatmul.bf16.gmra.mxu0 %v351
        %v891 = vpop.f32.mrf.mxu0
        %v892 = vadd.f32 %v878, %v891
        %v893 = vpop.f32.mrf.mxu0
        %v894 = vadd.f32 %v880, %v893
        %895 = vdwg.mxu0
        %896 = vmatpush.bf16.msra.mxu0 %v726
        %897 = vmatpush.bf16.msra.mxu0 %v724
        %898 = vmatpush.bf16.msra.mxu0 %v722
        %899 = vmatpush.bf16.msra.mxu0 %v720
        %900 = vmatpush.bf16.msra.mxu0 %v718
        %901 = vmatpush.bf16.msra.mxu0 %v716
        %902 = vmatpush.bf16.msra.mxu0 %v714
        %903 = vmatpush.bf16.msra.mxu0 %v712
        %904 = vmatmul.bf16.gmra.mxu0 %v352
        %v905 = vpop.f32.mrf.mxu0
        %v906 = vadd.f32 %v892, %v905
        %v907 = vpop.f32.mrf.mxu0
        %v908 = vadd.f32 %v894, %v907
        %909 = vdwg.mxu0
        %910 = vmatpush.bf16.msra.mxu0 %v742
        %911 = vmatpush.bf16.msra.mxu0 %v740
        %912 = vmatpush.bf16.msra.mxu0 %v738
        %913 = vmatpush.bf16.msra.mxu0 %v736
        %914 = vmatpush.bf16.msra.mxu0 %v734
        %915 = vmatpush.bf16.msra.mxu0 %v732
        %916 = vmatpush.bf16.msra.mxu0 %v730
        %917 = vmatpush.bf16.msra.mxu0 %v728
        %918 = vmatmul.bf16.gmra.mxu0 %v353
        %v919 = vpop.f32.mrf.mxu0
        %v920 = vadd.f32 %v906, %v919
        %v921 = vpop.f32.mrf.mxu0
        %v922 = vadd.f32 %v908, %v921
        %923 = vdwg.mxu0
        %924 = vmatpush.bf16.msra.mxu0 %v663
        %925 = vmatpush.bf16.msra.mxu0 %v661
        %926 = vmatpush.bf16.msra.mxu0 %v659
        %927 = vmatpush.bf16.msra.mxu0 %v657
        %928 = vmatpush.bf16.msra.mxu0 %v655
        %929 = vmatpush.bf16.msra.mxu0 %v653
        %930 = vmatpush.bf16.msra.mxu0 %v651
        %931 = vmatpush.bf16.msra.mxu0 %v649
        %932 = vmatmul.bf16.gmra.mxu0 %v348
        %v933 = vpop.f32.mrf.mxu0
        %v934 = vadd.f32 0.0, %v933
        %v935 = vpop.f32.mrf.mxu0
        %v936 = vadd.f32 0.0, %v935
        %937 = vdwg.mxu0
        %938 = vmatpush.bf16.msra.mxu0 %v679
        %939 = vmatpush.bf16.msra.mxu0 %v677
        %940 = vmatpush.bf16.msra.mxu0 %v675
        %941 = vmatpush.bf16.msra.mxu0 %v673
        %942 = vmatpush.bf16.msra.mxu0 %v671
        %943 = vmatpush.bf16.msra.mxu0 %v669
        %944 = vmatpush.bf16.msra.mxu0 %v667
        %945 = vmatpush.bf16.msra.mxu0 %v665
        %946 = vmatmul.bf16.gmra.mxu0 %v349
        %v947 = vpop.f32.mrf.mxu0
        %v948 = vadd.f32 %v934, %v947
        %v949 = vpop.f32.mrf.mxu0
        %v950 = vadd.f32 %v936, %v949
        %951 = vdwg.mxu0
        %952 = vmatpush.bf16.msra.mxu0 %v695
        %953 = vmatpush.bf16.msra.mxu0 %v693
        %954 = vmatpush.bf16.msra.mxu0 %v691
        %955 = vmatpush.bf16.msra.mxu0 %v689
        %956 = vmatpush.bf16.msra.mxu0 %v687
        %957 = vmatpush.bf16.msra.mxu0 %v685
        %958 = vmatpush.bf16.msra.mxu0 %v683
        %959 = vmatpush.bf16.msra.mxu0 %v681
        %960 = vmatmul.bf16.gmra.mxu0 %v350
        %v961 = vpop.f32.mrf.mxu0
        %v962 = vadd.f32 %v948, %v961
        %v963 = vpop.f32.mrf.mxu0
        %v964 = vadd.f32 %v950, %v963
        %965 = vdwg.mxu0
        %966 = vmatpush.bf16.msra.mxu0 %v711
        %967 = vmatpush.bf16.msra.mxu0 %v709
        %968 = vmatpush.bf16.msra.mxu0 %v707
        %969 = vmatpush.bf16.msra.mxu0 %v705
        %970 = vmatpush.bf16.msra.mxu0 %v703
        %971 = vmatpush.bf16.msra.mxu0 %v701
        %972 = vmatpush.bf16.msra.mxu0 %v699
        %973 = vmatpush.bf16.msra.mxu0 %v697
        %974 = vmatmul.bf16.gmra.mxu0 %v351
        %v975 = vpop.f32.mrf.mxu0
        %v976 = vadd.f32 %v962, %v975
        %v977 = vpop.f32.mrf.mxu0
        %v978 = vadd.f32 %v964, %v977
        %979 = vdwg.mxu0
        %980 = vmatpush.bf16.msra.mxu0 %v727
        %981 = vmatpush.bf16.msra.mxu0 %v725
        %982 = vmatpush.bf16.msra.mxu0 %v723
        %983 = vmatpush.bf16.msra.mxu0 %v721
        %984 = vmatpush.bf16.msra.mxu0 %v719
        %985 = vmatpush.bf16.msra.mxu0 %v717
        %986 = vmatpush.bf16.msra.mxu0 %v715
        %987 = vmatpush.bf16.msra.mxu0 %v713
        %988 = vmatmul.bf16.gmra.mxu0 %v352
        %v989 = vpop.f32.mrf.mxu0
        %v990 = vadd.f32 %v976, %v989
        %v991 = vpop.f32.mrf.mxu0
        %v992 = vadd.f32 %v978, %v991
        %993 = vdwg.mxu0
        %994 = vmatpush.bf16.msra.mxu0 %v743
        %995 = vmatpush.bf16.msra.mxu0 %v741
        %996 = vmatpush.bf16.msra.mxu0 %v739
        %997 = vmatpush.bf16.msra.mxu0 %v737
        %998 = vmatpush.bf16.msra.mxu0 %v735
        %999 = vmatpush.bf16.msra.mxu0 %v733
        %1000 = vmatpush.bf16.msra.mxu0 %v731
        %1001 = vmatpush.bf16.msra.mxu0 %v729
        %1002 = vmatmul.bf16.gmra.mxu0 %v353
        %v1003 = vpop.f32.mrf.mxu0
        %v1004 = vadd.f32 %v990, %v1003
        %v1005 = vpop.f32.mrf.mxu0
        %v1006 = vadd.f32 %v992, %v1005
        %1007 = vdwg.mxu0
        %v1008 = vadd.f32 %v224, %v920
        %v1009 = vadd.f32 %v225, %v1004
        %v1010 = vadd.f32 %v226, %v922
        %v1011 = vadd.f32 %v227, %v1006
        %1012 = vst [vmem:[#allocation2] sm:$0xff] %v1008
        %1013 = vst [vmem:[#allocation2 + $0x8] sm:$0xff] %v1009
        %1014 = vst [vmem:[#allocation2 + $0x10] sm:$0xff] %v1010
        %1015 = vst [vmem:[#allocation2 + $0x18] sm:$0xff] %v1011
        %p1016 = scmp.eq.s32.totalorder %s18, 2
        // Predicated region
        $region56: #{generator_resnet_forward.13} parent=46 // pred_check
          %p1017 = pneg %p1016
        $region57: #{generator_resnet_forward.13} parent=46 // pred_check_branch
          %1019 = sbr.rel (%p1017) target = $region59
        $region58: #{generator_resnet_forward.13} parent=46 // pred_region
          %v1020 = vld [vmem:[#allocation2] sm:$0xff]
          %v1021 = vld [vmem:[#allocation2 + $0x8] sm:$0xff]
          %v1022 = vld [vmem:[#allocation2 + $0x10] sm:$0xff]
          %v1023 = vld [vmem:[#allocation2 + $0x18] sm:$0xff]
          %v1024 = vadd.f32 %v1020, %v1022
          %v1025 = vrot.slane %v1024, 4
          %v1026 = vadd.f32 %v1024, %v1025
          %v1027 = vrot.slane %v1026, 2
          %v1028 = vadd.f32 %v1026, %v1027
          %v1029 = vrot.slane %v1028, 1
          %v1030 = vadd.f32 %v1028, %v1029
          %v1031 = vadd.f32 %v1021, %v1023
          %v1032 = vrot.slane %v1031, 4
          %v1033 = vadd.f32 %v1031, %v1032
          %v1034 = vrot.slane %v1033, 2
          %v1035 = vadd.f32 %v1033, %v1034
          %v1036 = vrot.slane %v1035, 1
          %v1037 = vadd.f32 %v1035, %v1036
          %v1038 = vmul.f32 %v1030, 0.0625
          %v1039 = vmul.f32 %v1037, 0.0625
          %v1040 = vmul.f32 %v1020, %v1020
          %v1041 = vmul.f32 %v1021, %v1021
          %v1042 = vmul.f32 %v1022, %v1022
          %v1043 = vmul.f32 %v1023, %v1023
          %v1044 = vadd.f32 %v1040, %v1042
          %v1045 = vrot.slane %v1044, 4
          %v1046 = vadd.f32 %v1044, %v1045
          %v1047 = vrot.slane %v1046, 2
          %v1048 = vadd.f32 %v1046, %v1047
          %v1049 = vrot.slane %v1048, 1
          %v1050 = vadd.f32 %v1048, %v1049
          %v1051 = vadd.f32 %v1041, %v1043
          %v1052 = vrot.slane %v1051, 4
          %v1053 = vadd.f32 %v1051, %v1052
          %v1054 = vrot.slane %v1053, 2
          %v1055 = vadd.f32 %v1053, %v1054
          %v1056 = vrot.slane %v1055, 1
          %v1057 = vadd.f32 %v1055, %v1056
          %v1058 = vmul.f32 %v1050, 0.0625
          %v1059 = vmul.f32 %v1057, 0.0625
          %v1060 = vmul.f32 %v1038, %v1038
          %v1061 = vmul.f32 %v1039, %v1039
          %v1062 = vsub.f32 %v1058, %v1060
          %v1063 = vsub.f32 %v1059, %v1061
          %v1064 = vmax.f32 %v1062, 0.0
          %v1065 = vmax.f32 %v1063, 0.0
          %v1066 = vsub.f32 %v1020, %v1038
          %v1067 = vsub.f32 %v1021, %v1039
          %v1068 = vsub.f32 %v1022, %v1038
          %v1069 = vsub.f32 %v1023, %v1039
          %v1070 = vadd.f32 %v1064, 1e-05
          %v1071 = vadd.f32 %v1065, 1e-05
          %v1072 = vrsqrt.pop %v1070
          %v1073 = vmul.f32 %v1072, %v1070
          %v1074 = vmul.f32 %v1073, %v1072
          %v1075 = vmul.f32 0.5, %v1074
          %v1076 = vsub.f32 1.5, %v1075
          %v1077 = vmul.f32 %v1072, %v1076
          %vm1078 = vweird.f32 %v1070
          %vm1079 = vweird.f32 %v1072
          %vm1080 = vmor %vm1078, %vm1079
          %v1081 = vsel %vm1080, %v1072, %v1077
          %v1082 = vrsqrt.pop %v1071
          %v1083 = vmul.f32 %v1082, %v1071
          %v1084 = vmul.f32 %v1083, %v1082
          %v1085 = vmul.f32 0.5, %v1084
          %v1086 = vsub.f32 1.5, %v1085
          %v1087 = vmul.f32 %v1082, %v1086
          %vm1088 = vweird.f32 %v1071
          %vm1089 = vweird.f32 %v1082
          %vm1090 = vmor %vm1088, %vm1089
          %v1091 = vsel %vm1090, %v1082, %v1087
          %v1092 = vmul.f32 %v1066, %v1081
          %v1093 = vmul.f32 %v1067, %v1091
          %v1094 = vmul.f32 %v1068, %v1081
          %v1095 = vmul.f32 %v1069, %v1091
          %v1096 = vmax.f32 %v1092, 0.0
          %v1097 = vmax.f32 %v1093, 0.0
          %v1098 = vmax.f32 %v1094, 0.0
          %v1099 = vmax.f32 %v1095, 0.0
          %1100 = vst [vmem:[%s215] sm:$0xff] %v1096
          %1101 = vst [vmem:[%s215 + $0x8] sm:$0xff] %v1097
          %1102 = vst [vmem:[%s215 + $0x10] sm:$0xff] %v1098
          %1103 = vst [vmem:[%s215 + $0x18] sm:$0xff] %v1099
        $region59: #{generator_resnet_forward.13} parent=46 // pred_fallthru
          _
        %p1104 = scmp.lt.s32.totalorder %s17, 1
        %s1105 = scalar_select %p1104, %s17, 1
        %s1106 = smul.addr %s1105, 4
        %s1107 = smul.addr %s1106, 8
        %s1108 = scalar_lea.vmem %s2, %s1107
        // Predicated region
        $region60: #{generator_resnet_forward.13} parent=46 // pred_check
          %p1109 = pneg %p97
        $region61: #{generator_resnet_forward.13} parent=46 // pred_check_branch
          %1111 = sbr.rel (%p1109) target = $region63
        $region62: #{generator_resnet_forward.13} parent=46 // pred_region
          _
        $region63: #{generator_resnet_forward.13} parent=46 // pred_fallthru
          _
      $region47: #{generator_resnet_forward.13} parent=5 // pred_fallthru
        _
      %p1112 = scmp.le.s32.totalorder 2, %s8
      // Predicated region
      $region64: #{generator_resnet_forward.13} parent=5 // pred_check
        %p1113 = pneg %p1112
      $region65: #{generator_resnet_forward.13} parent=5 // pred_check_branch
        %1115 = sbr.rel (%p1113) target = $region67
      $region66: #{generator_resnet_forward.13} parent=5 // pred_region
        %s1116 = ssub.s32 %s8, 2
        // Predicated region
        $region68: #{generator_resnet_forward.13} parent=66 // pred_check
          %p1117 = pneg %p103
        $region69: #{generator_resnet_forward.13} parent=66 // pred_check_branch
          %1119 = sbr.rel (%p1117) target = $region71
        $region70: #{generator_resnet_forward.13} parent=66 // pred_region
          %p1120 = scmp.lt.s32.totalorder %s19, 1
          %s1121 = scalar_select %p1120, %s19, 1
          %s1122 = smul.addr %s1121, 4
          %s1123 = smul.addr %s1122, 8
          %s1124 = scalar_lea.vmem %s2, %s1123
        $region71: #{generator_resnet_forward.13} parent=66 // pred_fallthru
          _
      $region67: #{generator_resnet_forward.13} parent=5 // pred_fallthru
        _
    $region6: #{generator_resnet_forward.13} parent=1 // loop_footer
      %s12 = sadd.s32 1, %s8
    $region7: #{generator_resnet_forward.13} parent=1 // loop_footer_branch
      %7 = sbr.rel target = $region3
    $region8: #{generator_resnet_forward.13} parent=1 // loop_exit
      _

// kernel: generator_resnet_forward.17
$region0: #{generator_resnet_forward.17}
  #allocation0 [shape = 'u32[]', space=smem, size = 0x4, offset = 0x4, fixed_abs, tag = 'smem constant byte address 0x4 - core index']
  #allocation1 [shape = 'u32[72,128]{1,0:T(1,128)}', space=vmem, size = 0x9000, scoped, tag = 'internal scratch']
  #allocation2 [shape = 'f32[64,128]{1,0:T(8,128)}', space=vmem, size = 0x8000, scoped, tag = 'scratch operand']
  %s0 = inlined_call_operand.vmem [shape: bf16[2,64,2304], index: 0, kind: input, shape index: {}]
  %s1 = inlined_call_operand.vmem [shape: bf16[2304,128], index: 1, kind: input, shape index: {}]
  %s2 = inlined_call_operand.vmem [shape: f32[2,64,128], index: 2, kind: output, shape index: {}]
  %s3 = sld [smem:[#allocation0]]
  $region72: #{generator_resnet_forward.17} parent=0
    _
  %s5 = ssub.s32 1, %s3
  %s6 = scalar_select 0, %s5, %s3
  $region1: #{generator_resnet_forward.17} parent=0
    #allocation3 [shape = 'u8[196608]{0}', space=vmem, size = 0x30000, scoped, tag = 'input window, operand 0']
    loop: start=0, step=1, limit=8
    $region2: #{generator_resnet_forward.17} parent=1 // loop_pre_header
      _
    $region3: #{generator_resnet_forward.17} parent=1 // loop_header
      %s8 = sphi 0, %s12
      %p9 = scmp.ge.s32.totalorder %s8, 8
      %s15 = sphi 0, %s27
      %s16 = sphi 0, %s23
      %s17 = sphi 0, %s15
      %s18 = sphi 0, %s16
      %s19 = sphi 0, %s17
      %s20 = sphi 0, %s18
      %s32 = sphi 0, %s34
      %s35 = sphi 0, %s32
      %s36 = sphi 0, %s35
      %s52 = sphi 0, %s36
      %s58 = sphi 0, %s60
      %s61 = sphi 0, %s58
      %s62 = sphi 0, %s61
      %s78 = sphi 0, %s62
      %s84 = sphi 0, %s86
      %s87 = sphi 0, %s84
      %s88 = sphi 0, %s87
      %s104 = sphi 0, %s88
    $region4: #{generator_resnet_forward.17} parent=1 // loop_header_branch
      %11 = sbr.rel (%p9) target = $region8
    $region5: #{generator_resnet_forward.17} parent=1 // loop_body
      %s13 = ssub.s32 %s8, 1
      %s14 = ssub.s32 %s8, 2
      %s21 = sadd.s32 1, %s16
      %p22 = scmp.ge.s32.totalorder %s21, 3
      %s23 = scalar_select %p22, 0, %s21
      %s24 = sadd.s32 1, %s15
      %s25 = scalar_select %p22, %s24, %s15
      %p26 = scmp.ge.s32.totalorder %s25, 2
      %s27 = scalar_select %p26, 0, %s25
      %s28 = ssub.s32 %s15, %s27
      %s29 = ssub.s32 %s16, %s23
      %s30 = sor.u32 %s28, %s29
      %p31 = scmp.eq.s32.totalorder %s30, 0
      %s33 = sadd.s32 %s32, 1
      %s34 = scalar_select %p31, %s32, %s33
      %p37 = pneg %p31
      %p38 = scmp.eq.s32.totalorder %s8, 5
      %p39 = por %p37, %p38
      %p40 = scmp.ne.s32.totalorder %s32, %s35
      %p41 = scmp.eq.s32.totalorder %s8, 0
      %p42 = por %p40, %p41
      %p43 = scmp.ne.s32.totalorder %s32, %s35
      %p44 = scmp.eq.s32.totalorder %s13, 5
      %p45 = por %p43, %p44
      %p46 = scmp.ne.s32.totalorder %s35, %s36
      %p47 = scmp.eq.s32.totalorder %s13, 0
      %p48 = por %p46, %p47
      %p49 = scmp.ne.s32.totalorder %s35, %s36
      %p50 = scmp.eq.s32.totalorder %s14, 5
      %p51 = por %p49, %p50
      %p53 = scmp.ne.s32.totalorder %s36, %s52
      %p54 = scmp.eq.s32.totalorder %s14, 0
      %p55 = por %p53, %p54
      %s56 = ssub.s32 %s16, %s23
      %p57 = scmp.eq.s32.totalorder %s56, 0
      %s59 = sadd.s32 %s58, 1
      %s60 = scalar_select %p57, %s58, %s59
      %p63 = pneg %p57
      %p64 = scmp.eq.s32.totalorder %s8, 5
      %p65 = por %p63, %p64
      %p66 = scmp.ne.s32.totalorder %s58, %s61
      %p67 = scmp.eq.s32.totalorder %s8, 0
      %p68 = por %p66, %p67
      %p69 = scmp.ne.s32.totalorder %s58, %s61
      %p70 = scmp.eq.s32.totalorder %s13, 5
      %p71 = por %p69, %p70
      %p72 = scmp.ne.s32.totalorder %s61, %s62
      %p73 = scmp.eq.s32.totalorder %s13, 0
      %p74 = por %p72, %p73
      %p75 = scmp.ne.s32.totalorder %s61, %s62
      %p76 = scmp.eq.s32.totalorder %s14, 5
      %p77 = por %p75, %p76
      %p79 = scmp.ne.s32.totalorder %s62, %s78
      %p80 = scmp.eq.s32.totalorder %s14, 0
      %p81 = por %p79, %p80
      %s82 = ssub.s32 %s15, %s27
      %p83 = scmp.eq.s32.totalorder %s82, 0
      %s85 = sadd.s32 %s84, 1
      %s86 = scalar_select %p83, %s84, %s85
      %p89 = pneg %p83
      %p90 = scmp.eq.s32.totalorder %s8, 5
      %p91 = por %p89, %p90
      %p92 = scmp.ne.s32.totalorder %s84, %s87
      %p93 = scmp.eq.s32.totalorder %s8, 0
      %p94 = por %p92, %p93
      %p95 = scmp.ne.s32.totalorder %s84, %s87
      %p96 = scmp.eq.s32.totalorder %s13, 5
      %p97 = por %p95, %p96
      %p98 = scmp.ne.s32.totalorder %s87, %s88
      %p99 = scmp.eq.s32.totalorder %s13, 0
      %p100 = por %p98, %p99
      %p101 = scmp.ne.s32.totalorder %s87, %s88
      %p102 = scmp.eq.s32.totalorder %s14, 5
      %p103 = por %p101, %p102
      %p105 = scmp.ne.s32.totalorder %s88, %s104
      %p106 = scmp.eq.s32.totalorder %s14, 0
      %p107 = por %p105, %p106
      %p108 = scmp.le.s32.totalorder 1, %s8
      %p109 = scmp.lt.s32.totalorder %s8, 7
      %p110 = pnand %p108, %p109
      %p111 = pneg %p110
      // Predicated region
      $region9: #{generator_resnet_forward.17} parent=5 // pred_check
        _
      $region10: #{generator_resnet_forward.17} parent=5 // pred_check_branch
        %113 = sbr.rel (%p110) target = $region12
      $region11: #{generator_resnet_forward.17} parent=5 // pred_region
        %s114 = ssub.s32 %s8, 1
      $region12: #{generator_resnet_forward.17} parent=5 // pred_fallthru
        _
      %p115 = scmp.lt.s32.totalorder %s8, 6
      // Predicated region
      $region13: #{generator_resnet_forward.17} parent=5 // pred_check
        %p116 = pneg %p115
      $region14: #{generator_resnet_forward.17} parent=5 // pred_check_branch
        %118 = sbr.rel (%p116) target = $region16
      $region15: #{generator_resnet_forward.17} parent=5 // pred_region
        // Predicated region
        $region17: #{generator_resnet_forward.17} parent=15 // pred_check
          %p119 = pneg %p42
        $region18: #{generator_resnet_forward.17} parent=15 // pred_check_branch
          %121 = sbr.rel (%p119) target = $region20
        $region19: #{generator_resnet_forward.17} parent=15 // pred_region
          %s122 = sand.u32 %s32, 1
          %s123 = sand.u32 %s32, 1
          %s124 = smul.addr %s123, 192
          %s125 = scalar_lea.vmem [#allocation3], %s124
          %s126 = smul.u32 6, %s16
          %s127 = smul.addr %s15, 144
          %s128 = sadd.s32 %s126, %s127
          %s129 = smul.addr %s128, 4
          %s130 = scalar_lea.vmem %s0, %s129
          // Predicated region
          $region21: #{generator_resnet_forward.17} parent=19 // pred_check
            _
          $region22: #{generator_resnet_forward.17} parent=19 // pred_check_branch
            %132 = sbr.rel (0) target = $region24
          $region23: #{generator_resnet_forward.17} parent=19 // pred_region
            // Predicated region
            $region25: #{generator_resnet_forward.17} parent=23 // pred_check
              _
            $region26: #{generator_resnet_forward.17} parent=23 // pred_check_branch
              %134 = sbr.rel (0) target = $region28
            $region27: #{generator_resnet_forward.17} parent=23 // pred_region
              loop: start=0, step=1, limit=1
              $region29: #{generator_resnet_forward.17} parent=27 // loop_pre_header
                _
              $region30: #{generator_resnet_forward.17} parent=27 // loop_header
                %s136 = sphi 0, %s140
                %p137 = scmp.ge.s32.totalorder %s136, 1
                %s141 = sphi %s130, %s130
                %s142 = sphi %s125, %s125
              $region31: #{generator_resnet_forward.17} parent=27 // loop_header_branch
                %139 = sbr.rel (%p137) target = $region35
              $region32: #{generator_resnet_forward.17} parent=27 // loop_body
                %v143 = vld [vmem:[%s141] sm:$0xff]
                %144 = vst [vmem:[%s142] sm:$0xff] %v143
                %v145 = vld [vmem:[%s141 + $0x8] sm:$0xff]
                %146 = vst [vmem:[%s142 + $0x8] sm:$0xff] %v145
                %v147 = vld [vmem:[%s141 + $0x10] sm:$0xff]
                %148 = vst [vmem:[%s142 + $0x10] sm:$0xff] %v147
                %v149 = vld [vmem:[%s141 + $0x48] sm:$0xff]
                %150 = vst [vmem:[%s142 + $0x18] sm:$0xff] %v149
                %v151 = vld [vmem:[%s141 + $0x50] sm:$0xff]
                %152 = vst [vmem:[%s142 + $0x20] sm:$0xff] %v151
                %v153 = vld [vmem:[%s141 + $0x58] sm:$0xff]
                %154 = vst [vmem:[%s142 + $0x28] sm:$0xff] %v153
                %v155 = vld [vmem:[%s141 + $0x90] sm:$0xff]
                %156 = vst [vmem:[%s142 + $0x30] sm:$0xff] %v155
                %v157 = vld [vmem:[%s141 + $0x98] sm:$0xff]
                %158 = vst [vmem:[%s142 + $0x38] sm:$0xff] %v157
                %v159 = vld [vmem:[%s141 + $0xa0] sm:$0xff]
                %160 = vst [vmem:[%s142 + $0x40] sm:$0xff] %v159
                %v161 = vld [vmem:[%s141 + $0xd8] sm:$0xff]
                %162 = vst [vmem:[%s142 + $0x48] sm:$0xff] %v161
                %v163 = vld [vmem:[%s141 + $0xe0] sm:$0xff]
                %164 = vst [vmem:[%s142 + $0x50] sm:$0xff] %v163
                %v165 = vld [vmem:[%s141 + $0xe8] sm:$0xff]
                %166 = vst [vmem:[%s142 + $0x58] sm:$0xff] %v165
                %v167 = vld [vmem:[%s141 + $0x120] sm:$0xff]
                %168 = vst [vmem:[%s142 + $0x60] sm:$0xff] %v167
                %v169 = vld [vmem:[%s141 + $0x128] sm:$0xff]
                %170 = vst [vmem:[%s142 + $0x68] sm:$0xff] %v169
                %v171 = vld [vmem:[%s141 + $0x130] sm:$0xff]
                %172 = vst [vmem:[%s142 + $0x70] sm:$0xff] %v171
                %v173 = vld [vmem:[%s141 + $0x168] sm:$0xff]
                %174 = vst [vmem:[%s142 + $0x78] sm:$0xff] %v173
                %v175 = vld [vmem:[%s141 + $0x170] sm:$0xff]
                %176 = vst [vmem:[%s142 + $0x80] sm:$0xff] %v175
                %v177 = vld [vmem:[%s141 + $0x178] sm:$0xff]
                %178 = vst [vmem:[%s142 + $0x88] sm:$0xff] %v177
                %v179 = vld [vmem:[%s141 + $0x1b0] sm:$0xff]
                %180 = vst [vmem:[%s142 + $0x90] sm:$0xff] %v179
                %v181 = vld [vmem:[%s141 + $0x1b8] sm:$0xff]
                %182 = vst [vmem:[%s142 + $0x98] sm:$0xff] %v181
                %v183 = vld [vmem:[%s141 + $0x1c0] sm:$0xff]
                %184 = vst [vmem:[%s142 + $0xa0] sm:$0xff] %v183
                %v185 = vld [vmem:[%s141 + $0x1f8] sm:$0xff]
                %186 = vst [vmem:[%s142 + $0xa8] sm:$0xff] %v185
                %v187 = vld [vmem:[%s141 + $0x200] sm:$0xff]
                %188 = vst [vmem:[%s142 + $0xb0] sm:$0xff] %v187
                %v189 = vld [vmem:[%s141 + $0x208] sm:$0xff]
                %190 = vst [vmem:[%s142 + $0xb8] sm:$0xff] %v189
              $region33: #{generator_resnet_forward.17} parent=27 // loop_footer
                %s140 = sadd.s32 1, %s136
              $region34: #{generator_resnet_forward.17} parent=27 // loop_footer_branch
                %135 = sbr.rel target = $region30
              $region35: #{generator_resnet_forward.17} parent=27 // loop_exit
                _
            $region28: #{generator_resnet_forward.17} parent=23 // pred_fallthru
              _
            // Predicated region
            $region36: #{generator_resnet_forward.17} parent=23 // pred_check
              _
            $region37: #{generator_resnet_forward.17} parent=23 // pred_check_branch
              %192 = sbr.rel target = $region39
            $region38: #{generator_resnet_forward.17} parent=23 // pred_region
              _
            $region39: #{generator_resnet_forward.17} parent=23 // pred_fallthru
              _
          $region24: #{generator_resnet_forward.17} parent=19 // pred_fallthru
            _
          %193 = vnop
        $region20: #{generator_resnet_forward.17} parent=15 // pred_fallthru
          _
        // Predicated region
        $region40: #{generator_resnet_forward.17} parent=15 // pred_check
          %p194 = pneg %p68
        $region41: #{generator_resnet_forward.17} parent=15 // pred_check_branch
          %196 = sbr.rel (%p194) target = $region43
        $region42: #{generator_resnet_forward.17} parent=15 // pred_region
          %s197 = smul.u32 96, %s16
          %p198 = scmp.lt.s32.totalorder %s197, 287
          %s199 = scalar_select %p198, %s197, 287
          %s200 = smul.addr %s199, 4
          %s201 = scalar_lea.vmem %s1, %s200
          %s202 = smul.u32 96, %s16
        $region43: #{generator_resnet_forward.17} parent=15 // pred_fallthru
          _
      $region16: #{generator_resnet_forward.17} parent=5 // pred_fallthru
        _
      %p203 = scmp.le.s32.totalorder 1, %s8
      %p204 = scmp.lt.s32.totalorder %s8, 7
      %p205 = pnand %p203, %p204
      %p206 = pneg %p205
      // Predicated region
      $region44: #{generator_resnet_forward.17} parent=5 // pred_check
        _
      $region45: #{generator_resnet_forward.17} parent=5 // pred_check_branch
        %208 = sbr.rel (%p205) target = $region47
      $region46: #{generator_resnet_forward.17} parent=5 // pred_region
        %s209 = ssub.s32 %s8, 1
        %s210 = sand.u32 %s35, 1
        %s211 = sand.u32 %s35, 1
        %s212 = smul.addr %s211, 192
        %s213 = scalar_lea.vmem [#allocation3], %s212
        // Predicated region
        $region48: #{generator_resnet_forward.17} parent=46 // pred_check
          %p214 = pneg %p48
        $region49: #{generator_resnet_forward.17} parent=46 // pred_check_branch
          %216 = sbr.rel (%p214) target = $region51
        $region50: #{generator_resnet_forward.17} parent=46 // pred_region
          _
        $region51: #{generator_resnet_forward.17} parent=46 // pred_fallthru
          _
        %s217 = sand.u32 %s35, 1
        %s218 = sand.u32 %s35, 1
        %s219 = smul.addr %s218, 192
        %s220 = scalar_lea.vmem [#allocation3], %s219
        %p221 = pneg %p48
        %p222 = pneg %p45
        %s223 = smul.u32 96, %s18
        %p224 = scmp.lt.s32.totalorder %s223, 287
        %s225 = scalar_select %p224, %s223, 287
        %s226 = smul.addr %s225, 4
        %s227 = scalar_lea.vmem %s1, %s226
        %p228 = pneg %p74
        %p229 = pneg %p71
        %p230 = pneg %p100
        %p231 = pneg %p97
        %p232 = scmp.lt.s32.totalorder %s17, 1
        %s233 = scalar_select %p232, %s17, 1
        %s234 = smul.addr %s233, 8
        %s235 = smul.addr %s234, 8
        %s236 = scalar_lea.vmem %s2, %s235
        %s237 = smul.u32 6, %s18
        %s238 = smul.u32 96, %s18
        %p239 = scmp.lt.s32.totalorder %s238, 287
        %s240 = scalar_select %p239, %s238, 287
        %s241 = smul.addr %s240, 4
        %s242 = scalar_lea.vmem %s1, %s241
        %s243 = smul.u32 96, %s18
        %p244 = scmp.lt.s32.totalorder %s17, 1
        %s245 = scalar_select %p244, %s17, 1
        %s246 = smul.addr %s245, 8
        %s247 = smul.addr %s246, 8
        %s248 = scalar_lea.vmem %s2, %s247
        %p249 = scmp.eq.s32.totalorder %s18, 0
        // Predicated region
        $region52: #{generator_resnet_forward.17} parent=46 // pred_check
          %p250 = pneg %p249
        $region53: #{generator_resnet_forward.17} parent=46 // pred_check_branch
          %252 = sbr.rel (%p250) target = $region55
        $region54: #{generator_resnet_forward.17} parent=46 // pred_region
          %253 = vst [vmem:[#allocation2] sm:$0xff] 0.0
          %254 = vst [vmem:[#allocation2 + $0x8] sm:$0xff] 0.0
          %255 = vst [vmem:[#allocation2 + $0x10] sm:$0xff] 0.0
          %256 = vst [vmem:[#allocation2 + $0x18] sm:$0xff] 0.0
          %257 = vst [vmem:[#allocation2 + $0x20] sm:$0xff] 0.0
          %258 = vst [vmem:[#allocation2 + $0x28] sm:$0xff] 0.0
          %259 = vst [vmem:[#allocation2 + $0x30] sm:$0xff] 0.0
          %260 = vst [vmem:[#allocation2 + $0x38] sm:$0xff] 0.0
        $region55: #{generator_resnet_forward.17} parent=46 // pred_fallthru
          _
        %v261 = vld [vmem:[#allocation2] sm:$0xff]
        %v262 = vld [vmem:[#allocation2 + $0x8] sm:$0xff]
        %v263 = vld [vmem:[#allocation2 + $0x10] sm:$0xff]
        %v264 = vld [vmem:[#allocation2 + $0x18] sm:$0xff]
        %v265 = vld [vmem:[#allocation2 + $0x20] sm:$0xff]
        %v266 = vld [vmem:[#allocation2 + $0x28] sm:$0xff]
        %v267 = vld [vmem:[#allocation2 + $0x30] sm:$0xff]
        %v268 = vld [vmem:[#allocation2 + $0x38] sm:$0xff]
        %v269 = vld [vmem:[%s213] sm:$0xff]
        %v270 = vld [vmem:[%s213 + $0x8] sm:$0xff]
        %v271 = vld [vmem:[%s213 + $0x10] sm:$0xff]
        %v272 = vld [vmem:[%s213 + $0x18] sm:$0xff]
        %v273 = vld [vmem:[%s213 + $0x20] sm:$0xff]
        %v274 = vld [vmem:[%s213 + $0x28] sm:$0xff]
        %v275 = vld [vmem:[%s213 + $0x30] sm:$0xff]
        %v276 = vld [vmem:[%s213 + $0x38] sm:$0xff]
        %v277 = vld [vmem:[%s213 + $0x40] sm:$0xff]
        %v278 = vld [vmem:[%s213 + $0x48] sm:$0xff]
        %v279 = vld [vmem:[%s213 + $0x50] sm:$0xff]
        %v280 = vld [vmem:[%s213 + $0x58] sm:$0xff]
        %v281 = vld [vmem:[%s213 + $0x60] sm:$0xff]
        %v282 = vld [vmem:[%s213 + $0x68] sm:$0xff]
        %v283 = vld [vmem:[%s213 + $0x70] sm:$0xff]
        %v284 = vld [vmem:[%s213 + $0x78] sm:$0xff]
        %v285 = vld [vmem:[%s213 + $0x80] sm:$0xff]
        %v286 = vld [vmem:[%s213 + $0x88] sm:$0xff]
        %v287 = vld [vmem:[%s213 + $0x90] sm:$0xff]
        %v288 = vld [vmem:[%s213 + $0x98] sm:$0xff]
        %v289 = vld [vmem:[%s213 + $0xa0] sm:$0xff]
        %v290 = vld [vmem:[%s213 + $0xa8] sm:$0xff]
        %v291 = vld [vmem:[%s213 + $0xb0] sm:$0xff]
        %v292 = vld [vmem:[%s213 + $0xb8] sm:$0xff]
        %v293 = vld [vmem:[%s242] sm:$0xf]
        %v294 = vld [vmem:[%s242 + $0x4] sm:$0xf]
        %v295 = vld [vmem:[%s242 + $0x8] sm:$0xf]
        %v296 = vld [vmem:[%s242 + $0xc] sm:$0xf]
        %v297 = vld [vmem:[%s242 + $0x10] sm:$0xf]
        %v298 = vld [vmem:[%s242 + $0x14] sm:$0xf]
        %v299 = vld [vmem:[%s242 + $0x18] sm:$0xf]
        %v300 = vld [vmem:[%s242 + $0x1c] sm:$0xf]
        %v301 = vld [vmem:[%s242 + $0x20] sm:$0xf]
        %v302 = vld [vmem:[%s242 + $0x24] sm:$0xf]
        %v303 = vld [vmem:[%s242 + $0x28] sm:$0xf]
        %v304 = vld [vmem:[%s242 + $0x2c] sm:$0xf]
        %v305 = vld [vmem:[%s242 + $0x30] sm:$0xf]
        %v306 = vld [vmem:[%s242 + $0x34] sm:$0xf]
        %v307 = vld [vmem:[%s242 + $0x38] sm:$0xf]
        %v308 = vld [vmem:[%s242 + $0x3c] sm:$0xf]
        %v309 = vld [vmem:[%s242 + $0x40] sm:$0xf]
        %v310 = vld [vmem:[%s242 + $0x44] sm:$0xf]
        %v311 = vld [vmem:[%s242 + $0x48] sm:$0xf]
        %v312 = vld [vmem:[%s242 + $0x4c] sm:$0xf]
        %v313 = vld [vmem:[%s242 + $0x50] sm:$0xf]
        %v314 = vld [vmem:[%s242 + $0x54] sm:$0xf]
        %v315 = vld [vmem:[%s242 + $0x58] sm:$0xf]
        %v316 = vld [vmem:[%s242 + $0x5c] sm:$0xf]
        %v317 = vld [vmem:[%s242 + $0x60] sm:$0xf]
        %v318 = vld [vmem:[%s242 + $0x64] sm:$0xf]
        %v319 = vld [vmem:[%s242 + $0x68] sm:$0xf]
        %v320 = vld [vmem:[%s242 + $0x6c] sm:$0xf]
        %v321 = vld [vmem:[%s242 + $0x70] sm:$0xf]
        %v322 = vld [vmem:[%s242 + $0x74] sm:$0xf]
        %v323 = vld [vmem:[%s242 + $0x78] sm:$0xf]
        %v324 = vld [vmem:[%s242 + $0x7c] sm:$0xf]
        %v325 = vld [vmem:[%s242 + $0x80] sm:$0xf]
        %v326 = vld [vmem:[%s242 + $0x84] sm:$0xf]
        %v327 = vld [vmem:[%s242 + $0x88] sm:$0xf]
        %v328 = vld [vmem:[%s242 + $0x8c] sm:$0xf]
        %v329 = vld [vmem:[%s242 + $0x90] sm:$0xf]
        %v330 = vld [vmem:[%s242 + $0x94] sm:$0xf]
        %v331 = vld [vmem:[%s242 + $0x98] sm:$0xf]
        %v332 = vld [vmem:[%s242 + $0x9c] sm:$0xf]
        %v333 = vld [vmem:[%s242 + $0xa0] sm:$0xf]
        %v334 = vld [vmem:[%s242 + $0xa4] sm:$0xf]
        %v335 = vld [vmem:[%s242 + $0xa8] sm:$0xf]
        %v336 = vld [vmem:[%s242 + $0xac] sm:$0xf]
        %v337 = vld [vmem:[%s242 + $0xb0] sm:$0xf]
        %v338 = vld [vmem:[%s242 + $0xb4] sm:$0xf]
        %v339 = vld [vmem:[%s242 + $0xb8] sm:$0xf]
        %v340 = vld [vmem:[%s242 + $0xbc] sm:$0xf]
        %v341 = vld [vmem:[%s242 + $0xc0] sm:$0xf]
        %v342 = vld [vmem:[%s242 + $0xc4] sm:$0xf]
        %v343 = vld [vmem:[%s242 + $0xc8] sm:$0xf]
        %v344 = vld [vmem:[%s242 + $0xcc] sm:$0xf]
        %v345 = vld [vmem:[%s242 + $0xd0] sm:$0xf]
        %v346 = vld [vmem:[%s242 + $0xd4] sm:$0xf]
        %v347 = vld [vmem:[%s242 + $0xd8] sm:$0xf]
        %v348 = vld [vmem:[%s242 + $0xdc] sm:$0xf]
        %v349 = vld [vmem:[%s242 + $0xe0] sm:$0xf]
        %v350 = vld [vmem:[%s242 + $0xe4] sm:$0xf]
        %v351 = vld [vmem:[%s242 + $0xe8] sm:$0xf]
        %v352 = vld [vmem:[%s242 + $0xec] sm:$0xf]
        %v353 = vld [vmem:[%s242 + $0xf0] sm:$0xf]
        %v354 = vld [vmem:[%s242 + $0xf4] sm:$0xf]
        %v355 = vld [vmem:[%s242 + $0xf8] sm:$0xf]
        %v356 = vld [vmem:[%s242 + $0xfc] sm:$0xf]
        %v357 = vld [vmem:[%s242 + $0x100] sm:$0xf]
        %v358 = vld [vmem:[%s242 + $0x104] sm:$0xf]
        %v359 = vld [vmem:[%s242 + $0x108] sm:$0xf]
        %v360 = vld [vmem:[%s242 + $0x10c] sm:$0xf]
        %v361 = vld [vmem:[%s242 + $0x110] sm:$0xf]
        %v362 = vld [vmem:[%s242 + $0x114] sm:$0xf]
        %v363 = vld [vmem:[%s242 + $0x118] sm:$0xf]
        %v364 = vld [vmem:[%s242 + $0x11c] sm:$0xf]
        %v365 = vld [vmem:[%s242 + $0x120] sm:$0xf]
        %v366 = vld [vmem:[%s242 + $0x124] sm:$0xf]
        %v367 = vld [vmem:[%s242 + $0x128] sm:$0xf]
        %v368 = vld [vmem:[%s242 + $0x12c] sm:$0xf]
        %v369 = vld [vmem:[%s242 + $0x130] sm:$0xf]
        %v370 = vld [vmem:[%s242 + $0x134] sm:$0xf]
        %v371 = vld [vmem:[%s242 + $0x138] sm:$0xf]
        %v372 = vld [vmem:[%s242 + $0x13c] sm:$0xf]
        %v373 = vld [vmem:[%s242 + $0x140] sm:$0xf]
        %v374 = vld [vmem:[%s242 + $0x144] sm:$0xf]
        %v375 = vld [vmem:[%s242 + $0x148] sm:$0xf]
        %v376 = vld [vmem:[%s242 + $0x14c] sm:$0xf]
        %v377 = vld [vmem:[%s242 + $0x150] sm:$0xf]
        %v378 = vld [vmem:[%s242 + $0x154] sm:$0xf]
        %v379 = vld [vmem:[%s242 + $0x158] sm:$0xf]
        %v380 = vld [vmem:[%s242 + $0x15c] sm:$0xf]
        %v381 = vld [vmem:[%s242 + $0x160] sm:$0xf]
        %v382 = vld [vmem:[%s242 + $0x164] sm:$0xf]
        %v383 = vld [vmem:[%s242 + $0x168] sm:$0xf]
        %v384 = vld [vmem:[%s242 + $0x16c] sm:$0xf]
        %v385 = vld [vmem:[%s242 + $0x170] sm:$0xf]
        %v386 = vld [vmem:[%s242 + $0x174] sm:$0xf]
        %v387 = vld [vmem:[%s242 + $0x178] sm:$0xf]
        %v388 = vld [vmem:[%s242 + $0x17c] sm:$0xf]
        %v413 = vunpack.c.l.b16 %v269
        %v414 = vunpack.c.h.b16 %v269
        %v415 = vunpack.c.l.b16 %v270
        %v416 = vunpack.c.h.b16 %v270
        %v417 = vunpack.c.l.b16 %v271
        %v418 = vunpack.c.h.b16 %v271
        %v419 = vunpack.c.l.b16 %v272
        %v420 = vunpack.c.h.b16 %v272
        %v421 = vunpack.c.l.b16 %v273
        %v422 = vunpack.c.h.b16 %v273
        %v423 = vunpack.c.l.b16 %v274
        %v424 = vunpack.c.h.b16 %v274
        %v425 = vunpack.c.l.b16 %v275
        %v426 = vunpack.c.h.b16 %v275
        %v427 = vunpack.c.l.b16 %v276
        %v428 = vunpack.c.h.b16 %v276
        %v429 = vunpack.c.l.b16 %v277
        %v430 = vunpack.c.h.b16 %v277
        %v431 = vunpack.c.l.b16 %v278
        %v432 = vunpack.c.h.b16 %v278
        %v433 = vunpack.c.l.b16 %v279
        %v434 = vunpack.c.h.b16 %v279
        %v435 = vunpack.c.l.b16 %v280
        %v436 = vunpack.c.h.b16 %v280
        %v437 = vunpack.c.l.b16 %v281
        %v438 = vunpack.c.h.b16 %v281
        %v439 = vunpack.c.l.b16 %v282
        %v440 = vunpack.c.h.b16 %v282
        %v441 = vunpack.c.l.b16 %v283
        %v442 = vunpack.c.h.b16 %v283
        %v443 = vunpack.c.l.b16 %v284
        %v444 = vunpack.c.h.b16 %v284
        %v445 = vunpack.c.l.b16 %v285
        %v446 = vunpack.c.h.b16 %v285
        %v447 = vunpack.c.l.b16 %v286
        %v448 = vunpack.c.h.b16 %v286
        %v449 = vunpack.c.l.b16 %v287
        %v450 = vunpack.c.h.b16 %v287
        %v451 = vunpack.c.l.b16 %v288
        %v452 = vunpack.c.h.b16 %v288
        %v453 = vunpack.c.l.b16 %v289
        %v454 = vunpack.c.h.b16 %v289
        %v455 = vunpack.c.l.b16 %v290
        %v456 = vunpack.c.h.b16 %v290
        %v457 = vunpack.c.l.b16 %v291
        %v458 = vunpack.c.h.b16 %v291
        %v459 = vunpack.c.l.b16 %v292
        %v460 = vunpack.c.h.b16 %v292
        %v461 = vpack.c.b16 %v419, %v413
        %v462 = vpack.c.b16 %v420, %v414
        %v463 = vpack.c.b16 %v421, %v415
        %v464 = vpack.c.b16 %v422, %v416
        %v465 = vpack.c.b16 %v423, %v417
        %v466 = vpack.c.b16 %v424, %v418
        %v467 = vpack.c.b16 %v431, %v425
        %v468 = vpack.c.b16 %v432, %v426
        %v469 = vpack.c.b16 %v433, %v427
        %v470 = vpack.c.b16 %v434, %v428
        %v471 = vpack.c.b16 %v435, %v429
        %v472 = vpack.c.b16 %v436, %v430
        %v473 = vpack.c.b16 %v443, %v437
        %v474 = vpack.c.b16 %v444, %v438
        %v475 = vpack.c.b16 %v445, %v439
        %v476 = vpack.c.b16 %v446, %v440
        %v477 = vpack.c.b16 %v447, %v441
        %v478 = vpack.c.b16 %v448, %v442
        %v479 = vpack.c.b16 %v455, %v449
        %v480 = vpack.c.b16 %v456, %v450
        %v481 = vpack.c.b16 %v457, %v451
        %v482 = vpack.c.b16 %v458, %v452
        %v483 = vpack.c.b16 %v459, %v453
        %v484 = vpack.c.b16 %v460, %v454
        %v605 = vunpack.c.l.b16 %v293
        %v606 = vunpack.c.l.b16 %v294
        %v607 = vunpack.c.l.b16 %v295
        %v608 = vunpack.c.l.b16 %v296
        %v609 = vunpack.c.l.b16 %v297
        %v610 = vunpack.c.l.b16 %v298
        %v611 = vunpack.c.l.b16 %v299
        %v612 = vunpack.c.l.b16 %v300
        %v613 = vunpack.c.l.b16 %v301
        %v614 = vunpack.c.l.b16 %v302
        %v615 = vunpack.c.l.b16 %v303
        %v616 = vunpack.c.l.b16 %v304
        %v617 = vunpack.c.l.b16 %v305
        %v618 = vunpack.c.l.b16 %v306
        %v619 = vunpack.c.l.b16 %v307
        %v620 = vunpack.c.l.b16 %v308
        %v621 = vunpack.c.l.b16 %v309
        %v622 = vunpack.c.l.b16 %v310
        %v623 = vunpack.c.l.b16 %v311
        %v624 = vunpack.c.l.b16 %v312
        %v625 = vunpack.c.l.b16 %v313
        %v626 = vunpack.c.l.b16 %v314
        %v627 = vunpack.c.l.b16 %v315
        %v628 = vunpack.c.l.b16 %v316
        %v629 = vunpack.c.l.b16 %v317
        %v630 = vunpack.c.l.b16 %v318
        %v631 = vunpack.c.l.b16 %v319
        %v632 = vunpack.c.l.b16 %v320
        %v633 = vunpack.c.l.b16 %v321
        %v634 = vunpack.c.l.b16 %v322
        %v635 = vunpack.c.l.b16 %v323
        %v636 = vunpack.c.l.b16 %v324
        %v637 = vunpack.c.l.b16 %v325
        %v638 = vunpack.c.l.b16 %v326
        %v639 = vunpack.c.l.b16 %v327
        %v640 = vunpack.c.l.b16 %v328
        %v641 = vunpack.c.l.b16 %v329
        %v642 = vunpack.c.l.b16 %v330
        %v643 = vunpack.c.l.b16 %v331
        %v644 = vunpack.c.l.b16 %v332
        %v645 = vunpack.c.l.b16 %v333
        %v646 = vunpack.c.l.b16 %v334
        %v647 = vunpack.c.l.b16 %v335
        %v648 = vunpack.c.l.b16 %v336
        %v649 = vunpack.c.l.b16 %v337
        %v650 = vunpack.c.l.b16 %v338
        %v651 = vunpack.c.l.b16 %v339
        %v652 = vunpack.c.l.b16 %v340
        %v653 = vunpack.c.l.b16 %v341
        %v654 = vunpack.c.l.b16 %v342
        %v655 = vunpack.c.l.b16 %v343
        %v656 = vunpack.c.l.b16 %v344
        %v657 = vunpack.c.l.b16 %v345
        %v658 = vunpack.c.l.b16 %v346
        %v659 = vunpack.c.l.b16 %v347
        %v660 = vunpack.c.l.b16 %v348
        %v661 = vunpack.c.l.b16 %v349
        %v662 = vunpack.c.l.b16 %v350
        %v663 = vunpack.c.l.b16 %v351
        %v664 = vunpack.c.l.b16 %v352
        %v665 = vunpack.c.l.b16 %v353
        %v666 = vunpack.c.l.b16 %v354
        %v667 = vunpack.c.l.b16 %v355
        %v668 = vunpack.c.l.b16 %v356
        %v669 = vunpack.c.l.b16 %v357
        %v670 = vunpack.c.l.b16 %v358
        %v671 = vunpack.c.l.b16 %v359
        %v672 = vunpack.c.l.b16 %v360
        %v673 = vunpack.c.l.b16 %v361
        %v674 = vunpack.c.l.b16 %v362
        %v675 = vunpack.c.l.b16 %v363
        %v676 = vunpack.c.l.b16 %v364
        %v677 = vunpack.c.l.b16 %v365
        %v678 = vunpack.c.l.b16 %v366
        %v679 = vunpack.c.l.b16 %v367
        %v680 = vunpack.c.l.b16 %v368
        %v681 = vunpack.c.l.b16 %v369
        %v682 = vunpack.c.l.b16 %v370
        %v683 = vunpack.c.l.b16 %v371
        %v684 = vunpack.c.l.b16 %v372
        %v685 = vunpack.c.l.b16 %v373
        %v686 = vunpack.c.l.b16 %v374
        %v687 = vunpack.c.l.b16 %v375
        %v688 = vunpack.c.l.b16 %v376
        %v689 = vunpack.c.l.b16 %v377
        %v690 = vunpack.c.l.b16 %v378
        %v691 = vunpack.c.l.b16 %v379
        %v692 = vunpack.c.l.b16 %v380
        %v693 = vunpack.c.l.b16 %v381
        %v694 = vunpack.c.l.b16 %v382
        %v695 = vunpack.c.l.b16 %v383
        %v696 = vunpack.c.l.b16 %v384
        %v697 = vunpack.c.l.b16 %v385
        %v698 = vunpack.c.l.b16 %v386
        %v699 = vunpack.c.l.b16 %v387
        %v700 = vunpack.c.l.b16 %v388
        %v701 = vpack.c.b16 %v606, %v605
        %v702 = vpack.c.b16 %v608, %v607
        %v703 = vpack.c.b16 %v610, %v609
        %v704 = vpack.c.b16 %v612, %v611
        %v705 = vpack.c.b16 %v614, %v613
        %v706 = vpack.c.b16 %v616, %v615
        %v707 = vpack.c.b16 %v618, %v617
        %v708 = vpack.c.b16 %v620, %v619
        %v709 = vpack.c.b16 %v622, %v621
        %v710 = vpack.c.b16 %v624, %v623
        %v711 = vpack.c.b16 %v626, %v625
        %v712 = vpack.c.b16 %v628, %v627
        %v713 = vpack.c.b16 %v630, %v629
        %v714 = vpack.c.b16 %v632, %v631
        %v715 = vpack.c.b16 %v634, %v633
        %v716 = vpack.c.b16 %v636, %v635
        %v717 = vpack.c.b16 %v638, %v637
        %v718 = vpack.c.b16 %v640, %v639
        %v719 = vpack.c.b16 %v642, %v641
        %v720 = vpack.c.b16 %v644, %v643
        %v721 = vpack.c.b16 %v646, %v645
        %v722 = vpack.c.b16 %v648, %v647
        %v723 = vpack.c.b16 %v650, %v649
        %v724 = vpack.c.b16 %v652, %v651
        %v725 = vpack.c.b16 %v654, %v653
        %v726 = vpack.c.b16 %v656, %v655
        %v727 = vpack.c.b16 %v658, %v657
        %v728 = vpack.c.b16 %v660, %v659
        %v729 = vpack.c.b16 %v662, %v661
        %v730 = vpack.c.b16 %v664, %v663
        %v731 = vpack.c.b16 %v666, %v665
        %v732 = vpack.c.b16 %v668, %v667
        %v733 = vpack.c.b16 %v670, %v669
        %v734 = vpack.c.b16 %v672, %v671
        %v735 = vpack.c.b16 %v674, %v673
        %v736 = vpack.c.b16 %v676, %v675
        %v737 = vpack.c.b16 %v678, %v677
        %v738 = vpack.c.b16 %v680, %v679
        %v739 = vpack.c.b16 %v682, %v681
        %v740 = vpack.c.b16 %v684, %v683
        %v741 = vpack.c.b16 %v686, %v685
        %v742 = vpack.c.b16 %v688, %v687
        %v743 = vpack.c.b16 %v690, %v689
        %v744 = vpack.c.b16 %v692, %v691
        %v745 = vpack.c.b16 %v694, %v693
        %v746 = vpack.c.b16 %v696, %v695
        %v747 = vpack.c.b16 %v698, %v697
        %v748 = vpack.c.b16 %v700, %v699
        %797 = vmatpush.bf16.msra.mxu0 %v708
        %798 = vmatpush.bf16.msra.mxu0 %v707
        %799 = vmatpush.bf16.msra.mxu0 %v706
        %800 = vmatpush.bf16.msra.mxu0 %v705
        %801 = vmatpush.bf16.msra.mxu0 %v704
        %802 = vmatpush.bf16.msra.mxu0 %v703
        %803 = vmatpush.bf16.msra.mxu0 %v702
        %804 = vmatpush.bf16.msra.mxu0 %v701
        %805 = vmatmul.bf16.gmra.mxu0 %v461
        %v806 = vpop.f32.mrf.mxu0
        %v807 = vadd.f32 0.0, %v806
        %v808 = vpop.f32.mrf.mxu0
        %v809 = vadd.f32 0.0, %v808
        %810 = vmatmul.bf16.gmra.mxu0 %v467
        %v811 = vpop.f32.mrf.mxu0
        %v812 = vadd.f32 0.0, %v811
        %v813 = vpop.f32.mrf.mxu0
        %v814 = vadd.f32 0.0, %v813
        %815 = vmatmul.bf16.gmra.mxu0 %v473
        %v816 = vpop.f32.mrf.mxu0
        %v817 = vadd.f32 0.0, %v816
        %v818 = vpop.f32.mrf.mxu0
        %v819 = vadd.f32 0.0, %v818
        %820 = vmatmul.bf16.gmra.mxu0 %v479
        %v821 = vpop.f32.mrf.mxu0
        %v822 = vadd.f32 0.0, %v821
        %v823 = vpop.f32.mrf.mxu0
        %v824 = vadd.f32 0.0, %v823
        %825 = vdwg.mxu0
        %826 = vmatpush.bf16.msra.mxu0 %v716
        %827 = vmatpush.bf16.msra.mxu0 %v715
        %828 = vmatpush.bf16.msra.mxu0 %v714
        %829 = vmatpush.bf16.msra.mxu0 %v713
        %830 = vmatpush.bf16.msra.mxu0 %v712
        %831 = vmatpush.bf16.msra.mxu0 %v711
        %832 = vmatpush.bf16.msra.mxu0 %v710
        %833 = vmatpush.bf16.msra.mxu0 %v709
        %834 = vmatmul.bf16.gmra.mxu0 %v462
        %v835 = vpop.f32.mrf.mxu0
        %v836 = vadd.f32 %v807, %v835
        %v837 = vpop.f32.mrf.mxu0
        %v838 = vadd.f32 %v809, %v837
        %839 = vmatmul.bf16.gmra.mxu0 %v468
        %v840 = vpop.f32.mrf.mxu0
        %v841 = vadd.f32 %v812, %v840
        %v842 = vpop.f32.mrf.mxu0
        %v843 = vadd.f32 %v814, %v842
        %844 = vmatmul.bf16.gmra.mxu0 %v474
        %v845 = vpop.f32.mrf.mxu0
        %v846 = vadd.f32 %v817, %v845
        %v847 = vpop.f32.mrf.mxu0
        %v848 = vadd.f32 %v819, %v847
        %849 = vmatmul.bf16.gmra.mxu0 %v480
        %v850 = vpop.f32.mrf.mxu0
        %v851 = vadd.f32 %v822, %v850
        %v852 = vpop.f32.mrf.mxu0
        %v853 = vadd.f32 %v824, %v852
        %854 = vdwg.mxu0
        %855 = vmatpush.bf16.msra.mxu0 %v724
        %856 = vmatpush.bf16.msra.mxu0 %v723
        %857 = vmatpush.bf16.msra.mxu0 %v722
        %858 = vmatpush.bf16.msra.mxu0 %v721
        %859 = vmatpush.bf16.msra.mxu0 %v720
        %860 = vmatpush.bf16.msra.mxu0 %v719
        %861 = vmatpush.bf16.msra.mxu0 %v718
        %862 = vmatpush.bf16.msra.mxu0 %v717
        %863 = vmatmul.bf16.gmra.mxu0 %v463
        %v864 = vpop.f32.mrf.mxu0
        %v865 = vadd.f32 %v836, %v864
        %v866 = vpop.f32.mrf.mxu0
        %v867 = vadd.f32 %v838, %v866
        %868 = vmatmul.bf16.gmra.mxu0 %v469
        %v869 = vpop.f32.mrf.mxu0
        %v870 = vadd.f32 %v841, %v869
        %v871 = vpop.f32.mrf.mxu0
        %v872 = vadd.f32 %v843, %v871
        %873 = vmatmul.bf16.gmra.mxu0 %v475
        %v874 = vpop.f32.mrf.mxu0
        %v875 = vadd.f32 %v846, %v874
        %v876 = vpop.f32.mrf.mxu0
        %v877 = vadd.f32 %v848, %v876
        %878 = vmatmul.bf16.gmra.mxu0 %v481
        %v879 = vpop.f32.mrf.mxu0
        %v880 = vadd.f32 %v851, %v879
        %v881 = vpop.f32.mrf.mxu0
        %v882 = vadd.f32 %v853, %v881
        %883 = vdwg.mxu0
        %884 = vmatpush.bf16.msra.mxu0 %v732
        %885 = vmatpush.bf16.msra.mxu0 %v731
        %886 = vmatpush.bf16.msra.mxu0 %v730
        %887 = vmatpush.bf16.msra.mxu0 %v729
        %888 = vmatpush.bf16.msra.mxu0 %v728
        %889 = vmatpush.bf16.msra.mxu0 %v727
        %890 = vmatpush.bf16.msra.mxu0 %v726
        %891 = vmatpush.bf16.msra.mxu0 %v725
        %892 = vmatmul.bf16.gmra.mxu0 %v464
        %v893 = vpop.f32.mrf.mxu0
        %v894 = vadd.f32 %v865, %v893
        %v895 = vpop.f32.mrf.mxu0
        %v896 = vadd.f32 %v867, %v895
        %897 = vmatmul.bf16.gmra.mxu0 %v470
        %v898 = vpop.f32.mrf.mxu0
        %v899 = vadd.f32 %v870, %v898
        %v900 = vpop.f32.mrf.mxu0
        %v901 = vadd.f32 %v872, %v900
        %902 = vmatmul.bf16.gmra.mxu0 %v476
        %v903 = vpop.f32.mrf.mxu0
        %v904 = vadd.f32 %v875, %v903
        %v905 = vpop.f32.mrf.mxu0
        %v906 = vadd.f32 %v877, %v905
        %907 = vmatmul.bf16.gmra.mxu0 %v482
        %v908 = vpop.f32.mrf.mxu0
        %v909 = vadd.f32 %v880, %v908
        %v910 = vpop.f32.mrf.mxu0
        %v911 = vadd.f32 %v882, %v910
        %912 = vdwg.mxu0
        %913 = vmatpush.bf16.msra.mxu0 %v740
        %914 = vmatpush.bf16.msra.mxu0 %v739
        %915 = vmatpush.bf16.msra.mxu0 %v738
        %916 = vmatpush.bf16.msra.mxu0 %v737
        %917 = vmatpush.bf16.msra.mxu0 %v736
        %918 = vmatpush.bf16.msra.mxu0 %v735
        %919 = vmatpush.bf16.msra.mxu0 %v734
        %920 = vmatpush.bf16.msra.mxu0 %v733
        %921 = vmatmul.bf16.gmra.mxu0 %v465
        %v922 = vpop.f32.mrf.mxu0
        %v923 = vadd.f32 %v894, %v922
        %v924 = vpop.f32.mrf.mxu0
        %v925 = vadd.f32 %v896, %v924
        %926 = vmatmul.bf16.gmra.mxu0 %v471
        %v927 = vpop.f32.mrf.mxu0
        %v928 = vadd.f32 %v899, %v927
        %v929 = vpop.f32.mrf.mxu0
        %v930 = vadd.f32 %v901, %v929
        %931 = vmatmul.bf16.gmra.mxu0 %v477
        %v932 = vpop.f32.mrf.mxu0
        %v933 = vadd.f32 %v904, %v932
        %v934 = vpop.f32.mrf.mxu0
        %v935 = vadd.f32 %v906, %v934
        %936 = vmatmul.bf16.gmra.mxu0 %v483
        %v937 = vpop.f32.mrf.mxu0
        %v938 = vadd.f32 %v909, %v937
        %v939 = vpop.f32.mrf.mxu0
        %v940 = vadd.f32 %v911, %v939
        %941 = vdwg.mxu0
        %942 = vmatpush.bf16.msra.mxu0 %v748
        %943 = vmatpush.bf16.msra.mxu0 %v747
        %944 = vmatpush.bf16.msra.mxu0 %v746
        %945 = vmatpush.bf16.msra.mxu0 %v745
        %946 = vmatpush.bf16.msra.mxu0 %v744
        %947 = vmatpush.bf16.msra.mxu0 %v743
        %948 = vmatpush.bf16.msra.mxu0 %v742
        %949 = vmatpush.bf16.msra.mxu0 %v741
        %950 = vmatmul.bf16.gmra.mxu0 %v466
        %v951 = vpop.f32.mrf.mxu0
        %v952 = vadd.f32 %v923, %v951
        %v953 = vpop.f32.mrf.mxu0
        %v954 = vadd.f32 %v925, %v953
        %955 = vmatmul.bf16.gmra.mxu0 %v472
        %v956 = vpop.f32.mrf.mxu0
        %v957 = vadd.f32 %v928, %v956
        %v958 = vpop.f32.mrf.mxu0
        %v959 = vadd.f32 %v930, %v958
        %960 = vmatmul.bf16.gmra.mxu0 %v478
        %v961 = vpop.f32.mrf.mxu0
        %v962 = vadd.f32 %v933, %v961
        %v963 = vpop.f32.mrf.mxu0
        %v964 = vadd.f32 %v935, %v963
        %965 = vmatmul.bf16.gmra.mxu0 %v484
        %v966 = vpop.f32.mrf.mxu0
        %v967 = vadd.f32 %v938, %v966
        %v968 = vpop.f32.mrf.mxu0
        %v969 = vadd.f32 %v940, %v968
        %970 = vdwg.mxu0
        %v971 = vadd.f32 %v261, %v952
        %v972 = vadd.f32 %v262, %v954
        %v973 = vadd.f32 %v263, %v957
        %v974 = vadd.f32 %v264, %v959
        %v975 = vadd.f32 %v265, %v962
        %v976 = vadd.f32 %v266, %v964
        %v977 = vadd.f32 %v267, %v967
        %v978 = vadd.f32 %v268, %v969
        %979 = vst [vmem:[#allocation2] sm:$0xff] %v971
        %980 = vst [vmem:[#allocation2 + $0x8] sm:$0xff] %v972
        %981 = vst [vmem:[#allocation2 + $0x10] sm:$0xff] %v973
        %982 = vst [vmem:[#allocation2 + $0x18] sm:$0xff] %v974
        %983 = vst [vmem:[#allocation2 + $0x20] sm:$0xff] %v975
        %984 = vst [vmem:[#allocation2 + $0x28] sm:$0xff] %v976
        %985 = vst [vmem:[#allocation2 + $0x30] sm:$0xff] %v977
        %986 = vst [vmem:[#allocation2 + $0x38] sm:$0xff] %v978
        %p987 = scmp.eq.s32.totalorder %s18, 2
        // Predicated region
        $region56: #{generator_resnet_forward.17} parent=46 // pred_check
          %p988 = pneg %p987
        $region57: #{generator_resnet_forward.17} parent=46 // pred_check_branch
          %990 = sbr.rel (%p988) target = $region59
        $region58: #{generator_resnet_forward.17} parent=46 // pred_region
          %v991 = vld [vmem:[#allocation2] sm:$0xff]
          %v992 = vld [vmem:[#allocation2 + $0x8] sm:$0xff]
          %v993 = vld [vmem:[#allocation2 + $0x10] sm:$0xff]
          %v994 = vld [vmem:[#allocation2 + $0x18] sm:$0xff]
          %v995 = vld [vmem:[#allocation2 + $0x20] sm:$0xff]
          %v996 = vld [vmem:[#allocation2 + $0x28] sm:$0xff]
          %v997 = vld [vmem:[#allocation2 + $0x30] sm:$0xff]
          %v998 = vld [vmem:[#allocation2 + $0x38] sm:$0xff]
          %v999 = vadd.f32 %v991, %v992
          %v1000 = vadd.f32 %v999, %v993
          %v1001 = vadd.f32 %v1000, %v994
          %v1002 = vadd.f32 %v1001, %v995
          %v1003 = vadd.f32 %v1002, %v996
          %v1004 = vadd.f32 %v1003, %v997
          %v1005 = vadd.f32 %v1004, %v998
          %v1006 = vrot.slane %v1005, 4
          %v1007 = vadd.f32 %v1005, %v1006
          %v1008 = vrot.slane %v1007, 2
          %v1009 = vadd.f32 %v1007, %v1008
          %v1010 = vrot.slane %v1009, 1
          %v1011 = vadd.f32 %v1009, %v1010
          %v1012 = vmul.f32 %v1011, 0.015625
          %v1013 = vmul.f32 %v991, %v991
          %v1014 = vmul.f32 %v992, %v992
          %v1015 = vmul.f32 %v993, %v993
          %v1016 = vmul.f32 %v994, %v994
          %v1017 = vmul.f32 %v995, %v995
          %v1018 = vmul.f32 %v996, %v996
          %v1019 = vmul.f32 %v997, %v997
          %v1020 = vmul.f32 %v998, %v998
          %v1021 = vadd.f32 %v1013, %v1014
          %v1022 = vadd.f32 %v1021, %v1015
          %v1023 = vadd.f32 %v1022, %v1016
          %v1024 = vadd.f32 %v1023, %v1017
          %v1025 = vadd.f32 %v1024, %v1018
          %v1026 = vadd.f32 %v1025, %v1019
          %v1027 = vadd.f32 %v1026, %v1020
          %v1028 = vrot.slane %v1027, 4
          %v1029 = vadd.f32 %v1027, %v1028
          %v1030 = vrot.slane %v1029, 2
          %v1031 = vadd.f32 %v1029, %v1030
          %v1032 = vrot.slane %v1031, 1
          %v1033 = vadd.f32 %v1031, %v1032
          %v1034 = vmul.f32 %v1033, 0.015625
          %v1035 = vmul.f32 %v1012, %v1012
          %v1036 = vsub.f32 %v1034, %v1035
          %v1037 = vmax.f32 %v1036, 0.0
          %v1038 = vsub.f32 %v991, %v1012
          %v1039 = vsub.f32 %v992, %v1012
          %v1040 = vsub.f32 %v993, %v1012
          %v1041 = vsub.f32 %v994, %v1012
          %v1042 = vsub.f32 %v995, %v1012
          %v1043 = vsub.f32 %v996, %v1012
          %v1044 = vsub.f32 %v997, %v1012
          %v1045 = vsub.f32 %v998, %v1012
          %v1046 = vadd.f32 %v1037, 1e-05
          %v1047 = vrsqrt.pop %v1046
          %v1048 = vmul.f32 %v1047, %v1046
          %v1049 = vmul.f32 %v1048, %v1047
          %v1050 = vmul.f32 0.5, %v1049
          %v1051 = vsub.f32 1.5, %v1050
          %v1052 = vmul.f32 %v1047, %v1051
          %vm1053 = vweird.f32 %v1046
          %vm1054 = vweird.f32 %v1047
          %vm1055 = vmor %vm1053, %vm1054
          %v1056 = vsel %vm1055, %v1047, %v1052
          %v1057 = vmul.f32 %v1038, %v1056
          %v1058 = vmul.f32 %v1039, %v1056
          %v1059 = vmul.f32 %v1040, %v1056
          %v1060 = vmul.f32 %v1041, %v1056
          %v1061 = vmul.f32 %v1042, %v1056
          %v1062 = vmul.f32 %v1043, %v1056
          %v1063 = vmul.f32 %v1044, %v1056
          %v1064 = vmul.f32 %v1045, %v1056
          %v1065 = vmax.f32 %v1057, 0.0
          %v1066 = vmax.f32 %v1058, 0.0
          %v1067 = vmax.f32 %v1059, 0.0
          %v1068 = vmax.f32 %v1060, 0.0
          %v1069 = vmax.f32 %v1061, 0.0
          %v1070 = vmax.f32 %v1062, 0.0
          %v1071 = vmax.f32 %v1063, 0.0
          %v1072 = vmax.f32 %v1064, 0.0
          %1073 = vst [vmem:[%s248] sm:$0xff] %v1065
          %1074 = vst [vmem:[%s248 + $0x8] sm:$0xff] %v1066
          %1075 = vst [vmem:[%s248 + $0x10] sm:$0xff] %v1067
          %1076 = vst [vmem:[%s248 + $0x18] sm:$0xff] %v1068
          %1077 = vst [vmem:[%s248 + $0x20] sm:$0xff] %v1069
          %1078 = vst [vmem:[%s248 + $0x28] sm:$0xff] %v1070
          %1079 = vst [vmem:[%s248 + $0x30] sm:$0xff] %v1071
          %1080 = vst [vmem:[%s248 + $0x38] sm:$0xff] %v1072
        $region59: #{generator_resnet_forward.17} parent=46 // pred_fallthru
          _
        %p1081 = scmp.lt.s32.totalorder %s17, 1
        %s1082 = scalar_select %p1081, %s17, 1
        %s1083 = smul.addr %s1082, 8
        %s1084 = smul.addr %s1083, 8
        %s1085 = scalar_lea.vmem %s2, %s1084
        // Predicated region
        $region60: #{generator_resnet_forward.17} parent=46 // pred_check
          %p1086 = pneg %p97
        $region61: #{generator_resnet_forward.17} parent=46 // pred_check_branch
          %1088 = sbr.rel (%p1086) target = $region63
        $region62: #{generator_resnet_forward.17} parent=46 // pred_region
          _
        $region63: #{generator_resnet_forward.17} parent=46 // pred_fallthru
          _
      $region47: #{generator_resnet_forward.17} parent=5 // pred_fallthru
        _
      %p1089 = scmp.le.s32.totalorder 2, %s8
      // Predicated region
      $region64: #{generator_resnet_forward.17} parent=5 // pred_check
        %p1090 = pneg %p1089
      $region65: #{generator_resnet_forward.17} parent=5 // pred_check_branch
        %1092 = sbr.rel (%p1090) target = $region67
      $region66: #{generator_resnet_forward.17} parent=5 // pred_region
        %s1093 = ssub.s32 %s8, 2
        // Predicated region
        $region68: #{generator_resnet_forward.17} parent=66 // pred_check
          %p1094 = pneg %p103
        $region69: #{generator_resnet_forward.17} parent=66 // pred_check_branch
          %1096 = sbr.rel (%p1094) target = $region71
        $region70: #{generator_resnet_forward.17} parent=66 // pred_region
          %p1097 = scmp.lt.s32.totalorder %s19, 1
          %s1098 = scalar_select %p1097, %s19, 1
          %s1099 = smul.addr %s1098, 8
          %s1100 = smul.addr %s1099, 8
          %s1101 = scalar_lea.vmem %s2, %s1100
        $region71: #{generator_resnet_forward.17} parent=66 // pred_fallthru
          _
      $region67: #{generator_resnet_forward.17} parent=5 // pred_fallthru
        _
    $region6: #{generator_resnet_forward.17} parent=1 // loop_footer
      %s12 = sadd.s32 1, %s8
    $region7: #{generator_resnet_forward.17} parent=1 // loop_footer_branch
      %7 = sbr.rel target = $region3
    $region8: #{generator_resnet_forward.17} parent=1 // loop_exit
      _

// kernel: generator_resnet_forward.18
$region0: #{generator_resnet_forward.18}
  #allocation0 [shape = 'u32[]', space=smem, size = 0x4, offset = 0x4, fixed_abs, tag = 'smem constant byte address 0x4 - core index']
  #allocation1 [shape = 'u32[72,128]{1,0:T(1,128)}', space=vmem, size = 0x9000, scoped, tag = 'internal scratch']
  #allocation2 [shape = 'f32[256,64]{1,0:T(8,128)}', space=vmem, size = 0x20000, scoped, tag = 'scratch operand']
  %s0 = inlined_call_operand.vmem [shape: bf16[2,256,1152], index: 0, kind: input, shape index: {}]
  %s1 = inlined_call_operand.vmem [shape: bf16[1152,64], index: 1, kind: input, shape index: {}]
  %s2 = inlined_call_operand.vmem [shape: f32[2,256,64], index: 2, kind: output, shape index: {}]
  %s3 = sld [smem:[#allocation0]]
  $region75: #{generator_resnet_forward.18} parent=0
    _
  %s5 = ssub.s32 1, %s3
  %s6 = scalar_select 0, %s5, %s3
  $region1: #{generator_resnet_forward.18} parent=0
    #allocation3 [shape = 'u8[393216]{0}', space=vmem, size = 0x60000, scoped, tag = 'input window, operand 0']
    loop: start=0, step=1, limit=8
    $region2: #{generator_resnet_forward.18} parent=1 // loop_pre_header
      _
    $region3: #{generator_resnet_forward.18} parent=1 // loop_header
      %s8 = sphi 0, %s12
      %p9 = scmp.ge.s32.totalorder %s8, 8
      %s15 = sphi 0, %s27
      %s16 = sphi 0, %s23
      %s17 = sphi 0, %s15
      %s18 = sphi 0, %s16
      %s19 = sphi 0, %s17
      %s20 = sphi 0, %s18
      %s32 = sphi 0, %s34
      %s35 = sphi 0, %s32
      %s36 = sphi 0, %s35
      %s52 = sphi 0, %s36
      %s58 = sphi 0, %s60
      %s61 = sphi 0, %s58
      %s62 = sphi 0, %s61
      %s78 = sphi 0, %s62
      %s84 = sphi 0, %s86
      %s87 = sphi 0, %s84
      %s88 = sphi 0, %s87
      %s104 = sphi 0, %s88
    $region4: #{generator_resnet_forward.18} parent=1 // loop_header_branch
      %11 = sbr.rel (%p9) target = $region8
    $region5: #{generator_resnet_forward.18} parent=1 // loop_body
      %s13 = ssub.s32 %s8, 1
      %s14 = ssub.s32 %s8, 2
      %s21 = sadd.s32 1, %s16
      %p22 = scmp.ge.s32.totalorder %s21, 3
      %s23 = scalar_select %p22, 0, %s21
      %s24 = sadd.s32 1, %s15
      %s25 = scalar_select %p22, %s24, %s15
      %p26 = scmp.ge.s32.totalorder %s25, 2
      %s27 = scalar_select %p26, 0, %s25
      %s28 = ssub.s32 %s15, %s27
      %s29 = ssub.s32 %s16, %s23
      %s30 = sor.u32 %s28, %s29
      %p31 = scmp.eq.s32.totalorder %s30, 0
      %s33 = sadd.s32 %s32, 1
      %s34 = scalar_select %p31, %s32, %s33
      %p37 = pneg %p31
      %p38 = scmp.eq.s32.totalorder %s8, 5
      %p39 = por %p37, %p38
      %p40 = scmp.ne.s32.totalorder %s32, %s35
      %p41 = scmp.eq.s32.totalorder %s8, 0
      %p42 = por %p40, %p41
      %p43 = scmp.ne.s32.totalorder %s32, %s35
      %p44 = scmp.eq.s32.totalorder %s13, 5
      %p45 = por %p43, %p44
      %p46 = scmp.ne.s32.totalorder %s35, %s36
      %p47 = scmp.eq.s32.totalorder %s13, 0
      %p48 = por %p46, %p47
      %p49 = scmp.ne.s32.totalorder %s35, %s36
      %p50 = scmp.eq.s32.totalorder %s14, 5
      %p51 = por %p49, %p50
      %p53 = scmp.ne.s32.totalorder %s36, %s52
      %p54 = scmp.eq.s32.totalorder %s14, 0
      %p55 = por %p53, %p54
      %s56 = ssub.s32 %s16, %s23
      %p57 = scmp.eq.s32.totalorder %s56, 0
      %s59 = sadd.s32 %s58, 1
      %s60 = scalar_select %p57, %s58, %s59
      %p63 = pneg %p57
      %p64 = scmp.eq.s32.totalorder %s8, 5
      %p65 = por %p63, %p64
      %p66 = scmp.ne.s32.totalorder %s58, %s61
      %p67 = scmp.eq.s32.totalorder %s8, 0
      %p68 = por %p66, %p67
      %p69 = scmp.ne.s32.totalorder %s58, %s61
      %p70 = scmp.eq.s32.totalorder %s13, 5
      %p71 = por %p69, %p70
      %p72 = scmp.ne.s32.totalorder %s61, %s62
      %p73 = scmp.eq.s32.totalorder %s13, 0
      %p74 = por %p72, %p73
      %p75 = scmp.ne.s32.totalorder %s61, %s62
      %p76 = scmp.eq.s32.totalorder %s14, 5
      %p77 = por %p75, %p76
      %p79 = scmp.ne.s32.totalorder %s62, %s78
      %p80 = scmp.eq.s32.totalorder %s14, 0
      %p81 = por %p79, %p80
      %s82 = ssub.s32 %s15, %s27
      %p83 = scmp.eq.s32.totalorder %s82, 0
      %s85 = sadd.s32 %s84, 1
      %s86 = scalar_select %p83, %s84, %s85
      %p89 = pneg %p83
      %p90 = scmp.eq.s32.totalorder %s8, 5
      %p91 = por %p89, %p90
      %p92 = scmp.ne.s32.totalorder %s84, %s87
      %p93 = scmp.eq.s32.totalorder %s8, 0
      %p94 = por %p92, %p93
      %p95 = scmp.ne.s32.totalorder %s84, %s87
      %p96 = scmp.eq.s32.totalorder %s13, 5
      %p97 = por %p95, %p96
      %p98 = scmp.ne.s32.totalorder %s87, %s88
      %p99 = scmp.eq.s32.totalorder %s13, 0
      %p100 = por %p98, %p99
      %p101 = scmp.ne.s32.totalorder %s87, %s88
      %p102 = scmp.eq.s32.totalorder %s14, 5
      %p103 = por %p101, %p102
      %p105 = scmp.ne.s32.totalorder %s88, %s104
      %p106 = scmp.eq.s32.totalorder %s14, 0
      %p107 = por %p105, %p106
      %p108 = scmp.le.s32.totalorder 1, %s8
      %p109 = scmp.lt.s32.totalorder %s8, 7
      %p110 = pnand %p108, %p109
      %p111 = pneg %p110
      // Predicated region
      $region9: #{generator_resnet_forward.18} parent=5 // pred_check
        _
      $region10: #{generator_resnet_forward.18} parent=5 // pred_check_branch
        %113 = sbr.rel (%p110) target = $region12
      $region11: #{generator_resnet_forward.18} parent=5 // pred_region
        %s114 = ssub.s32 %s8, 1
      $region12: #{generator_resnet_forward.18} parent=5 // pred_fallthru
        _
      %p115 = scmp.lt.s32.totalorder %s8, 6
      // Predicated region
      $region13: #{generator_resnet_forward.18} parent=5 // pred_check
        %p116 = pneg %p115
      $region14: #{generator_resnet_forward.18} parent=5 // pred_check_branch
        %118 = sbr.rel (%p116) target = $region16
      $region15: #{generator_resnet_forward.18} parent=5 // pred_region
        // Predicated region
        $region17: #{generator_resnet_forward.18} parent=15 // pred_check
          %p119 = pneg %p42
        $region18: #{generator_resnet_forward.18} parent=15 // pred_check_branch
          %121 = sbr.rel (%p119) target = $region20
        $region19: #{generator_resnet_forward.18} parent=15 // pred_region
          %s122 = sand.u32 %s32, 1
          %s123 = sand.u32 %s32, 1
          %s124 = smul.addr %s123, 384
          %s125 = scalar_lea.vmem [#allocation3], %s124
          %s126 = smul.u32 3, %s16
          %s127 = smul.addr %s15, 288
          %s128 = sadd.s32 %s126, %s127
          %s129 = smul.addr %s128, 4
          %s130 = scalar_lea.vmem %s0, %s129
          // Predicated region
          $region21: #{generator_resnet_forward.18} parent=19 // pred_check
            _
          $region22: #{generator_resnet_forward.18} parent=19 // pred_check_branch
            %132 = sbr.rel (0) target = $region24
          $region23: #{generator_resnet_forward.18} parent=19 // pred_region
            // Predicated region
            $region25: #{generator_resnet_forward.18} parent=23 // pred_check
              _
            $region26: #{generator_resnet_forward.18} parent=23 // pred_check_branch
              %134 = sbr.rel (0) target = $region28
            $region27: #{generator_resnet_forward.18} parent=23 // pred_region
              %s135 = scalar_lea.vmem %s130, 8
              %s136 = scalar_lea.vmem %s125, 8 [#allocation3]
              loop: start=0, step=1, limit=1
              $region29: #{generator_resnet_forward.18} parent=27 // loop_pre_header
                _
              $region30: #{generator_resnet_forward.18} parent=27 // loop_header
                %s138 = sphi 0, %s142
                %p139 = scmp.ge.s32.totalorder %s138, 1
                %s143 = sphi %s130, %s130
                %s144 = sphi %s125, %s125
              $region31: #{generator_resnet_forward.18} parent=27 // loop_header_branch
                %141 = sbr.rel (%p139) target = $region35
              $region32: #{generator_resnet_forward.18} parent=27 // loop_body
                %v145 = vld [vmem:[%s143] sm:$0xff]
                %146 = vst [vmem:[%s144] sm:$0xff] %v145
                %v147 = vld [vmem:[%s143 + $0x24] sm:$0xff]
                %148 = vst [vmem:[%s144 + $0xc] sm:$0xff] %v147
                %v149 = vld [vmem:[%s143 + $0x48] sm:$0xff]
                %150 = vst [vmem:[%s144 + $0x18] sm:$0xff] %v149
                %v151 = vld [vmem:[%s143 + $0x6c] sm:$0xff]
                %152 = vst [vmem:[%s144 + $0x24] sm:$0xff] %v151
                %v153 = vld [vmem:[%s143 + $0x90] sm:$0xff]
                %154 = vst [vmem:[%s144 + $0x30] sm:$0xff] %v153
                %v155 = vld [vmem:[%s143 + $0xb4] sm:$0xff]
                %156 = vst [vmem:[%s144 + $0x3c] sm:$0xff] %v155
                %v157 = vld [vmem:[%s143 + $0xd8] sm:$0xff]
                %158 = vst [vmem:[%s144 + $0x48] sm:$0xff] %v157
                %v159 = vld [vmem:[%s143 + $0xfc] sm:$0xff]
                %160 = vst [vmem:[%s144 + $0x54] sm:$0xff] %v159
                %v161 = vld [vmem:[%s143 + $0x120] sm:$0xff]
                %162 = vst [vmem:[%s144 + $0x60] sm:$0xff] %v161
                %v163 = vld [vmem:[%s143 + $0x144] sm:$0xff]
                %164 = vst [vmem:[%s144 + $0x6c] sm:$0xff] %v163
                %v165 = vld [vmem:[%s143 + $0x168] sm:$0xff]
                %166 = vst [vmem:[%s144 + $0x78] sm:$0xff] %v165
                %v167 = vld [vmem:[%s143 + $0x18c] sm:$0xff]
                %168 = vst [vmem:[%s144 + $0x84] sm:$0xff] %v167
                %v169 = vld [vmem:[%s143 + $0x1b0] sm:$0xff]
                %170 = vst [vmem:[%s144 + $0x90] sm:$0xff] %v169
                %v171 = vld [vmem:[%s143 + $0x1d4] sm:$0xff]
                %172 = vst [vmem:[%s144 + $0x9c] sm:$0xff] %v171
                %v173 = vld [vmem:[%s143 + $0x1f8] sm:$0xff]
                %174 = vst [vmem:[%s144 + $0xa8] sm:$0xff] %v173
                %v175 = vld [vmem:[%s143 + $0x21c] sm:$0xff]
                %176 = vst [vmem:[%s144 + $0xb4] sm:$0xff] %v175
                %v177 = vld [vmem:[%s143 + $0x240] sm:$0xff]
                %178 = vst [vmem:[%s144 + $0xc0] sm:$0xff] %v177
                %v179 = vld [vmem:[%s143 + $0x264] sm:$0xff]
                %180 = vst [vmem:[%s144 + $0xcc] sm:$0xff] %v179
                %v181 = vld [vmem:[%s143 + $0x288] sm:$0xff]
                %182 = vst [vmem:[%s144 + $0xd8] sm:$0xff] %v181
                %v183 = vld [vmem:[%s143 + $0x2ac] sm:$0xff]
                %184 = vst [vmem:[%s144 + $0xe4] sm:$0xff] %v183
                %v185 = vld [vmem:[%s143 + $0x2d0] sm:$0xff]
                %186 = vst [vmem:[%s144 + $0xf0] sm:$0xff] %v185
                %v187 = vld [vmem:[%s143 + $0x2f4] sm:$0xff]
                %188 = vst [vmem:[%s144 + $0xfc] sm:$0xff] %v187
                %v189 = vld [vmem:[%s143 + $0x318] sm:$0xff]
                %190 = vst [vmem:[%s144 + $0x108] sm:$0xff] %v189
                %v191 = vld [vmem:[%s143 + $0x33c] sm:$0xff]
                %192 = vst [vmem:[%s144 + $0x114] sm:$0xff] %v191
                %v193 = vld [vmem:[%s143 + $0x360] sm:$0xff]
                %194 = vst [vmem:[%s144 + $0x120] sm:$0xff] %v193
                %v195 = vld [vmem:[%s143 + $0x384] sm:$0xff]
                %196 = vst [vmem:[%s144 + $0x12c] sm:$0xff] %v195
                %v197 = vld [vmem:[%s143 + $0x3a8] sm:$0xff]
                %198 = vst [vmem:[%s144 + $0x138] sm:$0xff] %v197
                %v199 = vld [vmem:[%s143 + $0x3cc] sm:$0xff]
                %200 = vst [vmem:[%s144 + $0x144] sm:$0xff] %v199
                %v201 = vld [vmem:[%s143 + $0x3f0] sm:$0xff]
                %202 = vst [vmem:[%s144 + $0x150] sm:$0xff] %v201
                %v203 = vld [vmem:[%s143 + $0x414] sm:$0xff]
                %204 = vst [vmem:[%s144 + $0x15c] sm:$0xff] %v203
                %v205 = vld [vmem:[%s143 + $0x438] sm:$0xff]
                %206 = vst [vmem:[%s144 + $0x168] sm:$0xff] %v205
                %v207 = vld [vmem:[%s143 + $0x45c] sm:$0xff]
                %208 = vst [vmem:[%s144 + $0x174] sm:$0xff] %v207
              $region33: #{generator_resnet_forward.18} parent=27 // loop_footer
                %s142 = sadd.s32 1, %s138
              $region34: #{generator_resnet_forward.18} parent=27 // loop_footer_branch
                %137 = sbr.rel target = $region30
              $region35: #{generator_resnet_forward.18} parent=27 // loop_exit
                _
              %s210 = ssub.s32 16, 1
              loop: start=0, step=1, limit=1
              $region36: #{generator_resnet_forward.18} parent=27 // loop_pre_header
                _
              $region37: #{generator_resnet_forward.18} parent=27 // loop_header
                %s212 = sphi 0, %s216
                %p213 = scmp.ge.s32.totalorder %s212, 1
                %s217 = sphi %s135, %s135
                %s218 = sphi %s136, %s136
              $region38: #{generator_resnet_forward.18} parent=27 // loop_header_branch
                %215 = sbr.rel (%p213) target = $region42
              $region39: #{generator_resnet_forward.18} parent=27 // loop_body
                %v219 = vld [vmem:[%s217] sm:%s210]
                %220 = vst [vmem:[%s218] sm:%s210] %v219
                %v221 = vld [vmem:[%s217 + $0x24] sm:%s210]
                %222 = vst [vmem:[%s218 + $0xc] sm:%s210] %v221
                %v223 = vld [vmem:[%s217 + $0x48] sm:%s210]
                %224 = vst [vmem:[%s218 + $0x18] sm:%s210] %v223
                %v225 = vld [vmem:[%s217 + $0x6c] sm:%s210]
                %226 = vst [vmem:[%s218 + $0x24] sm:%s210] %v225
                %v227 = vld [vmem:[%s217 + $0x90] sm:%s210]
                %228 = vst [vmem:[%s218 + $0x30] sm:%s210] %v227
                %v229 = vld [vmem:[%s217 + $0xb4] sm:%s210]
                %230 = vst [vmem:[%s218 + $0x3c] sm:%s210] %v229
                %v231 = vld [vmem:[%s217 + $0xd8] sm:%s210]
                %232 = vst [vmem:[%s218 + $0x48] sm:%s210] %v231
                %v233 = vld [vmem:[%s217 + $0xfc] sm:%s210]
                %234 = vst [vmem:[%s218 + $0x54] sm:%s210] %v233
                %v235 = vld [vmem:[%s217 + $0x120] sm:%s210]
                %236 = vst [vmem:[%s218 + $0x60] sm:%s210] %v235
                %v237 = vld [vmem:[%s217 + $0x144] sm:%s210]
                %238 = vst [vmem:[%s218 + $0x6c] sm:%s210] %v237
                %v239 = vld [vmem:[%s217 + $0x168] sm:%s210]
                %240 = vst [vmem:[%s218 + $0x78] sm:%s210] %v239
                %v241 = vld [vmem:[%s217 + $0x18c] sm:%s210]
                %242 = vst [vmem:[%s218 + $0x84] sm:%s210] %v241
                %v243 = vld [vmem:[%s217 + $0x1b0] sm:%s210]
                %244 = vst [vmem:[%s218 + $0x90] sm:%s210] %v243
                %v245 = vld [vmem:[%s217 + $0x1d4] sm:%s210]
                %246 = vst [vmem:[%s218 + $0x9c] sm:%s210] %v245
                %v247 = vld [vmem:[%s217 + $0x1f8] sm:%s210]
                %248 = vst [vmem:[%s218 + $0xa8] sm:%s210] %v247
                %v249 = vld [vmem:[%s217 + $0x21c] sm:%s210]
                %250 = vst [vmem:[%s218 + $0xb4] sm:%s210] %v249
                %v251 = vld [vmem:[%s217 + $0x240] sm:%s210]
                %252 = vst [vmem:[%s218 + $0xc0] sm:%s210] %v251
                %v253 = vld [vmem:[%s217 + $0x264] sm:%s210]
                %254 = vst [vmem:[%s218 + $0xcc] sm:%s210] %v253
                %v255 = vld [vmem:[%s217 + $0x288] sm:%s210]
                %256 = vst [vmem:[%s218 + $0xd8] sm:%s210] %v255
                %v257 = vld [vmem:[%s217 + $0x2ac] sm:%s210]
                %258 = vst [vmem:[%s218 + $0xe4] sm:%s210] %v257
                %v259 = vld [vmem:[%s217 + $0x2d0] sm:%s210]
                %260 = vst [vmem:[%s218 + $0xf0] sm:%s210] %v259
                %v261 = vld [vmem:[%s217 + $0x2f4] sm:%s210]
                %262 = vst [vmem:[%s218 + $0xfc] sm:%s210] %v261
                %v263 = vld [vmem:[%s217 + $0x318] sm:%s210]
                %264 = vst [vmem:[%s218 + $0x108] sm:%s210] %v263
                %v265 = vld [vmem:[%s217 + $0x33c] sm:%s210]
                %266 = vst [vmem:[%s218 + $0x114] sm:%s210] %v265
                %v267 = vld [vmem:[%s217 + $0x360] sm:%s210]
                %268 = vst [vmem:[%s218 + $0x120] sm:%s210] %v267
                %v269 = vld [vmem:[%s217 + $0x384] sm:%s210]
                %270 = vst [vmem:[%s218 + $0x12c] sm:%s210] %v269
                %v271 = vld [vmem:[%s217 + $0x3a8] sm:%s210]
                %272 = vst [vmem:[%s218 + $0x138] sm:%s210] %v271
                %v273 = vld [vmem:[%s217 + $0x3cc] sm:%s210]
                %274 = vst [vmem:[%s218 + $0x144] sm:%s210] %v273
                %v275 = vld [vmem:[%s217 + $0x3f0] sm:%s210]
                %276 = vst [vmem:[%s218 + $0x150] sm:%s210] %v275
                %v277 = vld [vmem:[%s217 + $0x414] sm:%s210]
                %278 = vst [vmem:[%s218 + $0x15c] sm:%s210] %v277
                %v279 = vld [vmem:[%s217 + $0x438] sm:%s210]
                %280 = vst [vmem:[%s218 + $0x168] sm:%s210] %v279
                %v281 = vld [vmem:[%s217 + $0x45c] sm:%s210]
                %282 = vst [vmem:[%s218 + $0x174] sm:%s210] %v281
              $region40: #{generator_resnet_forward.18} parent=27 // loop_footer
                %s216 = sadd.s32 1, %s212
              $region41: #{generator_resnet_forward.18} parent=27 // loop_footer_branch
                %211 = sbr.rel target = $region37
              $region42: #{generator_resnet_forward.18} parent=27 // loop_exit
                _
            $region28: #{generator_resnet_forward.18} parent=23 // pred_fallthru
              _
          $region24: #{generator_resnet_forward.18} parent=19 // pred_fallthru
            _
          %283 = vnop
        $region20: #{generator_resnet_forward.18} parent=15 // pred_fallthru
          _
        // Predicated region
        $region43: #{generator_resnet_forward.18} parent=15 // pred_check
          %p284 = pneg %p68
        $region44: #{generator_resnet_forward.18} parent=15 // pred_check_branch
          %286 = sbr.rel (%p284) target = $region46
        $region45: #{generator_resnet_forward.18} parent=15 // pred_region
          %s287 = smul.u32 48, %s16
          %p288 = scmp.lt.s32.totalorder %s287, 143
          %s289 = scalar_select %p288, %s287, 143
          %s290 = smul.addr %s289, 4
          %s291 = scalar_lea.vmem %s1, %s290
          %s292 = smul.u32 48, %s16
        $region46: #{generator_resnet_forward.18} parent=15 // pred_fallthru
          _
      $region16: #{generator_resnet_forward.18} parent=5 // pred_fallthru
        _
      %p293 = scmp.le.s32.totalorder 1, %s8
      %p294 = scmp.lt.s32.totalorder %s8, 7
      %p295 = pnand %p293, %p294
      %p296 = pneg %p295
      // Predicated region
      $region47: #{generator_resnet_forward.18} parent=5 // pred_check
        _
      $region48: #{generator_resnet_forward.18} parent=5 // pred_check_branch
        %298 = sbr.rel (%p295) target = $region50
      $region49: #{generator_resnet_forward.18} parent=5 // pred_region
        %s299 = ssub.s32 %s8, 1
        %s300 = sand.u32 %s35, 1
        %s301 = sand.u32 %s35, 1
        %s302 = smul.addr %s301, 384
        %s303 = scalar_lea.vmem [#allocation3], %s302
        // Predicated region
        $region51: #{generator_resnet_forward.18} parent=49 // pred_check
          %p304 = pneg %p48
        $region52: #{generator_resnet_forward.18} parent=49 // pred_check_branch
          %306 = sbr.rel (%p304) target = $region54
        $region53: #{generator_resnet_forward.18} parent=49 // pred_region
          _
        $region54: #{generator_resnet_forward.18} parent=49 // pred_fallthru
          _
        %s307 = sand.u32 %s35, 1
        %s308 = sand.u32 %s35, 1
        %s309 = smul.addr %s308, 384
        %s310 = scalar_lea.vmem [#allocation3], %s309
        %p311 = pneg %p48
        %p312 = pneg %p45
        %s313 = smul.u32 48, %s18
        %p314 = scmp.lt.s32.totalorder %s313, 143
        %s315 = scalar_select %p314, %s313, 143
        %s316 = smul.addr %s315, 4
        %s317 = scalar_lea.vmem %s1, %s316
        %p318 = pneg %p74
        %p319 = pneg %p71
        %p320 = pneg %p100
        %p321 = pneg %p97
        %p322 = scmp.lt.s32.totalorder %s17, 1
        %s323 = scalar_select %p322, %s17, 1
        %s324 = smul.addr %s323, 32
        %s325 = smul.addr %s324, 8
        %s326 = scalar_lea.vmem %s2, %s325
        %s327 = smul.u32 3, %s18
        %s328 = smul.u32 48, %s18
        %p329 = scmp.lt.s32.totalorder %s328, 143
        %s330 = scalar_select %p329, %s328, 143
        %s331 = smul.addr %s330, 4
        %s332 = scalar_lea.vmem %s1, %s331
        %s333 = smul.u32 48, %s18
        %p334 = scmp.lt.s32.totalorder %s17, 1
        %s335 = scalar_select %p334, %s17, 1
        %s336 = smul.addr %s335, 32
        %s337 = smul.addr %s336, 8
        %s338 = scalar_lea.vmem %s2, %s337
        %p339 = scmp.eq.s32.totalorder %s18, 0
        // Predicated region
        $region55: #{generator_resnet_forward.18} parent=49 // pred_check
          %p340 = pneg %p339
        $region56: #{generator_resnet_forward.18} parent=49 // pred_check_branch
          %342 = sbr.rel (%p340) target = $region58
        $region57: #{generator_resnet_forward.18} parent=49 // pred_region
          %vm343 = vcmask 523264
          %344 = vst.msk [vmem:[#allocation2] sm:$0xff] %vm343, 0.0
          %345 = vst.msk [vmem:[#allocation2 + $0x8] sm:$0xff] %vm343, 0.0
          %346 = vst.msk [vmem:[#allocation2 + $0x10] sm:$0xff] %vm343, 0.0
          %347 = vst.msk [vmem:[#allocation2 + $0x18] sm:$0xff] %vm343, 0.0
          %348 = vst.msk [vmem:[#allocation2 + $0x20] sm:$0xff] %vm343, 0.0
          %349 = vst.msk [vmem:[#allocation2 + $0x28] sm:$0xff] %vm343, 0.0
          %350 = vst.msk [vmem:[#allocation2 + $0x30] sm:$0xff] %vm343, 0.0
          %351 = vst.msk [vmem:[#allocation2 + $0x38] sm:$0xff] %vm343, 0.0
          %352 = vst.msk [vmem:[#allocation2 + $0x40] sm:$0xff] %vm343, 0.0
          %353 = vst.msk [vmem:[#allocation2 + $0x48] sm:$0xff] %vm343, 0.0
          %354 = vst.msk [vmem:[#allocation2 + $0x50] sm:$0xff] %vm343, 0.0
          %355 = vst.msk [vmem:[#allocation2 + $0x58] sm:$0xff] %vm343, 0.0
          %356 = vst.msk [vmem:[#allocation2 + $0x60] sm:$0xff] %vm343, 0.0
          %357 = vst.msk [vmem:[#allocation2 + $0x68] sm:$0xff] %vm343, 0.0
          %358 = vst.msk [vmem:[#allocation2 + $0x70] sm:$0xff] %vm343, 0.0
          %359 = vst.msk [vmem:[#allocation2 + $0x78] sm:$0xff] %vm343, 0.0
          %360 = vst.msk [vmem:[#allocation2 + $0x80] sm:$0xff] %vm343, 0.0
          %361 = vst.msk [vmem:[#allocation2 + $0x88] sm:$0xff] %vm343, 0.0
          %362 = vst.msk [vmem:[#allocation2 + $0x90] sm:$0xff] %vm343, 0.0
          %363 = vst.msk [vmem:[#allocation2 + $0x98] sm:$0xff] %vm343, 0.0
          %364 = vst.msk [vmem:[#allocation2 + $0xa0] sm:$0xff] %vm343, 0.0
          %365 = vst.msk [vmem:[#allocation2 + $0xa8] sm:$0xff] %vm343, 0.0
          %366 = vst.msk [vmem:[#allocation2 + $0xb0] sm:$0xff] %vm343, 0.0
          %367 = vst.msk [vmem:[#allocation2 + $0xb8] sm:$0xff] %vm343, 0.0
          %368 = vst.msk [vmem:[#allocation2 + $0xc0] sm:$0xff] %vm343, 0.0
          %369 = vst.msk [vmem:[#allocation2 + $0xc8] sm:$0xff] %vm343, 0.0
          %370 = vst.msk [vmem:[#allocation2 + $0xd0] sm:$0xff] %vm343, 0.0
          %371 = vst.msk [vmem:[#allocation2 + $0xd8] sm:$0xff] %vm343, 0.0
          %372 = vst.msk [vmem:[#allocation2 + $0xe0] sm:$0xff] %vm343, 0.0
          %373 = vst.msk [vmem:[#allocation2 + $0xe8] sm:$0xff] %vm343, 0.0
          %374 = vst.msk [vmem:[#allocation2 + $0xf0] sm:$0xff] %vm343, 0.0
          %375 = vst.msk [vmem:[#allocation2 + $0xf8] sm:$0xff] %vm343, 0.0
        $region58: #{generator_resnet_forward.18} parent=49 // pred_fallthru
          _
        %v376 = vld [vmem:[#allocation2] sm:$0xff]
        %v377 = vld [vmem:[#allocation2 + $0x8] sm:$0xff]
        %v378 = vld [vmem:[#allocation2 + $0x10] sm:$0xff]
        %v379 = vld [vmem:[#allocation2 + $0x18] sm:$0xff]
        %v380 = vld [vmem:[#allocation2 + $0x20] sm:$0xff]
        %v381 = vld [vmem:[#allocation2 + $0x28] sm:$0xff]
        %v382 = vld [vmem:[#allocation2 + $0x30] sm:$0xff]
        %v383 = vld [vmem:[#allocation2 + $0x38] sm:$0xff]
        %v384 = vld [vmem:[#allocation2 + $0x40] sm:$0xff]
        %v385 = vld [vmem:[#allocation2 + $0x48] sm:$0xff]
        %v386 = vld [vmem:[#allocation2 + $0x50] sm:$0xff]
        %v387 = vld [vmem:[#allocation2 + $0x58] sm:$0xff]
        %v388 = vld [vmem:[#allocation2 + $0x60] sm:$0xff]
        %v389 = vld [vmem:[#allocation2 + $0x68] sm:$0xff]
        %v390 = vld [vmem:[#allocation2 + $0x70] sm:$0xff]
        %v391 = vld [vmem:[#allocation2 + $0x78] sm:$0xff]
        %v392 = vld [vmem:[#allocation2 + $0x80] sm:$0xff]
        %v393 = vld [vmem:[#allocation2 + $0x88] sm:$0xff]
        %v394 = vld [vmem:[#allocation2 + $0x90] sm:$0xff]
        %v395 = vld [vmem:[#allocation2 + $0x98] sm:$0xff]
        %v396 = vld [vmem:[#allocation2 + $0xa0] sm:$0xff]
        %v397 = vld [vmem:[#allocation2 + $0xa8] sm:$0xff]
        %v398 = vld [vmem:[#allocation2 + $0xb0] sm:$0xff]
        %v399 = vld [vmem:[#allocation2 + $0xb8] sm:$0xff]
        %v400 = vld [vmem:[#allocation2 + $0xc0] sm:$0xff]
        %v401 = vld [vmem:[#allocation2 + $0xc8] sm:$0xff]
        %v402 = vld [vmem:[#allocation2 + $0xd0] sm:$0xff]
        %v403 = vld [vmem:[#allocation2 + $0xd8] sm:$0xff]
        %v404 = vld [vmem:[#allocation2 + $0xe0] sm:$0xff]
        %v405 = vld [vmem:[#allocation2 + $0xe8] sm:$0xff]
        %v406 = vld [vmem:[#allocation2 + $0xf0] sm:$0xff]
        %v407 = vld [vmem:[#allocation2 + $0xf8] sm:$0xff]
        %v408 = vld [vmem:[%s303] sm:$0xff]
        %v409 = vld [vmem:[%s303 + $0x8] sm:$0xf]
        %v410 = vld [vmem:[%s303 + $0xc] sm:$0xff]
        %v411 = vld [vmem:[%s303 + $0x14] sm:$0xf]
        %v412 = vld [vmem:[%s303 + $0x18] sm:$0xff]
        %v413 = vld [vmem:[%s303 + $0x20] sm:$0xf]
        %v414 = vld [vmem:[%s303 + $0x24] sm:$0xff]
        %v415 = vld [vmem:[%s303 + $0x2c] sm:$0xf]
        %v416 = vld [vmem:[%s303 + $0x30] sm:$0xff]
        %v417 = vld [vmem:[%s303 + $0x38] sm:$0xf]
        %v418 = vld [vmem:[%s303 + $0x3c] sm:$0xff]
        %v419 = vld [vmem:[%s303 + $0x44] sm:$0xf]
        %v420 = vld [vmem:[%s303 + $0x48] sm:$0xff]
        %v421 = vld [vmem:[%s303 + $0x50] sm:$0xf]
        %v422 = vld [vmem:[%s303 + $0x54] sm:$0xff]
        %v423 = vld [vmem:[%s303 + $0x5c] sm:$0xf]
        %v424 = vld [vmem:[%s303 + $0x60] sm:$0xff]
        %v425 = vld [vmem:[%s303 + $0x68] sm:$0xf]
        %v426 = vld [vmem:[%s303 + $0x6c] sm:$0xff]
        %v427 = vld [vmem:[%s303 + $0x74] sm:$0xf]
        %v428 = vld [vmem:[%s303 + $0x78] sm:$0xff]
        %v429 = vld [vmem:[%s303 + $0x80] sm:$0xf]
        %v430 = vld [vmem:[%s303 + $0x84] sm:$0xff]
        %v431 = vld [vmem:[%s303 + $0x8c] sm:$0xf]
        %v432 = vld [vmem:[%s303 + $0x90] sm:$0xff]
        %v433 = vld [vmem:[%s303 + $0x98] sm:$0xf]
        %v434 = vld [vmem:[%s303 + $0x9c] sm:$0xff]
        %v435 = vld [vmem:[%s303 + $0xa4] sm:$0xf]
        %v436 = vld [vmem:[%s303 + $0xa8] sm:$0xff]
        %v437 = vld [vmem:[%s303 + $0xb0] sm:$0xf]
        %v438 = vld [vmem:[%s303 + $0xb4] sm:$0xff]
        %v439 = vld [vmem:[%s303 + $0xbc] sm:$0xf]
        %v440 = vld [vmem:[%s303 + $0xc0] sm:$0xff]
        %v441 = vld [vmem:[%s303 + $0xc8] sm:$0xf]
        %v442 = vld [vmem:[%s303 + $0xcc] sm:$0xff]
        %v443 = vld [vmem:[%s303 + $0xd4] sm:$0xf]
        %v444 = vld [vmem:[%s303 + $0xd8] sm:$0xff]
        %v445 = vld [vmem:[%s303 + $0xe0] sm:$0xf]
        %v446 = vld [vmem:[%s303 + $0xe4] sm:$0xff]
        %v447 = vld [vmem:[%s303 + $0xec] sm:$0xf]
        %v448 = vld [vmem:[%s303 + $0xf0] sm:$0xff]
        %v449 = vld [vmem:[%s303 + $0xf8] sm:$0xf]
        %v450 = vld [vmem:[%s303 + $0xfc] sm:$0xff]
        %v451 = vld [vmem:[%s303 + $0x104] sm:$0xf]
        %v452 = vld [vmem:[%s303 + $0x108] sm:$0xff]
        %v453 = vld [vmem:[%s303 + $0x110] sm:$0xf]
        %v454 = vld [vmem:[%s303 + $0x114] sm:$0xff]
        %v455 = vld [vmem:[%s303 + $0x11c] sm:$0xf]
        %v456 = vld [vmem:[%s303 + $0x120] sm:$0xff]
        %v457 = vld [vmem:[%s303 + $0x128] sm:$0xf]
        %v458 = vld [vmem:[%s303 + $0x12c] sm:$0xff]
        %v459 = vld [vmem:[%s303 + $0x134] sm:$0xf]
        %v460 = vld [vmem:[%s303 + $0x138] sm:$0xff]
        %v461 = vld [vmem:[%s303 + $0x140] sm:$0xf]
        %v462 = vld [vmem:[%s303 + $0x144] sm:$0xff]
        %v463 = vld [vmem:[%s303 + $0x14c] sm:$0xf]
        %v464 = vld [vmem:[%s303 + $0x150] sm:$0xff]
        %v465 = vld [vmem:[%s303 + $0x158] sm:$0xf]
        %v466 = vld [vmem:[%s303 + $0x15c] sm:$0xff]
        %v467 = vld [vmem:[%s303 + $0x164] sm:$0xf]
        %v468 = vld [vmem:[%s303 + $0x168] sm:$0xff]
        %v469 = vld [vmem:[%s303 + $0x170] sm:$0xf]
        %v470 = vld [vmem:[%s303 + $0x174] sm:$0xff]
        %v471 = vld [vmem:[%s303 + $0x17c] sm:$0xf]
        %v472 = vld [vmem:[%s332] sm:$0xf]
        %v473 = vld [vmem:[%s332 + $0x4] sm:$0xf]
        %v474 = vld [vmem:[%s332 + $0x8] sm:$0xf]
        %v475 = vld [vmem:[%s332 + $0xc] sm:$0xf]
        %v476 = vld [vmem:[%s332 + $0x10] sm:$0xf]
        %v477 = vld [vmem:[%s332 + $0x14] sm:$0xf]
        %v478 = vld [vmem:[%s332 + $0x18] sm:$0xf]
        %v479 = vld [vmem:[%s332 + $0x1c] sm:$0xf]
        %v480 = vld [vmem:[%s332 + $0x20] sm:$0xf]
        %v481 = vld [vmem:[%s332 + $0x24] sm:$0xf]
        %v482 = vld [vmem:[%s332 + $0x28] sm:$0xf]
        %v483 = vld [vmem:[%s332 + $0x2c] sm:$0xf]
        %v484 = vld [vmem:[%s332 + $0x30] sm:$0xf]
        %v485 = vld [vmem:[%s332 + $0x34] sm:$0xf]
        %v486 = vld [vmem:[%s332 + $0x38] sm:$0xf]
        %v487 = vld [vmem:[%s332 + $0x3c] sm:$0xf]
        %v488 = vld [vmem:[%s332 + $0x40] sm:$0xf]
        %v489 = vld [vmem:[%s332 + $0x44] sm:$0xf]
        %v490 = vld [vmem:[%s332 + $0x48] sm:$0xf]
        %v491 = vld [vmem:[%s332 + $0x4c] sm:$0xf]
        %v492 = vld [vmem:[%s332 + $0x50] sm:$0xf]
        %v493 = vld [vmem:[%s332 + $0x54] sm:$0xf]
        %v494 = vld [vmem:[%s332 + $0x58] sm:$0xf]
        %v495 = vld [vmem:[%s332 + $0x5c] sm:$0xf]
        %v496 = vld [vmem:[%s332 + $0x60] sm:$0xf]
        %v497 = vld [vmem:[%s332 + $0x64] sm:$0xf]
        %v498 = vld [vmem:[%s332 + $0x68] sm:$0xf]
        %v499 = vld [vmem:[%s332 + $0x6c] sm:$0xf]
        %v500 = vld [vmem:[%s332 + $0x70] sm:$0xf]
        %v501 = vld [vmem:[%s332 + $0x74] sm:$0xf]
        %v502 = vld [vmem:[%s332 + $0x78] sm:$0xf]
        %v503 = vld [vmem:[%s332 + $0x7c] sm:$0xf]
        %v504 = vld [vmem:[%s332 + $0x80] sm:$0xf]
        %v505 = vld [vmem:[%s332 + $0x84] sm:$0xf]
        %v506 = vld [vmem:[%s332 + $0x88] sm:$0xf]
        %v507 = vld [vmem:[%s332 + $0x8c] sm:$0xf]
        %v508 = vld [vmem:[%s332 + $0x90] sm:$0xf]
        %v509 = vld [vmem:[%s332 + $0x94] sm:$0xf]
        %v510 = vld [vmem:[%s332 + $0x98] sm:$0xf]
        %v511 = vld [vmem:[%s332 + $0x9c] sm:$0xf]
        %v512 = vld [vmem:[%s332 + $0xa0] sm:$0xf]
        %v513 = vld [vmem:[%s332 + $0xa4] sm:$0xf]
        %v514 = vld [vmem:[%s332 + $0xa8] sm:$0xf]
        %v515 = vld [vmem:[%s332 + $0xac] sm:$0xf]
        %v516 = vld [vmem:[%s332 + $0xb0] sm:$0xf]
        %v517 = vld [vmem:[%s332 + $0xb4] sm:$0xf]
        %v518 = vld [vmem:[%s332 + $0xb8] sm:$0xf]
        %v519 = vld [vmem:[%s332 + $0xbc] sm:$0xf]
        %v584 = vunpack.c.l.b16 %v408
        %v585 = vunpack.c.h.b16 %v408
        %v586 = vunpack.c.l.b16 %v409
        %v587 = vunpack.c.l.b16 %v410
        %v588 = vunpack.c.h.b16 %v410
        %v589 = vunpack.c.l.b16 %v411
        %v590 = vunpack.c.l.b16 %v412
        %v591 = vunpack.c.h.b16 %v412
        %v592 = vunpack.c.l.b16 %v413
        %v593 = vunpack.c.l.b16 %v414
        %v594 = vunpack.c.h.b16 %v414
        %v595 = vunpack.c.l.b16 %v415
        %v596 = vunpack.c.l.b16 %v416
        %v597 = vunpack.c.h.b16 %v416
        %v598 = vunpack.c.l.b16 %v417
        %v599 = vunpack.c.l.b16 %v418
        %v600 = vunpack.c.h.b16 %v418
        %v601 = vunpack.c.l.b16 %v419
        %v602 = vunpack.c.l.b16 %v420
        %v603 = vunpack.c.h.b16 %v420
        %v604 = vunpack.c.l.b16 %v421
        %v605 = vunpack.c.l.b16 %v422
        %v606 = vunpack.c.h.b16 %v422
        %v607 = vunpack.c.l.b16 %v423
        %v608 = vunpack.c.l.b16 %v424
        %v609 = vunpack.c.h.b16 %v424
        %v610 = vunpack.c.l.b16 %v425
        %v611 = vunpack.c.l.b16 %v426
        %v612 = vunpack.c.h.b16 %v426
        %v613 = vunpack.c.l.b16 %v427
        %v614 = vunpack.c.l.b16 %v428
        %v615 = vunpack.c.h.b16 %v428
        %v616 = vunpack.c.l.b16 %v429
        %v617 = vunpack.c.l.b16 %v430
        %v618 = vunpack.c.h.b16 %v430
        %v619 = vunpack.c.l.b16 %v431
        %v620 = vunpack.c.l.b16 %v432
        %v621 = vunpack.c.h.b16 %v432
        %v622 = vunpack.c.l.b16 %v433
        %v623 = vunpack.c.l.b16 %v434
        %v624 = vunpack.c.h.b16 %v434
        %v625 = vunpack.c.l.b16 %v435
        %v626 = vunpack.c.l.b16 %v436
        %v627 = vunpack.c.h.b16 %v436
        %v628 = vunpack.c.l.b16 %v437
        %v629 = vunpack.c.l.b16 %v438
        %v630 = vunpack.c.h.b16 %v438
        %v631 = vunpack.c.l.b16 %v439
        %v632 = vunpack.c.l.b16 %v440
        %v633 = vunpack.c.h.b16 %v440
        %v634 = vunpack.c.l.b16 %v441
        %v635 = vunpack.c.l.b16 %v442
        %v636 = vunpack.c.h.b16 %v442
        %v637 = vunpack.c.l.b16 %v443
        %v638 = vunpack.c.l.b16 %v444
        %v639 = vunpack.c.h.b16 %v444
        %v640 = vunpack.c.l.b16 %v445
        %v641 = vunpack.c.l.b16 %v446
        %v642 = vunpack.c.h.b16 %v446
        %v643 = vunpack.c.l.b16 %v447
        %v644 = vunpack.c.l.b16 %v448
        %v645 = vunpack.c.h.b16 %v448
        %v646 = vunpack.c.l.b16 %v449
        %v647 = vunpack.c.l.b16 %v450
        %v648 = vunpack.c.h.b16 %v450
        %v649 = vunpack.c.l.b16 %v451
        %v650 = vunpack.c.l.b16 %v452
        %v651 = vunpack.c.h.b16 %v452
        %v652 = vunpack.c.l.b16 %v453
        %v653 = vunpack.c.l.b16 %v454
        %v654 = vunpack.c.h.b16 %v454
        %v655 = vunpack.c.l.b16 %v455
        %v656 = vunpack.c.l.b16 %v456
        %v657 = vunpack.c.h.b16 %v456
        %v658 = vunpack.c.l.b16 %v457
        %v659 = vunpack.c.l.b16 %v458
        %v660 = vunpack.c.h.b16 %v458
        %v661 = vunpack.c.l.b16 %v459
        %v662 = vunpack.c.l.b16 %v460
        %v663 = vunpack.c.h.b16 %v460
        %v664 = vunpack.c.l.b16 %v461
        %v665 = vunpack.c.l.b16 %v462
        %v666 = vunpack.c.h.b16 %v462
        %v667 = vunpack.c.l.b16 %v463
        %v668 = vunpack.c.l.b16 %v464
        %v669 = vunpack.c.h.b16 %v464
        %v670 = vunpack.c.l.b16 %v465
        %v671 = vunpack.c.l.b16 %v466
        %v672 = vunpack.c.h.b16 %v466
        %v673 = vunpack.c.l.b16 %v467
        %v674 = vunpack.c.l.b16 %v468
        %v675 = vunpack.c.h.b16 %v468
        %v676 = vunpack.c.l.b16 %v469
        %v677 = vunpack.c.l.b16 %v470
        %v678 = vunpack.c.h.b16 %v470
        %v679 = vunpack.c.l.b16 %v471
        %v680 = vpack.c.b16 %v587, %v584
        %v681 = vpack.c.b16 %v588, %v585
        %v682 = vpack.c.b16 %v589, %v586
        %v683 = vpack.c.b16 %v593, %v590
        %v684 = vpack.c.b16 %v594, %v591
        %v685 = vpack.c.b16 %v595, %v592
        %v686 = vpack.c.b16 %v599, %v596
        %v687 = vpack.c.b16 %v600, %v597
        %v688 = vpack.c.b16 %v601, %v598
        %v689 = vpack.c.b16 %v605, %v602
        %v690 = vpack.c.b16 %v606, %v603
        %v691 = vpack.c.b16 %v607, %v604
        %v692 = vpack.c.b16 %v611, %v608
        %v693 = vpack.c.b16 %v612, %v609
        %v694 = vpack.c.b16 %v613, %v610
        %v695 = vpack.c.b16 %v617, %v614
        %v696 = vpack.c.b16 %v618, %v615
        %v697 = vpack.c.b16 %v619, %v616
        %v698 = vpack.c.b16 %v623, %v620
        %v699 = vpack.c.b16 %v624, %v621
        %v700 = vpack.c.b16 %v625, %v622
        %v701 = vpack.c.b16 %v629, %v626
        %v702 = vpack.c.b16 %v630, %v627
        %v703 = vpack.c.b16 %v631, %v628
        %v704 = vpack.c.b16 %v635, %v632
        %v705 = vpack.c.b16 %v636, %v633
        %v706 = vpack.c.b16 %v637, %v634
        %v707 = vpack.c.b16 %v641, %v638
        %v708 = vpack.c.b16 %v642, %v639
        %v709 = vpack.c.b16 %v643, %v640
        %v710 = vpack.c.b16 %v647, %v644
        %v711 = vpack.c.b16 %v648, %v645
        %v712 = vpack.c.b16 %v649, %v646
        %v713 = vpack.c.b16 %v653, %v650
        %v714 = vpack.c.b16 %v654, %v651
        %v715 = vpack.c.b16 %v655, %v652
        %v716 = vpack.c.b16 %v659, %v656
        %v717 = vpack.c.b16 %v660, %v657
        %v718 = vpack.c.b16 %v661, %v658
        %v719 = vpack.c.b16 %v665, %v662
        %v720 = vpack.c.b16 %v666, %v663
        %v721 = vpack.c.b16 %v667, %v664
        %v722 = vpack.c.b16 %v671, %v668
        %v723 = vpack.c.b16 %v672, %v669
        %v724 = vpack.c.b16 %v673, %v670
        %v725 = vpack.c.b16 %v677, %v674
        %v726 = vpack.c.b16 %v678, %v675
        %v727 = vpack.c.b16 %v679, %v676
        %v824 = vunpack.c.l.b16 %v472
        %v825 = vunpack.c.l.b16 %v473
        %v826 = vunpack.c.l.b16 %v474
        %v827 = vunpack.c.l.b16 %v475
        %v828 = vunpack.c.l.b16 %v476
        %v829 = vunpack.c.l.b16 %v477
        %v830 = vunpack.c.l.b16 %v478
        %v831 = vunpack.c.l.b16 %v479
        %v832 = vunpack.c.l.b16 %v480
        %v833 = vunpack.c.l.b16 %v481
        %v834 = vunpack.c.l.b16 %v482
        %v835 = vunpack.c.l.b16 %v483
        %v836 = vunpack.c.l.b16 %v484
        %v837 = vunpack.c.l.b16 %v485
        %v838 = vunpack.c.l.b16 %v486
        %v839 = vunpack.c.l.b16 %v487
        %v840 = vunpack.c.l.b16 %v488
        %v841 = vunpack.c.l.b16 %v489
        %v842 = vunpack.c.l.b16 %v490
        %v843 = vunpack.c.l.b16 %v491
        %v844 = vunpack.c.l.b16 %v492
        %v845 = vunpack.c.l.b16 %v493
        %v846 = vunpack.c.l.b16 %v494
        %v847 = vunpack.c.l.b16 %v495
        %v848 = vunpack.c.l.b16 %v496
        %v849 = vunpack.c.l.b16 %v497
        %v850 = vunpack.c.l.b16 %v498
        %v851 = vunpack.c.l.b16 %v499
        %v852 = vunpack.c.l.b16 %v500
        %v853 = vunpack.c.l.b16 %v501
        %v854 = vunpack.c.l.b16 %v502
        %v855 = vunpack.c.l.b16 %v503
        %v856 = vunpack.c.l.b16 %v504
        %v857 = vunpack.c.l.b16 %v505
        %v858 = vunpack.c.l.b16 %v506
        %v859 = vunpack.c.l.b16 %v507
        %v860 = vunpack.c.l.b16 %v508
        %v861 = vunpack.c.l.b16 %v509
        %v862 = vunpack.c.l.b16 %v510
        %v863 = vunpack.c.l.b16 %v511
        %v864 = vunpack.c.l.b16 %v512
        %v865 = vunpack.c.l.b16 %v513
        %v866 = vunpack.c.l.b16 %v514
        %v867 = vunpack.c.l.b16 %v515
        %v868 = vunpack.c.l.b16 %v516
        %v869 = vunpack.c.l.b16 %v517
        %v870 = vunpack.c.l.b16 %v518
        %v871 = vunpack.c.l.b16 %v519
        %v872 = vpack.c.b16 %v825, %v824
        %v873 = vpack.c.b16 %v827, %v826
        %v874 = vpack.c.b16 %v829, %v828
        %v875 = vpack.c.b16 %v831, %v830
        %v876 = vpack.c.b16 %v833, %v832
        %v877 = vpack.c.b16 %v835, %v834
        %v878 = vpack.c.b16 %v837, %v836
        %v879 = vpack.c.b16 %v839, %v838
        %v880 = vpack.c.b16 %v841, %v840
        %v881 = vpack.c.b16 %v843, %v842
        %v882 = vpack.c.b16 %v845, %v844
        %v883 = vpack.c.b16 %v847, %v846
        %v884 = vpack.c.b16 %v849, %v848
        %v885 = vpack.c.b16 %v851, %v850
        %v886 = vpack.c.b16 %v853, %v852
        %v887 = vpack.c.b16 %v855, %v854
        %v888 = vpack.c.b16 %v857, %v856
        %v889 = vpack.c.b16 %v859, %v858
        %v890 = vpack.c.b16 %v861, %v860
        %v891 = vpack.c.b16 %v863, %v862
        %v892 = vpack.c.b16 %v865, %v864
        %v893 = vpack.c.b16 %v867, %v866
        %v894 = vpack.c.b16 %v869, %v868
        %v895 = vpack.c.b16 %v871, %v870
        %920 = vmatpush.bf16.msra.mxu0 %v879
        %921 = vmatpush.bf16.msra.mxu0 %v878
        %922 = vmatpush.bf16.msra.mxu0 %v877
        %923 = vmatpush.bf16.msra.mxu0 %v876
        %924 = vmatpush.bf16.msra.mxu0 %v875
        %925 = vmatpush.bf16.msra.mxu0 %v874
        %926 = vmatpush.bf16.msra.mxu0 %v873
        %927 = vmatpush.bf16.msra.mxu0 %v872
        %928 = vmatmul.bf16.gmra.mxu0 %v680
        %v929 = vpop.f32.mrf.mxu0
        %v930 = vadd.f32 0.0, %v929
        %v931 = vpop.f32.mrf.mxu0
        %v932 = vadd.f32 0.0, %v931
        %933 = vmatmul.bf16.gmra.mxu0 %v683
        %v934 = vpop.f32.mrf.mxu0
        %v935 = vadd.f32 0.0, %v934
        %v936 = vpop.f32.mrf.mxu0
        %v937 = vadd.f32 0.0, %v936
        %938 = vmatmul.bf16.gmra.mxu0 %v686
        %v939 = vpop.f32.mrf.mxu0
        %v940 = vadd.f32 0.0, %v939
        %v941 = vpop.f32.mrf.mxu0
        %v942 = vadd.f32 0.0, %v941
        %943 = vmatmul.bf16.gmra.mxu0 %v689
        %v944 = vpop.f32.mrf.mxu0
        %v945 = vadd.f32 0.0, %v944
        %v946 = vpop.f32.mrf.mxu0
        %v947 = vadd.f32 0.0, %v946
        %948 = vmatmul.bf16.gmra.mxu0 %v692
        %v949 = vpop.f32.mrf.mxu0
        %v950 = vadd.f32 0.0, %v949
        %v951 = vpop.f32.mrf.mxu0
        %v952 = vadd.f32 0.0, %v951
        %953 = vmatmul.bf16.gmra.mxu0 %v695
        %v954 = vpop.f32.mrf.mxu0
        %v955 = vadd.f32 0.0, %v954
        %v956 = vpop.f32.mrf.mxu0
        %v957 = vadd.f32 0.0, %v956
        %958 = vmatmul.bf16.gmra.mxu0 %v698
        %v959 = vpop.f32.mrf.mxu0
        %v960 = vadd.f32 0.0, %v959
        %v961 = vpop.f32.mrf.mxu0
        %v962 = vadd.f32 0.0, %v961
        %963 = vmatmul.bf16.gmra.mxu0 %v701
        %v964 = vpop.f32.mrf.mxu0
        %v965 = vadd.f32 0.0, %v964
        %v966 = vpop.f32.mrf.mxu0
        %v967 = vadd.f32 0.0, %v966
        %968 = vmatmul.bf16.gmra.mxu0 %v704
        %v969 = vpop.f32.mrf.mxu0
        %v970 = vadd.f32 0.0, %v969
        %v971 = vpop.f32.mrf.mxu0
        %v972 = vadd.f32 0.0, %v971
        %973 = vmatmul.bf16.gmra.mxu0 %v707
        %v974 = vpop.f32.mrf.mxu0
        %v975 = vadd.f32 0.0, %v974
        %v976 = vpop.f32.mrf.mxu0
        %v977 = vadd.f32 0.0, %v976
        %978 = vmatmul.bf16.gmra.mxu0 %v710
        %v979 = vpop.f32.mrf.mxu0
        %v980 = vadd.f32 0.0, %v979
        %v981 = vpop.f32.mrf.mxu0
        %v982 = vadd.f32 0.0, %v981
        %983 = vmatmul.bf16.gmra.mxu0 %v713
        %v984 = vpop.f32.mrf.mxu0
        %v985 = vadd.f32 0.0, %v984
        %v986 = vpop.f32.mrf.mxu0
        %v987 = vadd.f32 0.0, %v986
        %988 = vmatmul.bf16.gmra.mxu0 %v716
        %v989 = vpop.f32.mrf.mxu0
        %v990 = vadd.f32 0.0, %v989
        %v991 = vpop.f32.mrf.mxu0
        %v992 = vadd.f32 0.0, %v991
        %993 = vmatmul.bf16.gmra.mxu0 %v719
        %v994 = vpop.f32.mrf.mxu0
        %v995 = vadd.f32 0.0, %v994
        %v996 = vpop.f32.mrf.mxu0
        %v997 = vadd.f32 0.0, %v996
        %998 = vmatmul.bf16.gmra.mxu0 %v722
        %v999 = vpop.f32.mrf.mxu0
        %v1000 = vadd.f32 0.0, %v999
        %v1001 = vpop.f32.mrf.mxu0
        %v1002 = vadd.f32 0.0, %v1001
        %1003 = vmatmul.bf16.gmra.mxu0 %v725
        %v1004 = vpop.f32.mrf.mxu0
        %v1005 = vadd.f32 0.0, %v1004
        %v1006 = vpop.f32.mrf.mxu0
        %v1007 = vadd.f32 0.0, %v1006
        %1008 = vdwg.mxu0
        %1009 = vmatpush.bf16.msra.mxu0 %v887
        %1010 = vmatpush.bf16.msra.mxu0 %v886
        %1011 = vmatpush.bf16.msra.mxu0 %v885
        %1012 = vmatpush.bf16.msra.mxu0 %v884
        %1013 = vmatpush.bf16.msra.mxu0 %v883
        %1014 = vmatpush.bf16.msra.mxu0 %v882
        %1015 = vmatpush.bf16.msra.mxu0 %v881
        %1016 = vmatpush.bf16.msra.mxu0 %v880
        %1017 = vmatmul.bf16.gmra.mxu0 %v681
        %v1018 = vpop.f32.mrf.mxu0
        %v1019 = vadd.f32 %v930, %v1018
        %v1020 = vpop.f32.mrf.mxu0
        %v1021 = vadd.f32 %v932, %v1020
        %1022 = vmatmul.bf16.gmra.mxu0 %v684
        %v1023 = vpop.f32.mrf.mxu0
        %v1024 = vadd.f32 %v935, %v1023
        %v1025 = vpop.f32.mrf.mxu0
        %v1026 = vadd.f32 %v937, %v1025
        %1027 = vmatmul.bf16.gmra.mxu0 %v687
        %v1028 = vpop.f32.mrf.mxu0
        %v1029 = vadd.f32 %v940, %v1028
        %v1030 = vpop.f32.mrf.mxu0
        %v1031 = vadd.f32 %v942, %v1030
        %1032 = vmatmul.bf16.gmra.mxu0 %v690
        %v1033 = vpop.f32.mrf.mxu0
        %v1034 = vadd.f32 %v945, %v1033
        %v1035 = vpop.f32.mrf.mxu0
        %v1036 = vadd.f32 %v947, %v1035
        %1037 = vmatmul.bf16.gmra.mxu0 %v693
        %v1038 = vpop.f32.mrf.mxu0
        %v1039 = vadd.f32 %v950, %v1038
        %v1040 = vpop.f32.mrf.mxu0
        %v1041 = vadd.f32 %v952, %v1040
        %1042 = vmatmul.bf16.gmra.mxu0 %v696
        %v1043 = vpop.f32.mrf.mxu0
        %v1044 = vadd.f32 %v955, %v1043
        %v1045 = vpop.f32.mrf.mxu0
        %v1046 = vadd.f32 %v957, %v1045
        %1047 = vmatmul.bf16.gmra.mxu0 %v699
        %v1048 = vpop.f32.mrf.mxu0
        %v1049 = vadd.f32 %v960, %v1048
        %v1050 = vpop.f32.mrf.mxu0
        %v1051 = vadd.f32 %v962, %v1050
        %1052 = vmatmul.bf16.gmra.mxu0 %v702
        %v1053 = vpop.f32.mrf.mxu0
        %v1054 = vadd.f32 %v965, %v1053
        %v1055 = vpop.f32.mrf.mxu0
        %v1056 = vadd.f32 %v967, %v1055
        %1057 = vmatmul.bf16.gmra.mxu0 %v705
        %v1058 = vpop.f32.mrf.mxu0
        %v1059 = vadd.f32 %v970, %v1058
        %v1060 = vpop.f32.mrf.mxu0
        %v1061 = vadd.f32 %v972, %v1060
        %1062 = vmatmul.bf16.gmra.mxu0 %v708
        %v1063 = vpop.f32.mrf.mxu0
        %v1064 = vadd.f32 %v975, %v1063
        %v1065 = vpop.f32.mrf.mxu0
        %v1066 = vadd.f32 %v977, %v1065
        %1067 = vmatmul.bf16.gmra.mxu0 %v711
        %v1068 = vpop.f32.mrf.mxu0
        %v1069 = vadd.f32 %v980, %v1068
        %v1070 = vpop.f32.mrf.mxu0
        %v1071 = vadd.f32 %v982, %v1070
        %1072 = vmatmul.bf16.gmra.mxu0 %v714
        %v1073 = vpop.f32.mrf.mxu0
        %v1074 = vadd.f32 %v985, %v1073
        %v1075 = vpop.f32.mrf.mxu0
        %v1076 = vadd.f32 %v987, %v1075
        %1077 = vmatmul.bf16.gmra.mxu0 %v717
        %v1078 = vpop.f32.mrf.mxu0
        %v1079 = vadd.f32 %v990, %v1078
        %v1080 = vpop.f32.mrf.mxu0
        %v1081 = vadd.f32 %v992, %v1080
        %1082 = vmatmul.bf16.gmra.mxu0 %v720
        %v1083 = vpop.f32.mrf.mxu0
        %v1084 = vadd.f32 %v995, %v1083
        %v1085 = vpop.f32.mrf.mxu0
        %v1086 = vadd.f32 %v997, %v1085
        %1087 = vmatmul.bf16.gmra.mxu0 %v723
        %v1088 = vpop.f32.mrf.mxu0
        %v1089 = vadd.f32 %v1000, %v1088
        %v1090 = vpop.f32.mrf.mxu0
        %v1091 = vadd.f32 %v1002, %v1090
        %1092 = vmatmul.bf16.gmra.mxu0 %v726
        %v1093 = vpop.f32.mrf.mxu0
        %v1094 = vadd.f32 %v1005, %v1093
        %v1095 = vpop.f32.mrf.mxu0
        %v1096 = vadd.f32 %v1007, %v1095
        %1097 = vdwg.mxu0
        %1098 = vmatpush.bf16.msra.mxu0 %v895
        %1099 = vmatpush.bf16.msra.mxu0 %v894
        %1100 = vmatpush.bf16.msra.mxu0 %v893
        %1101 = vmatpush.bf16.msra.mxu0 %v892
        %1102 = vmatpush.bf16.msra.mxu0 %v891
        %1103 = vmatpush.bf16.msra.mxu0 %v890
        %1104 = vmatpush.bf16.msra.mxu0 %v889
        %1105 = vmatpush.bf16.msra.mxu0 %v888
        %1106 = vmatmul.bf16.gmra.mxu0 %v682
        %v1107 = vpop.f32.mrf.mxu0
        %v1108 = vadd.f32 %v1019, %v1107
        %v1109 = vpop.f32.mrf.mxu0
        %v1110 = vadd.f32 %v1021, %v1109
        %1111 = vmatmul.bf16.gmra.mxu0 %v685
        %v1112 = vpop.f32.mrf.mxu0
        %v1113 = vadd.f32 %v1024, %v1112
        %v1114 = vpop.f32.mrf.mxu0
        %v1115 = vadd.f32 %v1026, %v1114
        %1116 = vmatmul.bf16.gmra.mxu0 %v688
        %v1117 = vpop.f32.mrf.mxu0
        %v1118 = vadd.f32 %v1029, %v1117
        %v1119 = vpop.f32.mrf.mxu0
        %v1120 = vadd.f32 %v1031, %v1119
        %1121 = vmatmul.bf16.gmra.mxu0 %v691
        %v1122 = vpop.f32.mrf.mxu0
        %v1123 = vadd.f32 %v1034, %v1122
        %v1124 = vpop.f32.mrf.mxu0
        %v1125 = vadd.f32 %v1036, %v1124
        %1126 = vmatmul.bf16.gmra.mxu0 %v694
        %v1127 = vpop.f32.mrf.mxu0
        %v1128 = vadd.f32 %v1039, %v1127
        %v1129 = vpop.f32.mrf.mxu0
        %v1130 = vadd.f32 %v1041, %v1129
        %1131 = vmatmul.bf16.gmra.mxu0 %v697
        %v1132 = vpop.f32.mrf.mxu0
        %v1133 = vadd.f32 %v1044, %v1132
        %v1134 = vpop.f32.mrf.mxu0
        %v1135 = vadd.f32 %v1046, %v1134
        %1136 = vmatmul.bf16.gmra.mxu0 %v700
        %v1137 = vpop.f32.mrf.mxu0
        %v1138 = vadd.f32 %v1049, %v1137
        %v1139 = vpop.f32.mrf.mxu0
        %v1140 = vadd.f32 %v1051, %v1139
        %1141 = vmatmul.bf16.gmra.mxu0 %v703
        %v1142 = vpop.f32.mrf.mxu0
        %v1143 = vadd.f32 %v1054, %v1142
        %v1144 = vpop.f32.mrf.mxu0
        %v1145 = vadd.f32 %v1056, %v1144
        %1146 = vmatmul.bf16.gmra.mxu0 %v706
        %v1147 = vpop.f32.mrf.mxu0
        %v1148 = vadd.f32 %v1059, %v1147
        %v1149 = vpop.f32.mrf.mxu0
        %v1150 = vadd.f32 %v1061, %v1149
        %1151 = vmatmul.bf16.gmra.mxu0 %v709
        %v1152 = vpop.f32.mrf.mxu0
        %v1153 = vadd.f32 %v1064, %v1152
        %v1154 = vpop.f32.mrf.mxu0
        %v1155 = vadd.f32 %v1066, %v1154
        %1156 = vmatmul.bf16.gmra.mxu0 %v712
        %v1157 = vpop.f32.mrf.mxu0
        %v1158 = vadd.f32 %v1069, %v1157
        %v1159 = vpop.f32.mrf.mxu0
        %v1160 = vadd.f32 %v1071, %v1159
        %1161 = vmatmul.bf16.gmra.mxu0 %v715
        %v1162 = vpop.f32.mrf.mxu0
        %v1163 = vadd.f32 %v1074, %v1162
        %v1164 = vpop.f32.mrf.mxu0
        %v1165 = vadd.f32 %v1076, %v1164
        %1166 = vmatmul.bf16.gmra.mxu0 %v718
        %v1167 = vpop.f32.mrf.mxu0
        %v1168 = vadd.f32 %v1079, %v1167
        %v1169 = vpop.f32.mrf.mxu0
        %v1170 = vadd.f32 %v1081, %v1169
        %1171 = vmatmul.bf16.gmra.mxu0 %v721
        %v1172 = vpop.f32.mrf.mxu0
        %v1173 = vadd.f32 %v1084, %v1172
        %v1174 = vpop.f32.mrf.mxu0
        %v1175 = vadd.f32 %v1086, %v1174
        %1176 = vmatmul.bf16.gmra.mxu0 %v724
        %v1177 = vpop.f32.mrf.mxu0
        %v1178 = vadd.f32 %v1089, %v1177
        %v1179 = vpop.f32.mrf.mxu0
        %v1180 = vadd.f32 %v1091, %v1179
        %1181 = vmatmul.bf16.gmra.mxu0 %v727
        %v1182 = vpop.f32.mrf.mxu0
        %v1183 = vadd.f32 %v1094, %v1182
        %v1184 = vpop.f32.mrf.mxu0
        %v1185 = vadd.f32 %v1096, %v1184
        %1186 = vdwg.mxu0
        %v1187 = vadd.f32 %v376, %v1108
        %v1188 = vadd.f32 %v377, %v1110
        %v1189 = vadd.f32 %v378, %v1113
        %v1190 = vadd.f32 %v379, %v1115
        %v1191 = vadd.f32 %v380, %v1118
        %v1192 = vadd.f32 %v381, %v1120
        %v1193 = vadd.f32 %v382, %v1123
        %v1194 = vadd.f32 %v383, %v1125
        %v1195 = vadd.f32 %v384, %v1128
        %v1196 = vadd.f32 %v385, %v1130
        %v1197 = vadd.f32 %v386, %v1133
        %v1198 = vadd.f32 %v387, %v1135
        %v1199 = vadd.f32 %v388, %v1138
        %v1200 = vadd.f32 %v389, %v1140
        %v1201 = vadd.f32 %v390, %v1143
        %v1202 = vadd.f32 %v391, %v1145
        %v1203 = vadd.f32 %v392, %v1148
        %v1204 = vadd.f32 %v393, %v1150
        %v1205 = vadd.f32 %v394, %v1153
        %v1206 = vadd.f32 %v395, %v1155
        %v1207 = vadd.f32 %v396, %v1158
        %v1208 = vadd.f32 %v397, %v1160
        %v1209 = vadd.f32 %v398, %v1163
        %v1210 = vadd.f32 %v399, %v1165
        %v1211 = vadd.f32 %v400, %v1168
        %v1212 = vadd.f32 %v401, %v1170
        %v1213 = vadd.f32 %v402, %v1173
        %v1214 = vadd.f32 %v403, %v1175
        %v1215 = vadd.f32 %v404, %v1178
        %v1216 = vadd.f32 %v405, %v1180
        %v1217 = vadd.f32 %v406, %v1183
        %v1218 = vadd.f32 %v407, %v1185
        %vm1219 = vcmask 523264
        %1220 = vst.msk [vmem:[#allocation2] sm:$0xff] %vm1219, %v1187
        %1221 = vst.msk [vmem:[#allocation2 + $0x8] sm:$0xff] %vm1219, %v1188
        %1222 = vst.msk [vmem:[#allocation2 + $0x10] sm:$0xff] %vm1219, %v1189
        %1223 = vst.msk [vmem:[#allocation2 + $0x18] sm:$0xff] %vm1219, %v1190
        %1224 = vst.msk [vmem:[#allocation2 + $0x20] sm:$0xff] %vm1219, %v1191
        %1225 = vst.msk [vmem:[#allocation2 + $0x28] sm:$0xff] %vm1219, %v1192
        %1226 = vst.msk [vmem:[#allocation2 + $0x30] sm:$0xff] %vm1219, %v1193
        %1227 = vst.msk [vmem:[#allocation2 + $0x38] sm:$0xff] %vm1219, %v1194
        %1228 = vst.msk [vmem:[#allocation2 + $0x40] sm:$0xff] %vm1219, %v1195
        %1229 = vst.msk [vmem:[#allocation2 + $0x48] sm:$0xff] %vm1219, %v1196
        %1230 = vst.msk [vmem:[#allocation2 + $0x50] sm:$0xff] %vm1219, %v1197
        %1231 = vst.msk [vmem:[#allocation2 + $0x58] sm:$0xff] %vm1219, %v1198
        %1232 = vst.msk [vmem:[#allocation2 + $0x60] sm:$0xff] %vm1219, %v1199
        %1233 = vst.msk [vmem:[#allocation2 + $0x68] sm:$0xff] %vm1219, %v1200
        %1234 = vst.msk [vmem:[#allocation2 + $0x70] sm:$0xff] %vm1219, %v1201
        %1235 = vst.msk [vmem:[#allocation2 + $0x78] sm:$0xff] %vm1219, %v1202
        %1236 = vst.msk [vmem:[#allocation2 + $0x80] sm:$0xff] %vm1219, %v1203
        %1237 = vst.msk [vmem:[#allocation2 + $0x88] sm:$0xff] %vm1219, %v1204
        %1238 = vst.msk [vmem:[#allocation2 + $0x90] sm:$0xff] %vm1219, %v1205
        %1239 = vst.msk [vmem:[#allocation2 + $0x98] sm:$0xff] %vm1219, %v1206
        %1240 = vst.msk [vmem:[#allocation2 + $0xa0] sm:$0xff] %vm1219, %v1207
        %1241 = vst.msk [vmem:[#allocation2 + $0xa8] sm:$0xff] %vm1219, %v1208
        %1242 = vst.msk [vmem:[#allocation2 + $0xb0] sm:$0xff] %vm1219, %v1209
        %1243 = vst.msk [vmem:[#allocation2 + $0xb8] sm:$0xff] %vm1219, %v1210
        %1244 = vst.msk [vmem:[#allocation2 + $0xc0] sm:$0xff] %vm1219, %v1211
        %1245 = vst.msk [vmem:[#allocation2 + $0xc8] sm:$0xff] %vm1219, %v1212
        %1246 = vst.msk [vmem:[#allocation2 + $0xd0] sm:$0xff] %vm1219, %v1213
        %1247 = vst.msk [vmem:[#allocation2 + $0xd8] sm:$0xff] %vm1219, %v1214
        %1248 = vst.msk [vmem:[#allocation2 + $0xe0] sm:$0xff] %vm1219, %v1215
        %1249 = vst.msk [vmem:[#allocation2 + $0xe8] sm:$0xff] %vm1219, %v1216
        %1250 = vst.msk [vmem:[#allocation2 + $0xf0] sm:$0xff] %vm1219, %v1217
        %1251 = vst.msk [vmem:[#allocation2 + $0xf8] sm:$0xff] %vm1219, %v1218
        %p1252 = scmp.eq.s32.totalorder %s18, 2
        // Predicated region
        $region59: #{generator_resnet_forward.18} parent=49 // pred_check
          %p1253 = pneg %p1252
        $region60: #{generator_resnet_forward.18} parent=49 // pred_check_branch
          %1255 = sbr.rel (%p1253) target = $region62
        $region61: #{generator_resnet_forward.18} parent=49 // pred_region
          %v1256 = vld [vmem:[#allocation2] sm:$0xff]
          %v1257 = vld [vmem:[#allocation2 + $0x8] sm:$0xff]
          %v1258 = vld [vmem:[#allocation2 + $0x10] sm:$0xff]
          %v1259 = vld [vmem:[#allocation2 + $0x18] sm:$0xff]
          %v1260 = vld [vmem:[#allocation2 + $0x20] sm:$0xff]
          %v1261 = vld [vmem:[#allocation2 + $0x28] sm:$0xff]
          %v1262 = vld [vmem:[#allocation2 + $0x30] sm:$0xff]
          %v1263 = vld [vmem:[#allocation2 + $0x38] sm:$0xff]
          %v1264 = vld [vmem:[#allocation2 + $0x40] sm:$0xff]
          %v1265 = vld [vmem:[#allocation2 + $0x48] sm:$0xff]
          %v1266 = vld [vmem:[#allocation2 + $0x50] sm:$0xff]
          %v1267 = vld [vmem:[#allocation2 + $0x58] sm:$0xff]
          %v1268 = vld [vmem:[#allocation2 + $0x60] sm:$0xff]
          %v1269 = vld [vmem:[#allocation2 + $0x68] sm:$0xff]
          %v1270 = vld [vmem:[#allocation2 + $0x70] sm:$0xff]
          %v1271 = vld [vmem:[#allocation2 + $0x78] sm:$0xff]
          %v1272 = vld [vmem:[#allocation2 + $0x80] sm:$0xff]
          %v1273 = vld [vmem:[#allocation2 + $0x88] sm:$0xff]
          %v1274 = vld [vmem:[#allocation2 + $0x90] sm:$0xff]
          %v1275 = vld [vmem:[#allocation2 + $0x98] sm:$0xff]
          %v1276 = vld [vmem:[#allocation2 + $0xa0] sm:$0xff]
          %v1277 = vld [vmem:[#allocation2 + $0xa8] sm:$0xff]
          %v1278 = vld [vmem:[#allocation2 + $0xb0] sm:$0xff]
          %v1279 = vld [vmem:[#allocation2 + $0xb8] sm:$0xff]
          %v1280 = vld [vmem:[#allocation2 + $0xc0] sm:$0xff]
          %v1281 = vld [vmem:[#allocation2 + $0xc8] sm:$0xff]
          %v1282 = vld [vmem:[#allocation2 + $0xd0] sm:$0xff]
          %v1283 = vld [vmem:[#allocation2 + $0xd8] sm:$0xff]
          %v1284 = vld [vmem:[#allocation2 + $0xe0] sm:$0xff]
          %v1285 = vld [vmem:[#allocation2 + $0xe8] sm:$0xff]
          %v1286 = vld [vmem:[#allocation2 + $0xf0] sm:$0xff]
          %v1287 = vld [vmem:[#allocation2 + $0xf8] sm:$0xff]
          %v1288 = vsel %vm1219, %v1256, 0.0
          %v1289 = vsel %vm1219, %v1257, 0.0
          %v1290 = vadd.f32 %v1288, %v1289
          %v1291 = vsel %vm1219, %v1258, 0.0
          %v1292 = vadd.f32 %v1290, %v1291
          %v1293 = vsel %vm1219, %v1259, 0.0
          %v1294 = vadd.f32 %v1292, %v1293
          %v1295 = vsel %vm1219, %v1260, 0.0
          %v1296 = vadd.f32 %v1294, %v1295
          %v1297 = vsel %vm1219, %v1261, 0.0
          %v1298 = vadd.f32 %v1296, %v1297
          %v1299 = vsel %vm1219, %v1262, 0.0
          %v1300 = vadd.f32 %v1298, %v1299
          %v1301 = vsel %vm1219, %v1263, 0.0
          %v1302 = vadd.f32 %v1300, %v1301
          %v1303 = vsel %vm1219, %v1264, 0.0
          %v1304 = vadd.f32 %v1302, %v1303
          %v1305 = vsel %vm1219, %v1265, 0.0
          %v1306 = vadd.f32 %v1304, %v1305
          %v1307 = vsel %vm1219, %v1266, 0.0
          %v1308 = vadd.f32 %v1306, %v1307
          %v1309 = vsel %vm1219, %v1267, 0.0
          %v1310 = vadd.f32 %v1308, %v1309
          %v1311 = vsel %vm1219, %v1268, 0.0
          %v1312 = vadd.f32 %v1310, %v1311
          %v1313 = vsel %vm1219, %v1269, 0.0
          %v1314 = vadd.f32 %v1312, %v1313
          %v1315 = vsel %vm1219, %v1270, 0.0
          %v1316 = vadd.f32 %v1314, %v1315
          %v1317 = vsel %vm1219, %v1271, 0.0
          %v1318 = vadd.f32 %v1316, %v1317
          %v1319 = vsel %vm1219, %v1272, 0.0
          %v1320 = vadd.f32 %v1318, %v1319
          %v1321 = vsel %vm1219, %v1273, 0.0
          %v1322 = vadd.f32 %v1320, %v1321
          %v1323 = vsel %vm1219, %v1274, 0.0
          %v1324 = vadd.f32 %v1322, %v1323
          %v1325 = vsel %vm1219, %v1275, 0.0
          %v1326 = vadd.f32 %v1324, %v1325
          %v1327 = vsel %vm1219, %v1276, 0.0
          %v1328 = vadd.f32 %v1326, %v1327
          %v1329 = vsel %vm1219, %v1277, 0.0
          %v1330 = vadd.f32 %v1328, %v1329
          %v1331 = vsel %vm1219, %v1278, 0.0
          %v1332 = vadd.f32 %v1330, %v1331
          %v1333 = vsel %vm1219, %v1279, 0.0
          %v1334 = vadd.f32 %v1332, %v1333
          %v1335 = vsel %vm1219, %v1280, 0.0
          %v1336 = vadd.f32 %v1334, %v1335
          %v1337 = vsel %vm1219, %v1281, 0.0
          %v1338 = vadd.f32 %v1336, %v1337
          %v1339 = vsel %vm1219, %v1282, 0.0
          %v1340 = vadd.f32 %v1338, %v1339
          %v1341 = vsel %vm1219, %v1283, 0.0
          %v1342 = vadd.f32 %v1340, %v1341
          %v1343 = vsel %vm1219, %v1284, 0.0
          %v1344 = vadd.f32 %v1342, %v1343
          %v1345 = vsel %vm1219, %v1285, 0.0
          %v1346 = vadd.f32 %v1344, %v1345
          %v1347 = vsel %vm1219, %v1286, 0.0
          %v1348 = vadd.f32 %v1346, %v1347
          %v1349 = vsel %vm1219, %v1287, 0.0
          %v1350 = vadd.f32 %v1348, %v1349
          %v1351 = vrot.slane %v1350, 4
          %v1352 = vadd.f32 %v1350, %v1351
          %v1353 = vrot.slane %v1352, 2
          %v1354 = vadd.f32 %v1352, %v1353
          %v1355 = vrot.slane %v1354, 1
          %v1356 = vadd.f32 %v1354, %v1355
          %v1357 = vmul.f32 %v1356, 0.00390625
          %v1358 = vmul.f32 %v1256, %v1256
          %v1359 = vmul.f32 %v1257, %v1257
          %v1360 = vmul.f32 %v1258, %v1258
          %v1361 = vmul.f32 %v1259, %v1259
          %v1362 = vmul.f32 %v1260, %v1260
          %v1363 = vmul.f32 %v1261, %v1261
          %v1364 = vmul.f32 %v1262, %v1262
          %v1365 = vmul.f32 %v1263, %v1263
          %v1366 = vmul.f32 %v1264, %v1264
          %v1367 = vmul.f32 %v1265, %v1265
          %v1368 = vmul.f32 %v1266, %v1266
          %v1369 = vmul.f32 %v1267, %v1267
          %v1370 = vmul.f32 %v1268, %v1268
          %v1371 = vmul.f32 %v1269, %v1269
          %v1372 = vmul.f32 %v1270, %v1270
          %v1373 = vmul.f32 %v1271, %v1271
          %v1374 = vmul.f32 %v1272, %v1272
          %v1375 = vmul.f32 %v1273, %v1273
          %v1376 = vmul.f32 %v1274, %v1274
          %v1377 = vmul.f32 %v1275, %v1275
          %v1378 = vmul.f32 %v1276, %v1276
          %v1379 = vmul.f32 %v1277, %v1277
          %v1380 = vmul.f32 %v1278, %v1278
          %v1381 = vmul.f32 %v1279, %v1279
          %v1382 = vmul.f32 %v1280, %v1280
          %v1383 = vmul.f32 %v1281, %v1281
          %v1384 = vmul.f32 %v1282, %v1282
          %v1385 = vmul.f32 %v1283, %v1283
          %v1386 = vmul.f32 %v1284, %v1284
          %v1387 = vmul.f32 %v1285, %v1285
          %v1388 = vmul.f32 %v1286, %v1286
          %v1389 = vmul.f32 %v1287, %v1287
          %v1390 = vsel %vm1219, %v1358, 0.0
          %v1391 = vsel %vm1219, %v1359, 0.0
          %v1392 = vadd.f32 %v1390, %v1391
          %v1393 = vsel %vm1219, %v1360, 0.0
          %v1394 = vadd.f32 %v1392, %v1393
          %v1395 = vsel %vm1219, %v1361, 0.0
          %v1396 = vadd.f32 %v1394, %v1395
          %v1397 = vsel %vm1219, %v1362, 0.0
          %v1398 = vadd.f32 %v1396, %v1397
          %v1399 = vsel %vm1219, %v1363, 0.0
          %v1400 = vadd.f32 %v1398, %v1399
          %v1401 = vsel %vm1219, %v1364, 0.0
          %v1402 = vadd.f32 %v1400, %v1401
          %v1403 = vsel %vm1219, %v1365, 0.0
          %v1404 = vadd.f32 %v1402, %v1403
          %v1405 = vsel %vm1219, %v1366, 0.0
          %v1406 = vadd.f32 %v1404, %v1405
          %v1407 = vsel %vm1219, %v1367, 0.0
          %v1408 = vadd.f32 %v1406, %v1407
          %v1409 = vsel %vm1219, %v1368, 0.0
          %v1410 = vadd.f32 %v1408, %v1409
          %v1411 = vsel %vm1219, %v1369, 0.0
          %v1412 = vadd.f32 %v1410, %v1411
          %v1413 = vsel %vm1219, %v1370, 0.0
          %v1414 = vadd.f32 %v1412, %v1413
          %v1415 = vsel %vm1219, %v1371, 0.0
          %v1416 = vadd.f32 %v1414, %v1415
          %v1417 = vsel %vm1219, %v1372, 0.0
          %v1418 = vadd.f32 %v1416, %v1417
          %v1419 = vsel %vm1219, %v1373, 0.0
          %v1420 = vadd.f32 %v1418, %v1419
          %v1421 = vsel %vm1219, %v1374, 0.0
          %v1422 = vadd.f32 %v1420, %v1421
          %v1423 = vsel %vm1219, %v1375, 0.0
          %v1424 = vadd.f32 %v1422, %v1423
          %v1425 = vsel %vm1219, %v1376, 0.0
          %v1426 = vadd.f32 %v1424, %v1425
          %v1427 = vsel %vm1219, %v1377, 0.0
          %v1428 = vadd.f32 %v1426, %v1427
          %v1429 = vsel %vm1219, %v1378, 0.0
          %v1430 = vadd.f32 %v1428, %v1429
          %v1431 = vsel %vm1219, %v1379, 0.0
          %v1432 = vadd.f32 %v1430, %v1431
          %v1433 = vsel %vm1219, %v1380, 0.0
          %v1434 = vadd.f32 %v1432, %v1433
          %v1435 = vsel %vm1219, %v1381, 0.0
          %v1436 = vadd.f32 %v1434, %v1435
          %v1437 = vsel %vm1219, %v1382, 0.0
          %v1438 = vadd.f32 %v1436, %v1437
          %v1439 = vsel %vm1219, %v1383, 0.0
          %v1440 = vadd.f32 %v1438, %v1439
          %v1441 = vsel %vm1219, %v1384, 0.0
          %v1442 = vadd.f32 %v1440, %v1441
          %v1443 = vsel %vm1219, %v1385, 0.0
          %v1444 = vadd.f32 %v1442, %v1443
          %v1445 = vsel %vm1219, %v1386, 0.0
          %v1446 = vadd.f32 %v1444, %v1445
          %v1447 = vsel %vm1219, %v1387, 0.0
          %v1448 = vadd.f32 %v1446, %v1447
          %v1449 = vsel %vm1219, %v1388, 0.0
          %v1450 = vadd.f32 %v1448, %v1449
          %v1451 = vsel %vm1219, %v1389, 0.0
          %v1452 = vadd.f32 %v1450, %v1451
          %v1453 = vrot.slane %v1452, 4
          %v1454 = vadd.f32 %v1452, %v1453
          %v1455 = vrot.slane %v1454, 2
          %v1456 = vadd.f32 %v1454, %v1455
          %v1457 = vrot.slane %v1456, 1
          %v1458 = vadd.f32 %v1456, %v1457
          %v1459 = vmul.f32 %v1458, 0.00390625
          %v1460 = vmul.f32 %v1357, %v1357
          %v1461 = vsub.f32 %v1459, %v1460
          %v1462 = vmax.f32 %v1461, 0.0
          %v1463 = vsub.f32 %v1256, %v1357
          %v1464 = vsub.f32 %v1257, %v1357
          %v1465 = vsub.f32 %v1258, %v1357
          %v1466 = vsub.f32 %v1259, %v1357
          %v1467 = vsub.f32 %v1260, %v1357
          %v1468 = vsub.f32 %v1261, %v1357
          %v1469 = vsub.f32 %v1262, %v1357
          %v1470 = vsub.f32 %v1263, %v1357
          %v1471 = vsub.f32 %v1264, %v1357
          %v1472 = vsub.f32 %v1265, %v1357
          %v1473 = vsub.f32 %v1266, %v1357
          %v1474 = vsub.f32 %v1267, %v1357
          %v1475 = vsub.f32 %v1268, %v1357
          %v1476 = vsub.f32 %v1269, %v1357
          %v1477 = vsub.f32 %v1270, %v1357
          %v1478 = vsub.f32 %v1271, %v1357
          %v1479 = vsub.f32 %v1272, %v1357
          %v1480 = vsub.f32 %v1273, %v1357
          %v1481 = vsub.f32 %v1274, %v1357
          %v1482 = vsub.f32 %v1275, %v1357
          %v1483 = vsub.f32 %v1276, %v1357
          %v1484 = vsub.f32 %v1277, %v1357
          %v1485 = vsub.f32 %v1278, %v1357
          %v1486 = vsub.f32 %v1279, %v1357
          %v1487 = vsub.f32 %v1280, %v1357
          %v1488 = vsub.f32 %v1281, %v1357
          %v1489 = vsub.f32 %v1282, %v1357
          %v1490 = vsub.f32 %v1283, %v1357
          %v1491 = vsub.f32 %v1284, %v1357
          %v1492 = vsub.f32 %v1285, %v1357
          %v1493 = vsub.f32 %v1286, %v1357
          %v1494 = vsub.f32 %v1287, %v1357
          %v1495 = vadd.f32 %v1462, 1e-05
          %v1496 = vrsqrt.pop %v1495
          %v1497 = vmul.f32 %v1496, %v1495
          %v1498 = vmul.f32 %v1497, %v1496
          %v1499 = vmul.f32 0.5, %v1498
          %v1500 = vsub.f32 1.5, %v1499
          %v1501 = vmul.f32 %v1496, %v1500
          %vm1502 = vweird.f32 %v1495
          %vm1503 = vweird.f32 %v1496
          %vm1504 = vmor %vm1502, %vm1503
          %v1505 = vsel %vm1504, %v1496, %v1501
          %v1506 = vmul.f32 %v1463, %v1505
          %v1507 = vmul.f32 %v1464, %v1505
          %v1508 = vmul.f32 %v1465, %v1505
          %v1509 = vmul.f32 %v1466, %v1505
          %v1510 = vmul.f32 %v1467, %v1505
          %v1511 = vmul.f32 %v1468, %v1505
          %v1512 = vmul.f32 %v1469, %v1505
          %v1513 = vmul.f32 %v1470, %v1505
          %v1514 = vmul.f32 %v1471, %v1505
          %v1515 = vmul.f32 %v1472, %v1505
          %v1516 = vmul.f32 %v1473, %v1505
          %v1517 = vmul.f32 %v1474, %v1505
          %v1518 = vmul.f32 %v1475, %v1505
          %v1519 = vmul.f32 %v1476, %v1505
          %v1520 = vmul.f32 %v1477, %v1505
          %v1521 = vmul.f32 %v1478, %v1505
          %v1522 = vmul.f32 %v1479, %v1505
          %v1523 = vmul.f32 %v1480, %v1505
          %v1524 = vmul.f32 %v1481, %v1505
          %v1525 = vmul.f32 %v1482, %v1505
          %v1526 = vmul.f32 %v1483, %v1505
          %v1527 = vmul.f32 %v1484, %v1505
          %v1528 = vmul.f32 %v1485, %v1505
          %v1529 = vmul.f32 %v1486, %v1505
          %v1530 = vmul.f32 %v1487, %v1505
          %v1531 = vmul.f32 %v1488, %v1505
          %v1532 = vmul.f32 %v1489, %v1505
          %v1533 = vmul.f32 %v1490, %v1505
          %v1534 = vmul.f32 %v1491, %v1505
          %v1535 = vmul.f32 %v1492, %v1505
          %v1536 = vmul.f32 %v1493, %v1505
          %v1537 = vmul.f32 %v1494, %v1505
          %v1538 = vmax.f32 %v1506, 0.0
          %v1539 = vmax.f32 %v1507, 0.0
          %v1540 = vmax.f32 %v1508, 0.0
          %v1541 = vmax.f32 %v1509, 0.0
          %v1542 = vmax.f32 %v1510, 0.0
          %v1543 = vmax.f32 %v1511, 0.0
          %v1544 = vmax.f32 %v1512, 0.0
          %v1545 = vmax.f32 %v1513, 0.0
          %v1546 = vmax.f32 %v1514, 0.0
          %v1547 = vmax.f32 %v1515, 0.0
          %v1548 = vmax.f32 %v1516, 0.0
          %v1549 = vmax.f32 %v1517, 0.0
          %v1550 = vmax.f32 %v1518, 0.0
          %v1551 = vmax.f32 %v1519, 0.0
          %v1552 = vmax.f32 %v1520, 0.0
          %v1553 = vmax.f32 %v1521, 0.0
          %v1554 = vmax.f32 %v1522, 0.0
          %v1555 = vmax.f32 %v1523, 0.0
          %v1556 = vmax.f32 %v1524, 0.0
          %v1557 = vmax.f32 %v1525, 0.0
          %v1558 = vmax.f32 %v1526, 0.0
          %v1559 = vmax.f32 %v1527, 0.0
          %v1560 = vmax.f32 %v1528, 0.0
          %v1561 = vmax.f32 %v1529, 0.0
          %v1562 = vmax.f32 %v1530, 0.0
          %v1563 = vmax.f32 %v1531, 0.0
          %v1564 = vmax.f32 %v1532, 0.0
          %v1565 = vmax.f32 %v1533, 0.0
          %v1566 = vmax.f32 %v1534, 0.0
          %v1567 = vmax.f32 %v1535, 0.0
          %v1568 = vmax.f32 %v1536, 0.0
          %v1569 = vmax.f32 %v1537, 0.0
          %1570 = vst.msk [vmem:[%s338] sm:$0xff] %vm1219, %v1538
          %1571 = vst.msk [vmem:[%s338 + $0x8] sm:$0xff] %vm1219, %v1539
          %1572 = vst.msk [vmem:[%s338 + $0x10] sm:$0xff] %vm1219, %v1540
          %1573 = vst.msk [vmem:[%s338 + $0x18] sm:$0xff] %vm1219, %v1541
          %1574 = vst.msk [vmem:[%s338 + $0x20] sm:$0xff] %vm1219, %v1542
          %1575 = vst.msk [vmem:[%s338 + $0x28] sm:$0xff] %vm1219, %v1543
          %1576 = vst.msk [vmem:[%s338 + $0x30] sm:$0xff] %vm1219, %v1544
          %1577 = vst.msk [vmem:[%s338 + $0x38] sm:$0xff] %vm1219, %v1545
          %1578 = vst.msk [vmem:[%s338 + $0x40] sm:$0xff] %vm1219, %v1546
          %1579 = vst.msk [vmem:[%s338 + $0x48] sm:$0xff] %vm1219, %v1547
          %1580 = vst.msk [vmem:[%s338 + $0x50] sm:$0xff] %vm1219, %v1548
          %1581 = vst.msk [vmem:[%s338 + $0x58] sm:$0xff] %vm1219, %v1549
          %1582 = vst.msk [vmem:[%s338 + $0x60] sm:$0xff] %vm1219, %v1550
          %1583 = vst.msk [vmem:[%s338 + $0x68] sm:$0xff] %vm1219, %v1551
          %1584 = vst.msk [vmem:[%s338 + $0x70] sm:$0xff] %vm1219, %v1552
          %1585 = vst.msk [vmem:[%s338 + $0x78] sm:$0xff] %vm1219, %v1553
          %1586 = vst.msk [vmem:[%s338 + $0x80] sm:$0xff] %vm1219, %v1554
          %1587 = vst.msk [vmem:[%s338 + $0x88] sm:$0xff] %vm1219, %v1555
          %1588 = vst.msk [vmem:[%s338 + $0x90] sm:$0xff] %vm1219, %v1556
          %1589 = vst.msk [vmem:[%s338 + $0x98] sm:$0xff] %vm1219, %v1557
          %1590 = vst.msk [vmem:[%s338 + $0xa0] sm:$0xff] %vm1219, %v1558
          %1591 = vst.msk [vmem:[%s338 + $0xa8] sm:$0xff] %vm1219, %v1559
          %1592 = vst.msk [vmem:[%s338 + $0xb0] sm:$0xff] %vm1219, %v1560
          %1593 = vst.msk [vmem:[%s338 + $0xb8] sm:$0xff] %vm1219, %v1561
          %1594 = vst.msk [vmem:[%s338 + $0xc0] sm:$0xff] %vm1219, %v1562
          %1595 = vst.msk [vmem:[%s338 + $0xc8] sm:$0xff] %vm1219, %v1563
          %1596 = vst.msk [vmem:[%s338 + $0xd0] sm:$0xff] %vm1219, %v1564
          %1597 = vst.msk [vmem:[%s338 + $0xd8] sm:$0xff] %vm1219, %v1565
          %1598 = vst.msk [vmem:[%s338 + $0xe0] sm:$0xff] %vm1219, %v1566
          %1599 = vst.msk [vmem:[%s338 + $0xe8] sm:$0xff] %vm1219, %v1567
          %1600 = vst.msk [vmem:[%s338 + $0xf0] sm:$0xff] %vm1219, %v1568
          %1601 = vst.msk [vmem:[%s338 + $0xf8] sm:$0xff] %vm1219, %v1569
        $region62: #{generator_resnet_forward.18} parent=49 // pred_fallthru
          _
        %p1602 = scmp.lt.s32.totalorder %s17, 1
        %s1603 = scalar_select %p1602, %s17, 1
        %s1604 = smul.addr %s1603, 32
        %s1605 = smul.addr %s1604, 8
        %s1606 = scalar_lea.vmem %s2, %s1605
        // Predicated region
        $region63: #{generator_resnet_forward.18} parent=49 // pred_check
          %p1607 = pneg %p97
        $region64: #{generator_resnet_forward.18} parent=49 // pred_check_branch
          %1609 = sbr.rel (%p1607) target = $region66
        $region65: #{generator_resnet_forward.18} parent=49 // pred_region
          _
        $region66: #{generator_resnet_forward.18} parent=49 // pred_fallthru
          _
      $region50: #{generator_resnet_forward.18} parent=5 // pred_fallthru
        _
      %p1610 = scmp.le.s32.totalorder 2, %s8
      // Predicated region
      $region67: #{generator_resnet_forward.18} parent=5 // pred_check
        %p1611 = pneg %p1610
      $region68: #{generator_resnet_forward.18} parent=5 // pred_check_branch
        %1613 = sbr.rel (%p1611) target = $region70
      $region69: #{generator_resnet_forward.18} parent=5 // pred_region
        %s1614 = ssub.s32 %s8, 2
        // Predicated region
        $region71: #{generator_resnet_forward.18} parent=69 // pred_check
          %p1615 = pneg %p103
        $region72: #{generator_resnet_forward.18} parent=69 // pred_check_branch
          %1617 = sbr.rel (%p1615) target = $region74
        $region73: #{generator_resnet_forward.18} parent=69 // pred_region
          %p1618 = scmp.lt.s32.totalorder %s19, 1
          %s1619 = scalar_select %p1618, %s19, 1
          %s1620 = smul.addr %s1619, 32
          %s1621 = smul.addr %s1620, 8
          %s1622 = scalar_lea.vmem %s2, %s1621
        $region74: #{generator_resnet_forward.18} parent=69 // pred_fallthru
          _
      $region70: #{generator_resnet_forward.18} parent=5 // pred_fallthru
        _
    $region6: #{generator_resnet_forward.18} parent=1 // loop_footer
      %s12 = sadd.s32 1, %s8
    $region7: #{generator_resnet_forward.18} parent=1 // loop_footer_branch
      %7 = sbr.rel target = $region3
    $region8: #{generator_resnet_forward.18} parent=1 // loop_exit
      _

// kernel: generator_resnet_forward.19
$region0: #{generator_resnet_forward.19}
  #allocation0 [shape = 'u32[]', space=smem, size = 0x4, offset = 0x4, fixed_abs, tag = 'smem constant byte address 0x4 - core index']
  #allocation1 [shape = 'u32[72,128]{1,0:T(1,128)}', space=vmem, size = 0x9000, scoped, tag = 'internal scratch']
  #allocation2 [shape = 'f32[256,128]{1,0:T(8,128)}', space=vmem, size = 0x20000, scoped, tag = 'scratch operand']
  %s0 = inlined_call_operand.vmem [shape: bf16[2,256,3200], index: 0, kind: input, shape index: {}]
  %s1 = inlined_call_operand.vmem [shape: bf16[3200,128], index: 1, kind: input, shape index: {}]
  %s2 = inlined_call_operand.vmem [shape: f32[1,128], index: 2, kind: input, shape index: {}]
  %s3 = inlined_call_operand.vmem [shape: f32[2,256,128], index: 3, kind: output, shape index: {}]
  %s4 = sld [smem:[#allocation0]]
  $region79: #{generator_resnet_forward.19} parent=0
    _
  %s6 = ssub.s32 1, %s4
  %s7 = scalar_select 0, %s6, %s4
  $region1: #{generator_resnet_forward.19} parent=0
    #allocation3 [shape = 'u8[655360]{0}', space=vmem, size = 0xa0000, scoped, tag = 'input window, operand 0']
    loop: start=0, step=1, limit=12
    $region2: #{generator_resnet_forward.19} parent=1 // loop_pre_header
      _
    $region3: #{generator_resnet_forward.19} parent=1 // loop_header
      %s9 = sphi 0, %s13
      %p10 = scmp.ge.s32.totalorder %s9, 12
      %s16 = sphi 0, %s35
      %s17 = sphi 0, %s31
      %s18 = sphi 0, %s27
      %s19 = sphi 0, %s16
      %s20 = sphi 0, %s17
      %s21 = sphi 0, %s18
      %s22 = sphi 0, %s19
      %s23 = sphi 0, %s20
      %s24 = sphi 0, %s21
      %s42 = sphi 0, %s44
      %s45 = sphi 0, %s42
      %s46 = sphi 0, %s45
      %s62 = sphi 0, %s46
      %s68 = sphi 0, %s70
      %s71 = sphi 0, %s68
      %s72 = sphi 0, %s71
      %s88 = sphi 0, %s72
      %s92 = sphi 0, %s92
      %s94 = sphi 0, %s92
      %s95 = sphi 0, %s94
      %s109 = sphi 0, %s95
      %s117 = sphi 0, %s119
      %s120 = sphi 0, %s117
      %s121 = sphi 0, %s120
      %s137 = sphi 0, %s121
    $region4: #{generator_resnet_forward.19} parent=1 // loop_header_branch
      %12 = sbr.rel (%p10) target = $region8
    $region5: #{generator_resnet_forward.19} parent=1 // loop_body
      %s14 = ssub.s32 %s9, 1
      %s15 = ssub.s32 %s9, 2
      %s25 = sadd.s32 1, %s18
      %p26 = scmp.ge.s32.totalorder %s25, 5
      %s27 = scalar_select %p26, 0, %s25
      %s28 = sadd.s32 1, %s17
      %s29 = scalar_select %p26, %s28, %s17
      %p30 = scmp.ge.s32.totalorder %s29, 1
      %s31 = scalar_select %p30, 0, %s29
      %s32 = sadd.s32 1, %s16
      %s33 = scalar_select %p30, %s32, %s16
      %p34 = scmp.ge.s32.totalorder %s33, 2
      %s35 = scalar_select %p34, 0, %s33
      %s36 = ssub.s32 %s16, %s35
      %s37 = ssub.s32 %s17, %s31
      %s38 = sor.u32 %s36, %s37
      %s39 = ssub.s32 %s18, %s27
      %s40 = sor.u32 %s38, %s39
      %p41 = scmp.eq.s32.totalorder %s40, 0
      %s43 = sadd.s32 %s42, 1
      %s44 = scalar_select %p41, %s42, %s43
      %p47 = pneg %p41
      %p48 = scmp.eq.s32.totalorder %s9, 9
      %p49 = por %p47, %p48
      %p50 = scmp.ne.s32.totalorder %s42, %s45
      %p51 = scmp.eq.s32.totalorder %s9, 0
      %p52 = por %p50, %p51
      %p53 = scmp.ne.s32.totalorder %s42, %s45
      %p54 = scmp.eq.s32.totalorder %s14, 9
      %p55 = por %p53, %p54
      %p56 = scmp.ne.s32.totalorder %s45, %s46
      %p57 = scmp.eq.s32.totalorder %s14, 0
      %p58 = por %p56, %p57
      %p59 = scmp.ne.s32.totalorder %s45, %s46
      %p60 = scmp.eq.s32.totalorder %s15, 9
      %p61 = por %p59, %p60
      %p63 = scmp.ne.s32.totalorder %s46, %s62
      %p64 = scmp.eq.s32.totalorder %s15, 0
      %p65 = por %p63, %p64
      %s66 = ssub.s32 %s18, %s27
      %p67 = scmp.eq.s32.totalorder %s66, 0
      %s69 = sadd.s32 %s68, 1
      %s70 = scalar_select %p67, %s68, %s69
      %p73 = pneg %p67
      %p74 = scmp.eq.s32.totalorder %s9, 9
      %p75 = por %p73, %p74
      %p76 = scmp.ne.s32.totalorder %s68, %s71
      %p77 = scmp.eq.s32.totalorder %s9, 0
      %p78 = por %p76, %p77
      %p79 = scmp.ne.s32.totalorder %s68, %s71
      %p80 = scmp.eq.s32.totalorder %s14, 9
      %p81 = por %p79, %p80
      %p82 = scmp.ne.s32.totalorder %s71, %s72
      %p83 = scmp.eq.s32.totalorder %s14, 0
      %p84 = por %p82, %p83
      %p85 = scmp.ne.s32.totalorder %s71, %s72
      %p86 = scmp.eq.s32.totalorder %s15, 9
      %p87 = por %p85, %p86
      %p89 = scmp.ne.s32.totalorder %s72, %s88
      %p90 = scmp.eq.s32.totalorder %s15, 0
      %p91 = por %p89, %p90
      %s93 = sadd.s32 %s92, 1
      %p96 = scmp.eq.s32.totalorder %s9, 9
      %p97 = scmp.ne.s32.totalorder %s92, %s94
      %p98 = scmp.eq.s32.totalorder %s9, 0
      %p99 = por %p97, %p98
      %p100 = scmp.ne.s32.totalorder %s92, %s94
      %p101 = scmp.eq.s32.totalorder %s14, 9
      %p102 = por %p100, %p101
      %p103 = scmp.ne.s32.totalorder %s94, %s95
      %p104 = scmp.eq.s32.totalorder %s14, 0
      %p105 = por %p103, %p104
      %p106 = scmp.ne.s32.totalorder %s94, %s95
      %p107 = scmp.eq.s32.totalorder %s15, 9
      %p108 = por %p106, %p107
      %p110 = scmp.ne.s32.totalorder %s95, %s109
      %p111 = scmp.eq.s32.totalorder %s15, 0
      %p112 = por %p110, %p111
      %s113 = ssub.s32 %s16, %s35
      %s114 = ssub.s32 %s17, %s31
      %s115 = sor.u32 %s113, %s114
      %p116 = scmp.eq.s32.totalorder %s115, 0
      %s118 = sadd.s32 %s117, 1
      %s119 = scalar_select %p116, %s117, %s118
      %p122 = pneg %p116
      %p123 = scmp.eq.s32.totalorder %s9, 9
      %p124 = por %p122, %p123
      %p125 = scmp.ne.s32.totalorder %s117, %s120
      %p126 = scmp.eq.s32.totalorder %s9, 0
      %p127 = por %p125, %p126
      %p128 = scmp.ne.s32.totalorder %s117, %s120
      %p129 = scmp.eq.s32.totalorder %s14, 9
      %p130 = por %p128, %p129
      %p131 = scmp.ne.s32.totalorder %s120, %s121
      %p132 = scmp.eq.s32.totalorder %s14, 0
      %p133 = por %p131, %p132
      %p134 = scmp.ne.s32.totalorder %s120, %s121
      %p135 = scmp.eq.s32.totalorder %s15, 9
      %p136 = por %p134, %p135
      %p138 = scmp.ne.s32.totalorder %s121, %s137
      %p139 = scmp.eq.s32.totalorder %s15, 0
      %p140 = por %p138, %p139
      %p141 = scmp.le.s32.totalorder 1, %s9
      %p142 = scmp.lt.s32.totalorder %s9, 11
      %p143 = pnand %p141, %p142
      %p144 = pneg %p143
      // Predicated region
      $region9: #{generator_resnet_forward.19} parent=5 // pred_check
        _
      $region10: #{generator_resnet_forward.19} parent=5 // pred_check_branch
        %146 = sbr.rel (%p143) target = $region12
      $region11: #{generator_resnet_forward.19} parent=5 // pred_region
        %s147 = ssub.s32 %s9, 1
        // Predicated region
        $region13: #{generator_resnet_forward.19} parent=11 // pred_check
          %p148 = pneg %p105
        $region14: #{generator_resnet_forward.19} parent=11 // pred_check_branch
          %150 = sbr.rel (%p148) target = $region16
        $region15: #{generator_resnet_forward.19} parent=11 // pred_region
          _
        $region16: #{generator_resnet_forward.19} parent=11 // pred_fallthru
          _
      $region12: #{generator_resnet_forward.19} parent=5 // pred_fallthru
        _
      %p151 = scmp.lt.s32.totalorder %s9, 10
      // Predicated region
      $region17: #{generator_resnet_forward.19} parent=5 // pred_check
        %p152 = pneg %p151
      $region18: #{generator_resnet_forward.19} parent=5 // pred_check_branch
        %154 = sbr.rel (%p152) target = $region20
      $region19: #{generator_resnet_forward.19} parent=5 // pred_region
        // Predicated region
        $region21: #{generator_resnet_forward.19} parent=19 // pred_check
          %p155 = pneg %p52
        $region22: #{generator_resnet_forward.19} parent=19 // pred_check_branch
          %157 = sbr.rel (%p155) target = $region24
        $region23: #{generator_resnet_forward.19} parent=19 // pred_region
          %s158 = sand.u32 %s42, 1
          %s159 = sand.u32 %s42, 1
          %s160 = smul.addr %s159, 640
          %s161 = scalar_lea.vmem [#allocation3], %s160
          %s162 = smul.u32 32, %s17
          %s163 = smul.u32 5, %s18
          %s164 = smul.addr %s162, 25
          %s165 = sadd.s32 %s163, %s164
          %s166 = smul.addr %s16, 800
          %s167 = sadd.s32 %s165, %s166
          %s168 = smul.addr %s167, 4
          %s169 = scalar_lea.vmem %s0, %s168
          // Predicated region
          $region25: #{generator_resnet_forward.19} parent=23 // pred_check
            _
          $region26: #{generator_resnet_forward.19} parent=23 // pred_check_branch
            %171 = sbr.rel (0) target = $region28
          $region27: #{generator_resnet_forward.19} parent=23 // pred_region
            // Predicated region
            $region29: #{generator_resnet_forward.19} parent=27 // pred_check
              _
            $region30: #{generator_resnet_forward.19} parent=27 // pred_check_branch
              %173 = sbr.rel (0) target = $region32
            $region31: #{generator_resnet_forward.19} parent=27 // pred_region
              %s174 = scalar_lea.vmem %s169, 16
              %s175 = scalar_lea.vmem %s161, 16 [#allocation3]
              loop: start=0, step=1, limit=1
              $region33: #{generator_resnet_forward.19} parent=31 // loop_pre_header
                _
              $region34: #{generator_resnet_forward.19} parent=31 // loop_header
                %s177 = sphi 0, %s181
                %p178 = scmp.ge.s32.totalorder %s177, 1
                %s182 = sphi %s169, %s169
                %s183 = sphi %s161, %s161
              $region35: #{generator_resnet_forward.19} parent=31 // loop_header_branch
                %180 = sbr.rel (%p178) target = $region39
              $region36: #{generator_resnet_forward.19} parent=31 // loop_body
                %v184 = vld [vmem:[%s182] sm:$0xff]
                %185 = vst [vmem:[%s183] sm:$0xff] %v184
                %v186 = vld [vmem:[%s182 + $0x8] sm:$0xff]
                %187 = vst [vmem:[%s183 + $0x8] sm:$0xff] %v186
                %v188 = vld [vmem:[%s182 + $0x64] sm:$0xff]
                %189 = vst [vmem:[%s183 + $0x14] sm:$0xff] %v188
                %v190 = vld [vmem:[%s182 + $0x6c] sm:$0xff]
                %191 = vst [vmem:[%s183 + $0x1c] sm:$0xff] %v190
                %v192 = vld [vmem:[%s182 + $0xc8] sm:$0xff]
                %193 = vst [vmem:[%s183 + $0x28] sm:$0xff] %v192
                %v194 = vld [vmem:[%s182 + $0xd0] sm:$0xff]
                %195 = vst [vmem:[%s183 + $0x30] sm:$0xff] %v194
                %v196 = vld [vmem:[%s182 + $0x12c] sm:$0xff]
                %197 = vst [vmem:[%s183 + $0x3c] sm:$0xff] %v196
                %v198 = vld [vmem:[%s182 + $0x134] sm:$0xff]
                %199 = vst [vmem:[%s183 + $0x44] sm:$0xff] %v198
                %v200 = vld [vmem:[%s182 + $0x190] sm:$0xff]
                %201 = vst [vmem:[%s183 + $0x50] sm:$0xff] %v200
                %v202 = vld [vmem:[%s182 + $0x198] sm:$0xff]
                %203 = vst [vmem:[%s183 + $0x58] sm:$0xff] %v202
                %v204 = vld [vmem:[%s182 + $0x1f4] sm:$0xff]
                %205 = vst [vmem:[%s183 + $0x64] sm:$0xff] %v204
                %v206 = vld [vmem:[%s182 + $0x1fc] sm:$0xff]
                %207 = vst [vmem:[%s183 + $0x6c] sm:$0xff] %v206
                %v208 = vld [vmem:[%s182 + $0x258] sm:$0xff]
                %209 = vst [vmem:[%s183 + $0x78] sm:$0xff] %v208
                %v210 = vld [vmem:[%s182 + $0x260] sm:$0xff]
                %211 = vst [vmem:[%s183 + $0x80] sm:$0xff] %v210
                %v212 = vld [vmem:[%s182 + $0x2bc] sm:$0xff]
                %213 = vst [vmem:[%s183 + $0x8c] sm:$0xff] %v212
                %v214 = vld [vmem:[%s182 + $0x2c4] sm:$0xff]
                %215 = vst [vmem:[%s183 + $0x94] sm:$0xff] %v214
                %v216 = vld [vmem:[%s182 + $0x320] sm:$0xff]
                %217 = vst [vmem:[%s183 + $0xa0] sm:$0xff] %v216
                %v218 = vld [vmem:[%s182 + $0x328] sm:$0xff]
                %219 = vst [vmem:[%s183 + $0xa8] sm:$0xff] %v218
                %v220 = vld [vmem:[%s182 + $0x384] sm:$0xff]
                %221 = vst [vmem:[%s183 + $0xb4] sm:$0xff] %v220
                %v222 = vld [vmem:[%s182 + $0x38c] sm:$0xff]
                %223 = vst [vmem:[%s183 + $0xbc] sm:$0xff] %v222
                %v224 = vld [vmem:[%s182 + $0x3e8] sm:$0xff]
                %225 = vst [vmem:[%s183 + $0xc8] sm:$0xff] %v224
                %v226 = vld [vmem:[%s182 + $0x3f0] sm:$0xff]
                %227 = vst [vmem:[%s183 + $0xd0] sm:$0xff] %v226
                %v228 = vld [vmem:[%s182 + $0x44c] sm:$0xff]
                %229 = vst [vmem:[%s183 + $0xdc] sm:$0xff] %v228
                %v230 = vld [vmem:[%s182 + $0x454] sm:$0xff]
                %231 = vst [vmem:[%s183 + $0xe4] sm:$0xff] %v230
                %v232 = vld [vmem:[%s182 + $0x4b0] sm:$0xff]
                %233 = vst [vmem:[%s183 + $0xf0] sm:$0xff] %v232
                %v234 = vld [vmem:[%s182 + $0x4b8] sm:$0xff]
                %235 = vst [vmem:[%s183 + $0xf8] sm:$0xff] %v234
                %v236 = vld [vmem:[%s182 + $0x514] sm:$0xff]
                %237 = vst [vmem:[%s183 + $0x104] sm:$0xff] %v236
                %v238 = vld [vmem:[%s182 + $0x51c] sm:$0xff]
                %239 = vst [vmem:[%s183 + $0x10c] sm:$0xff] %v238
                %v240 = vld [vmem:[%s182 + $0x578] sm:$0xff]
                %241 = vst [vmem:[%s183 + $0x118] sm:$0xff] %v240
                %v242 = vld [vmem:[%s182 + $0x580] sm:$0xff]
                %243 = vst [vmem:[%s183 + $0x120] sm:$0xff] %v242
                %v244 = vld [vmem:[%s182 + $0x5dc] sm:$0xff]
                %245 = vst [vmem:[%s183 + $0x12c] sm:$0xff] %v244
                %v246 = vld [vmem:[%s182 + $0x5e4] sm:$0xff]
                %247 = vst [vmem:[%s183 + $0x134] sm:$0xff] %v246
                %v248 = vld [vmem:[%s182 + $0x640] sm:$0xff]
                %249 = vst [vmem:[%s183 + $0x140] sm:$0xff] %v248
                %v250 = vld [vmem:[%s182 + $0x648] sm:$0xff]
                %251 = vst [vmem:[%s183 + $0x148] sm:$0xff] %v250
                %v252 = vld [vmem:[%s182 + $0x6a4] sm:$0xff]
                %253 = vst [vmem:[%s183 + $0x154] sm:$0xff] %v252
                %v254 = vld [vmem:[%s182 + $0x6ac] sm:$0xff]
                %255 = vst [vmem:[%s183 + $0x15c] sm:$0xff] %v254
                %v256 = vld [vmem:[%s182 + $0x708] sm:$0xff]
                %257 = vst [vmem:[%s183 + $0x168] sm:$0xff] %v256
                %v258 = vld [vmem:[%s182 + $0x710] sm:$0xff]
                %259 = vst [vmem:[%s183 + $0x170] sm:$0xff] %v258
                %v260 = vld [vmem:[%s182 + $0x76c] sm:$0xff]
                %261 = vst [vmem:[%s183 + $0x17c] sm:$0xff] %v260
                %v262 = vld [vmem:[%s182 + $0x774] sm:$0xff]
                %263 = vst [vmem:[%s183 + $0x184] sm:$0xff] %v262
                %v264 = vld [vmem:[%s182 + $0x7d0] sm:$0xff]
                %265 = vst [vmem:[%s183 + $0x190] sm:$0xff] %v264
                %v266 = vld [vmem:[%s182 + $0x7d8] sm:$0xff]
                %267 = vst [vmem:[%s183 + $0x198] sm:$0xff] %v266
                %v268 = vld [vmem:[%s182 + $0x834] sm:$0xff]
                %269 = vst [vmem:[%s183 + $0x1a4] sm:$0xff] %v268
                %v270 = vld [vmem:[%s182 + $0x83c] sm:$0xff]
                %271 = vst [vmem:[%s183 + $0x1ac] sm:$0xff] %v270
                %v272 = vld [vmem:[%s182 + $0x898] sm:$0xff]
                %273 = vst [vmem:[%s183 + $0x1b8] sm:$0xff] %v272
                %v274 = vld [vmem:[%s182 + $0x8a0] sm:$0xff]
                %275 = vst [vmem:[%s183 + $0x1c0] sm:$0xff] %v274
                %v276 = vld [vmem:[%s182 + $0x8fc] sm:$0xff]
                %277 = vst [vmem:[%s183 + $0x1cc] sm:$0xff] %v276
                %v278 = vld [vmem:[%s182 + $0x904] sm:$0xff]
                %279 = vst [vmem:[%s183 + $0x1d4] sm:$0xff] %v278
                %v280 = vld [vmem:[%s182 + $0x960] sm:$0xff]
                %281 = vst [vmem:[%s183 + $0x1e0] sm:$0xff] %v280
                %v282 = vld [vmem:[%s182 + $0x968] sm:$0xff]
                %283 = vst [vmem:[%s183 + $0x1e8] sm:$0xff] %v282
                %v284 = vld [vmem:[%s182 + $0x9c4] sm:$0xff]
                %285 = vst [vmem:[%s183 + $0x1f4] sm:$0xff] %v284
                %v286 = vld [vmem:[%s182 + $0x9cc] sm:$0xff]
                %287 = vst [vmem:[%s183 + $0x1fc] sm:$0xff] %v286
                %v288 = vld [vmem:[%s182 + $0xa28] sm:$0xff]
                %289 = vst [vmem:[%s183 + $0x208] sm:$0xff] %v288
                %v290 = vld [vmem:[%s182 + $0xa30] sm:$0xff]
                %291 = vst [vmem:[%s183 + $0x210] sm:$0xff] %v290
                %v292 = vld [vmem:[%s182 + $0xa8c] sm:$0xff]
                %293 = vst [vmem:[%s183 + $0x21c] sm:$0xff] %v292
                %v294 = vld [vmem:[%s182 + $0xa94] sm:$0xff]
                %295 = vst [vmem:[%s183 + $0x224] sm:$0xff] %v294
                %v296 = vld [vmem:[%s182 + $0xaf0] sm:$0xff]
                %297 = vst [vmem:[%s183 + $0x230] sm:$0xff] %v296
                %v298 = vld [vmem:[%s182 + $0xaf8] sm:$0xff]
                %299 = vst [vmem:[%s183 + $0x238] sm:$0xff] %v298
                %v300 = vld [vmem:[%s182 + $0xb54] sm:$0xff]
                %301 = vst [vmem:[%s183 + $0x244] sm:$0xff] %v300
                %v302 = vld [vmem:[%s182 + $0xb5c] sm:$0xff]
                %303 = vst [vmem:[%s183 + $0x24c] sm:$0xff] %v302
                %v304 = vld [vmem:[%s182 + $0xbb8] sm:$0xff]
                %305 = vst [vmem:[%s183 + $0x258] sm:$0xff] %v304
                %v306 = vld [vmem:[%s182 + $0xbc0] sm:$0xff]
                %307 = vst [vmem:[%s183 + $0x260] sm:$0xff] %v306
                %v308 = vld [vmem:[%s182 + $0xc1c] sm:$0xff]
                %309 = vst [vmem:[%s183 + $0x26c] sm:$0xff] %v308
                %v310 = vld [vmem:[%s182 + $0xc24] sm:$0xff]
                %311 = vst [vmem:[%s183 + $0x274] sm:$0xff] %v310
              $region37: #{generator_resnet_forward.19} parent=31 // loop_footer
                %s181 = sadd.s32 1, %s177
              $region38: #{generator_resnet_forward.19} parent=31 // loop_footer_branch
                %176 = sbr.rel target = $region34
              $region39: #{generator_resnet_forward.19} parent=31 // loop_exit
                _
              %s313 = ssub.s32 16, 1
              loop: start=0, step=1, limit=1
              $region40: #{generator_resnet_forward.19} parent=31 // loop_pre_header
                _
              $region41: #{generator_resnet_forward.19} parent=31 // loop_header
                %s315 = sphi 0, %s319
                %p316 = scmp.ge.s32.totalorder %s315, 1
                %s320 = sphi %s174, %s174
                %s321 = sphi %s175, %s175
              $region42: #{generator_resnet_forward.19} parent=31 // loop_header_branch
                %318 = sbr.rel (%p316) target = $region46
              $region43: #{generator_resnet_forward.19} parent=31 // loop_body
                %v322 = vld [vmem:[%s320] sm:%s313]
                %323 = vst [vmem:[%s321] sm:%s313] %v322
                %v324 = vld [vmem:[%s320 + $0x64] sm:%s313]
                %325 = vst [vmem:[%s321 + $0x14] sm:%s313] %v324
                %v326 = vld [vmem:[%s320 + $0xc8] sm:%s313]
                %327 = vst [vmem:[%s321 + $0x28] sm:%s313] %v326
                %v328 = vld [vmem:[%s320 + $0x12c] sm:%s313]
                %329 = vst [vmem:[%s321 + $0x3c] sm:%s313] %v328
                %v330 = vld [vmem:[%s320 + $0x190] sm:%s313]
                %331 = vst [vmem:[%s321 + $0x50] sm:%s313] %v330
                %v332 = vld [vmem:[%s320 + $0x1f4] sm:%s313]
                %333 = vst [vmem:[%s321 + $0x64] sm:%s313] %v332
                %v334 = vld [vmem:[%s320 + $0x258] sm:%s313]
                %335 = vst [vmem:[%s321 + $0x78] sm:%s313] %v334
                %v336 = vld [vmem:[%s320 + $0x2bc] sm:%s313]
                %337 = vst [vmem:[%s321 + $0x8c] sm:%s313] %v336
                %v338 = vld [vmem:[%s320 + $0x320] sm:%s313]
                %339 = vst [vmem:[%s321 + $0xa0] sm:%s313] %v338
                %v340 = vld [vmem:[%s320 + $0x384] sm:%s313]
                %341 = vst [vmem:[%s321 + $0xb4] sm:%s313] %v340
                %v342 = vld [vmem:[%s320 + $0x3e8] sm:%s313]
                %343 = vst [vmem:[%s321 + $0xc8] sm:%s313] %v342
                %v344 = vld [vmem:[%s320 + $0x44c] sm:%s313]
                %345 = vst [vmem:[%s321 + $0xdc] sm:%s313] %v344
                %v346 = vld [vmem:[%s320 + $0x4b0] sm:%s313]
                %347 = vst [vmem:[%s321 + $0xf0] sm:%s313] %v346
                %v348 = vld [vmem:[%s320 + $0x514] sm:%s313]
                %349 = vst [vmem:[%s321 + $0x104] sm:%s313] %v348
                %v350 = vld [vmem:[%s320 + $0x578] sm:%s313]
                %351 = vst [vmem:[%s321 + $0x118] sm:%s313] %v350
                %v352 = vld [vmem:[%s320 + $0x5dc] sm:%s313]
                %353 = vst [vmem:[%s321 + $0x12c] sm:%s313] %v352
                %v354 = vld [vmem:[%s320 + $0x640] sm:%s313]
                %355 = vst [vmem:[%s321 + $0x140] sm:%s313] %v354
                %v356 = vld [vmem:[%s320 + $0x6a4] sm:%s313]
                %357 = vst [vmem:[%s321 + $0x154] sm:%s313] %v356
                %v358 = vld [vmem:[%s320 + $0x708] sm:%s313]
                %359 = vst [vmem:[%s321 + $0x168] sm:%s313] %v358
                %v360 = vld [vmem:[%s320 + $0x76c] sm:%s313]
                %361 = vst [vmem:[%s321 + $0x17c] sm:%s313] %v360
                %v362 = vld [vmem:[%s320 + $0x7d0] sm:%s313]
                %363 = vst [vmem:[%s321 + $0x190] sm:%s313] %v362
                %v364 = vld [vmem:[%s320 + $0x834] sm:%s313]
                %365 = vst [vmem:[%s321 + $0x1a4] sm:%s313] %v364
                %v366 = vld [vmem:[%s320 + $0x898] sm:%s313]
                %367 = vst [vmem:[%s321 + $0x1b8] sm:%s313] %v366
                %v368 = vld [vmem:[%s320 + $0x8fc] sm:%s313]
                %369 = vst [vmem:[%s321 + $0x1cc] sm:%s313] %v368
                %v370 = vld [vmem:[%s320 + $0x960] sm:%s313]
                %371 = vst [vmem:[%s321 + $0x1e0] sm:%s313] %v370
                %v372 = vld [vmem:[%s320 + $0x9c4] sm:%s313]
                %373 = vst [vmem:[%s321 + $0x1f4] sm:%s313] %v372
                %v374 = vld [vmem:[%s320 + $0xa28] sm:%s313]
                %375 = vst [vmem:[%s321 + $0x208] sm:%s313] %v374
                %v376 = vld [vmem:[%s320 + $0xa8c] sm:%s313]
                %377 = vst [vmem:[%s321 + $0x21c] sm:%s313] %v376
                %v378 = vld [vmem:[%s320 + $0xaf0] sm:%s313]
                %379 = vst [vmem:[%s321 + $0x230] sm:%s313] %v378
                %v380 = vld [vmem:[%s320 + $0xb54] sm:%s313]
                %381 = vst [vmem:[%s321 + $0x244] sm:%s313] %v380
                %v382 = vld [vmem:[%s320 + $0xbb8] sm:%s313]
                %383 = vst [vmem:[%s321 + $0x258] sm:%s313] %v382
                %v384 = vld [vmem:[%s320 + $0xc1c] sm:%s313]
                %385 = vst [vmem:[%s321 + $0x26c] sm:%s313] %v384
              $region44: #{generator_resnet_forward.19} parent=31 // loop_footer
                %s319 = sadd.s32 1, %s315
              $region45: #{generator_resnet_forward.19} parent=31 // loop_footer_branch
                %314 = sbr.rel target = $region41
              $region46: #{generator_resnet_forward.19} parent=31 // loop_exit
                _
            $region32: #{generator_resnet_forward.19} parent=27 // pred_fallthru
              _
          $region28: #{generator_resnet_forward.19} parent=23 // pred_fallthru
            _
          %386 = vnop
        $region24: #{generator_resnet_forward.19} parent=19 // pred_fallthru
          _
        // Predicated region
        $region47: #{generator_resnet_forward.19} parent=19 // pred_check
          %p387 = pneg %p78
        $region48: #{generator_resnet_forward.19} parent=19 // pred_check_branch
          %389 = sbr.rel (%p387) target = $region50
        $region49: #{generator_resnet_forward.19} parent=19 // pred_region
          %s390 = smul.u32 80, %s18
          %p391 = scmp.lt.s32.totalorder %s390, 399
          %s392 = scalar_select %p391, %s390, 399
          %s393 = smul.addr %s392, 4
          %s394 = scalar_lea.vmem %s1, %s393
          %s395 = smul.u32 80, %s18
        $region50: #{generator_resnet_forward.19} parent=19 // pred_fallthru
          _
      $region20: #{generator_resnet_forward.19} parent=5 // pred_fallthru
        _
      %p396 = scmp.le.s32.totalorder 1, %s9
      %p397 = scmp.lt.s32.totalorder %s9, 11
      %p398 = pnand %p396, %p397
      %p399 = pneg %p398
      // Predicated region
      $region51: #{generator_resnet_forward.19} parent=5 // pred_check
        _
      $region52: #{generator_resnet_forward.19} parent=5 // pred_check_branch
        %401 = sbr.rel (%p398) target = $region54
      $region53: #{generator_resnet_forward.19} parent=5 // pred_region
        %s402 = ssub.s32 %s9, 1
        %s403 = sand.u32 %s45, 1
        %s404 = sand.u32 %s45, 1
        %s405 = smul.addr %s404, 640
        %s406 = scalar_lea.vmem [#allocation3], %s405
        // Predicated region
        $region55: #{generator_resnet_forward.19} parent=53 // pred_check
          %p407 = pneg %p58
        $region56: #{generator_resnet_forward.19} parent=53 // pred_check_branch
          %409 = sbr.rel (%p407) target = $region58
        $region57: #{generator_resnet_forward.19} parent=53 // pred_region
          _
        $region58: #{generator_resnet_forward.19} parent=53 // pred_fallthru
          _
        %s410 = sand.u32 %s45, 1
        %s411 = sand.u32 %s45, 1
        %s412 = smul.addr %s411, 640
        %s413 = scalar_lea.vmem [#allocation3], %s412
        %p414 = pneg %p58
        %p415 = pneg %p55
        %s416 = smul.u32 80, %s21
        %p417 = scmp.lt.s32.totalorder %s416, 399
        %s418 = scalar_select %p417, %s416, 399
        %s419 = smul.addr %s418, 4
        %s420 = scalar_lea.vmem %s1, %s419
        %p421 = pneg %p84
        %p422 = pneg %p81
        %p423 = pneg %p105
        %p424 = pneg %p102
        %p425 = pneg %p133
        %p426 = pneg %p130
        %s427 = smul.u32 32, %s20
        %p428 = scmp.lt.s32.totalorder %s19, 1
        %s429 = scalar_select %p428, %s19, 1
        %p430 = scmp.lt.s32.totalorder %s427, 31
        %s431 = scalar_select %p430, %s427, 31
        %s432 = smul.addr %s429, 32
        %s433 = sadd.s32 %s431, %s432
        %s434 = smul.addr %s433, 8
        %s435 = scalar_lea.vmem %s3, %s434
        %s436 = smul.u32 32, %s20
        %s437 = smul.u32 5, %s21
        %s438 = smul.u32 80, %s21
        %p439 = scmp.lt.s32.totalorder %s438, 399
        %s440 = scalar_select %p439, %s438, 399
        %s441 = smul.addr %s440, 4
        %s442 = scalar_lea.vmem %s1, %s441
        %s443 = smul.u32 80, %s21
        %s444 = smul.u32 32, %s20
        %p445 = scmp.lt.s32.totalorder %s19, 1
        %s446 = scalar_select %p445, %s19, 1
        %p447 = scmp.lt.s32.totalorder %s444, 31
        %s448 = scalar_select %p447, %s444, 31
        %s449 = smul.addr %s446, 32
        %s450 = sadd.s32 %s448, %s449
        %s451 = smul.addr %s450, 8
        %s452 = scalar_lea.vmem %s3, %s451
        %s453 = smul.u32 32, %s20
        %p454 = scmp.eq.s32.totalorder %s21, 0
        // Predicated region
        $region59: #{generator_resnet_forward.19} parent=53 // pred_check
          %p455 = pneg %p454
        $region60: #{generator_resnet_forward.19} parent=53 // pred_check_branch
          %457 = sbr.rel (%p455) target = $region62
        $region61: #{generator_resnet_forward.19} parent=53 // pred_region
          %458 = vst [vmem:[#allocation2] sm:$0xff] 0.0
          %459 = vst [vmem:[#allocation2 + $0x8] sm:$0xff] 0.0
          %460 = vst [vmem:[#allocation2 + $0x10] sm:$0xff] 0.0
          %461 = vst [vmem:[#allocation2 + $0x18] sm:$0xff] 0.0
          %462 = vst [vmem:[#allocation2 + $0x20] sm:$0xff] 0.0
          %463 = vst [vmem:[#allocation2 + $0x28] sm:$0xff] 0.0
          %464 = vst [vmem:[#allocation2 + $0x30] sm:$0xff] 0.0
          %465 = vst [vmem:[#allocation2 + $0x38] sm:$0xff] 0.0
          %466 = vst [vmem:[#allocation2 + $0x40] sm:$0xff] 0.0
          %467 = vst [vmem:[#allocation2 + $0x48] sm:$0xff] 0.0
          %468 = vst [vmem:[#allocation2 + $0x50] sm:$0xff] 0.0
          %469 = vst [vmem:[#allocation2 + $0x58] sm:$0xff] 0.0
          %470 = vst [vmem:[#allocation2 + $0x60] sm:$0xff] 0.0
          %471 = vst [vmem:[#allocation2 + $0x68] sm:$0xff] 0.0
          %472 = vst [vmem:[#allocation2 + $0x70] sm:$0xff] 0.0
          %473 = vst [vmem:[#allocation2 + $0x78] sm:$0xff] 0.0
          %474 = vst [vmem:[#allocation2 + $0x80] sm:$0xff] 0.0
          %475 = vst [vmem:[#allocation2 + $0x88] sm:$0xff] 0.0
          %476 = vst [vmem:[#allocation2 + $0x90] sm:$0xff] 0.0
          %477 = vst [vmem:[#allocation2 + $0x98] sm:$0xff] 0.0
          %478 = vst [vmem:[#allocation2 + $0xa0] sm:$0xff] 0.0
          %479 = vst [vmem:[#allocation2 + $0xa8] sm:$0xff] 0.0
          %480 = vst [vmem:[#allocation2 + $0xb0] sm:$0xff] 0.0
          %481 = vst [vmem:[#allocation2 + $0xb8] sm:$0xff] 0.0
          %482 = vst [vmem:[#allocation2 + $0xc0] sm:$0xff] 0.0
          %483 = vst [vmem:[#allocation2 + $0xc8] sm:$0xff] 0.0
          %484 = vst [vmem:[#allocation2 + $0xd0] sm:$0xff] 0.0
          %485 = vst [vmem:[#allocation2 + $0xd8] sm:$0xff] 0.0
          %486 = vst [vmem:[#allocation2 + $0xe0] sm:$0xff] 0.0
          %487 = vst [vmem:[#allocation2 + $0xe8] sm:$0xff] 0.0
          %488 = vst [vmem:[#allocation2 + $0xf0] sm:$0xff] 0.0
          %489 = vst [vmem:[#allocation2 + $0xf8] sm:$0xff] 0.0
        $region62: #{generator_resnet_forward.19} parent=53 // pred_fallthru
          _
        %v490 = vld [vmem:[#allocation2] sm:$0xff]
        %v491 = vld [vmem:[#allocation2 + $0x8] sm:$0xff]
        %v492 = vld [vmem:[#allocation2 + $0x10] sm:$0xff]
        %v493 = vld [vmem:[#allocation2 + $0x18] sm:$0xff]
        %v494 = vld [vmem:[#allocation2 + $0x20] sm:$0xff]
        %v495 = vld [vmem:[#allocation2 + $0x28] sm:$0xff]
        %v496 = vld [vmem:[#allocation2 + $0x30] sm:$0xff]
        %v497 = vld [vmem:[#allocation2 + $0x38] sm:$0xff]
        %v498 = vld [vmem:[#allocation2 + $0x40] sm:$0xff]
        %v499 = vld [vmem:[#allocation2 + $0x48] sm:$0xff]
        %v500 = vld [vmem:[#allocation2 + $0x50] sm:$0xff]
        %v501 = vld [vmem:[#allocation2 + $0x58] sm:$0xff]
        %v502 = vld [vmem:[#allocation2 + $0x60] sm:$0xff]
        %v503 = vld [vmem:[#allocation2 + $0x68] sm:$0xff]
        %v504 = vld [vmem:[#allocation2 + $0x70] sm:$0xff]
        %v505 = vld [vmem:[#allocation2 + $0x78] sm:$0xff]
        %v506 = vld [vmem:[#allocation2 + $0x80] sm:$0xff]
        %v507 = vld [vmem:[#allocation2 + $0x88] sm:$0xff]
        %v508 = vld [vmem:[#allocation2 + $0x90] sm:$0xff]
        %v509 = vld [vmem:[#allocation2 + $0x98] sm:$0xff]
        %v510 = vld [vmem:[#allocation2 + $0xa0] sm:$0xff]
        %v511 = vld [vmem:[#allocation2 + $0xa8] sm:$0xff]
        %v512 = vld [vmem:[#allocation2 + $0xb0] sm:$0xff]
        %v513 = vld [vmem:[#allocation2 + $0xb8] sm:$0xff]
        %v514 = vld [vmem:[#allocation2 + $0xc0] sm:$0xff]
        %v515 = vld [vmem:[#allocation2 + $0xc8] sm:$0xff]
        %v516 = vld [vmem:[#allocation2 + $0xd0] sm:$0xff]
        %v517 = vld [vmem:[#allocation2 + $0xd8] sm:$0xff]
        %v518 = vld [vmem:[#allocation2 + $0xe0] sm:$0xff]
        %v519 = vld [vmem:[#allocation2 + $0xe8] sm:$0xff]
        %v520 = vld [vmem:[#allocation2 + $0xf0] sm:$0xff]
        %v521 = vld [vmem:[#allocation2 + $0xf8] sm:$0xff]
        %v522 = vld [vmem:[%s406] sm:$0xff]
        %v523 = vld [vmem:[%s406 + $0x8] sm:$0xff]
        %v524 = vld [vmem:[%s406 + $0x10] sm:$0xf]
        %v525 = vld [vmem:[%s406 + $0x14] sm:$0xff]
        %v526 = vld [vmem:[%s406 + $0x1c] sm:$0xff]
        %v527 = vld [vmem:[%s406 + $0x24] sm:$0xf]
        %v528 = vld [vmem:[%s406 + $0x28] sm:$0xff]
        %v529 = vld [vmem:[%s406 + $0x30] sm:$0xff]
        %v530 = vld [vmem:[%s406 + $0x38] sm:$0xf]
        %v531 = vld [vmem:[%s406 + $0x3c] sm:$0xff]
        %v532 = vld [vmem:[%s406 + $0x44] sm:$0xff]
        %v533 = vld [vmem:[%s406 + $0x4c] sm:$0xf]
        %v534 = vld [vmem:[%s406 + $0x50] sm:$0xff]
        %v535 = vld [vmem:[%s406 + $0x58] sm:$0xff]
        %v536 = vld [vmem:[%s406 + $0x60] sm:$0xf]
        %v537 = vld [vmem:[%s406 + $0x64] sm:$0xff]
        %v538 = vld [vmem:[%s406 + $0x6c] sm:$0xff]
        %v539 = vld [vmem:[%s406 + $0x74] sm:$0xf]
        %v540 = vld [vmem:[%s406 + $0x78] sm:$0xff]
        %v541 = vld [vmem:[%s406 + $0x80] sm:$0xff]
        %v542 = vld [vmem:[%s406 + $0x88] sm:$0xf]
        %v543 = vld [vmem:[%s406 + $0x8c] sm:$0xff]
        %v544 = vld [vmem:[%s406 + $0x94] sm:$0xff]
        %v545 = vld [vmem:[%s406 + $0x9c] sm:$0xf]
        %v546 = vld [vmem:[%s406 + $0xa0] sm:$0xff]
        %v547 = vld [vmem:[%s406 + $0xa8] sm:$0xff]
        %v548 = vld [vmem:[%s406 + $0xb0] sm:$0xf]
        %v549 = vld [vmem:[%s406 + $0xb4] sm:$0xff]
        %v550 = vld [vmem:[%s406 + $0xbc] sm:$0xff]
        %v551 = vld [vmem:[%s406 + $0xc4] sm:$0xf]
        %v552 = vld [vmem:[%s406 + $0xc8] sm:$0xff]
        %v553 = vld [vmem:[%s406 + $0xd0] sm:$0xff]
        %v554 = vld [vmem:[%s406 + $0xd8] sm:$0xf]
        %v555 = vld [vmem:[%s406 + $0xdc] sm:$0xff]
        %v556 = vld [vmem:[%s406 + $0xe4] sm:$0xff]
        %v557 = vld [vmem:[%s406 + $0xec] sm:$0xf]
        %v558 = vld [vmem:[%s406 + $0xf0] sm:$0xff]
        %v559 = vld [vmem:[%s406 + $0xf8] sm:$0xff]
        %v560 = vld [vmem:[%s406 + $0x100] sm:$0xf]
        %v561 = vld [vmem:[%s406 + $0x104] sm:$0xff]
        %v562 = vld [vmem:[%s406 + $0x10c] sm:$0xff]
        %v563 = vld [vmem:[%s406 + $0x114] sm:$0xf]
        %v564 = vld [vmem:[%s406 + $0x118] sm:$0xff]
        %v565 = vld [vmem:[%s406 + $0x120] sm:$0xff]
        %v566 = vld [vmem:[%s406 + $0x128] sm:$0xf]
        %v567 = vld [vmem:[%s406 + $0x12c] sm:$0xff]
        %v568 = vld [vmem:[%s406 + $0x134] sm:$0xff]
        %v569 = vld [vmem:[%s406 + $0x13c] sm:$0xf]
        %v570 = vld [vmem:[%s406 + $0x140] sm:$0xff]
        %v571 = vld [vmem:[%s406 + $0x148] sm:$0xff]
        %v572 = vld [vmem:[%s406 + $0x150] sm:$0xf]
        %v573 = vld [vmem:[%s406 + $0x154] sm:$0xff]
        %v574 = vld [vmem:[%s406 + $0x15c] sm:$0xff]
        %v575 = vld [vmem:[%s406 + $0x164] sm:$0xf]
        %v576 = vld [vmem:[%s406 + $0x168] sm:$0xff]
        %v577 = vld [vmem:[%s406 + $0x170] sm:$0xff]
        %v578 = vld [vmem:[%s406 + $0x178] sm:$0xf]
        %v579 = vld [vmem:[%s406 + $0x17c] sm:$0xff]
        %v580 = vld [vmem:[%s406 + $0x184] sm:$0xff]
        %v581 = vld [vmem:[%s406 + $0x18c] sm:$0xf]
        %v582 = vld [vmem:[%s406 + $0x190] sm:$0xff]
        %v583 = vld [vmem:[%s406 + $0x198] sm:$0xff]
        %v584 = vld [vmem:[%s406 + $0x1a0] sm:$0xf]
        %v585 = vld [vmem:[%s406 + $0x1a4] sm:$0xff]
        %v586 = vld [vmem:[%s406 + $0x1ac] sm:$0xff]
        %v587 = vld [vmem:[%s406 + $0x1b4] sm:$0xf]
        %v588 = vld [vmem:[%s406 + $0x1b8] sm:$0xff]
        %v589 = vld [vmem:[%s406 + $0x1c0] sm:$0xff]
        %v590 = vld [vmem:[%s406 + $0x1c8] sm:$0xf]
        %v591 = vld [vmem:[%s406 + $0x1cc] sm:$0xff]
        %v592 = vld [vmem:[%s406 + $0x1d4] sm:$0xff]
        %v593 = vld [vmem:[%s406 + $0x1dc] sm:$0xf]
        %v594 = vld [vmem:[%s406 + $0x1e0] sm:$0xff]
        %v595 = vld [vmem:[%s406 + $0x1e8] sm:$0xff]
        %v596 = vld [vmem:[%s406 + $0x1f0] sm:$0xf]
        %v597 = vld [vmem:[%s406 + $0x1f4] sm:$0xff]
        %v598 = vld [vmem:[%s406 + $0x1fc] sm:$0xff]
        %v599 = vld [vmem:[%s406 + $0x204] sm:$0xf]
        %v600 = vld [vmem:[%s406 + $0x208] sm:$0xff]
        %v601 = vld [vmem:[%s406 + $0x210] sm:$0xff]
        %v602 = vld [vmem:[%s406 + $0x218] sm:$0xf]
        %v603 = vld [vmem:[%s406 + $0x21c] sm:$0xff]
        %v604 = vld [vmem:[%s406 + $0x224] sm:$0xff]
        %v605 = vld [vmem:[%s406 + $0x22c] sm:$0xf]
        %v606 = vld [vmem:[%s406 + $0x230] sm:$0xff]
        %v607 = vld [vmem:[%s406 + $0x238] sm:$0xff]
        %v608 = vld [vmem:[%s406 + $0x240] sm:$0xf]
        %v609 = vld [vmem:[%s406 + $0x244] sm:$0xff]
        %v610 = vld [vmem:[%s406 + $0x24c] sm:$0xff]
        %v611 = vld [vmem:[%s406 + $0x254] sm:$0xf]
        %v612 = vld [vmem:[%s406 + $0x258] sm:$0xff]
        %v613 = vld [vmem:[%s406 + $0x260] sm:$0xff]
        %v614 = vld [vmem:[%s406 + $0x268] sm:$0xf]
        %v615 = vld [vmem:[%s406 + $0x26c] sm:$0xff]
        %v616 = vld [vmem:[%s406 + $0x274] sm:$0xff]
        %v617 = vld [vmem:[%s406 + $0x27c] sm:$0xf]
        %v618 = vld [vmem:[%s442] sm:$0xf]
        %v619 = vld [vmem:[%s442 + $0x4] sm:$0xf]
        %v620 = vld [vmem:[%s442 + $0x8] sm:$0xf]
        %v621 = vld [vmem:[%s442 + $0xc] sm:$0xf]
        %v622 = vld [vmem:[%s442 + $0x10] sm:$0xf]
        %v623 = vld [vmem:[%s442 + $0x14] sm:$0xf]
        %v624 = vld [vmem:[%s442 + $0x18] sm:$0xf]
        %v625 = vld [vmem:[%s442 + $0x1c] sm:$0xf]
        %v626 = vld [vmem:[%s442 + $0x20] sm:$0xf]
        %v627 = vld [vmem:[%s442 + $0x24] sm:$0xf]
        %v628 = vld [vmem:[%s442 + $0x28] sm:$0xf]
        %v629 = vld [vmem:[%s442 + $0x2c] sm:$0xf]
        %v630 = vld [vmem:[%s442 + $0x30] sm:$0xf]
        %v631 = vld [vmem:[%s442 + $0x34] sm:$0xf]
        %v632 = vld [vmem:[%s442 + $0x38] sm:$0xf]
        %v633 = vld [vmem:[%s442 + $0x3c] sm:$0xf]
        %v634 = vld [vmem:[%s442 + $0x40] sm:$0xf]
        %v635 = vld [vmem:[%s442 + $0x44] sm:$0xf]
        %v636 = vld [vmem:[%s442 + $0x48] sm:$0xf]
        %v637 = vld [vmem:[%s442 + $0x4c] sm:$0xf]
        %v638 = vld [vmem:[%s442 + $0x50] sm:$0xf]
        %v639 = vld [vmem:[%s442 + $0x54] sm:$0xf]
        %v640 = vld [vmem:[%s442 + $0x58] sm:$0xf]
        %v641 = vld [vmem:[%s442 + $0x5c] sm:$0xf]
        %v642 = vld [vmem:[%s442 + $0x60] sm:$0xf]
        %v643 = vld [vmem:[%s442 + $0x64] sm:$0xf]
        %v644 = vld [vmem:[%s442 + $0x68] sm:$0xf]
        %v645 = vld [vmem:[%s442 + $0x6c] sm:$0xf]
        %v646 = vld [vmem:[%s442 + $0x70] sm:$0xf]
        %v647 = vld [vmem:[%s442 + $0x74] sm:$0xf]
        %v648 = vld [vmem:[%s442 + $0x78] sm:$0xf]
        %v649 = vld [vmem:[%s442 + $0x7c] sm:$0xf]
        %v650 = vld [vmem:[%s442 + $0x80] sm:$0xf]
        %v651 = vld [vmem:[%s442 + $0x84] sm:$0xf]
        %v652 = vld [vmem:[%s442 + $0x88] sm:$0xf]
        %v653 = vld [vmem:[%s442 + $0x8c] sm:$0xf]
        %v654 = vld [vmem:[%s442 + $0x90] sm:$0xf]
        %v655 = vld [vmem:[%s442 + $0x94] sm:$0xf]
        %v656 = vld [vmem:[%s442 + $0x98] sm:$0xf]
        %v657 = vld [vmem:[%s442 + $0x9c] sm:$0xf]
        %v658 = vld [vmem:[%s442 + $0xa0] sm:$0xf]
        %v659 = vld [vmem:[%s442 + $0xa4] sm:$0xf]
        %v660 = vld [vmem:[%s442 + $0xa8] sm:$0xf]
        %v661 = vld [vmem:[%s442 + $0xac] sm:$0xf]
        %v662 = vld [vmem:[%s442 + $0xb0] sm:$0xf]
        %v663 = vld [vmem:[%s442 + $0xb4] sm:$0xf]
        %v664 = vld [vmem:[%s442 + $0xb8] sm:$0xf]
        %v665 = vld [vmem:[%s442 + $0xbc] sm:$0xf]
        %v666 = vld [vmem:[%s442 + $0xc0] sm:$0xf]
        %v667 = vld [vmem:[%s442 + $0xc4] sm:$0xf]
        %v668 = vld [vmem:[%s442 + $0xc8] sm:$0xf]
        %v669 = vld [vmem:[%s442 + $0xcc] sm:$0xf]
        %v670 = vld [vmem:[%s442 + $0xd0] sm:$0xf]
        %v671 = vld [vmem:[%s442 + $0xd4] sm:$0xf]
        %v672 = vld [vmem:[%s442 + $0xd8] sm:$0xf]
        %v673 = vld [vmem:[%s442 + $0xdc] sm:$0xf]
        %v674 = vld [vmem:[%s442 + $0xe0] sm:$0xf]
        %v675 = vld [vmem:[%s442 + $0xe4] sm:$0xf]
        %v676 = vld [vmem:[%s442 + $0xe8] sm:$0xf]
        %v677 = vld [vmem:[%s442 + $0xec] sm:$0xf]
        %v678 = vld [vmem:[%s442 + $0xf0] sm:$0xf]
        %v679 = vld [vmem:[%s442 + $0xf4] sm:$0xf]
        %v680 = vld [vmem:[%s442 + $0xf8] sm:$0xf]
        %v681 = vld [vmem:[%s442 + $0xfc] sm:$0xf]
        %v682 = vld [vmem:[%s442 + $0x100] sm:$0xf]
        %v683 = vld [vmem:[%s442 + $0x104] sm:$0xf]
        %v684 = vld [vmem:[%s442 + $0x108] sm:$0xf]
        %v685 = vld [vmem:[%s442 + $0x10c] sm:$0xf]
        %v686 = vld [vmem:[%s442 + $0x110] sm:$0xf]
        %v687 = vld [vmem:[%s442 + $0x114] sm:$0xf]
        %v688 = vld [vmem:[%s442 + $0x118] sm:$0xf]
        %v689 = vld [vmem:[%s442 + $0x11c] sm:$0xf]
        %v690 = vld [vmem:[%s442 + $0x120] sm:$0xf]
        %v691 = vld [vmem:[%s442 + $0x124] sm:$0xf]
        %v692 = vld [vmem:[%s442 + $0x128] sm:$0xf]
        %v693 = vld [vmem:[%s442 + $0x12c] sm:$0xf]
        %v694 = vld [vmem:[%s442 + $0x130] sm:$0xf]
        %v695 = vld [vmem:[%s442 + $0x134] sm:$0xf]
        %v696 = vld [vmem:[%s442 + $0x138] sm:$0xf]
        %v697 = vld [vmem:[%s442 + $0x13c] sm:$0xf]
        %v794 = vunpack.c.l.b16 %v522
        %v795 = vunpack.c.h.b16 %v522
        %v796 = vunpack.c.l.b16 %v523
        %v797 = vunpack.c.h.b16 %v523
        %v798 = vunpack.c.l.b16 %v524
        %v799 = vunpack.c.l.b16 %v525
        %v800 = vunpack.c.h.b16 %v525
        %v801 = vunpack.c.l.b16 %v526
        %v802 = vunpack.c.h.b16 %v526
        %v803 = vunpack.c.l.b16 %v527
        %v804 = vunpack.c.l.b16 %v528
        %v805 = vunpack.c.h.b16 %v528
        %v806 = vunpack.c.l.b16 %v529
        %v807 = vunpack.c.h.b16 %v529
        %v808 = vunpack.c.l.b16 %v530
        %v809 = vunpack.c.l.b16 %v531
        %v810 = vunpack.c.h.b16 %v531
        %v811 = vunpack.c.l.b16 %v532
        %v812 = vunpack.c.h.b16 %v532
        %v813 = vunpack.c.l.b16 %v533
        %v814 = vunpack.c.l.b16 %v534
        %v815 = vunpack.c.h.b16 %v534
        %v816 = vunpack.c.l.b16 %v535
        %v817 = vunpack.c.h.b16 %v535
        %v818 = vunpack.c.l.b16 %v536
        %v819 = vunpack.c.l.b16 %v537
        %v820 = vunpack.c.h.b16 %v537
        %v821 = vunpack.c.l.b16 %v538
        %v822 = vunpack.c.h.b16 %v538
        %v823 = vunpack.c.l.b16 %v539
        %v824 = vunpack.c.l.b16 %v540
        %v825 = vunpack.c.h.b16 %v540
        %v826 = vunpack.c.l.b16 %v541
        %v827 = vunpack.c.h.b16 %v541
        %v828 = vunpack.c.l.b16 %v542
        %v829 = vunpack.c.l.b16 %v543
        %v830 = vunpack.c.h.b16 %v543
        %v831 = vunpack.c.l.b16 %v544
        %v832 = vunpack.c.h.b16 %v544
        %v833 = vunpack.c.l.b16 %v545
        %v834 = vunpack.c.l.b16 %v546
        %v835 = vunpack.c.h.b16 %v546
        %v836 = vunpack.c.l.b16 %v547
        %v837 = vunpack.c.h.b16 %v547
        %v838 = vunpack.c.l.b16 %v548
        %v839 = vunpack.c.l.b16 %v549
        %v840 = vunpack.c.h.b16 %v549
        %v841 = vunpack.c.l.b16 %v550
        %v842 = vunpack.c.h.b16 %v550
        %v843 = vunpack.c.l.b16 %v551
        %v844 = vunpack.c.l.b16 %v552
        %v845 = vunpack.c.h.b16 %v552
        %v846 = vunpack.c.l.b16 %v553
        %v847 = vunpack.c.h.b16 %v553
        %v848 = vunpack.c.l.b16 %v554
        %v849 = vunpack.c.l.b16 %v555
        %v850 = vunpack.c.h.b16 %v555
        %v851 = vunpack.c.l.b16 %v556
        %v852 = vunpack.c.h.b16 %v556
        %v853 = vunpack.c.l.b16 %v557
        %v854 = vunpack.c.l.b16 %v558
        %v855 = vunpack.c.h.b16 %v558
        %v856 = vunpack.c.l.b16 %v559
        %v857 = vunpack.c.h.b16 %v559
        %v858 = vunpack.c.l.b16 %v560
        %v859 = vunpack.c.l.b16 %v561
        %v860 = vunpack.c.h.b16 %v561
        %v861 = vunpack.c.l.b16 %v562
        %v862 = vunpack.c.h.b16 %v562
        %v863 = vunpack.c.l.b16 %v563
        %v864 = vunpack.c.l.b16 %v564
        %v865 = vunpack.c.h.b16 %v564
        %v866 = vunpack.c.l.b16 %v565
        %v867 = vunpack.c.h.b16 %v565
        %v868 = vunpack.c.l.b16 %v566
        %v869 = vunpack.c.l.b16 %v567
        %v870 = vunpack.c.h.b16 %v567
        %v871 = vunpack.c.l.b16 %v568
        %v872 = vunpack.c.h.b16 %v568
        %v873 = vunpack.c.l.b16 %v569
        %v874 = vunpack.c.l.b16 %v570
        %v875 = vunpack.c.h.b16 %v570
        %v876 = vunpack.c.l.b16 %v571
        %v877 = vunpack.c.h.b16 %v571
        %v878 = vunpack.c.l.b16 %v572
        %v879 = vunpack.c.l.b16 %v573
        %v880 = vunpack.c.h.b16 %v573
        %v881 = vunpack.c.l.b16 %v574
        %v882 = vunpack.c.h.b16 %v574
        %v883 = vunpack.c.l.b16 %v575
        %v884 = vunpack.c.l.b16 %v576
        %v885 = vunpack.c.h.b16 %v576
        %v886 = vunpack.c.l.b16 %v577
        %v887 = vunpack.c.h.b16 %v577
        %v888 = vunpack.c.l.b16 %v578
        %v889 = vunpack.c.l.b16 %v579
        %v890 = vunpack.c.h.b16 %v579
        %v891 = vunpack.c.l.b16 %v580
        %v892 = vunpack.c.h.b16 %v580
        %v893 = vunpack.c.l.b16 %v581
        %v894 = vunpack.c.l.b16 %v582
        %v895 = vunpack.c.h.b16 %v582
        %v896 = vunpack.c.l.b16 %v583
        %v897 = vunpack.c.h.b16 %v583
        %v898 = vunpack.c.l.b16 %v584
        %v899 = vunpack.c.l.b16 %v585
        %v900 = vunpack.c.h.b16 %v585
        %v901 = vunpack.c.l.b16 %v586
        %v902 = vunpack.c.h.b16 %v586
        %v903 = vunpack.c.l.b16 %v587
        %v904 = vunpack.c.l.b16 %v588
        %v905 = vunpack.c.h.b16 %v588
        %v906 = vunpack.c.l.b16 %v589
        %v907 = vunpack.c.h.b16 %v589
        %v908 = vunpack.c.l.b16 %v590
        %v909 = vunpack.c.l.b16 %v591
        %v910 = vunpack.c.h.b16 %v591
        %v911 = vunpack.c.l.b16 %v592
        %v912 = vunpack.c.h.b16 %v592
        %v913 = vunpack.c.l.b16 %v593
        %v914 = vunpack.c.l.b16 %v594
        %v915 = vunpack.c.h.b16 %v594
        %v916 = vunpack.c.l.b16 %v595
        %v917 = vunpack.c.h.b16 %v595
        %v918 = vunpack.c.l.b16 %v596
        %v919 = vunpack.c.l.b16 %v597
        %v920 = vunpack.c.h.b16 %v597
        %v921 = vunpack.c.l.b16 %v598
        %v922 = vunpack.c.h.b16 %v598
        %v923 = vunpack.c.l.b16 %v599
        %v924 = vunpack.c.l.b16 %v600
        %v925 = vunpack.c.h.b16 %v600
        %v926 = vunpack.c.l.b16 %v601
        %v927 = vunpack.c.h.b16 %v601
        %v928 = vunpack.c.l.b16 %v602
        %v929 = vunpack.c.l.b16 %v603
        %v930 = vunpack.c.h.b16 %v603
        %v931 = vunpack.c.l.b16 %v604
        %v932 = vunpack.c.h.b16 %v604
        %v933 = vunpack.c.l.b16 %v605
        %v934 = vunpack.c.l.b16 %v606
        %v935 = vunpack.c.h.b16 %v606
        %v936 = vunpack.c.l.b16 %v607
        %v937 = vunpack.c.h.b16 %v607
        %v938 = vunpack.c.l.b16 %v608
        %v939 = vunpack.c.l.b16 %v609
        %v940 = vunpack.c.h.b16 %v609
        %v941 = vunpack.c.l.b16 %v610
        %v942 = vunpack.c.h.b16 %v610
        %v943 = vunpack.c.l.b16 %v611
        %v944 = vunpack.c.l.b16 %v612
        %v945 = vunpack.c.h.b16 %v612
        %v946 = vunpack.c.l.b16 %v613
        %v947 = vunpack.c.h.b16 %v613
        %v948 = vunpack.c.l.b16 %v614
        %v949 = vunpack.c.l.b16 %v615
        %v950 = vunpack.c.h.b16 %v615
        %v951 = vunpack.c.l.b16 %v616
        %v952 = vunpack.c.h.b16 %v616
        %v953 = vunpack.c.l.b16 %v617
        %v954 = vpack.c.b16 %v799, %v794
        %v955 = vpack.c.b16 %v800, %v795
        %v956 = vpack.c.b16 %v801, %v796
        %v957 = vpack.c.b16 %v802, %v797
        %v958 = vpack.c.b16 %v803, %v798
        %v959 = vpack.c.b16 %v809, %v804
        %v960 = vpack.c.b16 %v810, %v805
        %v961 = vpack.c.b16 %v811, %v806
        %v962 = vpack.c.b16 %v812, %v807
        %v963 = vpack.c.b16 %v813, %v808
        %v964 = vpack.c.b16 %v819, %v814
        %v965 = vpack.c.b16 %v820, %v815
        %v966 = vpack.c.b16 %v821, %v816
        %v967 = vpack.c.b16 %v822, %v817
        %v968 = vpack.c.b16 %v823, %v818
        %v969 = vpack.c.b16 %v829, %v824
        %v970 = vpack.c.b16 %v830, %v825
        %v971 = vpack.c.b16 %v831, %v826
        %v972 = vpack.c.b16 %v832, %v827
        %v973 = vpack.c.b16 %v833, %v828
        %v974 = vpack.c.b16 %v839, %v834
        %v975 = vpack.c.b16 %v840, %v835
        %v976 = vpack.c.b16 %v841, %v836
        %v977 = vpack.c.b16 %v842, %v837
        %v978 = vpack.c.b16 %v843, %v838
        %v979 = vpack.c.b16 %v849, %v844
        %v980 = vpack.c.b16 %v850, %v845
        %v981 = vpack.c.b16 %v851, %v846
        %v982 = vpack.c.b16 %v852, %v847
        %v983 = vpack.c.b16 %v853, %v848
        %v984 = vpack.c.b16 %v859, %v854
        %v985 = vpack.c.b16 %v860, %v855
        %v986 = vpack.c.b16 %v861, %v856
        %v987 = vpack.c.b16 %v862, %v857
        %v988 = vpack.c.b16 %v863, %v858
        %v989 = vpack.c.b16 %v869, %v864
        %v990 = vpack.c.b16 %v870, %v865
        %v991 = vpack.c.b16 %v871, %v866
        %v992 = vpack.c.b16 %v872, %v867
        %v993 = vpack.c.b16 %v873, %v868
        %v994 = vpack.c.b16 %v879, %v874
        %v995 = vpack.c.b16 %v880, %v875
        %v996 = vpack.c.b16 %v881, %v876
        %v997 = vpack.c.b16 %v882, %v877
        %v998 = vpack.c.b16 %v883, %v878
        %v999 = vpack.c.b16 %v889, %v884
        %v1000 = vpack.c.b16 %v890, %v885
        %v1001 = vpack.c.b16 %v891, %v886
        %v1002 = vpack.c.b16 %v892, %v887
        %v1003 = vpack.c.b16 %v893, %v888
        %v1004 = vpack.c.b16 %v899, %v894
        %v1005 = vpack.c.b16 %v900, %v895
        %v1006 = vpack.c.b16 %v901, %v896
        %v1007 = vpack.c.b16 %v902, %v897
        %v1008 = vpack.c.b16 %v903, %v898
        %v1009 = vpack.c.b16 %v909, %v904
        %v1010 = vpack.c.b16 %v910, %v905
        %v1011 = vpack.c.b16 %v911, %v906
        %v1012 = vpack.c.b16 %v912, %v907
        %v1013 = vpack.c.b16 %v913, %v908
        %v1014 = vpack.c.b16 %v919, %v914
        %v1015 = vpack.c.b16 %v920, %v915
        %v1016 = vpack.c.b16 %v921, %v916
        %v1017 = vpack.c.b16 %v922, %v917
        %v1018 = vpack.c.b16 %v923, %v918
        %v1019 = vpack.c.b16 %v929, %v924
        %v1020 = vpack.c.b16 %v930, %v925
        %v1021 = vpack.c.b16 %v931, %v926
        %v1022 = vpack.c.b16 %v932, %v927
        %v1023 = vpack.c.b16 %v933, %v928
        %v1024 = vpack.c.b16 %v939, %v934
        %v1025 = vpack.c.b16 %v940, %v935
        %v1026 = vpack.c.b16 %v941, %v936
        %v1027 = vpack.c.b16 %v942, %v937
        %v1028 = vpack.c.b16 %v943, %v938
        %v1029 = vpack.c.b16 %v949, %v944
        %v1030 = vpack.c.b16 %v950, %v945
        %v1031 = vpack.c.b16 %v951, %v946
        %v1032 = vpack.c.b16 %v952, %v947
        %v1033 = vpack.c.b16 %v953, %v948
        %v1194 = vunpack.c.l.b16 %v618
        %v1195 = vunpack.c.l.b16 %v619
        %v1196 = vunpack.c.l.b16 %v620
        %v1197 = vunpack.c.l.b16 %v621
        %v1198 = vunpack.c.l.b16 %v622
        %v1199 = vunpack.c.l.b16 %v623
        %v1200 = vunpack.c.l.b16 %v624
        %v1201 = vunpack.c.l.b16 %v625
        %v1202 = vunpack.c.l.b16 %v626
        %v1203 = vunpack.c.l.b16 %v627
        %v1204 = vunpack.c.l.b16 %v628
        %v1205 = vunpack.c.l.b16 %v629
        %v1206 = vunpack.c.l.b16 %v630
        %v1207 = vunpack.c.l.b16 %v631
        %v1208 = vunpack.c.l.b16 %v632
        %v1209 = vunpack.c.l.b16 %v633
        %v1210 = vunpack.c.l.b16 %v634
        %v1211 = vunpack.c.l.b16 %v635
        %v1212 = vunpack.c.l.b16 %v636
        %v1213 = vunpack.c.l.b16 %v637
        %v1214 = vunpack.c.l.b16 %v638
        %v1215 = vunpack.c.l.b16 %v639
        %v1216 = vunpack.c.l.b16 %v640
        %v1217 = vunpack.c.l.b16 %v641
        %v1218 = vunpack.c.l.b16 %v642
        %v1219 = vunpack.c.l.b16 %v643
        %v1220 = vunpack.c.l.b16 %v644
        %v1221 = vunpack.c.l.b16 %v645
        %v1222 = vunpack.c.l.b16 %v646
        %v1223 = vunpack.c.l.b16 %v647
        %v1224 = vunpack.c.l.b16 %v648
        %v1225 = vunpack.c.l.b16 %v649
        %v1226 = vunpack.c.l.b16 %v650
        %v1227 = vunpack.c.l.b16 %v651
        %v1228 = vunpack.c.l.b16 %v652
        %v1229 = vunpack.c.l.b16 %v653
        %v1230 = vunpack.c.l.b16 %v654
        %v1231 = vunpack.c.l.b16 %v655
        %v1232 = vunpack.c.l.b16 %v656
        %v1233 = vunpack.c.l.b16 %v657
        %v1234 = vunpack.c.l.b16 %v658
        %v1235 = vunpack.c.l.b16 %v659
        %v1236 = vunpack.c.l.b16 %v660
        %v1237 = vunpack.c.l.b16 %v661
        %v1238 = vunpack.c.l.b16 %v662
        %v1239 = vunpack.c.l.b16 %v663
        %v1240 = vunpack.c.l.b16 %v664
        %v1241 = vunpack.c.l.b16 %v665
        %v1242 = vunpack.c.l.b16 %v666
        %v1243 = vunpack.c.l.b16 %v667
        %v1244 = vunpack.c.l.b16 %v668
        %v1245 = vunpack.c.l.b16 %v669
        %v1246 = vunpack.c.l.b16 %v670
        %v1247 = vunpack.c.l.b16 %v671
        %v1248 = vunpack.c.l.b16 %v672
        %v1249 = vunpack.c.l.b16 %v673
        %v1250 = vunpack.c.l.b16 %v674
        %v1251 = vunpack.c.l.b16 %v675
        %v1252 = vunpack.c.l.b16 %v676
        %v1253 = vunpack.c.l.b16 %v677
        %v1254 = vunpack.c.l.b16 %v678
        %v1255 = vunpack.c.l.b16 %v679
        %v1256 = vunpack.c.l.b16 %v680
        %v1257 = vunpack.c.l.b16 %v681
        %v1258 = vunpack.c.l.b16 %v682
        %v1259 = vunpack.c.l.b16 %v683
        %v1260 = vunpack.c.l.b16 %v684
        %v1261 = vunpack.c.l.b16 %v685
        %v1262 = vunpack.c.l.b16 %v686
        %v1263 = vunpack.c.l.b16 %v687
        %v1264 = vunpack.c.l.b16 %v688
        %v1265 = vunpack.c.l.b16 %v689
        %v1266 = vunpack.c.l.b16 %v690
        %v1267 = vunpack.c.l.b16 %v691
        %v1268 = vunpack.c.l.b16 %v692
        %v1269 = vunpack.c.l.b16 %v693
        %v1270 = vunpack.c.l.b16 %v694
        %v1271 = vunpack.c.l.b16 %v695
        %v1272 = vunpack.c.l.b16 %v696
        %v1273 = vunpack.c.l.b16 %v697
        %v1274 = vpack.c.b16 %v1195, %v1194
        %v1275 = vpack.c.b16 %v1197, %v1196
        %v1276 = vpack.c.b16 %v1199, %v1198
        %v1277 = vpack.c.b16 %v1201, %v1200
        %v1278 = vpack.c.b16 %v1203, %v1202
        %v1279 = vpack.c.b16 %v1205, %v1204
        %v1280 = vpack.c.b16 %v1207, %v1206
        %v1281 = vpack.c.b16 %v1209, %v1208
        %v1282 = vpack.c.b16 %v1211, %v1210
        %v1283 = vpack.c.b16 %v1213, %v1212
        %v1284 = vpack.c.b16 %v1215, %v1214
        %v1285 = vpack.c.b16 %v1217, %v1216
        %v1286 = vpack.c.b16 %v1219, %v1218
        %v1287 = vpack.c.b16 %v1221, %v1220
        %v1288 = vpack.c.b16 %v1223, %v1222
        %v1289 = vpack.c.b16 %v1225, %v1224
        %v1290 = vpack.c.b16 %v1227, %v1226
        %v1291 = vpack.c.b16 %v1229, %v1228
        %v1292 = vpack.c.b16 %v1231, %v1230
        %v1293 = vpack.c.b16 %v1233, %v1232
        %v1294 = vpack.c.b16 %v1235, %v1234
        %v1295 = vpack.c.b16 %v1237, %v1236
        %v1296 = vpack.c.b16 %v1239, %v1238
        %v1297 = vpack.c.b16 %v1241, %v1240
        %v1298 = vpack.c.b16 %v1243, %v1242
        %v1299 = vpack.c.b16 %v1245, %v1244
        %v1300 = vpack.c.b16 %v1247, %v1246
        %v1301 = vpack.c.b16 %v1249, %v1248
        %v1302 = vpack.c.b16 %v1251, %v1250
        %v1303 = vpack.c.b16 %v1253, %v1252
        %v1304 = vpack.c.b16 %v1255, %v1254
        %v1305 = vpack.c.b16 %v1257, %v1256
        %v1306 = vpack.c.b16 %v1259, %v1258
        %v1307 = vpack.c.b16 %v1261, %v1260
        %v1308 = vpack.c.b16 %v1263, %v1262
        %v1309 = vpack.c.b16 %v1265, %v1264
        %v1310 = vpack.c.b16 %v1267, %v1266
        %v1311 = vpack.c.b16 %v1269, %v1268
        %v1312 = vpack.c.b16 %v1271, %v1270
        %v1313 = vpack.c.b16 %v1273, %v1272
        %1354 = vmatpush.bf16.msra.mxu0 %v1281
        %1355 = vmatpush.bf16.msra.mxu0 %v1280
        %1356 = vmatpush.bf16.msra.mxu0 %v1279
        %1357 = vmatpush.bf16.msra.mxu0 %v1278
        %1358 = vmatpush.bf16.msra.mxu0 %v1277
        %1359 = vmatpush.bf16.msra.mxu0 %v1276
        %1360 = vmatpush.bf16.msra.mxu0 %v1275
        %1361 = vmatpush.bf16.msra.mxu0 %v1274
        %1362 = vmatmul.bf16.gmra.mxu0 %v954
        %v1363 = vpop.f32.mrf.mxu0
        %v1364 = vadd.f32 0.0, %v1363
        %v1365 = vpop.f32.mrf.mxu0
        %v1366 = vadd.f32 0.0, %v1365
        %1367 = vmatmul.bf16.gmra.mxu0 %v959
        %v1368 = vpop.f32.mrf.mxu0
        %v1369 = vadd.f32 0.0, %v1368
        %v1370 = vpop.f32.mrf.mxu0
        %v1371 = vadd.f32 0.0, %v1370
        %1372 = vmatmul.bf16.gmra.mxu0 %v964
        %v1373 = vpop.f32.mrf.mxu0
        %v1374 = vadd.f32 0.0, %v1373
        %v1375 = vpop.f32.mrf.mxu0
        %v1376 = vadd.f32 0.0, %v1375
        %1377 = vmatmul.bf16.gmra.mxu0 %v969
        %v1378 = vpop.f32.mrf.mxu0
        %v1379 = vadd.f32 0.0, %v1378
        %v1380 = vpop.f32.mrf.mxu0
        %v1381 = vadd.f32 0.0, %v1380
        %1382 = vmatmul.bf16.gmra.mxu0 %v974
        %v1383 = vpop.f32.mrf.mxu0
        %v1384 = vadd.f32 0.0, %v1383
        %v1385 = vpop.f32.mrf.mxu0
        %v1386 = vadd.f32 0.0, %v1385
        %1387 = vmatmul.bf16.gmra.mxu0 %v979
        %v1388 = vpop.f32.mrf.mxu0
        %v1389 = vadd.f32 0.0, %v1388
        %v1390 = vpop.f32.mrf.mxu0
        %v1391 = vadd.f32 0.0, %v1390
        %1392 = vmatmul.bf16.gmra.mxu0 %v984
        %v1393 = vpop.f32.mrf.mxu0
        %v1394 = vadd.f32 0.0, %v1393
        %v1395 = vpop.f32.mrf.mxu0
        %v1396 = vadd.f32 0.0, %v1395
        %1397 = vmatmul.bf16.gmra.mxu0 %v989
        %v1398 = vpop.f32.mrf.mxu0
        %v1399 = vadd.f32 0.0, %v1398
        %v1400 = vpop.f32.mrf.mxu0
        %v1401 = vadd.f32 0.0, %v1400
        %1402 = vmatmul.bf16.gmra.mxu0 %v994
        %v1403 = vpop.f32.mrf.mxu0
        %v1404 = vadd.f32 0.0, %v1403
        %v1405 = vpop.f32.mrf.mxu0
        %v1406 = vadd.f32 0.0, %v1405
        %1407 = vmatmul.bf16.gmra.mxu0 %v999
        %v1408 = vpop.f32.mrf.mxu0
        %v1409 = vadd.f32 0.0, %v1408
        %v1410 = vpop.f32.mrf.mxu0
        %v1411 = vadd.f32 0.0, %v1410
        %1412 = vmatmul.bf16.gmra.mxu0 %v1004
        %v1413 = vpop.f32.mrf.mxu0
        %v1414 = vadd.f32 0.0, %v1413
        %v1415 = vpop.f32.mrf.mxu0
        %v1416 = vadd.f32 0.0, %v1415
        %1417 = vmatmul.bf16.gmra.mxu0 %v1009
        %v1418 = vpop.f32.mrf.mxu0
        %v1419 = vadd.f32 0.0, %v1418
        %v1420 = vpop.f32.mrf.mxu0
        %v1421 = vadd.f32 0.0, %v1420
        %1422 = vmatmul.bf16.gmra.mxu0 %v1014
        %v1423 = vpop.f32.mrf.mxu0
        %v1424 = vadd.f32 0.0, %v1423
        %v1425 = vpop.f32.mrf.mxu0
        %v1426 = vadd.f32 0.0, %v1425
        %1427 = vmatmul.bf16.gmra.mxu0 %v1019
        %v1428 = vpop.f32.mrf.mxu0
        %v1429 = vadd.f32 0.0, %v1428
        %v1430 = vpop.f32.mrf.mxu0
        %v1431 = vadd.f32 0.0, %v1430
        %1432 = vmatmul.bf16.gmra.mxu0 %v1024
        %v1433 = vpop.f32.mrf.mxu0
        %v1434 = vadd.f32 0.0, %v1433
        %v1435 = vpop.f32.mrf.mxu0
        %v1436 = vadd.f32 0.0, %v1435
        %1437 = vmatmul.bf16.gmra.mxu0 %v1029
        %v1438 = vpop.f32.mrf.mxu0
        %v1439 = vadd.f32 0.0, %v1438
        %v1440 = vpop.f32.mrf.mxu0
        %v1441 = vadd.f32 0.0, %v1440
        %1442 = vdwg.mxu0
        %1443 = vmatpush.bf16.msra.mxu0 %v1289
        %1444 = vmatpush.bf16.msra.mxu0 %v1288
        %1445 = vmatpush.bf16.msra.mxu0 %v1287
        %1446 = vmatpush.bf16.msra.mxu0 %v1286
        %1447 = vmatpush.bf16.msra.mxu0 %v1285
        %1448 = vmatpush.bf16.msra.mxu0 %v1284
        %1449 = vmatpush.bf16.msra.mxu0 %v1283
        %1450 = vmatpush.bf16.msra.mxu0 %v1282
        %1451 = vmatmul.bf16.gmra.mxu0 %v955
        %v1452 = vpop.f32.mrf.mxu0
        %v1453 = vadd.f32 %v1364, %v1452
        %v1454 = vpop.f32.mrf.mxu0
        %v1455 = vadd.f32 %v1366, %v1454
        %1456 = vmatmul.bf16.gmra.mxu0 %v960
        %v1457 = vpop.f32.mrf.mxu0
        %v1458 = vadd.f32 %v1369, %v1457
        %v1459 = vpop.f32.mrf.mxu0
        %v1460 = vadd.f32 %v1371, %v1459
        %1461 = vmatmul.bf16.gmra.mxu0 %v965
        %v1462 = vpop.f32.mrf.mxu0
        %v1463 = vadd.f32 %v1374, %v1462
        %v1464 = vpop.f32.mrf.mxu0
        %v1465 = vadd.f32 %v1376, %v1464
        %1466 = vmatmul.bf16.gmra.mxu0 %v970
        %v1467 = vpop.f32.mrf.mxu0
        %v1468 = vadd.f32 %v1379, %v1467
        %v1469 = vpop.f32.mrf.mxu0
        %v1470 = vadd.f32 %v1381, %v1469
        %1471 = vmatmul.bf16.gmra.mxu0 %v975
        %v1472 = vpop.f32.mrf.mxu0
        %v1473 = vadd.f32 %v1384, %v1472
        %v1474 = vpop.f32.mrf.mxu0
        %v1475 = vadd.f32 %v1386, %v1474
        %1476 = vmatmul.bf16.gmra.mxu0 %v980
        %v1477 = vpop.f32.mrf.mxu0
        %v1478 = vadd.f32 %v1389, %v1477
        %v1479 = vpop.f32.mrf.mxu0
        %v1480 = vadd.f32 %v1391, %v1479
        %1481 = vmatmul.bf16.gmra.mxu0 %v985
        %v1482 = vpop.f32.mrf.mxu0
        %v1483 = vadd.f32 %v1394, %v1482
        %v1484 = vpop.f32.mrf.mxu0
        %v1485 = vadd.f32 %v1396, %v1484
        %1486 = vmatmul.bf16.gmra.mxu0 %v990
        %v1487 = vpop.f32.mrf.mxu0
        %v1488 = vadd.f32 %v1399, %v1487
        %v1489 = vpop.f32.mrf.mxu0
        %v1490 = vadd.f32 %v1401, %v1489
        %1491 = vmatmul.bf16.gmra.mxu0 %v995
        %v1492 = vpop.f32.mrf.mxu0
        %v1493 = vadd.f32 %v1404, %v1492
        %v1494 = vpop.f32.mrf.mxu0
        %v1495 = vadd.f32 %v1406, %v1494
        %1496 = vmatmul.bf16.gmra.mxu0 %v1000
        %v1497 = vpop.f32.mrf.mxu0
        %v1498 = vadd.f32 %v1409, %v1497
        %v1499 = vpop.f32.mrf.mxu0
        %v1500 = vadd.f32 %v1411, %v1499
        %1501 = vmatmul.bf16.gmra.mxu0 %v1005
        %v1502 = vpop.f32.mrf.mxu0
        %v1503 = vadd.f32 %v1414, %v1502
        %v1504 = vpop.f32.mrf.mxu0
        %v1505 = vadd.f32 %v1416, %v1504
        %1506 = vmatmul.bf16.gmra.mxu0 %v1010
        %v1507 = vpop.f32.mrf.mxu0
        %v1508 = vadd.f32 %v1419, %v1507
        %v1509 = vpop.f32.mrf.mxu0
        %v1510 = vadd.f32 %v1421, %v1509
        %1511 = vmatmul.bf16.gmra.mxu0 %v1015
        %v1512 = vpop.f32.mrf.mxu0
        %v1513 = vadd.f32 %v1424, %v1512
        %v1514 = vpop.f32.mrf.mxu0
        %v1515 = vadd.f32 %v1426, %v1514
        %1516 = vmatmul.bf16.gmra.mxu0 %v1020
        %v1517 = vpop.f32.mrf.mxu0
        %v1518 = vadd.f32 %v1429, %v1517
        %v1519 = vpop.f32.mrf.mxu0
        %v1520 = vadd.f32 %v1431, %v1519
        %1521 = vmatmul.bf16.gmra.mxu0 %v1025
        %v1522 = vpop.f32.mrf.mxu0
        %v1523 = vadd.f32 %v1434, %v1522
        %v1524 = vpop.f32.mrf.mxu0
        %v1525 = vadd.f32 %v1436, %v1524
        %1526 = vmatmul.bf16.gmra.mxu0 %v1030
        %v1527 = vpop.f32.mrf.mxu0
        %v1528 = vadd.f32 %v1439, %v1527
        %v1529 = vpop.f32.mrf.mxu0
        %v1530 = vadd.f32 %v1441, %v1529
        %1531 = vdwg.mxu0
        %1532 = vmatpush.bf16.msra.mxu0 %v1297
        %1533 = vmatpush.bf16.msra.mxu0 %v1296
        %1534 = vmatpush.bf16.msra.mxu0 %v1295
        %1535 = vmatpush.bf16.msra.mxu0 %v1294
        %1536 = vmatpush.bf16.msra.mxu0 %v1293
        %1537 = vmatpush.bf16.msra.mxu0 %v1292
        %1538 = vmatpush.bf16.msra.mxu0 %v1291
        %1539 = vmatpush.bf16.msra.mxu0 %v1290
        %1540 = vmatmul.bf16.gmra.mxu0 %v956
        %v1541 = vpop.f32.mrf.mxu0
        %v1542 = vadd.f32 %v1453, %v1541
        %v1543 = vpop.f32.mrf.mxu0
        %v1544 = vadd.f32 %v1455, %v1543
        %1545 = vmatmul.bf16.gmra.mxu0 %v961
        %v1546 = vpop.f32.mrf.mxu0
        %v1547 = vadd.f32 %v1458, %v1546
        %v1548 = vpop.f32.mrf.mxu0
        %v1549 = vadd.f32 %v1460, %v1548
        %1550 = vmatmul.bf16.gmra.mxu0 %v966
        %v1551 = vpop.f32.mrf.mxu0
        %v1552 = vadd.f32 %v1463, %v1551
        %v1553 = vpop.f32.mrf.mxu0
        %v1554 = vadd.f32 %v1465, %v1553
        %1555 = vmatmul.bf16.gmra.mxu0 %v971
        %v1556 = vpop.f32.mrf.mxu0
        %v1557 = vadd.f32 %v1468, %v1556
        %v1558 = vpop.f32.mrf.mxu0
        %v1559 = vadd.f32 %v1470, %v1558
        %1560 = vmatmul.bf16.gmra.mxu0 %v976
        %v1561 = vpop.f32.mrf.mxu0
        %v1562 = vadd.f32 %v1473, %v1561
        %v1563 = vpop.f32.mrf.mxu0
        %v1564 = vadd.f32 %v1475, %v1563
        %1565 = vmatmul.bf16.gmra.mxu0 %v981
        %v1566 = vpop.f32.mrf.mxu0
        %v1567 = vadd.f32 %v1478, %v1566
        %v1568 = vpop.f32.mrf.mxu0
        %v1569 = vadd.f32 %v1480, %v1568
        %1570 = vmatmul.bf16.gmra.mxu0 %v986
        %v1571 = vpop.f32.mrf.mxu0
        %v1572 = vadd.f32 %v1483, %v1571
        %v1573 = vpop.f32.mrf.mxu0
        %v1574 = vadd.f32 %v1485, %v1573
        %1575 = vmatmul.bf16.gmra.mxu0 %v991
        %v1576 = vpop.f32.mrf.mxu0
        %v1577 = vadd.f32 %v1488, %v1576
        %v1578 = vpop.f32.mrf.mxu0
        %v1579 = vadd.f32 %v1490, %v1578
        %1580 = vmatmul.bf16.gmra.mxu0 %v996
        %v1581 = vpop.f32.mrf.mxu0
        %v1582 = vadd.f32 %v1493, %v1581
        %v1583 = vpop.f32.mrf.mxu0
        %v1584 = vadd.f32 %v1495, %v1583
        %1585 = vmatmul.bf16.gmra.mxu0 %v1001
        %v1586 = vpop.f32.mrf.mxu0
        %v1587 = vadd.f32 %v1498, %v1586
        %v1588 = vpop.f32.mrf.mxu0
        %v1589 = vadd.f32 %v1500, %v1588
        %1590 = vmatmul.bf16.gmra.mxu0 %v1006
        %v1591 = vpop.f32.mrf.mxu0
        %v1592 = vadd.f32 %v1503, %v1591
        %v1593 = vpop.f32.mrf.mxu0
        %v1594 = vadd.f32 %v1505, %v1593
        %1595 = vmatmul.bf16.gmra.mxu0 %v1011
        %v1596 = vpop.f32.mrf.mxu0
        %v1597 = vadd.f32 %v1508, %v1596
        %v1598 = vpop.f32.mrf.mxu0
        %v1599 = vadd.f32 %v1510, %v1598
        %1600 = vmatmul.bf16.gmra.mxu0 %v1016
        %v1601 = vpop.f32.mrf.mxu0
        %v1602 = vadd.f32 %v1513, %v1601
        %v1603 = vpop.f32.mrf.mxu0
        %v1604 = vadd.f32 %v1515, %v1603
        %1605 = vmatmul.bf16.gmra.mxu0 %v1021
        %v1606 = vpop.f32.mrf.mxu0
        %v1607 = vadd.f32 %v1518, %v1606
        %v1608 = vpop.f32.mrf.mxu0
        %v1609 = vadd.f32 %v1520, %v1608
        %1610 = vmatmul.bf16.gmra.mxu0 %v1026
        %v1611 = vpop.f32.mrf.mxu0
        %v1612 = vadd.f32 %v1523, %v1611
        %v1613 = vpop.f32.mrf.mxu0
        %v1614 = vadd.f32 %v1525, %v1613
        %1615 = vmatmul.bf16.gmra.mxu0 %v1031
        %v1616 = vpop.f32.mrf.mxu0
        %v1617 = vadd.f32 %v1528, %v1616
        %v1618 = vpop.f32.mrf.mxu0
        %v1619 = vadd.f32 %v1530, %v1618
        %1620 = vdwg.mxu0
        %1621 = vmatpush.bf16.msra.mxu0 %v1305
        %1622 = vmatpush.bf16.msra.mxu0 %v1304
        %1623 = vmatpush.bf16.msra.mxu0 %v1303
        %1624 = vmatpush.bf16.msra.mxu0 %v1302
        %1625 = vmatpush.bf16.msra.mxu0 %v1301
        %1626 = vmatpush.bf16.msra.mxu0 %v1300
        %1627 = vmatpush.bf16.msra.mxu0 %v1299
        %1628 = vmatpush.bf16.msra.mxu0 %v1298
        %1629 = vmatmul.bf16.gmra.mxu0 %v957
        %v1630 = vpop.f32.mrf.mxu0
        %v1631 = vadd.f32 %v1542, %v1630
        %v1632 = vpop.f32.mrf.mxu0
        %v1633 = vadd.f32 %v1544, %v1632
        %1634 = vmatmul.bf16.gmra.mxu0 %v962
        %v1635 = vpop.f32.mrf.mxu0
        %v1636 = vadd.f32 %v1547, %v1635
        %v1637 = vpop.f32.mrf.mxu0
        %v1638 = vadd.f32 %v1549, %v1637
        %1639 = vmatmul.bf16.gmra.mxu0 %v967
        %v1640 = vpop.f32.mrf.mxu0
        %v1641 = vadd.f32 %v1552, %v1640
        %v1642 = vpop.f32.mrf.mxu0
        %v1643 = vadd.f32 %v1554, %v1642
        %1644 = vmatmul.bf16.gmra.mxu0 %v972
        %v1645 = vpop.f32.mrf.mxu0
        %v1646 = vadd.f32 %v1557, %v1645
        %v1647 = vpop.f32.mrf.mxu0
        %v1648 = vadd.f32 %v1559, %v1647
        %1649 = vmatmul.bf16.gmra.mxu0 %v977
        %v1650 = vpop.f32.mrf.mxu0
        %v1651 = vadd.f32 %v1562, %v1650
        %v1652 = vpop.f32.mrf.mxu0
        %v1653 = vadd.f32 %v1564, %v1652
        %1654 = vmatmul.bf16.gmra.mxu0 %v982
        %v1655 = vpop.f32.mrf.mxu0
        %v1656 = vadd.f32 %v1567, %v1655
        %v1657 = vpop.f32.mrf.mxu0
        %v1658 = vadd.f32 %v1569, %v1657
        %1659 = vmatmul.bf16.gmra.mxu0 %v987
        %v1660 = vpop.f32.mrf.mxu0
        %v1661 = vadd.f32 %v1572, %v1660
        %v1662 = vpop.f32.mrf.mxu0
        %v1663 = vadd.f32 %v1574, %v1662
        %1664 = vmatmul.bf16.gmra.mxu0 %v992
        %v1665 = vpop.f32.mrf.mxu0
        %v1666 = vadd.f32 %v1577, %v1665
        %v1667 = vpop.f32.mrf.mxu0
        %v1668 = vadd.f32 %v1579, %v1667
        %1669 = vmatmul.bf16.gmra.mxu0 %v997
        %v1670 = vpop.f32.mrf.mxu0
        %v1671 = vadd.f32 %v1582, %v1670
        %v1672 = vpop.f32.mrf.mxu0
        %v1673 = vadd.f32 %v1584, %v1672
        %1674 = vmatmul.bf16.gmra.mxu0 %v1002
        %v1675 = vpop.f32.mrf.mxu0
        %v1676 = vadd.f32 %v1587, %v1675
        %v1677 = vpop.f32.mrf.mxu0
        %v1678 = vadd.f32 %v1589, %v1677
        %1679 = vmatmul.bf16.gmra.mxu0 %v1007
        %v1680 = vpop.f32.mrf.mxu0
        %v1681 = vadd.f32 %v1592, %v1680
        %v1682 = vpop.f32.mrf.mxu0
        %v1683 = vadd.f32 %v1594, %v1682
        %1684 = vmatmul.bf16.gmra.mxu0 %v1012
        %v1685 = vpop.f32.mrf.mxu0
        %v1686 = vadd.f32 %v1597, %v1685
        %v1687 = vpop.f32.mrf.mxu0
        %v1688 = vadd.f32 %v1599, %v1687
        %1689 = vmatmul.bf16.gmra.mxu0 %v1017
        %v1690 = vpop.f32.mrf.mxu0
        %v1691 = vadd.f32 %v1602, %v1690
        %v1692 = vpop.f32.mrf.mxu0
        %v1693 = vadd.f32 %v1604, %v1692
        %1694 = vmatmul.bf16.gmra.mxu0 %v1022
        %v1695 = vpop.f32.mrf.mxu0
        %v1696 = vadd.f32 %v1607, %v1695
        %v1697 = vpop.f32.mrf.mxu0
        %v1698 = vadd.f32 %v1609, %v1697
        %1699 = vmatmul.bf16.gmra.mxu0 %v1027
        %v1700 = vpop.f32.mrf.mxu0
        %v1701 = vadd.f32 %v1612, %v1700
        %v1702 = vpop.f32.mrf.mxu0
        %v1703 = vadd.f32 %v1614, %v1702
        %1704 = vmatmul.bf16.gmra.mxu0 %v1032
        %v1705 = vpop.f32.mrf.mxu0
        %v1706 = vadd.f32 %v1617, %v1705
        %v1707 = vpop.f32.mrf.mxu0
        %v1708 = vadd.f32 %v1619, %v1707
        %1709 = vdwg.mxu0
        %1710 = vmatpush.bf16.msra.mxu0 %v1313
        %1711 = vmatpush.bf16.msra.mxu0 %v1312
        %1712 = vmatpush.bf16.msra.mxu0 %v1311
        %1713 = vmatpush.bf16.msra.mxu0 %v1310
        %1714 = vmatpush.bf16.msra.mxu0 %v1309
        %1715 = vmatpush.bf16.msra.mxu0 %v1308
        %1716 = vmatpush.bf16.msra.mxu0 %v1307
        %1717 = vmatpush.bf16.msra.mxu0 %v1306
        %1718 = vmatmul.bf16.gmra.mxu0 %v958
        %v1719 = vpop.f32.mrf.mxu0
        %v1720 = vadd.f32 %v1631, %v1719
        %v1721 = vpop.f32.mrf.mxu0
        %v1722 = vadd.f32 %v1633, %v1721
        %1723 = vmatmul.bf16.gmra.mxu0 %v963
        %v1724 = vpop.f32.mrf.mxu0
        %v1725 = vadd.f32 %v1636, %v1724
        %v1726 = vpop.f32.mrf.mxu0
        %v1727 = vadd.f32 %v1638, %v1726
        %1728 = vmatmul.bf16.gmra.mxu0 %v968
        %v1729 = vpop.f32.mrf.mxu0
        %v1730 = vadd.f32 %v1641, %v1729
        %v1731 = vpop.f32.mrf.mxu0
        %v1732 = vadd.f32 %v1643, %v1731
        %1733 = vmatmul.bf16.gmra.mxu0 %v973
        %v1734 = vpop.f32.mrf.mxu0
        %v1735 = vadd.f32 %v1646, %v1734
        %v1736 = vpop.f32.mrf.mxu0
        %v1737 = vadd.f32 %v1648, %v1736
        %1738 = vmatmul.bf16.gmra.mxu0 %v978
        %v1739 = vpop.f32.mrf.mxu0
        %v1740 = vadd.f32 %v1651, %v1739
        %v1741 = vpop.f32.mrf.mxu0
        %v1742 = vadd.f32 %v1653, %v1741
        %1743 = vmatmul.bf16.gmra.mxu0 %v983
        %v1744 = vpop.f32.mrf.mxu0
        %v1745 = vadd.f32 %v1656, %v1744
        %v1746 = vpop.f32.mrf.mxu0
        %v1747 = vadd.f32 %v1658, %v1746
        %1748 = vmatmul.bf16.gmra.mxu0 %v988
        %v1749 = vpop.f32.mrf.mxu0
        %v1750 = vadd.f32 %v1661, %v1749
        %v1751 = vpop.f32.mrf.mxu0
        %v1752 = vadd.f32 %v1663, %v1751
        %1753 = vmatmul.bf16.gmra.mxu0 %v993
        %v1754 = vpop.f32.mrf.mxu0
        %v1755 = vadd.f32 %v1666, %v1754
        %v1756 = vpop.f32.mrf.mxu0
        %v1757 = vadd.f32 %v1668, %v1756
        %1758 = vmatmul.bf16.gmra.mxu0 %v998
        %v1759 = vpop.f32.mrf.mxu0
        %v1760 = vadd.f32 %v1671, %v1759
        %v1761 = vpop.f32.mrf.mxu0
        %v1762 = vadd.f32 %v1673, %v1761
        %1763 = vmatmul.bf16.gmra.mxu0 %v1003
        %v1764 = vpop.f32.mrf.mxu0
        %v1765 = vadd.f32 %v1676, %v1764
        %v1766 = vpop.f32.mrf.mxu0
        %v1767 = vadd.f32 %v1678, %v1766
        %1768 = vmatmul.bf16.gmra.mxu0 %v1008
        %v1769 = vpop.f32.mrf.mxu0
        %v1770 = vadd.f32 %v1681, %v1769
        %v1771 = vpop.f32.mrf.mxu0
        %v1772 = vadd.f32 %v1683, %v1771
        %1773 = vmatmul.bf16.gmra.mxu0 %v1013
        %v1774 = vpop.f32.mrf.mxu0
        %v1775 = vadd.f32 %v1686, %v1774
        %v1776 = vpop.f32.mrf.mxu0
        %v1777 = vadd.f32 %v1688, %v1776
        %1778 = vmatmul.bf16.gmra.mxu0 %v1018
        %v1779 = vpop.f32.mrf.mxu0
        %v1780 = vadd.f32 %v1691, %v1779
        %v1781 = vpop.f32.mrf.mxu0
        %v1782 = vadd.f32 %v1693, %v1781
        %1783 = vmatmul.bf16.gmra.mxu0 %v1023
        %v1784 = vpop.f32.mrf.mxu0
        %v1785 = vadd.f32 %v1696, %v1784
        %v1786 = vpop.f32.mrf.mxu0
        %v1787 = vadd.f32 %v1698, %v1786
        %1788 = vmatmul.bf16.gmra.mxu0 %v1028
        %v1789 = vpop.f32.mrf.mxu0
        %v1790 = vadd.f32 %v1701, %v1789
        %v1791 = vpop.f32.mrf.mxu0
        %v1792 = vadd.f32 %v1703, %v1791
        %1793 = vmatmul.bf16.gmra.mxu0 %v1033
        %v1794 = vpop.f32.mrf.mxu0
        %v1795 = vadd.f32 %v1706, %v1794
        %v1796 = vpop.f32.mrf.mxu0
        %v1797 = vadd.f32 %v1708, %v1796
        %1798 = vdwg.mxu0
        %v1799 = vadd.f32 %v490, %v1720
        %v1800 = vadd.f32 %v491, %v1722
        %v1801 = vadd.f32 %v492, %v1725
        %v1802 = vadd.f32 %v493, %v1727
        %v1803 = vadd.f32 %v494, %v1730
        %v1804 = vadd.f32 %v495, %v1732
        %v1805 = vadd.f32 %v496, %v1735
        %v1806 = vadd.f32 %v497, %v1737
        %v1807 = vadd.f32 %v498, %v1740
        %v1808 = vadd.f32 %v499, %v1742
        %v1809 = vadd.f32 %v500, %v1745
        %v1810 = vadd.f32 %v501, %v1747
        %v1811 = vadd.f32 %v502, %v1750
        %v1812 = vadd.f32 %v503, %v1752
        %v1813 = vadd.f32 %v504, %v1755
        %v1814 = vadd.f32 %v505, %v1757
        %v1815 = vadd.f32 %v506, %v1760
        %v1816 = vadd.f32 %v507, %v1762
        %v1817 = vadd.f32 %v508, %v1765
        %v1818 = vadd.f32 %v509, %v1767
        %v1819 = vadd.f32 %v510, %v1770
        %v1820 = vadd.f32 %v511, %v1772
        %v1821 = vadd.f32 %v512, %v1775
        %v1822 = vadd.f32 %v513, %v1777
        %v1823 = vadd.f32 %v514, %v1780
        %v1824 = vadd.f32 %v515, %v1782
        %v1825 = vadd.f32 %v516, %v1785
        %v1826 = vadd.f32 %v517, %v1787
        %v1827 = vadd.f32 %v518, %v1790
        %v1828 = vadd.f32 %v519, %v1792
        %v1829 = vadd.f32 %v520, %v1795
        %v1830 = vadd.f32 %v521, %v1797
        %1831 = vst [vmem:[#allocation2] sm:$0xff] %v1799
        %1832 = vst [vmem:[#allocation2 + $0x8] sm:$0xff] %v1800
        %1833 = vst [vmem:[#allocation2 + $0x10] sm:$0xff] %v1801
        %1834 = vst [vmem:[#allocation2 + $0x18] sm:$0xff] %v1802
        %1835 = vst [vmem:[#allocation2 + $0x20] sm:$0xff] %v1803
        %1836 = vst [vmem:[#allocation2 + $0x28] sm:$0xff] %v1804
        %1837 = vst [vmem:[#allocation2 + $0x30] sm:$0xff] %v1805
        %1838 = vst [vmem:[#allocation2 + $0x38] sm:$0xff] %v1806
        %1839 = vst [vmem:[#allocation2 + $0x40] sm:$0xff] %v1807
        %1840 = vst [vmem:[#allocation2 + $0x48] sm:$0xff] %v1808
        %1841 = vst [vmem:[#allocation2 + $0x50] sm:$0xff] %v1809
        %1842 = vst [vmem:[#allocation2 + $0x58] sm:$0xff] %v1810
        %1843 = vst [vmem:[#allocation2 + $0x60] sm:$0xff] %v1811
        %1844 = vst [vmem:[#allocation2 + $0x68] sm:$0xff] %v1812
        %1845 = vst [vmem:[#allocation2 + $0x70] sm:$0xff] %v1813
        %1846 = vst [vmem:[#allocation2 + $0x78] sm:$0xff] %v1814
        %1847 = vst [vmem:[#allocation2 + $0x80] sm:$0xff] %v1815
        %1848 = vst [vmem:[#allocation2 + $0x88] sm:$0xff] %v1816
        %1849 = vst [vmem:[#allocation2 + $0x90] sm:$0xff] %v1817
        %1850 = vst [vmem:[#allocation2 + $0x98] sm:$0xff] %v1818
        %1851 = vst [vmem:[#allocation2 + $0xa0] sm:$0xff] %v1819
        %1852 = vst [vmem:[#allocation2 + $0xa8] sm:$0xff] %v1820
        %1853 = vst [vmem:[#allocation2 + $0xb0] sm:$0xff] %v1821
        %1854 = vst [vmem:[#allocation2 + $0xb8] sm:$0xff] %v1822
        %1855 = vst [vmem:[#allocation2 + $0xc0] sm:$0xff] %v1823
        %1856 = vst [vmem:[#allocation2 + $0xc8] sm:$0xff] %v1824
        %1857 = vst [vmem:[#allocation2 + $0xd0] sm:$0xff] %v1825
        %1858 = vst [vmem:[#allocation2 + $0xd8] sm:$0xff] %v1826
        %1859 = vst [vmem:[#allocation2 + $0xe0] sm:$0xff] %v1827
        %1860 = vst [vmem:[#allocation2 + $0xe8] sm:$0xff] %v1828
        %1861 = vst [vmem:[#allocation2 + $0xf0] sm:$0xff] %v1829
        %1862 = vst [vmem:[#allocation2 + $0xf8] sm:$0xff] %v1830
        %p1863 = scmp.eq.s32.totalorder %s21, 4
        // Predicated region
        $region63: #{generator_resnet_forward.19} parent=53 // pred_check
          %p1864 = pneg %p1863
        $region64: #{generator_resnet_forward.19} parent=53 // pred_check_branch
          %1866 = sbr.rel (%p1864) target = $region66
        $region65: #{generator_resnet_forward.19} parent=53 // pred_region
          %v1867 = vld [vmem:[#allocation2] sm:$0xff]
          %v1868 = vld [vmem:[#allocation2 + $0x8] sm:$0xff]
          %v1869 = vld [vmem:[#allocation2 + $0x10] sm:$0xff]
          %v1870 = vld [vmem:[#allocation2 + $0x18] sm:$0xff]
          %v1871 = vld [vmem:[#allocation2 + $0x20] sm:$0xff]
          %v1872 = vld [vmem:[#allocation2 + $0x28] sm:$0xff]
          %v1873 = vld [vmem:[#allocation2 + $0x30] sm:$0xff]
          %v1874 = vld [vmem:[#allocation2 + $0x38] sm:$0xff]
          %v1875 = vld [vmem:[#allocation2 + $0x40] sm:$0xff]
          %v1876 = vld [vmem:[#allocation2 + $0x48] sm:$0xff]
          %v1877 = vld [vmem:[#allocation2 + $0x50] sm:$0xff]
          %v1878 = vld [vmem:[#allocation2 + $0x58] sm:$0xff]
          %v1879 = vld [vmem:[#allocation2 + $0x60] sm:$0xff]
          %v1880 = vld [vmem:[#allocation2 + $0x68] sm:$0xff]
          %v1881 = vld [vmem:[#allocation2 + $0x70] sm:$0xff]
          %v1882 = vld [vmem:[#allocation2 + $0x78] sm:$0xff]
          %v1883 = vld [vmem:[#allocation2 + $0x80] sm:$0xff]
          %v1884 = vld [vmem:[#allocation2 + $0x88] sm:$0xff]
          %v1885 = vld [vmem:[#allocation2 + $0x90] sm:$0xff]
          %v1886 = vld [vmem:[#allocation2 + $0x98] sm:$0xff]
          %v1887 = vld [vmem:[#allocation2 + $0xa0] sm:$0xff]
          %v1888 = vld [vmem:[#allocation2 + $0xa8] sm:$0xff]
          %v1889 = vld [vmem:[#allocation2 + $0xb0] sm:$0xff]
          %v1890 = vld [vmem:[#allocation2 + $0xb8] sm:$0xff]
          %v1891 = vld [vmem:[#allocation2 + $0xc0] sm:$0xff]
          %v1892 = vld [vmem:[#allocation2 + $0xc8] sm:$0xff]
          %v1893 = vld [vmem:[#allocation2 + $0xd0] sm:$0xff]
          %v1894 = vld [vmem:[#allocation2 + $0xd8] sm:$0xff]
          %v1895 = vld [vmem:[#allocation2 + $0xe0] sm:$0xff]
          %v1896 = vld [vmem:[#allocation2 + $0xe8] sm:$0xff]
          %v1897 = vld [vmem:[#allocation2 + $0xf0] sm:$0xff]
          %v1898 = vld [vmem:[#allocation2 + $0xf8] sm:$0xff]
          %v1899 = vld [vmem:[%s2] sm:$0x1]
          %v1901 = vperm.slane %v1899, 0
          %v1903 = vadd.f32 %v1867, %v1901
          %v1904 = vadd.f32 %v1868, %v1901
          %v1905 = vadd.f32 %v1869, %v1901
          %v1906 = vadd.f32 %v1870, %v1901
          %v1907 = vadd.f32 %v1871, %v1901
          %v1908 = vadd.f32 %v1872, %v1901
          %v1909 = vadd.f32 %v1873, %v1901
          %v1910 = vadd.f32 %v1874, %v1901
          %v1911 = vadd.f32 %v1875, %v1901
          %v1912 = vadd.f32 %v1876, %v1901
          %v1913 = vadd.f32 %v1877, %v1901
          %v1914 = vadd.f32 %v1878, %v1901
          %v1915 = vadd.f32 %v1879, %v1901
          %v1916 = vadd.f32 %v1880, %v1901
          %v1917 = vadd.f32 %v1881, %v1901
          %v1918 = vadd.f32 %v1882, %v1901
          %v1919 = vadd.f32 %v1883, %v1901
          %v1920 = vadd.f32 %v1884, %v1901
          %v1921 = vadd.f32 %v1885, %v1901
          %v1922 = vadd.f32 %v1886, %v1901
          %v1923 = vadd.f32 %v1887, %v1901
          %v1924 = vadd.f32 %v1888, %v1901
          %v1925 = vadd.f32 %v1889, %v1901
          %v1926 = vadd.f32 %v1890, %v1901
          %v1927 = vadd.f32 %v1891, %v1901
          %v1928 = vadd.f32 %v1892, %v1901
          %v1929 = vadd.f32 %v1893, %v1901
          %v1930 = vadd.f32 %v1894, %v1901
          %v1931 = vadd.f32 %v1895, %v1901
          %v1932 = vadd.f32 %v1896, %v1901
          %v1933 = vadd.f32 %v1897, %v1901
          %v1934 = vadd.f32 %v1898, %v1901
          %v1935 = vtanh.pop %v1903
          %v1936 = vtanh.pop %v1904
          %v1937 = vtanh.pop %v1905
          %v1938 = vtanh.pop %v1906
          %v1939 = vtanh.pop %v1907
          %v1940 = vtanh.pop %v1908
          %v1941 = vtanh.pop %v1909
          %v1942 = vtanh.pop %v1910
          %v1943 = vtanh.pop %v1911
          %v1944 = vtanh.pop %v1912
          %v1945 = vtanh.pop %v1913
          %v1946 = vtanh.pop %v1914
          %v1947 = vtanh.pop %v1915
          %v1948 = vtanh.pop %v1916
          %v1949 = vtanh.pop %v1917
          %v1950 = vtanh.pop %v1918
          %v1951 = vtanh.pop %v1919
          %v1952 = vtanh.pop %v1920
          %v1953 = vtanh.pop %v1921
          %v1954 = vtanh.pop %v1922
          %v1955 = vtanh.pop %v1923
          %v1956 = vtanh.pop %v1924
          %v1957 = vtanh.pop %v1925
          %v1958 = vtanh.pop %v1926
          %v1959 = vtanh.pop %v1927
          %v1960 = vtanh.pop %v1928
          %v1961 = vtanh.pop %v1929
          %v1962 = vtanh.pop %v1930
          %v1963 = vtanh.pop %v1931
          %v1964 = vtanh.pop %v1932
          %v1965 = vtanh.pop %v1933
          %v1966 = vtanh.pop %v1934
          %1967 = vst [vmem:[%s452] sm:$0xff] %v1935
          %1968 = vst [vmem:[%s452 + $0x8] sm:$0xff] %v1936
          %1969 = vst [vmem:[%s452 + $0x10] sm:$0xff] %v1937
          %1970 = vst [vmem:[%s452 + $0x18] sm:$0xff] %v1938
          %1971 = vst [vmem:[%s452 + $0x20] sm:$0xff] %v1939
          %1972 = vst [vmem:[%s452 + $0x28] sm:$0xff] %v1940
          %1973 = vst [vmem:[%s452 + $0x30] sm:$0xff] %v1941
          %1974 = vst [vmem:[%s452 + $0x38] sm:$0xff] %v1942
          %1975 = vst [vmem:[%s452 + $0x40] sm:$0xff] %v1943
          %1976 = vst [vmem:[%s452 + $0x48] sm:$0xff] %v1944
          %1977 = vst [vmem:[%s452 + $0x50] sm:$0xff] %v1945
          %1978 = vst [vmem:[%s452 + $0x58] sm:$0xff] %v1946
          %1979 = vst [vmem:[%s452 + $0x60] sm:$0xff] %v1947
          %1980 = vst [vmem:[%s452 + $0x68] sm:$0xff] %v1948
          %1981 = vst [vmem:[%s452 + $0x70] sm:$0xff] %v1949
          %1982 = vst [vmem:[%s452 + $0x78] sm:$0xff] %v1950
          %1983 = vst [vmem:[%s452 + $0x80] sm:$0xff] %v1951
          %1984 = vst [vmem:[%s452 + $0x88] sm:$0xff] %v1952
          %1985 = vst [vmem:[%s452 + $0x90] sm:$0xff] %v1953
          %1986 = vst [vmem:[%s452 + $0x98] sm:$0xff] %v1954
          %1987 = vst [vmem:[%s452 + $0xa0] sm:$0xff] %v1955
          %1988 = vst [vmem:[%s452 + $0xa8] sm:$0xff] %v1956
          %1989 = vst [vmem:[%s452 + $0xb0] sm:$0xff] %v1957
          %1990 = vst [vmem:[%s452 + $0xb8] sm:$0xff] %v1958
          %1991 = vst [vmem:[%s452 + $0xc0] sm:$0xff] %v1959
          %1992 = vst [vmem:[%s452 + $0xc8] sm:$0xff] %v1960
          %1993 = vst [vmem:[%s452 + $0xd0] sm:$0xff] %v1961
          %1994 = vst [vmem:[%s452 + $0xd8] sm:$0xff] %v1962
          %1995 = vst [vmem:[%s452 + $0xe0] sm:$0xff] %v1963
          %1996 = vst [vmem:[%s452 + $0xe8] sm:$0xff] %v1964
          %1997 = vst [vmem:[%s452 + $0xf0] sm:$0xff] %v1965
          %1998 = vst [vmem:[%s452 + $0xf8] sm:$0xff] %v1966
        $region66: #{generator_resnet_forward.19} parent=53 // pred_fallthru
          _
        %s1999 = smul.u32 32, %s20
        %p2000 = scmp.lt.s32.totalorder %s19, 1
        %s2001 = scalar_select %p2000, %s19, 1
        %p2002 = scmp.lt.s32.totalorder %s1999, 31
        %s2003 = scalar_select %p2002, %s1999, 31
        %s2004 = smul.addr %s2001, 32
        %s2005 = sadd.s32 %s2003, %s2004
        %s2006 = smul.addr %s2005, 8
        %s2007 = scalar_lea.vmem %s3, %s2006
        // Predicated region
        $region67: #{generator_resnet_forward.19} parent=53 // pred_check
          %p2008 = pneg %p130
        $region68: #{generator_resnet_forward.19} parent=53 // pred_check_branch
          %2010 = sbr.rel (%p2008) target = $region70
        $region69: #{generator_resnet_forward.19} parent=53 // pred_region
          %s2011 = smul.u32 32, %s20
        $region70: #{generator_resnet_forward.19} parent=53 // pred_fallthru
          _
      $region54: #{generator_resnet_forward.19} parent=5 // pred_fallthru
        _
      %p2012 = scmp.le.s32.totalorder 2, %s9
      // Predicated region
      $region71: #{generator_resnet_forward.19} parent=5 // pred_check
        %p2013 = pneg %p2012
      $region72: #{generator_resnet_forward.19} parent=5 // pred_check_branch
        %2015 = sbr.rel (%p2013) target = $region74
      $region73: #{generator_resnet_forward.19} parent=5 // pred_region
        %s2016 = ssub.s32 %s9, 2
        // Predicated region
        $region75: #{generator_resnet_forward.19} parent=73 // pred_check
          %p2017 = pneg %p136
        $region76: #{generator_resnet_forward.19} parent=73 // pred_check_branch
          %2019 = sbr.rel (%p2017) target = $region78
        $region77: #{generator_resnet_forward.19} parent=73 // pred_region
          %s2020 = smul.u32 32, %s23
          %p2021 = scmp.lt.s32.totalorder %s22, 1
          %s2022 = scalar_select %p2021, %s22, 1
          %p2023 = scmp.lt.s32.totalorder %s2020, 31
          %s2024 = scalar_select %p2023, %s2020, 31
          %s2025 = smul.addr %s2022, 32
          %s2026 = sadd.s32 %s2024, %s2025
          %s2027 = smul.addr %s2026, 8
          %s2028 = scalar_lea.vmem %s3, %s2027
        $region78: #{generator_resnet_forward.19} parent=73 // pred_fallthru
          _
      $region74: #{generator_resnet_forward.19} parent=5 // pred_fallthru
        _
    $region6: #{generator_resnet_forward.19} parent=1 // loop_footer
      %s13 = sadd.s32 1, %s9
    $region7: #{generator_resnet_forward.19} parent=1 // loop_footer_branch
      %8 = sbr.rel target = $region3
    $region8: #{generator_resnet_forward.19} parent=1 // loop_exit
      _

</llo_original>
